<compile_context>
chip_gen: v6e
topology: v6e:2x2x1
jax: 0.10.0
libtpu: 0.0.40
codegen_flags: <defaults>
</compile_context>

<pallas_src>
import jax
import jax.numpy as jnp
from jax.experimental import pallas as pl
from jax.experimental.pallas import tpu as pltpu


def _fused_mlp_kernel(x_ref,
                      w1_ref, b1_ref,
                      w2_ref, b2_ref,
                      w3_ref, b3_ref,
                      w4_ref, b4_ref,
                      o_ref):
    # Layer 1: relu(x @ W1 + b1)
    h = jnp.dot(x_ref[...].astype(w1_ref.dtype), w1_ref[...],
                preferred_element_type=jnp.float32)
    h = jnp.maximum(h + b1_ref[...], 0.0)

    # Layer 2: relu(h @ W2 + b2)
    h = jnp.dot(h.astype(w2_ref.dtype), w2_ref[...],
                preferred_element_type=jnp.float32)
    h = jnp.maximum(h + b2_ref[...], 0.0)

    # Layer 3: relu(h @ W3 + b3)
    h = jnp.dot(h.astype(w3_ref.dtype), w3_ref[...],
                preferred_element_type=jnp.float32)
    h = jnp.maximum(h + b3_ref[...], 0.0)

    # Layer 4: log_softmax(h @ W4 + b4), numerically stable (max-subtracted).
    z = jnp.dot(h.astype(w4_ref.dtype), w4_ref[...],
                preferred_element_type=jnp.float32)
    z = z + b4_ref[...]
    m = jnp.max(z, axis=-1, keepdims=True)
    lse = jnp.log(jnp.sum(jnp.exp(z - m), axis=-1, keepdims=True)) + m
    o_ref[...] = (z - lse).astype(o_ref.dtype)


def fused_mlp_forward(x, params):
    """x: (B, input_size) f32. params: list of (W_bf16 (K,N), b_f32 (1,N))."""
    (w1, b1), (w2, b2), (w3, b3), (w4, b4) = params
    B = x.shape[0]
    N_out = w4.shape[1]

    def full_spec(shape):
        return pl.BlockSpec(shape, lambda i: tuple(0 for _ in shape))

    return pl.pallas_call(
        _fused_mlp_kernel,
        out_shape=jax.ShapeDtypeStruct((B, N_out), jnp.float32),
        grid=(1,),
        in_specs=[
            full_spec(x.shape),
            full_spec(w1.shape), full_spec(b1.shape),
            full_spec(w2.shape), full_spec(b2.shape),
            full_spec(w3.shape), full_spec(b3.shape),
            full_spec(w4.shape), full_spec(b4.shape),
        ],
        out_specs=full_spec((B, N_out)),
        compiler_params=pltpu.CompilerParams(
            dimension_semantics=("arbitrary",),
            vmem_limit_bytes=32 << 20,   # fits v7x's 64 MiB physical VMEM
        ),
    )(x, w1, b1, w2, b2, w3, b3, w4, b4)


def init_params(key, input_size, output_size):
    """Deterministic init mimicking nn.Linear's U(-1/sqrt(fan_in), 1/sqrt(fan_in)).

    Weights stored as bf16 (K, N); biases stored f32 pre-shaped to (1, N).
    """
    dims = [(input_size, 2048), (2048, 1024), (1024, 256), (256, output_size)]
    params = []
    for (fan_in, fan_out) in dims:
        key, kw, kb = jax.random.split(key, 3)
        bound = 1.0 / jnp.sqrt(fan_in)
        w = jax.random.uniform(kw, (fan_in, fan_out), jnp.float32, -bound, bound)
        b = jax.random.uniform(kb, (fan_out,), jnp.float32, -bound, bound)
        params.append((w.astype(jnp.bfloat16), b.reshape(1, fan_out)))
    return params


@jax.jit
def model_forward(x, params):
    return fused_mlp_forward(x, params)


if __name__ == "__main__":
    batch = 8
    input_size = 64
    output_size = 16

    key = jax.random.PRNGKey(0)
    kx, kp = jax.random.split(key)
    x = jax.random.normal(kx, (batch, input_size), jnp.float32)
    params = init_params(kp, input_size, output_size)

    out = model_forward(x, params)
    jax.block_until_ready(out)

    assert out.shape == (batch, output_size)
    # log_softmax rows should sum (in prob space) to ~1
    row_prob_sums = jnp.sum(jnp.exp(out), axis=-1)
    assert jnp.allclose(row_prob_sums, 1.0, atol=1e-3), row_prob_sums

    # Sanity check against a pure-JAX reference with identical (bf16) weights.
    def ref_forward(x, params):
        h = x
        for i, (w, b) in enumerate(params):
            h = jnp.dot(h.astype(jnp.bfloat16), w,
                        preferred_element_type=jnp.float32) + b
            if i < 3:
                h = jnp.maximum(h, 0.0)
        return jax.nn.log_softmax(h, axis=-1)

    ref = ref_forward(x, params)
    assert jnp.allclose(out, ref, atol=2e-2, rtol=2e-2), jnp.max(jnp.abs(out - ref))

    print("KERNEL_OK")
</pallas_src>

<mosaic_0001>
module attributes {stable_mosaic.version = 11 : i64} {
  func.func @_fused_mlp_kernel(%arg0: i32, %arg1: memref<8x64xf32, #tpu.memory_space<vmem>>, %arg2: memref<64x2048xbf16, #tpu.memory_space<vmem>>, %arg3: memref<1x2048xf32, #tpu.memory_space<vmem>>, %arg4: memref<2048x1024xbf16, #tpu.memory_space<vmem>>, %arg5: memref<1x1024xf32, #tpu.memory_space<vmem>>, %arg6: memref<1024x256xbf16, #tpu.memory_space<vmem>>, %arg7: memref<1x256xf32, #tpu.memory_space<vmem>>, %arg8: memref<256x16xbf16, #tpu.memory_space<vmem>>, %arg9: memref<1x16xf32, #tpu.memory_space<vmem>>, %arg10: memref<8x16xf32, #tpu.memory_space<vmem>>) attributes {dimension_semantics = [#tpu.dimension_semantics<arbitrary>], iteration_bounds = array<i64: 1>, scalar_prefetch = 0 : i64, scratch_operands = 0 : i64, tpu.core_type = #tpu.core_type<tc>, window_params = [{pipeline_mode = #tpu.pipeline_mode<synchronous>, transform_indices = @transform_0, window_bounds = array<i64: 8, 64>}, {pipeline_mode = #tpu.pipeline_mode<synchronous>, transform_indices = @transform_1, window_bounds = array<i64: 64, 2048>}, {pipeline_mode = #tpu.pipeline_mode<synchronous>, transform_indices = @transform_2, window_bounds = array<i64: 1, 2048>}, {pipeline_mode = #tpu.pipeline_mode<synchronous>, transform_indices = @transform_3, window_bounds = array<i64: 2048, 1024>}, {pipeline_mode = #tpu.pipeline_mode<synchronous>, transform_indices = @transform_4, window_bounds = array<i64: 1, 1024>}, {pipeline_mode = #tpu.pipeline_mode<synchronous>, transform_indices = @transform_5, window_bounds = array<i64: 1024, 256>}, {pipeline_mode = #tpu.pipeline_mode<synchronous>, transform_indices = @transform_6, window_bounds = array<i64: 1, 256>}, {pipeline_mode = #tpu.pipeline_mode<synchronous>, transform_indices = @transform_7, window_bounds = array<i64: 256, 16>}, {pipeline_mode = #tpu.pipeline_mode<synchronous>, transform_indices = @transform_8, window_bounds = array<i64: 1, 16>}, {pipeline_mode = #tpu.pipeline_mode<synchronous>, transform_indices = @transform_9, window_bounds = array<i64: 8, 16>}]} {
    %c0 = arith.constant 0 : index
    %c0_0 = arith.constant 0 : index
    %0 = vector.load %arg1[%c0, %c0_0] : memref<8x64xf32, #tpu.memory_space<vmem>>, vector<8x64xf32>
    %1 = arith.truncf %0 : vector<8x64xf32> to vector<8x64xbf16>
    %c0_1 = arith.constant 0 : index
    %c0_2 = arith.constant 0 : index
    %2 = vector.load %arg2[%c0_1, %c0_2] : memref<64x2048xbf16, #tpu.memory_space<vmem>>, vector<64x2048xbf16>
    %cst = arith.constant dense<0.000000e+00> : vector<8x2048xf32>
    %3 = tpu.matmul %1, %2, %cst {dimension_numbers = #tpu.dot_dimension_numbers<[1], [0], [0], [1], [0, 0, 1, 1], [], []>} : vector<8x64xbf16>, vector<64x2048xbf16>, vector<8x2048xf32> -> vector<8x2048xf32>
    %c0_3 = arith.constant 0 : index
    %c0_4 = arith.constant 0 : index
    %4 = vector.load %arg3[%c0_3, %c0_4] : memref<1x2048xf32, #tpu.memory_space<vmem>>, vector<1x2048xf32>
    %5 = vector.broadcast %4 : vector<1x2048xf32> to vector<8x2048xf32>
    %6 = arith.addf %3, %5 : vector<8x2048xf32>
    %cst_5 = arith.constant 0.000000e+00 : f32
    %7 = vector.broadcast %cst_5 : f32 to vector<8x2048xf32>
    %8 = arith.maximumf %6, %7 : vector<8x2048xf32>
    %9 = arith.truncf %8 : vector<8x2048xf32> to vector<8x2048xbf16>
    %c0_6 = arith.constant 0 : index
    %c0_7 = arith.constant 0 : index
    %10 = vector.load %arg4[%c0_6, %c0_7] : memref<2048x1024xbf16, #tpu.memory_space<vmem>>, vector<2048x1024xbf16>
    %cst_8 = arith.constant dense<0.000000e+00> : vector<8x1024xf32>
    %11 = tpu.matmul %9, %10, %cst_8 {dimension_numbers = #tpu.dot_dimension_numbers<[1], [0], [0], [1], [0, 0, 1, 1], [], []>} : vector<8x2048xbf16>, vector<2048x1024xbf16>, vector<8x1024xf32> -> vector<8x1024xf32>
    %c0_9 = arith.constant 0 : index
    %c0_10 = arith.constant 0 : index
    %12 = vector.load %arg5[%c0_9, %c0_10] : memref<1x1024xf32, #tpu.memory_space<vmem>>, vector<1x1024xf32>
    %13 = vector.broadcast %12 : vector<1x1024xf32> to vector<8x1024xf32>
    %14 = arith.addf %11, %13 : vector<8x1024xf32>
    %cst_11 = arith.constant 0.000000e+00 : f32
    %15 = vector.broadcast %cst_11 : f32 to vector<8x1024xf32>
    %16 = arith.maximumf %14, %15 : vector<8x1024xf32>
    %17 = arith.truncf %16 : vector<8x1024xf32> to vector<8x1024xbf16>
    %c0_12 = arith.constant 0 : index
    %c0_13 = arith.constant 0 : index
    %18 = vector.load %arg6[%c0_12, %c0_13] : memref<1024x256xbf16, #tpu.memory_space<vmem>>, vector<1024x256xbf16>
    %cst_14 = arith.constant dense<0.000000e+00> : vector<8x256xf32>
    %19 = tpu.matmul %17, %18, %cst_14 {dimension_numbers = #tpu.dot_dimension_numbers<[1], [0], [0], [1], [0, 0, 1, 1], [], []>} : vector<8x1024xbf16>, vector<1024x256xbf16>, vector<8x256xf32> -> vector<8x256xf32>
    %c0_15 = arith.constant 0 : index
    %c0_16 = arith.constant 0 : index
    %20 = vector.load %arg7[%c0_15, %c0_16] : memref<1x256xf32, #tpu.memory_space<vmem>>, vector<1x256xf32>
    %21 = vector.broadcast %20 : vector<1x256xf32> to vector<8x256xf32>
    %22 = arith.addf %19, %21 : vector<8x256xf32>
    %cst_17 = arith.constant 0.000000e+00 : f32
    %23 = vector.broadcast %cst_17 : f32 to vector<8x256xf32>
    %24 = arith.maximumf %22, %23 : vector<8x256xf32>
    %25 = arith.truncf %24 : vector<8x256xf32> to vector<8x256xbf16>
    %c0_18 = arith.constant 0 : index
    %c0_19 = arith.constant 0 : index
    %26 = vector.load %arg8[%c0_18, %c0_19] : memref<256x16xbf16, #tpu.memory_space<vmem>>, vector<256x16xbf16>
    %cst_20 = arith.constant dense<0.000000e+00> : vector<8x16xf32>
    %27 = tpu.matmul %25, %26, %cst_20 {dimension_numbers = #tpu.dot_dimension_numbers<[1], [0], [0], [1], [0, 0, 1, 1], [], []>} : vector<8x256xbf16>, vector<256x16xbf16>, vector<8x16xf32> -> vector<8x16xf32>
    %c0_21 = arith.constant 0 : index
    %c0_22 = arith.constant 0 : index
    %28 = vector.load %arg9[%c0_21, %c0_22] : memref<1x16xf32, #tpu.memory_space<vmem>>, vector<1x16xf32>
    %29 = vector.broadcast %28 : vector<1x16xf32> to vector<8x16xf32>
    %30 = arith.addf %27, %29 : vector<8x16xf32>
    %cst_23 = arith.constant dense<0xFF800000> : vector<8xf32>
    %31 = vector.multi_reduction <maximumf>, %30, %cst_23 [1] : vector<8x16xf32> to vector<8xf32>
    %32 = vector.shape_cast %31 : vector<8xf32> to vector<8x1xf32>
    %33 = vector.broadcast %32 : vector<8x1xf32> to vector<8x16xf32>
    %34 = arith.subf %30, %33 : vector<8x16xf32>
    %35 = math.exp %34 : vector<8x16xf32>
    %cst_24 = arith.constant dense<0.000000e+00> : vector<8xf32>
    %36 = vector.multi_reduction <add>, %35, %cst_24 [1] : vector<8x16xf32> to vector<8xf32>
    %37 = vector.shape_cast %36 : vector<8xf32> to vector<8x1xf32>
    %38 = math.log %37 : vector<8x1xf32>
    %39 = arith.addf %38, %32 : vector<8x1xf32>
    %40 = vector.broadcast %39 : vector<8x1xf32> to vector<8x16xf32>
    %41 = arith.subf %30, %40 : vector<8x16xf32>
    %c0_25 = arith.constant 0 : index
    %c0_26 = arith.constant 0 : index
    %42 = vector.load %arg10[%c0_25, %c0_26] : memref<8x16xf32, #tpu.memory_space<vmem>>, vector<8x16xf32>
    tpu.vector_store %arg10[%c0_25, %c0_26], %41 {strides = array<i32>} : memref<8x16xf32, #tpu.memory_space<vmem>>, vector<8x16xf32>,
    return
  }
  func.func @transform_0(%arg0: i32) -> (i32, i32) {
    %c0_i32 = arith.constant 0 : i32
    %c0_i32_0 = arith.constant 0 : i32
    %c0_i32_1 = arith.constant 0 : i32
    return %c0_i32, %c0_i32_0 : i32, i32
  }
  func.func @transform_1(%arg0: i32) -> (i32, i32) {
    %c0_i32 = arith.constant 0 : i32
    %c0_i32_0 = arith.constant 0 : i32
    %c0_i32_1 = arith.constant 0 : i32
    return %c0_i32, %c0_i32_0 : i32, i32
  }
  func.func @transform_2(%arg0: i32) -> (i32, i32) {
    %c0_i32 = arith.constant 0 : i32
    %c0_i32_0 = arith.constant 0 : i32
    %c0_i32_1 = arith.constant 0 : i32
    return %c0_i32, %c0_i32_0 : i32, i32
  }
  func.func @transform_3(%arg0: i32) -> (i32, i32) {
    %c0_i32 = arith.constant 0 : i32
    %c0_i32_0 = arith.constant 0 : i32
    %c0_i32_1 = arith.constant 0 : i32
    return %c0_i32, %c0_i32_0 : i32, i32
  }
  func.func @transform_4(%arg0: i32) -> (i32, i32) {
    %c0_i32 = arith.constant 0 : i32
    %c0_i32_0 = arith.constant 0 : i32
    %c0_i32_1 = arith.constant 0 : i32
    return %c0_i32, %c0_i32_0 : i32, i32
  }
  func.func @transform_5(%arg0: i32) -> (i32, i32) {
    %c0_i32 = arith.constant 0 : i32
    %c0_i32_0 = arith.constant 0 : i32
    %c0_i32_1 = arith.constant 0 : i32
    return %c0_i32, %c0_i32_0 : i32, i32
  }
  func.func @transform_6(%arg0: i32) -> (i32, i32) {
    %c0_i32 = arith.constant 0 : i32
    %c0_i32_0 = arith.constant 0 : i32
    %c0_i32_1 = arith.constant 0 : i32
    return %c0_i32, %c0_i32_0 : i32, i32
  }
  func.func @transform_7(%arg0: i32) -> (i32, i32) {
    %c0_i32 = arith.constant 0 : i32
    %c0_i32_0 = arith.constant 0 : i32
    %c0_i32_1 = arith.constant 0 : i32
    return %c0_i32, %c0_i32_0 : i32, i32
  }
  func.func @transform_8(%arg0: i32) -> (i32, i32) {
    %c0_i32 = arith.constant 0 : i32
    %c0_i32_0 = arith.constant 0 : i32
    %c0_i32_1 = arith.constant 0 : i32
    return %c0_i32, %c0_i32_0 : i32, i32
  }
  func.func @transform_9(%arg0: i32) -> (i32, i32) {
    %c0_i32 = arith.constant 0 : i32
    %c0_i32_0 = arith.constant 0 : i32
    %c0_i32_1 = arith.constant 0 : i32
    return %c0_i32, %c0_i32_0 : i32, i32
  }
}

</mosaic_0001>

<llo_original>
// kernel: model_forward.1
$region0: #{model_forward.1}
  #allocation0 [shape = 'u32[]', space=smem, size = 0x4, offset = 0x4, fixed_abs, tag = 'smem constant byte address 0x4 - core index']
  #allocation1 [shape = 'u32[144,128]{1,0:T(1,128)}', space=vmem, size = 0x12000, scoped, tag = 'internal scratch']
  %s0 = inlined_call_operand.hbm [shape: f32[8,64], index: 0, kind: input, shape index: {}]
  %s1 = inlined_call_operand.hbm [shape: bf16[64,2048], index: 1, kind: input, shape index: {}]
  %s2 = inlined_call_operand.hbm [shape: f32[1,2048], index: 2, kind: input, shape index: {}]
  %s3 = inlined_call_operand.hbm [shape: bf16[2048,1024], index: 3, kind: input, shape index: {}]
  %s4 = inlined_call_operand.hbm [shape: f32[1,1024], index: 4, kind: input, shape index: {}]
  %s5 = inlined_call_operand.hbm [shape: bf16[1024,256], index: 5, kind: input, shape index: {}]
  %s6 = inlined_call_operand.hbm [shape: f32[1,256], index: 6, kind: input, shape index: {}]
  %s7 = inlined_call_operand.vmem [shape: bf16[256,16], index: 7, kind: input, shape index: {}]
  %s8 = inlined_call_operand.hbm [shape: f32[1,16], index: 8, kind: input, shape index: {}]
  %s9 = inlined_call_operand.hbm [shape: f32[8,16], index: 9, kind: output, shape index: {}]
  %s10 = sld [smem:[#allocation0]]
  $region78: #{model_forward.1} parent=0
    _
  %s12 = ssub.s32 1, %s10
  %s13 = scalar_select 0, %s12, %s10
  $region1: #{model_forward.1} parent=0
    #allocation2 [shape = 'u8[4096]{0}', space=vmem, size = 0x1000, scoped, tag = 'input window, operand 0, single buffered']
    #allocation3 [shape = 's32[1]{0}', space=sflag, size = 0x4, scoped, tag = 'scoped memory for model_forward.1']
    #allocation4 [shape = 's32[1]{0}', space=sflag, size = 0x4, scoped, tag = 'scoped memory for model_forward.1']
    #allocation5 [shape = 'u8[262144]{0}', space=vmem, size = 0x40000, scoped, tag = 'input window, operand 1, single buffered']
    #allocation6 [shape = 's32[1]{0}', space=sflag, size = 0x4, scoped, tag = 'scoped memory for model_forward.1']
    #allocation7 [shape = 'u8[8192]{0}', space=vmem, size = 0x2000, scoped, tag = 'input window, operand 2, single buffered']
    #allocation8 [shape = 'u8[4194304]{0}', space=vmem, size = 0x400000, scoped, tag = 'input window, operand 3, single buffered']
    #allocation9 [shape = 's32[1]{0}', space=sflag, size = 0x4, scoped, tag = 'scoped memory for model_forward.1']
    #allocation10 [shape = 'u8[4096]{0}', space=vmem, size = 0x1000, scoped, tag = 'input window, operand 4, single buffered']
    #allocation11 [shape = 'u8[524288]{0}', space=vmem, size = 0x80000, scoped, tag = 'input window, operand 5, single buffered']
    #allocation12 [shape = 's32[1]{0}', space=sflag, size = 0x4, scoped, tag = 'scoped memory for model_forward.1']
    #allocation13 [shape = 'u8[1024]{0}', space=vmem, size = 0x400, scoped, tag = 'input window, operand 6, single buffered']
    #allocation14 [shape = 'u8[512]{0}', space=vmem, size = 0x400, scoped, tag = 'input window, operand 8, single buffered']
    #allocation15 [shape = 's32[1]{0}', space=sflag, size = 0x4, scoped, tag = 'scoped memory for model_forward.1']
    #allocation16 [shape = 'u8[4096]{0}', space=vmem, size = 0x1000, scoped, tag = 'output window, operand 0, single buffered']
    %14 = vsyncpa [#allocation3], 0
    %15 = vsyncpa [#allocation6], 0
    %16 = vsyncpa [#allocation9], 0
    %17 = vsyncpa [#allocation12], 0
    %18 = vsyncpa [#allocation15], 0
    %19 = vsyncpa [#allocation4], 0
    // Predicated region
    $region2: #{model_forward.1} parent=1 // pred_check
      _
    $region3: #{model_forward.1} parent=1 // pred_check_branch
      %21 = sbr.rel (0) target = $region5
    $region4: #{model_forward.1} parent=1 // pred_region
      %s23 = ssub.s32 128, 128
      %24 = vsyncadd [#allocation3], %s23
      %s26 = sshll.u32 [#allocation2], 4
      %s27 = int_to_ptr.vmem [resolvable:$true] %s26
      %29 = dma.hbm_to_vmem [thread:$0]  %s0, 128, %s27, [#allocation3]
    $region5: #{model_forward.1} parent=1 // pred_fallthru
      _
    // Predicated region
    $region6: #{model_forward.1} parent=1 // pred_check
      _
    $region7: #{model_forward.1} parent=1 // pred_check_branch
      %31 = sbr.rel (0) target = $region9
    $region8: #{model_forward.1} parent=1 // pred_region
      %s33 = ssub.s32 8192, 8192
      %34 = vsyncadd [#allocation6], %s33
      %s35 = sshll.u32 [#allocation5], 4
      %s36 = int_to_ptr.vmem [resolvable:$true] %s35
      %41 = dma.hbm_to_vmem [thread:$0]  %s1, 8192, %s36, [#allocation6], 1024, 1024, 64
    $region9: #{model_forward.1} parent=1 // pred_fallthru
      _
    // Predicated region
    $region10: #{model_forward.1} parent=1 // pred_check
      _
    $region11: #{model_forward.1} parent=1 // pred_check_branch
      %43 = sbr.rel (0) target = $region13
    $region12: #{model_forward.1} parent=1 // pred_region
      %s45 = ssub.s32 256, 256
      %46 = vsyncadd [#allocation6], %s45
      %s48 = sshll.u32 [#allocation7], 4
      %s49 = int_to_ptr.vmem [resolvable:$true] %s48
      %51 = dma.hbm_to_vmem [thread:$0]  %s2, 256, %s49, [#allocation6]
    $region13: #{model_forward.1} parent=1 // pred_fallthru
      _
    // Predicated region
    $region14: #{model_forward.1} parent=1 // pred_check
      _
    $region15: #{model_forward.1} parent=1 // pred_check_branch
      %53 = sbr.rel (0) target = $region17
    $region16: #{model_forward.1} parent=1 // pred_region
      %s55 = ssub.s32 131072, 131072
      %56 = vsyncadd [#allocation9], %s55
      %s57 = sshll.u32 [#allocation8], 4
      %s58 = int_to_ptr.vmem [resolvable:$true] %s57
      %63 = dma.hbm_to_vmem [thread:$0]  %s3, 131072, %s58, [#allocation9], 512, 512, 32
    $region17: #{model_forward.1} parent=1 // pred_fallthru
      _
    // Predicated region
    $region18: #{model_forward.1} parent=1 // pred_check
      _
    $region19: #{model_forward.1} parent=1 // pred_check_branch
      %65 = sbr.rel (0) target = $region21
    $region20: #{model_forward.1} parent=1 // pred_region
      %s67 = ssub.s32 128, 128
      %68 = vsyncadd [#allocation9], %s67
      %s70 = sshll.u32 [#allocation10], 4
      %s71 = int_to_ptr.vmem [resolvable:$true] %s70
      %73 = dma.hbm_to_vmem [thread:$0]  %s4, 128, %s71, [#allocation9]
    $region21: #{model_forward.1} parent=1 // pred_fallthru
      _
    // Predicated region
    $region22: #{model_forward.1} parent=1 // pred_check
      _
    $region23: #{model_forward.1} parent=1 // pred_check_branch
      %75 = sbr.rel (0) target = $region25
    $region24: #{model_forward.1} parent=1 // pred_region
      %s77 = ssub.s32 16384, 16384
      %78 = vsyncadd [#allocation12], %s77
      %s79 = sshll.u32 [#allocation11], 4
      %s80 = int_to_ptr.vmem [resolvable:$true] %s79
      %85 = dma.hbm_to_vmem [thread:$0]  %s5, 16384, %s80, [#allocation12], 128, 128, 8
    $region25: #{model_forward.1} parent=1 // pred_fallthru
      _
    // Predicated region
    $region26: #{model_forward.1} parent=1 // pred_check
      _
    $region27: #{model_forward.1} parent=1 // pred_check_branch
      %87 = sbr.rel (0) target = $region29
    $region28: #{model_forward.1} parent=1 // pred_region
      %s89 = ssub.s32 32, 32
      %90 = vsyncadd [#allocation12], %s89
      %s92 = sshll.u32 [#allocation13], 4
      %s93 = int_to_ptr.vmem [resolvable:$true] %s92
      %95 = dma.hbm_to_vmem [thread:$0]  %s6, 32, %s93, [#allocation12]
    $region29: #{model_forward.1} parent=1 // pred_fallthru
      _
    // Predicated region
    $region30: #{model_forward.1} parent=1 // pred_check
      _
    $region31: #{model_forward.1} parent=1 // pred_check_branch
      %97 = sbr.rel (0) target = $region33
    $region32: #{model_forward.1} parent=1 // pred_region
      _
    $region33: #{model_forward.1} parent=1 // pred_fallthru
      _
    // Predicated region
    $region34: #{model_forward.1} parent=1 // pred_check
      _
    $region35: #{model_forward.1} parent=1 // pred_check_branch
      %99 = sbr.rel (0) target = $region37
    $region36: #{model_forward.1} parent=1 // pred_region
      %s101 = ssub.s32 16, 16
      %102 = vsyncadd [#allocation15], %s101
      %s104 = sshll.u32 [#allocation14], 4
      %s105 = int_to_ptr.vmem [resolvable:$true] %s104
      %107 = dma.hbm_to_vmem [thread:$0]  %s8, 16, %s105, [#allocation15]
    $region37: #{model_forward.1} parent=1 // pred_fallthru
      _
    // Predicated region
    $region38: #{model_forward.1} parent=1 // pred_check
      _
    $region39: #{model_forward.1} parent=1 // pred_check_branch
      %109 = sbr.rel (0) target = $region41
    $region40: #{model_forward.1} parent=1 // pred_region
      %110 = dma.done [#allocation3], 128
    $region41: #{model_forward.1} parent=1 // pred_fallthru
      _
    // Predicated region
    $region42: #{model_forward.1} parent=1 // pred_check
      _
    $region43: #{model_forward.1} parent=1 // pred_check_branch
      %112 = sbr.rel (0) target = $region45
    $region44: #{model_forward.1} parent=1 // pred_region
      %113 = dma.done [#allocation6], 8192
    $region45: #{model_forward.1} parent=1 // pred_fallthru
      _
    // Predicated region
    $region46: #{model_forward.1} parent=1 // pred_check
      _
    $region47: #{model_forward.1} parent=1 // pred_check_branch
      %115 = sbr.rel (0) target = $region49
    $region48: #{model_forward.1} parent=1 // pred_region
      %116 = dma.done [#allocation6], 256
    $region49: #{model_forward.1} parent=1 // pred_fallthru
      _
    // Predicated region
    $region50: #{model_forward.1} parent=1 // pred_check
      _
    $region51: #{model_forward.1} parent=1 // pred_check_branch
      %118 = sbr.rel (0) target = $region53
    $region52: #{model_forward.1} parent=1 // pred_region
      %119 = dma.done [#allocation9], 131072
    $region53: #{model_forward.1} parent=1 // pred_fallthru
      _
    // Predicated region
    $region54: #{model_forward.1} parent=1 // pred_check
      _
    $region55: #{model_forward.1} parent=1 // pred_check_branch
      %121 = sbr.rel (0) target = $region57
    $region56: #{model_forward.1} parent=1 // pred_region
      %122 = dma.done [#allocation9], 128
    $region57: #{model_forward.1} parent=1 // pred_fallthru
      _
    // Predicated region
    $region58: #{model_forward.1} parent=1 // pred_check
      _
    $region59: #{model_forward.1} parent=1 // pred_check_branch
      %124 = sbr.rel (0) target = $region61
    $region60: #{model_forward.1} parent=1 // pred_region
      %125 = dma.done [#allocation12], 16384
    $region61: #{model_forward.1} parent=1 // pred_fallthru
      _
    // Predicated region
    $region62: #{model_forward.1} parent=1 // pred_check
      _
    $region63: #{model_forward.1} parent=1 // pred_check_branch
      %127 = sbr.rel (0) target = $region65
    $region64: #{model_forward.1} parent=1 // pred_region
      %128 = dma.done [#allocation12], 32
    $region65: #{model_forward.1} parent=1 // pred_fallthru
      _
    // Predicated region
    $region66: #{model_forward.1} parent=1 // pred_check
      _
    $region67: #{model_forward.1} parent=1 // pred_check_branch
      %130 = sbr.rel (0) target = $region69
    $region68: #{model_forward.1} parent=1 // pred_region
      %131 = dma.done [#allocation15], 16
    $region69: #{model_forward.1} parent=1 // pred_fallthru
      _
    %v133 = vld [vmem:[#allocation2] sm:$0xff]
    %v134 = vpack.c.bf16 %v133, %v133
    %v135 = vld [vmem:[#allocation5] sm:$0xff]
    %v136 = vld [vmem:[#allocation5 + $0x8] sm:$0xff]
    %v137 = vld [vmem:[#allocation5 + $0x10] sm:$0xff]
    %v138 = vld [vmem:[#allocation5 + $0x18] sm:$0xff]
    %v139 = vld [vmem:[#allocation5 + $0x20] sm:$0xff]
    %v140 = vld [vmem:[#allocation5 + $0x28] sm:$0xff]
    %v141 = vld [vmem:[#allocation5 + $0x30] sm:$0xff]
    %v142 = vld [vmem:[#allocation5 + $0x38] sm:$0xff]
    %v143 = vld [vmem:[#allocation5 + $0x40] sm:$0xff]
    %v144 = vld [vmem:[#allocation5 + $0x48] sm:$0xff]
    %v145 = vld [vmem:[#allocation5 + $0x50] sm:$0xff]
    %v146 = vld [vmem:[#allocation5 + $0x58] sm:$0xff]
    %v147 = vld [vmem:[#allocation5 + $0x60] sm:$0xff]
    %v148 = vld [vmem:[#allocation5 + $0x68] sm:$0xff]
    %v149 = vld [vmem:[#allocation5 + $0x70] sm:$0xff]
    %v150 = vld [vmem:[#allocation5 + $0x78] sm:$0xff]
    %v151 = vld [vmem:[#allocation5 + $0x80] sm:$0xff]
    %v152 = vld [vmem:[#allocation5 + $0x88] sm:$0xff]
    %v153 = vld [vmem:[#allocation5 + $0x90] sm:$0xff]
    %v154 = vld [vmem:[#allocation5 + $0x98] sm:$0xff]
    %v155 = vld [vmem:[#allocation5 + $0xa0] sm:$0xff]
    %v156 = vld [vmem:[#allocation5 + $0xa8] sm:$0xff]
    %v157 = vld [vmem:[#allocation5 + $0xb0] sm:$0xff]
    %v158 = vld [vmem:[#allocation5 + $0xb8] sm:$0xff]
    %v159 = vld [vmem:[#allocation5 + $0xc0] sm:$0xff]
    %v160 = vld [vmem:[#allocation5 + $0xc8] sm:$0xff]
    %v161 = vld [vmem:[#allocation5 + $0xd0] sm:$0xff]
    %v162 = vld [vmem:[#allocation5 + $0xd8] sm:$0xff]
    %v163 = vld [vmem:[#allocation5 + $0xe0] sm:$0xff]
    %v164 = vld [vmem:[#allocation5 + $0xe8] sm:$0xff]
    %v165 = vld [vmem:[#allocation5 + $0xf0] sm:$0xff]
    %v166 = vld [vmem:[#allocation5 + $0xf8] sm:$0xff]
    %v167 = vld [vmem:[#allocation5 + $0x100] sm:$0xff]
    %v168 = vld [vmem:[#allocation5 + $0x108] sm:$0xff]
    %v169 = vld [vmem:[#allocation5 + $0x110] sm:$0xff]
    %v170 = vld [vmem:[#allocation5 + $0x118] sm:$0xff]
    %v171 = vld [vmem:[#allocation5 + $0x120] sm:$0xff]
    %v172 = vld [vmem:[#allocation5 + $0x128] sm:$0xff]
    %v173 = vld [vmem:[#allocation5 + $0x130] sm:$0xff]
    %v174 = vld [vmem:[#allocation5 + $0x138] sm:$0xff]
    %v175 = vld [vmem:[#allocation5 + $0x140] sm:$0xff]
    %v176 = vld [vmem:[#allocation5 + $0x148] sm:$0xff]
    %v177 = vld [vmem:[#allocation5 + $0x150] sm:$0xff]
    %v178 = vld [vmem:[#allocation5 + $0x158] sm:$0xff]
    %v179 = vld [vmem:[#allocation5 + $0x160] sm:$0xff]
    %v180 = vld [vmem:[#allocation5 + $0x168] sm:$0xff]
    %v181 = vld [vmem:[#allocation5 + $0x170] sm:$0xff]
    %v182 = vld [vmem:[#allocation5 + $0x178] sm:$0xff]
    %v183 = vld [vmem:[#allocation5 + $0x180] sm:$0xff]
    %v184 = vld [vmem:[#allocation5 + $0x188] sm:$0xff]
    %v185 = vld [vmem:[#allocation5 + $0x190] sm:$0xff]
    %v186 = vld [vmem:[#allocation5 + $0x198] sm:$0xff]
    %v187 = vld [vmem:[#allocation5 + $0x1a0] sm:$0xff]
    %v188 = vld [vmem:[#allocation5 + $0x1a8] sm:$0xff]
    %v189 = vld [vmem:[#allocation5 + $0x1b0] sm:$0xff]
    %v190 = vld [vmem:[#allocation5 + $0x1b8] sm:$0xff]
    %v191 = vld [vmem:[#allocation5 + $0x1c0] sm:$0xff]
    %v192 = vld [vmem:[#allocation5 + $0x1c8] sm:$0xff]
    %v193 = vld [vmem:[#allocation5 + $0x1d0] sm:$0xff]
    %v194 = vld [vmem:[#allocation5 + $0x1d8] sm:$0xff]
    %v195 = vld [vmem:[#allocation5 + $0x1e0] sm:$0xff]
    %v196 = vld [vmem:[#allocation5 + $0x1e8] sm:$0xff]
    %v197 = vld [vmem:[#allocation5 + $0x1f0] sm:$0xff]
    %v198 = vld [vmem:[#allocation5 + $0x1f8] sm:$0xff]
    %v199 = vld [vmem:[#allocation7] sm:$0xff]
    %v200 = vld [vmem:[#allocation7 + $0x8] sm:$0xff]
    %v203 = vlaneseq
    %v204 = vshrl.u32 %v203, 7
    %v205 = vsub.s32 0, %v204
    %v206 = vrot.slane %v199, %v205
    %v207 = vlaneseq
    %v208 = vshrl.u32 %v207, 7
    %v209 = vsub.s32 1, %v208
    %v210 = vrot.slane %v199, %v209
    %v211 = vlaneseq
    %v212 = vshrl.u32 %v211, 7
    %v213 = vsub.s32 2, %v212
    %v214 = vrot.slane %v199, %v213
    %v215 = vlaneseq
    %v216 = vshrl.u32 %v215, 7
    %v217 = vsub.s32 3, %v216
    %v218 = vrot.slane %v199, %v217
    %v219 = vlaneseq
    %v220 = vshrl.u32 %v219, 7
    %v221 = vsub.s32 4, %v220
    %v222 = vrot.slane %v199, %v221
    %v223 = vlaneseq
    %v224 = vshrl.u32 %v223, 7
    %v225 = vsub.s32 5, %v224
    %v226 = vrot.slane %v199, %v225
    %v227 = vlaneseq
    %v228 = vshrl.u32 %v227, 7
    %v229 = vsub.s32 6, %v228
    %v230 = vrot.slane %v199, %v229
    %v231 = vlaneseq
    %v232 = vshrl.u32 %v231, 7
    %v233 = vsub.s32 7, %v232
    %v234 = vrot.slane %v199, %v233
    %v235 = vlaneseq
    %v236 = vshrl.u32 %v235, 7
    %v237 = vsub.s32 0, %v236
    %v238 = vrot.slane %v200, %v237
    %v239 = vlaneseq
    %v240 = vshrl.u32 %v239, 7
    %v241 = vsub.s32 1, %v240
    %v242 = vrot.slane %v200, %v241
    %v243 = vlaneseq
    %v244 = vshrl.u32 %v243, 7
    %v245 = vsub.s32 2, %v244
    %v246 = vrot.slane %v200, %v245
    %v247 = vlaneseq
    %v248 = vshrl.u32 %v247, 7
    %v249 = vsub.s32 3, %v248
    %v250 = vrot.slane %v200, %v249
    %v251 = vlaneseq
    %v252 = vshrl.u32 %v251, 7
    %v253 = vsub.s32 4, %v252
    %v254 = vrot.slane %v200, %v253
    %v255 = vlaneseq
    %v256 = vshrl.u32 %v255, 7
    %v257 = vsub.s32 5, %v256
    %v258 = vrot.slane %v200, %v257
    %v259 = vlaneseq
    %v260 = vshrl.u32 %v259, 7
    %v261 = vsub.s32 6, %v260
    %v262 = vrot.slane %v200, %v261
    %v263 = vlaneseq
    %v264 = vshrl.u32 %v263, 7
    %v265 = vsub.s32 7, %v264
    %v266 = vrot.slane %v200, %v265
    %v347 = vunpack.c.l.b16 %v135
    %v348 = vunpack.c.h.b16 %v135
    %v349 = vunpack.c.l.b16 %v136
    %v350 = vunpack.c.h.b16 %v136
    %v351 = vunpack.c.l.b16 %v137
    %v352 = vunpack.c.h.b16 %v137
    %v353 = vunpack.c.l.b16 %v138
    %v354 = vunpack.c.h.b16 %v138
    %v355 = vunpack.c.l.b16 %v139
    %v356 = vunpack.c.h.b16 %v139
    %v357 = vunpack.c.l.b16 %v140
    %v358 = vunpack.c.h.b16 %v140
    %v359 = vunpack.c.l.b16 %v141
    %v360 = vunpack.c.h.b16 %v141
    %v361 = vunpack.c.l.b16 %v142
    %v362 = vunpack.c.h.b16 %v142
    %v363 = vunpack.c.l.b16 %v143
    %v364 = vunpack.c.h.b16 %v143
    %v365 = vunpack.c.l.b16 %v144
    %v366 = vunpack.c.h.b16 %v144
    %v367 = vunpack.c.l.b16 %v145
    %v368 = vunpack.c.h.b16 %v145
    %v369 = vunpack.c.l.b16 %v146
    %v370 = vunpack.c.h.b16 %v146
    %v371 = vunpack.c.l.b16 %v147
    %v372 = vunpack.c.h.b16 %v147
    %v373 = vunpack.c.l.b16 %v148
    %v374 = vunpack.c.h.b16 %v148
    %v375 = vunpack.c.l.b16 %v149
    %v376 = vunpack.c.h.b16 %v149
    %v377 = vunpack.c.l.b16 %v150
    %v378 = vunpack.c.h.b16 %v150
    %v379 = vunpack.c.l.b16 %v151
    %v380 = vunpack.c.h.b16 %v151
    %v381 = vunpack.c.l.b16 %v152
    %v382 = vunpack.c.h.b16 %v152
    %v383 = vunpack.c.l.b16 %v153
    %v384 = vunpack.c.h.b16 %v153
    %v385 = vunpack.c.l.b16 %v154
    %v386 = vunpack.c.h.b16 %v154
    %v387 = vunpack.c.l.b16 %v155
    %v388 = vunpack.c.h.b16 %v155
    %v389 = vunpack.c.l.b16 %v156
    %v390 = vunpack.c.h.b16 %v156
    %v391 = vunpack.c.l.b16 %v157
    %v392 = vunpack.c.h.b16 %v157
    %v393 = vunpack.c.l.b16 %v158
    %v394 = vunpack.c.h.b16 %v158
    %v395 = vunpack.c.l.b16 %v159
    %v396 = vunpack.c.h.b16 %v159
    %v397 = vunpack.c.l.b16 %v160
    %v398 = vunpack.c.h.b16 %v160
    %v399 = vunpack.c.l.b16 %v161
    %v400 = vunpack.c.h.b16 %v161
    %v401 = vunpack.c.l.b16 %v162
    %v402 = vunpack.c.h.b16 %v162
    %v403 = vunpack.c.l.b16 %v163
    %v404 = vunpack.c.h.b16 %v163
    %v405 = vunpack.c.l.b16 %v164
    %v406 = vunpack.c.h.b16 %v164
    %v407 = vunpack.c.l.b16 %v165
    %v408 = vunpack.c.h.b16 %v165
    %v409 = vunpack.c.l.b16 %v166
    %v410 = vunpack.c.h.b16 %v166
    %v411 = vunpack.c.l.b16 %v167
    %v412 = vunpack.c.h.b16 %v167
    %v413 = vunpack.c.l.b16 %v168
    %v414 = vunpack.c.h.b16 %v168
    %v415 = vunpack.c.l.b16 %v169
    %v416 = vunpack.c.h.b16 %v169
    %v417 = vunpack.c.l.b16 %v170
    %v418 = vunpack.c.h.b16 %v170
    %v419 = vunpack.c.l.b16 %v171
    %v420 = vunpack.c.h.b16 %v171
    %v421 = vunpack.c.l.b16 %v172
    %v422 = vunpack.c.h.b16 %v172
    %v423 = vunpack.c.l.b16 %v173
    %v424 = vunpack.c.h.b16 %v173
    %v425 = vunpack.c.l.b16 %v174
    %v426 = vunpack.c.h.b16 %v174
    %v427 = vunpack.c.l.b16 %v175
    %v428 = vunpack.c.h.b16 %v175
    %v429 = vunpack.c.l.b16 %v176
    %v430 = vunpack.c.h.b16 %v176
    %v431 = vunpack.c.l.b16 %v177
    %v432 = vunpack.c.h.b16 %v177
    %v433 = vunpack.c.l.b16 %v178
    %v434 = vunpack.c.h.b16 %v178
    %v435 = vunpack.c.l.b16 %v179
    %v436 = vunpack.c.h.b16 %v179
    %v437 = vunpack.c.l.b16 %v180
    %v438 = vunpack.c.h.b16 %v180
    %v439 = vunpack.c.l.b16 %v181
    %v440 = vunpack.c.h.b16 %v181
    %v441 = vunpack.c.l.b16 %v182
    %v442 = vunpack.c.h.b16 %v182
    %v443 = vunpack.c.l.b16 %v183
    %v444 = vunpack.c.h.b16 %v183
    %v445 = vunpack.c.l.b16 %v184
    %v446 = vunpack.c.h.b16 %v184
    %v447 = vunpack.c.l.b16 %v185
    %v448 = vunpack.c.h.b16 %v185
    %v449 = vunpack.c.l.b16 %v186
    %v450 = vunpack.c.h.b16 %v186
    %v451 = vunpack.c.l.b16 %v187
    %v452 = vunpack.c.h.b16 %v187
    %v453 = vunpack.c.l.b16 %v188
    %v454 = vunpack.c.h.b16 %v188
    %v455 = vunpack.c.l.b16 %v189
    %v456 = vunpack.c.h.b16 %v189
    %v457 = vunpack.c.l.b16 %v190
    %v458 = vunpack.c.h.b16 %v190
    %v459 = vunpack.c.l.b16 %v191
    %v460 = vunpack.c.h.b16 %v191
    %v461 = vunpack.c.l.b16 %v192
    %v462 = vunpack.c.h.b16 %v192
    %v463 = vunpack.c.l.b16 %v193
    %v464 = vunpack.c.h.b16 %v193
    %v465 = vunpack.c.l.b16 %v194
    %v466 = vunpack.c.h.b16 %v194
    %v467 = vunpack.c.l.b16 %v195
    %v468 = vunpack.c.h.b16 %v195
    %v469 = vunpack.c.l.b16 %v196
    %v470 = vunpack.c.h.b16 %v196
    %v471 = vunpack.c.l.b16 %v197
    %v472 = vunpack.c.h.b16 %v197
    %v473 = vunpack.c.l.b16 %v198
    %v474 = vunpack.c.h.b16 %v198
    %v475 = vpack.c.b16 %v363, %v347
    %v476 = vpack.c.b16 %v364, %v348
    %v477 = vpack.c.b16 %v365, %v349
    %v478 = vpack.c.b16 %v366, %v350
    %v479 = vpack.c.b16 %v367, %v351
    %v480 = vpack.c.b16 %v368, %v352
    %v481 = vpack.c.b16 %v369, %v353
    %v482 = vpack.c.b16 %v370, %v354
    %v483 = vpack.c.b16 %v371, %v355
    %v484 = vpack.c.b16 %v372, %v356
    %v485 = vpack.c.b16 %v373, %v357
    %v486 = vpack.c.b16 %v374, %v358
    %v487 = vpack.c.b16 %v375, %v359
    %v488 = vpack.c.b16 %v376, %v360
    %v489 = vpack.c.b16 %v377, %v361
    %v490 = vpack.c.b16 %v378, %v362
    %v491 = vpack.c.b16 %v395, %v379
    %v492 = vpack.c.b16 %v396, %v380
    %v493 = vpack.c.b16 %v397, %v381
    %v494 = vpack.c.b16 %v398, %v382
    %v495 = vpack.c.b16 %v399, %v383
    %v496 = vpack.c.b16 %v400, %v384
    %v497 = vpack.c.b16 %v401, %v385
    %v498 = vpack.c.b16 %v402, %v386
    %v499 = vpack.c.b16 %v403, %v387
    %v500 = vpack.c.b16 %v404, %v388
    %v501 = vpack.c.b16 %v405, %v389
    %v502 = vpack.c.b16 %v406, %v390
    %v503 = vpack.c.b16 %v407, %v391
    %v504 = vpack.c.b16 %v408, %v392
    %v505 = vpack.c.b16 %v409, %v393
    %v506 = vpack.c.b16 %v410, %v394
    %v507 = vpack.c.b16 %v427, %v411
    %v508 = vpack.c.b16 %v428, %v412
    %v509 = vpack.c.b16 %v429, %v413
    %v510 = vpack.c.b16 %v430, %v414
    %v511 = vpack.c.b16 %v431, %v415
    %v512 = vpack.c.b16 %v432, %v416
    %v513 = vpack.c.b16 %v433, %v417
    %v514 = vpack.c.b16 %v434, %v418
    %v515 = vpack.c.b16 %v435, %v419
    %v516 = vpack.c.b16 %v436, %v420
    %v517 = vpack.c.b16 %v437, %v421
    %v518 = vpack.c.b16 %v438, %v422
    %v519 = vpack.c.b16 %v439, %v423
    %v520 = vpack.c.b16 %v440, %v424
    %v521 = vpack.c.b16 %v441, %v425
    %v522 = vpack.c.b16 %v442, %v426
    %v523 = vpack.c.b16 %v459, %v443
    %v524 = vpack.c.b16 %v460, %v444
    %v525 = vpack.c.b16 %v461, %v445
    %v526 = vpack.c.b16 %v462, %v446
    %v527 = vpack.c.b16 %v463, %v447
    %v528 = vpack.c.b16 %v464, %v448
    %v529 = vpack.c.b16 %v465, %v449
    %v530 = vpack.c.b16 %v466, %v450
    %v531 = vpack.c.b16 %v467, %v451
    %v532 = vpack.c.b16 %v468, %v452
    %v533 = vpack.c.b16 %v469, %v453
    %v534 = vpack.c.b16 %v470, %v454
    %v535 = vpack.c.b16 %v471, %v455
    %v536 = vpack.c.b16 %v472, %v456
    %v537 = vpack.c.b16 %v473, %v457
    %v538 = vpack.c.b16 %v474, %v458
    %vm603 = vcmask 523264
    %v605 = vsel %vm603, %v134, 0
    %607 = vmatprep.subr.bf16.mxu0 0
    %608 = vmatpush1.bf16.msra.mxu0 0
    %609 = vmatprep.subr.bf16.mxu0 0
    %610 = vmatpush1.bf16.msra.mxu0 0
    %611 = vmatprep.subr.bf16.mxu0 0
    %612 = vmatpush1.bf16.msra.mxu0 0
    %613 = vmatprep.subr.bf16.mxu0 0
    %614 = vmatpush1.bf16.msra.mxu0 0
    %615 = vmatprep.subr.bf16.mxu0 %v524
    %616 = vmatpush1.bf16.msra.mxu0 %v523
    %617 = vmatprep.subr.bf16.mxu0 %v508
    %618 = vmatpush1.bf16.msra.mxu0 %v507
    %619 = vmatprep.subr.bf16.mxu0 %v492
    %620 = vmatpush1.bf16.msra.mxu0 %v491
    %621 = vmatprep.subr.bf16.mxu0 %v476
    %622 = vmatpush1.bf16.msra.mxu0 %v475
    %623 = vmatprep.subr.bf16.mxu0 0
    %624 = vmatpush2.bf16.msra.mxu0 0
    %625 = vmatprep.subr.bf16.mxu0 0
    %626 = vmatpush2.bf16.msra.mxu0 0
    %627 = vmatprep.subr.bf16.mxu0 0
    %628 = vmatpush2.bf16.msra.mxu0 0
    %629 = vmatprep.subr.bf16.mxu0 0
    %630 = vmatpush2.bf16.msra.mxu0 0
    %631 = vmatprep.subr.bf16.mxu0 0
    %632 = vmatpush2.bf16.msra.mxu0 0
    %633 = vmatprep.subr.bf16.mxu0 0
    %634 = vmatpush2.bf16.msra.mxu0 0
    %635 = vmatprep.subr.bf16.mxu0 0
    %636 = vmatpush2.bf16.msra.mxu0 0
    %637 = vmatprep.subr.bf16.mxu0 0
    %638 = vmatpush2.bf16.msra.mxu0 0
    %639 = vmatprep.mubr.bf16.mxu0 0
    %640 = vmatmul.mubr.bf16.gmra.mxu0 %v605
    %v641 = vpop.f32.mrf.mxu0
    %v642 = vadd.f32 %v206, %v641
    %v643 = vpop.f32.mrf.mxu0
    %v644 = vadd.f32 %v210, %v643
    %v645 = vpop.f32.mrf.mxu0
    %v646 = vpop.f32.mrf.mxu0
    %647 = vdwg.mxu0
    %648 = vmatprep.subr.bf16.mxu0 0
    %649 = vmatpush1.bf16.msra.mxu0 0
    %650 = vmatprep.subr.bf16.mxu0 0
    %651 = vmatpush1.bf16.msra.mxu0 0
    %652 = vmatprep.subr.bf16.mxu0 0
    %653 = vmatpush1.bf16.msra.mxu0 0
    %654 = vmatprep.subr.bf16.mxu0 0
    %655 = vmatpush1.bf16.msra.mxu0 0
    %656 = vmatprep.subr.bf16.mxu0 %v526
    %657 = vmatpush1.bf16.msra.mxu0 %v525
    %658 = vmatprep.subr.bf16.mxu0 %v510
    %659 = vmatpush1.bf16.msra.mxu0 %v509
    %660 = vmatprep.subr.bf16.mxu0 %v494
    %661 = vmatpush1.bf16.msra.mxu0 %v493
    %662 = vmatprep.subr.bf16.mxu0 %v478
    %663 = vmatpush1.bf16.msra.mxu0 %v477
    %664 = vmatprep.subr.bf16.mxu0 0
    %665 = vmatpush2.bf16.msra.mxu0 0
    %666 = vmatprep.subr.bf16.mxu0 0
    %667 = vmatpush2.bf16.msra.mxu0 0
    %668 = vmatprep.subr.bf16.mxu0 0
    %669 = vmatpush2.bf16.msra.mxu0 0
    %670 = vmatprep.subr.bf16.mxu0 0
    %671 = vmatpush2.bf16.msra.mxu0 0
    %672 = vmatprep.subr.bf16.mxu0 0
    %673 = vmatpush2.bf16.msra.mxu0 0
    %674 = vmatprep.subr.bf16.mxu0 0
    %675 = vmatpush2.bf16.msra.mxu0 0
    %676 = vmatprep.subr.bf16.mxu0 0
    %677 = vmatpush2.bf16.msra.mxu0 0
    %678 = vmatprep.subr.bf16.mxu0 0
    %679 = vmatpush2.bf16.msra.mxu0 0
    %680 = vmatprep.mubr.bf16.mxu0 0
    %681 = vmatmul.mubr.bf16.gmra.mxu0 %v605
    %v682 = vpop.f32.mrf.mxu0
    %v683 = vadd.f32 %v214, %v682
    %v684 = vpop.f32.mrf.mxu0
    %v685 = vadd.f32 %v218, %v684
    %v686 = vpop.f32.mrf.mxu0
    %v687 = vpop.f32.mrf.mxu0
    %688 = vdwg.mxu0
    %689 = vmatprep.subr.bf16.mxu0 0
    %690 = vmatpush1.bf16.msra.mxu0 0
    %691 = vmatprep.subr.bf16.mxu0 0
    %692 = vmatpush1.bf16.msra.mxu0 0
    %693 = vmatprep.subr.bf16.mxu0 0
    %694 = vmatpush1.bf16.msra.mxu0 0
    %695 = vmatprep.subr.bf16.mxu0 0
    %696 = vmatpush1.bf16.msra.mxu0 0
    %697 = vmatprep.subr.bf16.mxu0 %v528
    %698 = vmatpush1.bf16.msra.mxu0 %v527
    %699 = vmatprep.subr.bf16.mxu0 %v512
    %700 = vmatpush1.bf16.msra.mxu0 %v511
    %701 = vmatprep.subr.bf16.mxu0 %v496
    %702 = vmatpush1.bf16.msra.mxu0 %v495
    %703 = vmatprep.subr.bf16.mxu0 %v480
    %704 = vmatpush1.bf16.msra.mxu0 %v479
    %705 = vmatprep.subr.bf16.mxu0 0
    %706 = vmatpush2.bf16.msra.mxu0 0
    %707 = vmatprep.subr.bf16.mxu0 0
    %708 = vmatpush2.bf16.msra.mxu0 0
    %709 = vmatprep.subr.bf16.mxu0 0
    %710 = vmatpush2.bf16.msra.mxu0 0
    %711 = vmatprep.subr.bf16.mxu0 0
    %712 = vmatpush2.bf16.msra.mxu0 0
    %713 = vmatprep.subr.bf16.mxu0 0
    %714 = vmatpush2.bf16.msra.mxu0 0
    %715 = vmatprep.subr.bf16.mxu0 0
    %716 = vmatpush2.bf16.msra.mxu0 0
    %717 = vmatprep.subr.bf16.mxu0 0
    %718 = vmatpush2.bf16.msra.mxu0 0
    %719 = vmatprep.subr.bf16.mxu0 0
    %720 = vmatpush2.bf16.msra.mxu0 0
    %721 = vmatprep.mubr.bf16.mxu0 0
    %722 = vmatmul.mubr.bf16.gmra.mxu0 %v605
    %v723 = vpop.f32.mrf.mxu0
    %v724 = vadd.f32 %v222, %v723
    %v725 = vpop.f32.mrf.mxu0
    %v726 = vadd.f32 %v226, %v725
    %v727 = vpop.f32.mrf.mxu0
    %v728 = vpop.f32.mrf.mxu0
    %729 = vdwg.mxu0
    %730 = vmatprep.subr.bf16.mxu0 0
    %731 = vmatpush1.bf16.msra.mxu0 0
    %732 = vmatprep.subr.bf16.mxu0 0
    %733 = vmatpush1.bf16.msra.mxu0 0
    %734 = vmatprep.subr.bf16.mxu0 0
    %735 = vmatpush1.bf16.msra.mxu0 0
    %736 = vmatprep.subr.bf16.mxu0 0
    %737 = vmatpush1.bf16.msra.mxu0 0
    %738 = vmatprep.subr.bf16.mxu0 %v530
    %739 = vmatpush1.bf16.msra.mxu0 %v529
    %740 = vmatprep.subr.bf16.mxu0 %v514
    %741 = vmatpush1.bf16.msra.mxu0 %v513
    %742 = vmatprep.subr.bf16.mxu0 %v498
    %743 = vmatpush1.bf16.msra.mxu0 %v497
    %744 = vmatprep.subr.bf16.mxu0 %v482
    %745 = vmatpush1.bf16.msra.mxu0 %v481
    %746 = vmatprep.subr.bf16.mxu0 0
    %747 = vmatpush2.bf16.msra.mxu0 0
    %748 = vmatprep.subr.bf16.mxu0 0
    %749 = vmatpush2.bf16.msra.mxu0 0
    %750 = vmatprep.subr.bf16.mxu0 0
    %751 = vmatpush2.bf16.msra.mxu0 0
    %752 = vmatprep.subr.bf16.mxu0 0
    %753 = vmatpush2.bf16.msra.mxu0 0
    %754 = vmatprep.subr.bf16.mxu0 0
    %755 = vmatpush2.bf16.msra.mxu0 0
    %756 = vmatprep.subr.bf16.mxu0 0
    %757 = vmatpush2.bf16.msra.mxu0 0
    %758 = vmatprep.subr.bf16.mxu0 0
    %759 = vmatpush2.bf16.msra.mxu0 0
    %760 = vmatprep.subr.bf16.mxu0 0
    %761 = vmatpush2.bf16.msra.mxu0 0
    %762 = vmatprep.mubr.bf16.mxu0 0
    %763 = vmatmul.mubr.bf16.gmra.mxu0 %v605
    %v764 = vpop.f32.mrf.mxu0
    %v765 = vadd.f32 %v230, %v764
    %v766 = vpop.f32.mrf.mxu0
    %v767 = vadd.f32 %v234, %v766
    %v768 = vpop.f32.mrf.mxu0
    %v769 = vpop.f32.mrf.mxu0
    %770 = vdwg.mxu0
    %771 = vmatprep.subr.bf16.mxu0 0
    %772 = vmatpush1.bf16.msra.mxu0 0
    %773 = vmatprep.subr.bf16.mxu0 0
    %774 = vmatpush1.bf16.msra.mxu0 0
    %775 = vmatprep.subr.bf16.mxu0 0
    %776 = vmatpush1.bf16.msra.mxu0 0
    %777 = vmatprep.subr.bf16.mxu0 0
    %778 = vmatpush1.bf16.msra.mxu0 0
    %779 = vmatprep.subr.bf16.mxu0 %v532
    %780 = vmatpush1.bf16.msra.mxu0 %v531
    %781 = vmatprep.subr.bf16.mxu0 %v516
    %782 = vmatpush1.bf16.msra.mxu0 %v515
    %783 = vmatprep.subr.bf16.mxu0 %v500
    %784 = vmatpush1.bf16.msra.mxu0 %v499
    %785 = vmatprep.subr.bf16.mxu0 %v484
    %786 = vmatpush1.bf16.msra.mxu0 %v483
    %787 = vmatprep.subr.bf16.mxu0 0
    %788 = vmatpush2.bf16.msra.mxu0 0
    %789 = vmatprep.subr.bf16.mxu0 0
    %790 = vmatpush2.bf16.msra.mxu0 0
    %791 = vmatprep.subr.bf16.mxu0 0
    %792 = vmatpush2.bf16.msra.mxu0 0
    %793 = vmatprep.subr.bf16.mxu0 0
    %794 = vmatpush2.bf16.msra.mxu0 0
    %795 = vmatprep.subr.bf16.mxu0 0
    %796 = vmatpush2.bf16.msra.mxu0 0
    %797 = vmatprep.subr.bf16.mxu0 0
    %798 = vmatpush2.bf16.msra.mxu0 0
    %799 = vmatprep.subr.bf16.mxu0 0
    %800 = vmatpush2.bf16.msra.mxu0 0
    %801 = vmatprep.subr.bf16.mxu0 0
    %802 = vmatpush2.bf16.msra.mxu0 0
    %803 = vmatprep.mubr.bf16.mxu0 0
    %804 = vmatmul.mubr.bf16.gmra.mxu0 %v605
    %v805 = vpop.f32.mrf.mxu0
    %v806 = vadd.f32 %v238, %v805
    %v807 = vpop.f32.mrf.mxu0
    %v808 = vadd.f32 %v242, %v807
    %v809 = vpop.f32.mrf.mxu0
    %v810 = vpop.f32.mrf.mxu0
    %811 = vdwg.mxu0
    %812 = vmatprep.subr.bf16.mxu0 0
    %813 = vmatpush1.bf16.msra.mxu0 0
    %814 = vmatprep.subr.bf16.mxu0 0
    %815 = vmatpush1.bf16.msra.mxu0 0
    %816 = vmatprep.subr.bf16.mxu0 0
    %817 = vmatpush1.bf16.msra.mxu0 0
    %818 = vmatprep.subr.bf16.mxu0 0
    %819 = vmatpush1.bf16.msra.mxu0 0
    %820 = vmatprep.subr.bf16.mxu0 %v534
    %821 = vmatpush1.bf16.msra.mxu0 %v533
    %822 = vmatprep.subr.bf16.mxu0 %v518
    %823 = vmatpush1.bf16.msra.mxu0 %v517
    %824 = vmatprep.subr.bf16.mxu0 %v502
    %825 = vmatpush1.bf16.msra.mxu0 %v501
    %826 = vmatprep.subr.bf16.mxu0 %v486
    %827 = vmatpush1.bf16.msra.mxu0 %v485
    %828 = vmatprep.subr.bf16.mxu0 0
    %829 = vmatpush2.bf16.msra.mxu0 0
    %830 = vmatprep.subr.bf16.mxu0 0
    %831 = vmatpush2.bf16.msra.mxu0 0
    %832 = vmatprep.subr.bf16.mxu0 0
    %833 = vmatpush2.bf16.msra.mxu0 0
    %834 = vmatprep.subr.bf16.mxu0 0
    %835 = vmatpush2.bf16.msra.mxu0 0
    %836 = vmatprep.subr.bf16.mxu0 0
    %837 = vmatpush2.bf16.msra.mxu0 0
    %838 = vmatprep.subr.bf16.mxu0 0
    %839 = vmatpush2.bf16.msra.mxu0 0
    %840 = vmatprep.subr.bf16.mxu0 0
    %841 = vmatpush2.bf16.msra.mxu0 0
    %842 = vmatprep.subr.bf16.mxu0 0
    %843 = vmatpush2.bf16.msra.mxu0 0
    %844 = vmatprep.mubr.bf16.mxu0 0
    %845 = vmatmul.mubr.bf16.gmra.mxu0 %v605
    %v846 = vpop.f32.mrf.mxu0
    %v847 = vadd.f32 %v246, %v846
    %v848 = vpop.f32.mrf.mxu0
    %v849 = vadd.f32 %v250, %v848
    %v850 = vpop.f32.mrf.mxu0
    %v851 = vpop.f32.mrf.mxu0
    %852 = vdwg.mxu0
    %853 = vmatprep.subr.bf16.mxu0 0
    %854 = vmatpush1.bf16.msra.mxu0 0
    %855 = vmatprep.subr.bf16.mxu0 0
    %856 = vmatpush1.bf16.msra.mxu0 0
    %857 = vmatprep.subr.bf16.mxu0 0
    %858 = vmatpush1.bf16.msra.mxu0 0
    %859 = vmatprep.subr.bf16.mxu0 0
    %860 = vmatpush1.bf16.msra.mxu0 0
    %861 = vmatprep.subr.bf16.mxu0 %v536
    %862 = vmatpush1.bf16.msra.mxu0 %v535
    %863 = vmatprep.subr.bf16.mxu0 %v520
    %864 = vmatpush1.bf16.msra.mxu0 %v519
    %865 = vmatprep.subr.bf16.mxu0 %v504
    %866 = vmatpush1.bf16.msra.mxu0 %v503
    %867 = vmatprep.subr.bf16.mxu0 %v488
    %868 = vmatpush1.bf16.msra.mxu0 %v487
    %869 = vmatprep.subr.bf16.mxu0 0
    %870 = vmatpush2.bf16.msra.mxu0 0
    %871 = vmatprep.subr.bf16.mxu0 0
    %872 = vmatpush2.bf16.msra.mxu0 0
    %873 = vmatprep.subr.bf16.mxu0 0
    %874 = vmatpush2.bf16.msra.mxu0 0
    %875 = vmatprep.subr.bf16.mxu0 0
    %876 = vmatpush2.bf16.msra.mxu0 0
    %877 = vmatprep.subr.bf16.mxu0 0
    %878 = vmatpush2.bf16.msra.mxu0 0
    %879 = vmatprep.subr.bf16.mxu0 0
    %880 = vmatpush2.bf16.msra.mxu0 0
    %881 = vmatprep.subr.bf16.mxu0 0
    %882 = vmatpush2.bf16.msra.mxu0 0
    %883 = vmatprep.subr.bf16.mxu0 0
    %884 = vmatpush2.bf16.msra.mxu0 0
    %885 = vmatprep.mubr.bf16.mxu0 0
    %886 = vmatmul.mubr.bf16.gmra.mxu0 %v605
    %v887 = vpop.f32.mrf.mxu0
    %v888 = vadd.f32 %v254, %v887
    %v889 = vpop.f32.mrf.mxu0
    %v890 = vadd.f32 %v258, %v889
    %v891 = vpop.f32.mrf.mxu0
    %v892 = vpop.f32.mrf.mxu0
    %893 = vdwg.mxu0
    %894 = vmatprep.subr.bf16.mxu0 0
    %895 = vmatpush1.bf16.msra.mxu0 0
    %896 = vmatprep.subr.bf16.mxu0 0
    %897 = vmatpush1.bf16.msra.mxu0 0
    %898 = vmatprep.subr.bf16.mxu0 0
    %899 = vmatpush1.bf16.msra.mxu0 0
    %900 = vmatprep.subr.bf16.mxu0 0
    %901 = vmatpush1.bf16.msra.mxu0 0
    %902 = vmatprep.subr.bf16.mxu0 %v538
    %903 = vmatpush1.bf16.msra.mxu0 %v537
    %904 = vmatprep.subr.bf16.mxu0 %v522
    %905 = vmatpush1.bf16.msra.mxu0 %v521
    %906 = vmatprep.subr.bf16.mxu0 %v506
    %907 = vmatpush1.bf16.msra.mxu0 %v505
    %908 = vmatprep.subr.bf16.mxu0 %v490
    %909 = vmatpush1.bf16.msra.mxu0 %v489
    %910 = vmatprep.subr.bf16.mxu0 0
    %911 = vmatpush2.bf16.msra.mxu0 0
    %912 = vmatprep.subr.bf16.mxu0 0
    %913 = vmatpush2.bf16.msra.mxu0 0
    %914 = vmatprep.subr.bf16.mxu0 0
    %915 = vmatpush2.bf16.msra.mxu0 0
    %916 = vmatprep.subr.bf16.mxu0 0
    %917 = vmatpush2.bf16.msra.mxu0 0
    %918 = vmatprep.subr.bf16.mxu0 0
    %919 = vmatpush2.bf16.msra.mxu0 0
    %920 = vmatprep.subr.bf16.mxu0 0
    %921 = vmatpush2.bf16.msra.mxu0 0
    %922 = vmatprep.subr.bf16.mxu0 0
    %923 = vmatpush2.bf16.msra.mxu0 0
    %924 = vmatprep.subr.bf16.mxu0 0
    %925 = vmatpush2.bf16.msra.mxu0 0
    %926 = vmatprep.mubr.bf16.mxu0 0
    %927 = vmatmul.mubr.bf16.gmra.mxu0 %v605
    %v928 = vpop.f32.mrf.mxu0
    %v929 = vadd.f32 %v262, %v928
    %v930 = vpop.f32.mrf.mxu0
    %v931 = vadd.f32 %v266, %v930
    %v932 = vpop.f32.mrf.mxu0
    %v933 = vpop.f32.mrf.mxu0
    %934 = vdwg.mxu0
    %v935 = vmax.f32 %v642, 0.0
    %v936 = vmax.f32 %v644, 0.0
    %v937 = vmax.f32 %v683, 0.0
    %v938 = vmax.f32 %v685, 0.0
    %v939 = vmax.f32 %v724, 0.0
    %v940 = vmax.f32 %v726, 0.0
    %v941 = vmax.f32 %v765, 0.0
    %v942 = vmax.f32 %v767, 0.0
    %v943 = vmax.f32 %v806, 0.0
    %v944 = vmax.f32 %v808, 0.0
    %v945 = vmax.f32 %v847, 0.0
    %v946 = vmax.f32 %v849, 0.0
    %v947 = vmax.f32 %v888, 0.0
    %v948 = vmax.f32 %v890, 0.0
    %v949 = vmax.f32 %v929, 0.0
    %v950 = vmax.f32 %v931, 0.0
    %v951 = vpack.c.bf16 %v935, %v935
    %v952 = vpack.c.bf16 %v936, %v936
    %v953 = vpack.c.bf16 %v937, %v937
    %v954 = vpack.c.bf16 %v938, %v938
    %v955 = vpack.c.bf16 %v939, %v939
    %v956 = vpack.c.bf16 %v940, %v940
    %v957 = vpack.c.bf16 %v941, %v941
    %v958 = vpack.c.bf16 %v942, %v942
    %v959 = vpack.c.bf16 %v943, %v943
    %v960 = vpack.c.bf16 %v944, %v944
    %v961 = vpack.c.bf16 %v945, %v945
    %v962 = vpack.c.bf16 %v946, %v946
    %v963 = vpack.c.bf16 %v947, %v947
    %v964 = vpack.c.bf16 %v948, %v948
    %v965 = vpack.c.bf16 %v949, %v949
    %v966 = vpack.c.bf16 %v950, %v950
    %v967 = vld [vmem:[#allocation8] sm:$0xff]
    %v968 = vld [vmem:[#allocation8 + $0x8] sm:$0xff]
    %v969 = vld [vmem:[#allocation8 + $0x10] sm:$0xff]
    %v970 = vld [vmem:[#allocation8 + $0x18] sm:$0xff]
    %v971 = vld [vmem:[#allocation8 + $0x20] sm:$0xff]
    %v972 = vld [vmem:[#allocation8 + $0x28] sm:$0xff]
    %v973 = vld [vmem:[#allocation8 + $0x30] sm:$0xff]
    %v974 = vld [vmem:[#allocation8 + $0x38] sm:$0xff]
    %v975 = vld [vmem:[#allocation8 + $0x40] sm:$0xff]
    %v976 = vld [vmem:[#allocation8 + $0x48] sm:$0xff]
    %v977 = vld [vmem:[#allocation8 + $0x50] sm:$0xff]
    %v978 = vld [vmem:[#allocation8 + $0x58] sm:$0xff]
    %v979 = vld [vmem:[#allocation8 + $0x60] sm:$0xff]
    %v980 = vld [vmem:[#allocation8 + $0x68] sm:$0xff]
    %v981 = vld [vmem:[#allocation8 + $0x70] sm:$0xff]
    %v982 = vld [vmem:[#allocation8 + $0x78] sm:$0xff]
    %v983 = vld [vmem:[#allocation8 + $0x80] sm:$0xff]
    %v984 = vld [vmem:[#allocation8 + $0x88] sm:$0xff]
    %v985 = vld [vmem:[#allocation8 + $0x90] sm:$0xff]
    %v986 = vld [vmem:[#allocation8 + $0x98] sm:$0xff]
    %v987 = vld [vmem:[#allocation8 + $0xa0] sm:$0xff]
    %v988 = vld [vmem:[#allocation8 + $0xa8] sm:$0xff]
    %v989 = vld [vmem:[#allocation8 + $0xb0] sm:$0xff]
    %v990 = vld [vmem:[#allocation8 + $0xb8] sm:$0xff]
    %v991 = vld [vmem:[#allocation8 + $0xc0] sm:$0xff]
    %v992 = vld [vmem:[#allocation8 + $0xc8] sm:$0xff]
    %v993 = vld [vmem:[#allocation8 + $0xd0] sm:$0xff]
    %v994 = vld [vmem:[#allocation8 + $0xd8] sm:$0xff]
    %v995 = vld [vmem:[#allocation8 + $0xe0] sm:$0xff]
    %v996 = vld [vmem:[#allocation8 + $0xe8] sm:$0xff]
    %v997 = vld [vmem:[#allocation8 + $0xf0] sm:$0xff]
    %v998 = vld [vmem:[#allocation8 + $0xf8] sm:$0xff]
    %v999 = vld [vmem:[#allocation8 + $0x100] sm:$0xff]
    %v1000 = vld [vmem:[#allocation8 + $0x108] sm:$0xff]
    %v1001 = vld [vmem:[#allocation8 + $0x110] sm:$0xff]
    %v1002 = vld [vmem:[#allocation8 + $0x118] sm:$0xff]
    %v1003 = vld [vmem:[#allocation8 + $0x120] sm:$0xff]
    %v1004 = vld [vmem:[#allocation8 + $0x128] sm:$0xff]
    %v1005 = vld [vmem:[#allocation8 + $0x130] sm:$0xff]
    %v1006 = vld [vmem:[#allocation8 + $0x138] sm:$0xff]
    %v1007 = vld [vmem:[#allocation8 + $0x140] sm:$0xff]
    %v1008 = vld [vmem:[#allocation8 + $0x148] sm:$0xff]
    %v1009 = vld [vmem:[#allocation8 + $0x150] sm:$0xff]
    %v1010 = vld [vmem:[#allocation8 + $0x158] sm:$0xff]
    %v1011 = vld [vmem:[#allocation8 + $0x160] sm:$0xff]
    %v1012 = vld [vmem:[#allocation8 + $0x168] sm:$0xff]
    %v1013 = vld [vmem:[#allocation8 + $0x170] sm:$0xff]
    %v1014 = vld [vmem:[#allocation8 + $0x178] sm:$0xff]
    %v1015 = vld [vmem:[#allocation8 + $0x180] sm:$0xff]
    %v1016 = vld [vmem:[#allocation8 + $0x188] sm:$0xff]
    %v1017 = vld [vmem:[#allocation8 + $0x190] sm:$0xff]
    %v1018 = vld [vmem:[#allocation8 + $0x198] sm:$0xff]
    %v1019 = vld [vmem:[#allocation8 + $0x1a0] sm:$0xff]
    %v1020 = vld [vmem:[#allocation8 + $0x1a8] sm:$0xff]
    %v1021 = vld [vmem:[#allocation8 + $0x1b0] sm:$0xff]
    %v1022 = vld [vmem:[#allocation8 + $0x1b8] sm:$0xff]
    %v1023 = vld [vmem:[#allocation8 + $0x1c0] sm:$0xff]
    %v1024 = vld [vmem:[#allocation8 + $0x1c8] sm:$0xff]
    %v1025 = vld [vmem:[#allocation8 + $0x1d0] sm:$0xff]
    %v1026 = vld [vmem:[#allocation8 + $0x1d8] sm:$0xff]
    %v1027 = vld [vmem:[#allocation8 + $0x1e0] sm:$0xff]
    %v1028 = vld [vmem:[#allocation8 + $0x1e8] sm:$0xff]
    %v1029 = vld [vmem:[#allocation8 + $0x1f0] sm:$0xff]
    %v1030 = vld [vmem:[#allocation8 + $0x1f8] sm:$0xff]
    %v1031 = vld [vmem:[#allocation8 + $0x200] sm:$0xff]
    %v1032 = vld [vmem:[#allocation8 + $0x208] sm:$0xff]
    %v1033 = vld [vmem:[#allocation8 + $0x210] sm:$0xff]
    %v1034 = vld [vmem:[#allocation8 + $0x218] sm:$0xff]
    %v1035 = vld [vmem:[#allocation8 + $0x220] sm:$0xff]
    %v1036 = vld [vmem:[#allocation8 + $0x228] sm:$0xff]
    %v1037 = vld [vmem:[#allocation8 + $0x230] sm:$0xff]
    %v1038 = vld [vmem:[#allocation8 + $0x238] sm:$0xff]
    %v1039 = vld [vmem:[#allocation8 + $0x240] sm:$0xff]
    %v1040 = vld [vmem:[#allocation8 + $0x248] sm:$0xff]
    %v1041 = vld [vmem:[#allocation8 + $0x250] sm:$0xff]
    %v1042 = vld [vmem:[#allocation8 + $0x258] sm:$0xff]
    %v1043 = vld [vmem:[#allocation8 + $0x260] sm:$0xff]
    %v1044 = vld [vmem:[#allocation8 + $0x268] sm:$0xff]
    %v1045 = vld [vmem:[#allocation8 + $0x270] sm:$0xff]
    %v1046 = vld [vmem:[#allocation8 + $0x278] sm:$0xff]
    %v1047 = vld [vmem:[#allocation8 + $0x280] sm:$0xff]
    %v1048 = vld [vmem:[#allocation8 + $0x288] sm:$0xff]
    %v1049 = vld [vmem:[#allocation8 + $0x290] sm:$0xff]
    %v1050 = vld [vmem:[#allocation8 + $0x298] sm:$0xff]
    %v1051 = vld [vmem:[#allocation8 + $0x2a0] sm:$0xff]
    %v1052 = vld [vmem:[#allocation8 + $0x2a8] sm:$0xff]
    %v1053 = vld [vmem:[#allocation8 + $0x2b0] sm:$0xff]
    %v1054 = vld [vmem:[#allocation8 + $0x2b8] sm:$0xff]
    %v1055 = vld [vmem:[#allocation8 + $0x2c0] sm:$0xff]
    %v1056 = vld [vmem:[#allocation8 + $0x2c8] sm:$0xff]
    %v1057 = vld [vmem:[#allocation8 + $0x2d0] sm:$0xff]
    %v1058 = vld [vmem:[#allocation8 + $0x2d8] sm:$0xff]
    %v1059 = vld [vmem:[#allocation8 + $0x2e0] sm:$0xff]
    %v1060 = vld [vmem:[#allocation8 + $0x2e8] sm:$0xff]
    %v1061 = vld [vmem:[#allocation8 + $0x2f0] sm:$0xff]
    %v1062 = vld [vmem:[#allocation8 + $0x2f8] sm:$0xff]
    %v1063 = vld [vmem:[#allocation8 + $0x300] sm:$0xff]
    %v1064 = vld [vmem:[#allocation8 + $0x308] sm:$0xff]
    %v1065 = vld [vmem:[#allocation8 + $0x310] sm:$0xff]
    %v1066 = vld [vmem:[#allocation8 + $0x318] sm:$0xff]
    %v1067 = vld [vmem:[#allocation8 + $0x320] sm:$0xff]
    %v1068 = vld [vmem:[#allocation8 + $0x328] sm:$0xff]
    %v1069 = vld [vmem:[#allocation8 + $0x330] sm:$0xff]
    %v1070 = vld [vmem:[#allocation8 + $0x338] sm:$0xff]
    %v1071 = vld [vmem:[#allocation8 + $0x340] sm:$0xff]
    %v1072 = vld [vmem:[#allocation8 + $0x348] sm:$0xff]
    %v1073 = vld [vmem:[#allocation8 + $0x350] sm:$0xff]
    %v1074 = vld [vmem:[#allocation8 + $0x358] sm:$0xff]
    %v1075 = vld [vmem:[#allocation8 + $0x360] sm:$0xff]
    %v1076 = vld [vmem:[#allocation8 + $0x368] sm:$0xff]
    %v1077 = vld [vmem:[#allocation8 + $0x370] sm:$0xff]
    %v1078 = vld [vmem:[#allocation8 + $0x378] sm:$0xff]
    %v1079 = vld [vmem:[#allocation8 + $0x380] sm:$0xff]
    %v1080 = vld [vmem:[#allocation8 + $0x388] sm:$0xff]
    %v1081 = vld [vmem:[#allocation8 + $0x390] sm:$0xff]
    %v1082 = vld [vmem:[#allocation8 + $0x398] sm:$0xff]
    %v1083 = vld [vmem:[#allocation8 + $0x3a0] sm:$0xff]
    %v1084 = vld [vmem:[#allocation8 + $0x3a8] sm:$0xff]
    %v1085 = vld [vmem:[#allocation8 + $0x3b0] sm:$0xff]
    %v1086 = vld [vmem:[#allocation8 + $0x3b8] sm:$0xff]
    %v1087 = vld [vmem:[#allocation8 + $0x3c0] sm:$0xff]
    %v1088 = vld [vmem:[#allocation8 + $0x3c8] sm:$0xff]
    %v1089 = vld [vmem:[#allocation8 + $0x3d0] sm:$0xff]
    %v1090 = vld [vmem:[#allocation8 + $0x3d8] sm:$0xff]
    %v1091 = vld [vmem:[#allocation8 + $0x3e0] sm:$0xff]
    %v1092 = vld [vmem:[#allocation8 + $0x3e8] sm:$0xff]
    %v1093 = vld [vmem:[#allocation8 + $0x3f0] sm:$0xff]
    %v1094 = vld [vmem:[#allocation8 + $0x3f8] sm:$0xff]
    %v1095 = vld [vmem:[#allocation8 + $0x400] sm:$0xff]
    %v1096 = vld [vmem:[#allocation8 + $0x408] sm:$0xff]
    %v1097 = vld [vmem:[#allocation8 + $0x410] sm:$0xff]
    %v1098 = vld [vmem:[#allocation8 + $0x418] sm:$0xff]
    %v1099 = vld [vmem:[#allocation8 + $0x420] sm:$0xff]
    %v1100 = vld [vmem:[#allocation8 + $0x428] sm:$0xff]
    %v1101 = vld [vmem:[#allocation8 + $0x430] sm:$0xff]
    %v1102 = vld [vmem:[#allocation8 + $0x438] sm:$0xff]
    %v1103 = vld [vmem:[#allocation8 + $0x440] sm:$0xff]
    %v1104 = vld [vmem:[#allocation8 + $0x448] sm:$0xff]
    %v1105 = vld [vmem:[#allocation8 + $0x450] sm:$0xff]
    %v1106 = vld [vmem:[#allocation8 + $0x458] sm:$0xff]
    %v1107 = vld [vmem:[#allocation8 + $0x460] sm:$0xff]
    %v1108 = vld [vmem:[#allocation8 + $0x468] sm:$0xff]
    %v1109 = vld [vmem:[#allocation8 + $0x470] sm:$0xff]
    %v1110 = vld [vmem:[#allocation8 + $0x478] sm:$0xff]
    %v1111 = vld [vmem:[#allocation8 + $0x480] sm:$0xff]
    %v1112 = vld [vmem:[#allocation8 + $0x488] sm:$0xff]
    %v1113 = vld [vmem:[#allocation8 + $0x490] sm:$0xff]
    %v1114 = vld [vmem:[#allocation8 + $0x498] sm:$0xff]
    %v1115 = vld [vmem:[#allocation8 + $0x4a0] sm:$0xff]
    %v1116 = vld [vmem:[#allocation8 + $0x4a8] sm:$0xff]
    %v1117 = vld [vmem:[#allocation8 + $0x4b0] sm:$0xff]
    %v1118 = vld [vmem:[#allocation8 + $0x4b8] sm:$0xff]
    %v1119 = vld [vmem:[#allocation8 + $0x4c0] sm:$0xff]
    %v1120 = vld [vmem:[#allocation8 + $0x4c8] sm:$0xff]
    %v1121 = vld [vmem:[#allocation8 + $0x4d0] sm:$0xff]
    %v1122 = vld [vmem:[#allocation8 + $0x4d8] sm:$0xff]
    %v1123 = vld [vmem:[#allocation8 + $0x4e0] sm:$0xff]
    %v1124 = vld [vmem:[#allocation8 + $0x4e8] sm:$0xff]
    %v1125 = vld [vmem:[#allocation8 + $0x4f0] sm:$0xff]
    %v1126 = vld [vmem:[#allocation8 + $0x4f8] sm:$0xff]
    %v1127 = vld [vmem:[#allocation8 + $0x500] sm:$0xff]
    %v1128 = vld [vmem:[#allocation8 + $0x508] sm:$0xff]
    %v1129 = vld [vmem:[#allocation8 + $0x510] sm:$0xff]
    %v1130 = vld [vmem:[#allocation8 + $0x518] sm:$0xff]
    %v1131 = vld [vmem:[#allocation8 + $0x520] sm:$0xff]
    %v1132 = vld [vmem:[#allocation8 + $0x528] sm:$0xff]
    %v1133 = vld [vmem:[#allocation8 + $0x530] sm:$0xff]
    %v1134 = vld [vmem:[#allocation8 + $0x538] sm:$0xff]
    %v1135 = vld [vmem:[#allocation8 + $0x540] sm:$0xff]
    %v1136 = vld [vmem:[#allocation8 + $0x548] sm:$0xff]
    %v1137 = vld [vmem:[#allocation8 + $0x550] sm:$0xff]
    %v1138 = vld [vmem:[#allocation8 + $0x558] sm:$0xff]
    %v1139 = vld [vmem:[#allocation8 + $0x560] sm:$0xff]
    %v1140 = vld [vmem:[#allocation8 + $0x568] sm:$0xff]
    %v1141 = vld [vmem:[#allocation8 + $0x570] sm:$0xff]
    %v1142 = vld [vmem:[#allocation8 + $0x578] sm:$0xff]
    %v1143 = vld [vmem:[#allocation8 + $0x580] sm:$0xff]
    %v1144 = vld [vmem:[#allocation8 + $0x588] sm:$0xff]
    %v1145 = vld [vmem:[#allocation8 + $0x590] sm:$0xff]
    %v1146 = vld [vmem:[#allocation8 + $0x598] sm:$0xff]
    %v1147 = vld [vmem:[#allocation8 + $0x5a0] sm:$0xff]
    %v1148 = vld [vmem:[#allocation8 + $0x5a8] sm:$0xff]
    %v1149 = vld [vmem:[#allocation8 + $0x5b0] sm:$0xff]
    %v1150 = vld [vmem:[#allocation8 + $0x5b8] sm:$0xff]
    %v1151 = vld [vmem:[#allocation8 + $0x5c0] sm:$0xff]
    %v1152 = vld [vmem:[#allocation8 + $0x5c8] sm:$0xff]
    %v1153 = vld [vmem:[#allocation8 + $0x5d0] sm:$0xff]
    %v1154 = vld [vmem:[#allocation8 + $0x5d8] sm:$0xff]
    %v1155 = vld [vmem:[#allocation8 + $0x5e0] sm:$0xff]
    %v1156 = vld [vmem:[#allocation8 + $0x5e8] sm:$0xff]
    %v1157 = vld [vmem:[#allocation8 + $0x5f0] sm:$0xff]
    %v1158 = vld [vmem:[#allocation8 + $0x5f8] sm:$0xff]
    %v1159 = vld [vmem:[#allocation8 + $0x600] sm:$0xff]
    %v1160 = vld [vmem:[#allocation8 + $0x608] sm:$0xff]
    %v1161 = vld [vmem:[#allocation8 + $0x610] sm:$0xff]
    %v1162 = vld [vmem:[#allocation8 + $0x618] sm:$0xff]
    %v1163 = vld [vmem:[#allocation8 + $0x620] sm:$0xff]
    %v1164 = vld [vmem:[#allocation8 + $0x628] sm:$0xff]
    %v1165 = vld [vmem:[#allocation8 + $0x630] sm:$0xff]
    %v1166 = vld [vmem:[#allocation8 + $0x638] sm:$0xff]
    %v1167 = vld [vmem:[#allocation8 + $0x640] sm:$0xff]
    %v1168 = vld [vmem:[#allocation8 + $0x648] sm:$0xff]
    %v1169 = vld [vmem:[#allocation8 + $0x650] sm:$0xff]
    %v1170 = vld [vmem:[#allocation8 + $0x658] sm:$0xff]
    %v1171 = vld [vmem:[#allocation8 + $0x660] sm:$0xff]
    %v1172 = vld [vmem:[#allocation8 + $0x668] sm:$0xff]
    %v1173 = vld [vmem:[#allocation8 + $0x670] sm:$0xff]
    %v1174 = vld [vmem:[#allocation8 + $0x678] sm:$0xff]
    %v1175 = vld [vmem:[#allocation8 + $0x680] sm:$0xff]
    %v1176 = vld [vmem:[#allocation8 + $0x688] sm:$0xff]
    %v1177 = vld [vmem:[#allocation8 + $0x690] sm:$0xff]
    %v1178 = vld [vmem:[#allocation8 + $0x698] sm:$0xff]
    %v1179 = vld [vmem:[#allocation8 + $0x6a0] sm:$0xff]
    %v1180 = vld [vmem:[#allocation8 + $0x6a8] sm:$0xff]
    %v1181 = vld [vmem:[#allocation8 + $0x6b0] sm:$0xff]
    %v1182 = vld [vmem:[#allocation8 + $0x6b8] sm:$0xff]
    %v1183 = vld [vmem:[#allocation8 + $0x6c0] sm:$0xff]
    %v1184 = vld [vmem:[#allocation8 + $0x6c8] sm:$0xff]
    %v1185 = vld [vmem:[#allocation8 + $0x6d0] sm:$0xff]
    %v1186 = vld [vmem:[#allocation8 + $0x6d8] sm:$0xff]
    %v1187 = vld [vmem:[#allocation8 + $0x6e0] sm:$0xff]
    %v1188 = vld [vmem:[#allocation8 + $0x6e8] sm:$0xff]
    %v1189 = vld [vmem:[#allocation8 + $0x6f0] sm:$0xff]
    %v1190 = vld [vmem:[#allocation8 + $0x6f8] sm:$0xff]
    %v1191 = vld [vmem:[#allocation8 + $0x700] sm:$0xff]
    %v1192 = vld [vmem:[#allocation8 + $0x708] sm:$0xff]
    %v1193 = vld [vmem:[#allocation8 + $0x710] sm:$0xff]
    %v1194 = vld [vmem:[#allocation8 + $0x718] sm:$0xff]
    %v1195 = vld [vmem:[#allocation8 + $0x720] sm:$0xff]
    %v1196 = vld [vmem:[#allocation8 + $0x728] sm:$0xff]
    %v1197 = vld [vmem:[#allocation8 + $0x730] sm:$0xff]
    %v1198 = vld [vmem:[#allocation8 + $0x738] sm:$0xff]
    %v1199 = vld [vmem:[#allocation8 + $0x740] sm:$0xff]
    %v1200 = vld [vmem:[#allocation8 + $0x748] sm:$0xff]
    %v1201 = vld [vmem:[#allocation8 + $0x750] sm:$0xff]
    %v1202 = vld [vmem:[#allocation8 + $0x758] sm:$0xff]
    %v1203 = vld [vmem:[#allocation8 + $0x760] sm:$0xff]
    %v1204 = vld [vmem:[#allocation8 + $0x768] sm:$0xff]
    %v1205 = vld [vmem:[#allocation8 + $0x770] sm:$0xff]
    %v1206 = vld [vmem:[#allocation8 + $0x778] sm:$0xff]
    %v1207 = vld [vmem:[#allocation8 + $0x780] sm:$0xff]
    %v1208 = vld [vmem:[#allocation8 + $0x788] sm:$0xff]
    %v1209 = vld [vmem:[#allocation8 + $0x790] sm:$0xff]
    %v1210 = vld [vmem:[#allocation8 + $0x798] sm:$0xff]
    %v1211 = vld [vmem:[#allocation8 + $0x7a0] sm:$0xff]
    %v1212 = vld [vmem:[#allocation8 + $0x7a8] sm:$0xff]
    %v1213 = vld [vmem:[#allocation8 + $0x7b0] sm:$0xff]
    %v1214 = vld [vmem:[#allocation8 + $0x7b8] sm:$0xff]
    %v1215 = vld [vmem:[#allocation8 + $0x7c0] sm:$0xff]
    %v1216 = vld [vmem:[#allocation8 + $0x7c8] sm:$0xff]
    %v1217 = vld [vmem:[#allocation8 + $0x7d0] sm:$0xff]
    %v1218 = vld [vmem:[#allocation8 + $0x7d8] sm:$0xff]
    %v1219 = vld [vmem:[#allocation8 + $0x7e0] sm:$0xff]
    %v1220 = vld [vmem:[#allocation8 + $0x7e8] sm:$0xff]
    %v1221 = vld [vmem:[#allocation8 + $0x7f0] sm:$0xff]
    %v1222 = vld [vmem:[#allocation8 + $0x7f8] sm:$0xff]
    %v1223 = vld [vmem:[#allocation8 + $0x800] sm:$0xff]
    %v1224 = vld [vmem:[#allocation8 + $0x808] sm:$0xff]
    %v1225 = vld [vmem:[#allocation8 + $0x810] sm:$0xff]
    %v1226 = vld [vmem:[#allocation8 + $0x818] sm:$0xff]
    %v1227 = vld [vmem:[#allocation8 + $0x820] sm:$0xff]
    %v1228 = vld [vmem:[#allocation8 + $0x828] sm:$0xff]
    %v1229 = vld [vmem:[#allocation8 + $0x830] sm:$0xff]
    %v1230 = vld [vmem:[#allocation8 + $0x838] sm:$0xff]
    %v1231 = vld [vmem:[#allocation8 + $0x840] sm:$0xff]
    %v1232 = vld [vmem:[#allocation8 + $0x848] sm:$0xff]
    %v1233 = vld [vmem:[#allocation8 + $0x850] sm:$0xff]
    %v1234 = vld [vmem:[#allocation8 + $0x858] sm:$0xff]
    %v1235 = vld [vmem:[#allocation8 + $0x860] sm:$0xff]
    %v1236 = vld [vmem:[#allocation8 + $0x868] sm:$0xff]
    %v1237 = vld [vmem:[#allocation8 + $0x870] sm:$0xff]
    %v1238 = vld [vmem:[#allocation8 + $0x878] sm:$0xff]
    %v1239 = vld [vmem:[#allocation8 + $0x880] sm:$0xff]
    %v1240 = vld [vmem:[#allocation8 + $0x888] sm:$0xff]
    %v1241 = vld [vmem:[#allocation8 + $0x890] sm:$0xff]
    %v1242 = vld [vmem:[#allocation8 + $0x898] sm:$0xff]
    %v1243 = vld [vmem:[#allocation8 + $0x8a0] sm:$0xff]
    %v1244 = vld [vmem:[#allocation8 + $0x8a8] sm:$0xff]
    %v1245 = vld [vmem:[#allocation8 + $0x8b0] sm:$0xff]
    %v1246 = vld [vmem:[#allocation8 + $0x8b8] sm:$0xff]
    %v1247 = vld [vmem:[#allocation8 + $0x8c0] sm:$0xff]
    %v1248 = vld [vmem:[#allocation8 + $0x8c8] sm:$0xff]
    %v1249 = vld [vmem:[#allocation8 + $0x8d0] sm:$0xff]
    %v1250 = vld [vmem:[#allocation8 + $0x8d8] sm:$0xff]
    %v1251 = vld [vmem:[#allocation8 + $0x8e0] sm:$0xff]
    %v1252 = vld [vmem:[#allocation8 + $0x8e8] sm:$0xff]
    %v1253 = vld [vmem:[#allocation8 + $0x8f0] sm:$0xff]
    %v1254 = vld [vmem:[#allocation8 + $0x8f8] sm:$0xff]
    %v1255 = vld [vmem:[#allocation8 + $0x900] sm:$0xff]
    %v1256 = vld [vmem:[#allocation8 + $0x908] sm:$0xff]
    %v1257 = vld [vmem:[#allocation8 + $0x910] sm:$0xff]
    %v1258 = vld [vmem:[#allocation8 + $0x918] sm:$0xff]
    %v1259 = vld [vmem:[#allocation8 + $0x920] sm:$0xff]
    %v1260 = vld [vmem:[#allocation8 + $0x928] sm:$0xff]
    %v1261 = vld [vmem:[#allocation8 + $0x930] sm:$0xff]
    %v1262 = vld [vmem:[#allocation8 + $0x938] sm:$0xff]
    %v1263 = vld [vmem:[#allocation8 + $0x940] sm:$0xff]
    %v1264 = vld [vmem:[#allocation8 + $0x948] sm:$0xff]
    %v1265 = vld [vmem:[#allocation8 + $0x950] sm:$0xff]
    %v1266 = vld [vmem:[#allocation8 + $0x958] sm:$0xff]
    %v1267 = vld [vmem:[#allocation8 + $0x960] sm:$0xff]
    %v1268 = vld [vmem:[#allocation8 + $0x968] sm:$0xff]
    %v1269 = vld [vmem:[#allocation8 + $0x970] sm:$0xff]
    %v1270 = vld [vmem:[#allocation8 + $0x978] sm:$0xff]
    %v1271 = vld [vmem:[#allocation8 + $0x980] sm:$0xff]
    %v1272 = vld [vmem:[#allocation8 + $0x988] sm:$0xff]
    %v1273 = vld [vmem:[#allocation8 + $0x990] sm:$0xff]
    %v1274 = vld [vmem:[#allocation8 + $0x998] sm:$0xff]
    %v1275 = vld [vmem:[#allocation8 + $0x9a0] sm:$0xff]
    %v1276 = vld [vmem:[#allocation8 + $0x9a8] sm:$0xff]
    %v1277 = vld [vmem:[#allocation8 + $0x9b0] sm:$0xff]
    %v1278 = vld [vmem:[#allocation8 + $0x9b8] sm:$0xff]
    %v1279 = vld [vmem:[#allocation8 + $0x9c0] sm:$0xff]
    %v1280 = vld [vmem:[#allocation8 + $0x9c8] sm:$0xff]
    %v1281 = vld [vmem:[#allocation8 + $0x9d0] sm:$0xff]
    %v1282 = vld [vmem:[#allocation8 + $0x9d8] sm:$0xff]
    %v1283 = vld [vmem:[#allocation8 + $0x9e0] sm:$0xff]
    %v1284 = vld [vmem:[#allocation8 + $0x9e8] sm:$0xff]
    %v1285 = vld [vmem:[#allocation8 + $0x9f0] sm:$0xff]
    %v1286 = vld [vmem:[#allocation8 + $0x9f8] sm:$0xff]
    %v1287 = vld [vmem:[#allocation8 + $0xa00] sm:$0xff]
    %v1288 = vld [vmem:[#allocation8 + $0xa08] sm:$0xff]
    %v1289 = vld [vmem:[#allocation8 + $0xa10] sm:$0xff]
    %v1290 = vld [vmem:[#allocation8 + $0xa18] sm:$0xff]
    %v1291 = vld [vmem:[#allocation8 + $0xa20] sm:$0xff]
    %v1292 = vld [vmem:[#allocation8 + $0xa28] sm:$0xff]
    %v1293 = vld [vmem:[#allocation8 + $0xa30] sm:$0xff]
    %v1294 = vld [vmem:[#allocation8 + $0xa38] sm:$0xff]
    %v1295 = vld [vmem:[#allocation8 + $0xa40] sm:$0xff]
    %v1296 = vld [vmem:[#allocation8 + $0xa48] sm:$0xff]
    %v1297 = vld [vmem:[#allocation8 + $0xa50] sm:$0xff]
    %v1298 = vld [vmem:[#allocation8 + $0xa58] sm:$0xff]
    %v1299 = vld [vmem:[#allocation8 + $0xa60] sm:$0xff]
    %v1300 = vld [vmem:[#allocation8 + $0xa68] sm:$0xff]
    %v1301 = vld [vmem:[#allocation8 + $0xa70] sm:$0xff]
    %v1302 = vld [vmem:[#allocation8 + $0xa78] sm:$0xff]
    %v1303 = vld [vmem:[#allocation8 + $0xa80] sm:$0xff]
    %v1304 = vld [vmem:[#allocation8 + $0xa88] sm:$0xff]
    %v1305 = vld [vmem:[#allocation8 + $0xa90] sm:$0xff]
    %v1306 = vld [vmem:[#allocation8 + $0xa98] sm:$0xff]
    %v1307 = vld [vmem:[#allocation8 + $0xaa0] sm:$0xff]
    %v1308 = vld [vmem:[#allocation8 + $0xaa8] sm:$0xff]
    %v1309 = vld [vmem:[#allocation8 + $0xab0] sm:$0xff]
    %v1310 = vld [vmem:[#allocation8 + $0xab8] sm:$0xff]
    %v1311 = vld [vmem:[#allocation8 + $0xac0] sm:$0xff]
    %v1312 = vld [vmem:[#allocation8 + $0xac8] sm:$0xff]
    %v1313 = vld [vmem:[#allocation8 + $0xad0] sm:$0xff]
    %v1314 = vld [vmem:[#allocation8 + $0xad8] sm:$0xff]
    %v1315 = vld [vmem:[#allocation8 + $0xae0] sm:$0xff]
    %v1316 = vld [vmem:[#allocation8 + $0xae8] sm:$0xff]
    %v1317 = vld [vmem:[#allocation8 + $0xaf0] sm:$0xff]
    %v1318 = vld [vmem:[#allocation8 + $0xaf8] sm:$0xff]
    %v1319 = vld [vmem:[#allocation8 + $0xb00] sm:$0xff]
    %v1320 = vld [vmem:[#allocation8 + $0xb08] sm:$0xff]
    %v1321 = vld [vmem:[#allocation8 + $0xb10] sm:$0xff]
    %v1322 = vld [vmem:[#allocation8 + $0xb18] sm:$0xff]
    %v1323 = vld [vmem:[#allocation8 + $0xb20] sm:$0xff]
    %v1324 = vld [vmem:[#allocation8 + $0xb28] sm:$0xff]
    %v1325 = vld [vmem:[#allocation8 + $0xb30] sm:$0xff]
    %v1326 = vld [vmem:[#allocation8 + $0xb38] sm:$0xff]
    %v1327 = vld [vmem:[#allocation8 + $0xb40] sm:$0xff]
    %v1328 = vld [vmem:[#allocation8 + $0xb48] sm:$0xff]
    %v1329 = vld [vmem:[#allocation8 + $0xb50] sm:$0xff]
    %v1330 = vld [vmem:[#allocation8 + $0xb58] sm:$0xff]
    %v1331 = vld [vmem:[#allocation8 + $0xb60] sm:$0xff]
    %v1332 = vld [vmem:[#allocation8 + $0xb68] sm:$0xff]
    %v1333 = vld [vmem:[#allocation8 + $0xb70] sm:$0xff]
    %v1334 = vld [vmem:[#allocation8 + $0xb78] sm:$0xff]
    %v1335 = vld [vmem:[#allocation8 + $0xb80] sm:$0xff]
    %v1336 = vld [vmem:[#allocation8 + $0xb88] sm:$0xff]
    %v1337 = vld [vmem:[#allocation8 + $0xb90] sm:$0xff]
    %v1338 = vld [vmem:[#allocation8 + $0xb98] sm:$0xff]
    %v1339 = vld [vmem:[#allocation8 + $0xba0] sm:$0xff]
    %v1340 = vld [vmem:[#allocation8 + $0xba8] sm:$0xff]
    %v1341 = vld [vmem:[#allocation8 + $0xbb0] sm:$0xff]
    %v1342 = vld [vmem:[#allocation8 + $0xbb8] sm:$0xff]
    %v1343 = vld [vmem:[#allocation8 + $0xbc0] sm:$0xff]
    %v1344 = vld [vmem:[#allocation8 + $0xbc8] sm:$0xff]
    %v1345 = vld [vmem:[#allocation8 + $0xbd0] sm:$0xff]
    %v1346 = vld [vmem:[#allocation8 + $0xbd8] sm:$0xff]
    %v1347 = vld [vmem:[#allocation8 + $0xbe0] sm:$0xff]
    %v1348 = vld [vmem:[#allocation8 + $0xbe8] sm:$0xff]
    %v1349 = vld [vmem:[#allocation8 + $0xbf0] sm:$0xff]
    %v1350 = vld [vmem:[#allocation8 + $0xbf8] sm:$0xff]
    %v1351 = vld [vmem:[#allocation8 + $0xc00] sm:$0xff]
    %v1352 = vld [vmem:[#allocation8 + $0xc08] sm:$0xff]
    %v1353 = vld [vmem:[#allocation8 + $0xc10] sm:$0xff]
    %v1354 = vld [vmem:[#allocation8 + $0xc18] sm:$0xff]
    %v1355 = vld [vmem:[#allocation8 + $0xc20] sm:$0xff]
    %v1356 = vld [vmem:[#allocation8 + $0xc28] sm:$0xff]
    %v1357 = vld [vmem:[#allocation8 + $0xc30] sm:$0xff]
    %v1358 = vld [vmem:[#allocation8 + $0xc38] sm:$0xff]
    %v1359 = vld [vmem:[#allocation8 + $0xc40] sm:$0xff]
    %v1360 = vld [vmem:[#allocation8 + $0xc48] sm:$0xff]
    %v1361 = vld [vmem:[#allocation8 + $0xc50] sm:$0xff]
    %v1362 = vld [vmem:[#allocation8 + $0xc58] sm:$0xff]
    %v1363 = vld [vmem:[#allocation8 + $0xc60] sm:$0xff]
    %v1364 = vld [vmem:[#allocation8 + $0xc68] sm:$0xff]
    %v1365 = vld [vmem:[#allocation8 + $0xc70] sm:$0xff]
    %v1366 = vld [vmem:[#allocation8 + $0xc78] sm:$0xff]
    %v1367 = vld [vmem:[#allocation8 + $0xc80] sm:$0xff]
    %v1368 = vld [vmem:[#allocation8 + $0xc88] sm:$0xff]
    %v1369 = vld [vmem:[#allocation8 + $0xc90] sm:$0xff]
    %v1370 = vld [vmem:[#allocation8 + $0xc98] sm:$0xff]
    %v1371 = vld [vmem:[#allocation8 + $0xca0] sm:$0xff]
    %v1372 = vld [vmem:[#allocation8 + $0xca8] sm:$0xff]
    %v1373 = vld [vmem:[#allocation8 + $0xcb0] sm:$0xff]
    %v1374 = vld [vmem:[#allocation8 + $0xcb8] sm:$0xff]
    %v1375 = vld [vmem:[#allocation8 + $0xcc0] sm:$0xff]
    %v1376 = vld [vmem:[#allocation8 + $0xcc8] sm:$0xff]
    %v1377 = vld [vmem:[#allocation8 + $0xcd0] sm:$0xff]
    %v1378 = vld [vmem:[#allocation8 + $0xcd8] sm:$0xff]
    %v1379 = vld [vmem:[#allocation8 + $0xce0] sm:$0xff]
    %v1380 = vld [vmem:[#allocation8 + $0xce8] sm:$0xff]
    %v1381 = vld [vmem:[#allocation8 + $0xcf0] sm:$0xff]
    %v1382 = vld [vmem:[#allocation8 + $0xcf8] sm:$0xff]
    %v1383 = vld [vmem:[#allocation8 + $0xd00] sm:$0xff]
    %v1384 = vld [vmem:[#allocation8 + $0xd08] sm:$0xff]
    %v1385 = vld [vmem:[#allocation8 + $0xd10] sm:$0xff]
    %v1386 = vld [vmem:[#allocation8 + $0xd18] sm:$0xff]
    %v1387 = vld [vmem:[#allocation8 + $0xd20] sm:$0xff]
    %v1388 = vld [vmem:[#allocation8 + $0xd28] sm:$0xff]
    %v1389 = vld [vmem:[#allocation8 + $0xd30] sm:$0xff]
    %v1390 = vld [vmem:[#allocation8 + $0xd38] sm:$0xff]
    %v1391 = vld [vmem:[#allocation8 + $0xd40] sm:$0xff]
    %v1392 = vld [vmem:[#allocation8 + $0xd48] sm:$0xff]
    %v1393 = vld [vmem:[#allocation8 + $0xd50] sm:$0xff]
    %v1394 = vld [vmem:[#allocation8 + $0xd58] sm:$0xff]
    %v1395 = vld [vmem:[#allocation8 + $0xd60] sm:$0xff]
    %v1396 = vld [vmem:[#allocation8 + $0xd68] sm:$0xff]
    %v1397 = vld [vmem:[#allocation8 + $0xd70] sm:$0xff]
    %v1398 = vld [vmem:[#allocation8 + $0xd78] sm:$0xff]
    %v1399 = vld [vmem:[#allocation8 + $0xd80] sm:$0xff]
    %v1400 = vld [vmem:[#allocation8 + $0xd88] sm:$0xff]
    %v1401 = vld [vmem:[#allocation8 + $0xd90] sm:$0xff]
    %v1402 = vld [vmem:[#allocation8 + $0xd98] sm:$0xff]
    %v1403 = vld [vmem:[#allocation8 + $0xda0] sm:$0xff]
    %v1404 = vld [vmem:[#allocation8 + $0xda8] sm:$0xff]
    %v1405 = vld [vmem:[#allocation8 + $0xdb0] sm:$0xff]
    %v1406 = vld [vmem:[#allocation8 + $0xdb8] sm:$0xff]
    %v1407 = vld [vmem:[#allocation8 + $0xdc0] sm:$0xff]
    %v1408 = vld [vmem:[#allocation8 + $0xdc8] sm:$0xff]
    %v1409 = vld [vmem:[#allocation8 + $0xdd0] sm:$0xff]
    %v1410 = vld [vmem:[#allocation8 + $0xdd8] sm:$0xff]
    %v1411 = vld [vmem:[#allocation8 + $0xde0] sm:$0xff]
    %v1412 = vld [vmem:[#allocation8 + $0xde8] sm:$0xff]
    %v1413 = vld [vmem:[#allocation8 + $0xdf0] sm:$0xff]
    %v1414 = vld [vmem:[#allocation8 + $0xdf8] sm:$0xff]
    %v1415 = vld [vmem:[#allocation8 + $0xe00] sm:$0xff]
    %v1416 = vld [vmem:[#allocation8 + $0xe08] sm:$0xff]
    %v1417 = vld [vmem:[#allocation8 + $0xe10] sm:$0xff]
    %v1418 = vld [vmem:[#allocation8 + $0xe18] sm:$0xff]
    %v1419 = vld [vmem:[#allocation8 + $0xe20] sm:$0xff]
    %v1420 = vld [vmem:[#allocation8 + $0xe28] sm:$0xff]
    %v1421 = vld [vmem:[#allocation8 + $0xe30] sm:$0xff]
    %v1422 = vld [vmem:[#allocation8 + $0xe38] sm:$0xff]
    %v1423 = vld [vmem:[#allocation8 + $0xe40] sm:$0xff]
    %v1424 = vld [vmem:[#allocation8 + $0xe48] sm:$0xff]
    %v1425 = vld [vmem:[#allocation8 + $0xe50] sm:$0xff]
    %v1426 = vld [vmem:[#allocation8 + $0xe58] sm:$0xff]
    %v1427 = vld [vmem:[#allocation8 + $0xe60] sm:$0xff]
    %v1428 = vld [vmem:[#allocation8 + $0xe68] sm:$0xff]
    %v1429 = vld [vmem:[#allocation8 + $0xe70] sm:$0xff]
    %v1430 = vld [vmem:[#allocation8 + $0xe78] sm:$0xff]
    %v1431 = vld [vmem:[#allocation8 + $0xe80] sm:$0xff]
    %v1432 = vld [vmem:[#allocation8 + $0xe88] sm:$0xff]
    %v1433 = vld [vmem:[#allocation8 + $0xe90] sm:$0xff]
    %v1434 = vld [vmem:[#allocation8 + $0xe98] sm:$0xff]
    %v1435 = vld [vmem:[#allocation8 + $0xea0] sm:$0xff]
    %v1436 = vld [vmem:[#allocation8 + $0xea8] sm:$0xff]
    %v1437 = vld [vmem:[#allocation8 + $0xeb0] sm:$0xff]
    %v1438 = vld [vmem:[#allocation8 + $0xeb8] sm:$0xff]
    %v1439 = vld [vmem:[#allocation8 + $0xec0] sm:$0xff]
    %v1440 = vld [vmem:[#allocation8 + $0xec8] sm:$0xff]
    %v1441 = vld [vmem:[#allocation8 + $0xed0] sm:$0xff]
    %v1442 = vld [vmem:[#allocation8 + $0xed8] sm:$0xff]
    %v1443 = vld [vmem:[#allocation8 + $0xee0] sm:$0xff]
    %v1444 = vld [vmem:[#allocation8 + $0xee8] sm:$0xff]
    %v1445 = vld [vmem:[#allocation8 + $0xef0] sm:$0xff]
    %v1446 = vld [vmem:[#allocation8 + $0xef8] sm:$0xff]
    %v1447 = vld [vmem:[#allocation8 + $0xf00] sm:$0xff]
    %v1448 = vld [vmem:[#allocation8 + $0xf08] sm:$0xff]
    %v1449 = vld [vmem:[#allocation8 + $0xf10] sm:$0xff]
    %v1450 = vld [vmem:[#allocation8 + $0xf18] sm:$0xff]
    %v1451 = vld [vmem:[#allocation8 + $0xf20] sm:$0xff]
    %v1452 = vld [vmem:[#allocation8 + $0xf28] sm:$0xff]
    %v1453 = vld [vmem:[#allocation8 + $0xf30] sm:$0xff]
    %v1454 = vld [vmem:[#allocation8 + $0xf38] sm:$0xff]
    %v1455 = vld [vmem:[#allocation8 + $0xf40] sm:$0xff]
    %v1456 = vld [vmem:[#allocation8 + $0xf48] sm:$0xff]
    %v1457 = vld [vmem:[#allocation8 + $0xf50] sm:$0xff]
    %v1458 = vld [vmem:[#allocation8 + $0xf58] sm:$0xff]
    %v1459 = vld [vmem:[#allocation8 + $0xf60] sm:$0xff]
    %v1460 = vld [vmem:[#allocation8 + $0xf68] sm:$0xff]
    %v1461 = vld [vmem:[#allocation8 + $0xf70] sm:$0xff]
    %v1462 = vld [vmem:[#allocation8 + $0xf78] sm:$0xff]
    %v1463 = vld [vmem:[#allocation8 + $0xf80] sm:$0xff]
    %v1464 = vld [vmem:[#allocation8 + $0xf88] sm:$0xff]
    %v1465 = vld [vmem:[#allocation8 + $0xf90] sm:$0xff]
    %v1466 = vld [vmem:[#allocation8 + $0xf98] sm:$0xff]
    %v1467 = vld [vmem:[#allocation8 + $0xfa0] sm:$0xff]
    %v1468 = vld [vmem:[#allocation8 + $0xfa8] sm:$0xff]
    %v1469 = vld [vmem:[#allocation8 + $0xfb0] sm:$0xff]
    %v1470 = vld [vmem:[#allocation8 + $0xfb8] sm:$0xff]
    %v1471 = vld [vmem:[#allocation8 + $0xfc0] sm:$0xff]
    %v1472 = vld [vmem:[#allocation8 + $0xfc8] sm:$0xff]
    %v1473 = vld [vmem:[#allocation8 + $0xfd0] sm:$0xff]
    %v1474 = vld [vmem:[#allocation8 + $0xfd8] sm:$0xff]
    %v1475 = vld [vmem:[#allocation8 + $0xfe0] sm:$0xff]
    %v1476 = vld [vmem:[#allocation8 + $0xfe8] sm:$0xff]
    %v1477 = vld [vmem:[#allocation8 + $0xff0] sm:$0xff]
    %v1478 = vld [vmem:[#allocation8 + $0xff8] sm:$0xff]
    %v1479 = vld [vmem:[#allocation8 + $0x1000] sm:$0xff]
    %v1480 = vld [vmem:[#allocation8 + $0x1008] sm:$0xff]
    %v1481 = vld [vmem:[#allocation8 + $0x1010] sm:$0xff]
    %v1482 = vld [vmem:[#allocation8 + $0x1018] sm:$0xff]
    %v1483 = vld [vmem:[#allocation8 + $0x1020] sm:$0xff]
    %v1484 = vld [vmem:[#allocation8 + $0x1028] sm:$0xff]
    %v1485 = vld [vmem:[#allocation8 + $0x1030] sm:$0xff]
    %v1486 = vld [vmem:[#allocation8 + $0x1038] sm:$0xff]
    %v1487 = vld [vmem:[#allocation8 + $0x1040] sm:$0xff]
    %v1488 = vld [vmem:[#allocation8 + $0x1048] sm:$0xff]
    %v1489 = vld [vmem:[#allocation8 + $0x1050] sm:$0xff]
    %v1490 = vld [vmem:[#allocation8 + $0x1058] sm:$0xff]
    %v1491 = vld [vmem:[#allocation8 + $0x1060] sm:$0xff]
    %v1492 = vld [vmem:[#allocation8 + $0x1068] sm:$0xff]
    %v1493 = vld [vmem:[#allocation8 + $0x1070] sm:$0xff]
    %v1494 = vld [vmem:[#allocation8 + $0x1078] sm:$0xff]
    %v1495 = vld [vmem:[#allocation8 + $0x1080] sm:$0xff]
    %v1496 = vld [vmem:[#allocation8 + $0x1088] sm:$0xff]
    %v1497 = vld [vmem:[#allocation8 + $0x1090] sm:$0xff]
    %v1498 = vld [vmem:[#allocation8 + $0x1098] sm:$0xff]
    %v1499 = vld [vmem:[#allocation8 + $0x10a0] sm:$0xff]
    %v1500 = vld [vmem:[#allocation8 + $0x10a8] sm:$0xff]
    %v1501 = vld [vmem:[#allocation8 + $0x10b0] sm:$0xff]
    %v1502 = vld [vmem:[#allocation8 + $0x10b8] sm:$0xff]
    %v1503 = vld [vmem:[#allocation8 + $0x10c0] sm:$0xff]
    %v1504 = vld [vmem:[#allocation8 + $0x10c8] sm:$0xff]
    %v1505 = vld [vmem:[#allocation8 + $0x10d0] sm:$0xff]
    %v1506 = vld [vmem:[#allocation8 + $0x10d8] sm:$0xff]
    %v1507 = vld [vmem:[#allocation8 + $0x10e0] sm:$0xff]
    %v1508 = vld [vmem:[#allocation8 + $0x10e8] sm:$0xff]
    %v1509 = vld [vmem:[#allocation8 + $0x10f0] sm:$0xff]
    %v1510 = vld [vmem:[#allocation8 + $0x10f8] sm:$0xff]
    %v1511 = vld [vmem:[#allocation8 + $0x1100] sm:$0xff]
    %v1512 = vld [vmem:[#allocation8 + $0x1108] sm:$0xff]
    %v1513 = vld [vmem:[#allocation8 + $0x1110] sm:$0xff]
    %v1514 = vld [vmem:[#allocation8 + $0x1118] sm:$0xff]
    %v1515 = vld [vmem:[#allocation8 + $0x1120] sm:$0xff]
    %v1516 = vld [vmem:[#allocation8 + $0x1128] sm:$0xff]
    %v1517 = vld [vmem:[#allocation8 + $0x1130] sm:$0xff]
    %v1518 = vld [vmem:[#allocation8 + $0x1138] sm:$0xff]
    %v1519 = vld [vmem:[#allocation8 + $0x1140] sm:$0xff]
    %v1520 = vld [vmem:[#allocation8 + $0x1148] sm:$0xff]
    %v1521 = vld [vmem:[#allocation8 + $0x1150] sm:$0xff]
    %v1522 = vld [vmem:[#allocation8 + $0x1158] sm:$0xff]
    %v1523 = vld [vmem:[#allocation8 + $0x1160] sm:$0xff]
    %v1524 = vld [vmem:[#allocation8 + $0x1168] sm:$0xff]
    %v1525 = vld [vmem:[#allocation8 + $0x1170] sm:$0xff]
    %v1526 = vld [vmem:[#allocation8 + $0x1178] sm:$0xff]
    %v1527 = vld [vmem:[#allocation8 + $0x1180] sm:$0xff]
    %v1528 = vld [vmem:[#allocation8 + $0x1188] sm:$0xff]
    %v1529 = vld [vmem:[#allocation8 + $0x1190] sm:$0xff]
    %v1530 = vld [vmem:[#allocation8 + $0x1198] sm:$0xff]
    %v1531 = vld [vmem:[#allocation8 + $0x11a0] sm:$0xff]
    %v1532 = vld [vmem:[#allocation8 + $0x11a8] sm:$0xff]
    %v1533 = vld [vmem:[#allocation8 + $0x11b0] sm:$0xff]
    %v1534 = vld [vmem:[#allocation8 + $0x11b8] sm:$0xff]
    %v1535 = vld [vmem:[#allocation8 + $0x11c0] sm:$0xff]
    %v1536 = vld [vmem:[#allocation8 + $0x11c8] sm:$0xff]
    %v1537 = vld [vmem:[#allocation8 + $0x11d0] sm:$0xff]
    %v1538 = vld [vmem:[#allocation8 + $0x11d8] sm:$0xff]
    %v1539 = vld [vmem:[#allocation8 + $0x11e0] sm:$0xff]
    %v1540 = vld [vmem:[#allocation8 + $0x11e8] sm:$0xff]
    %v1541 = vld [vmem:[#allocation8 + $0x11f0] sm:$0xff]
    %v1542 = vld [vmem:[#allocation8 + $0x11f8] sm:$0xff]
    %v1543 = vld [vmem:[#allocation8 + $0x1200] sm:$0xff]
    %v1544 = vld [vmem:[#allocation8 + $0x1208] sm:$0xff]
    %v1545 = vld [vmem:[#allocation8 + $0x1210] sm:$0xff]
    %v1546 = vld [vmem:[#allocation8 + $0x1218] sm:$0xff]
    %v1547 = vld [vmem:[#allocation8 + $0x1220] sm:$0xff]
    %v1548 = vld [vmem:[#allocation8 + $0x1228] sm:$0xff]
    %v1549 = vld [vmem:[#allocation8 + $0x1230] sm:$0xff]
    %v1550 = vld [vmem:[#allocation8 + $0x1238] sm:$0xff]
    %v1551 = vld [vmem:[#allocation8 + $0x1240] sm:$0xff]
    %v1552 = vld [vmem:[#allocation8 + $0x1248] sm:$0xff]
    %v1553 = vld [vmem:[#allocation8 + $0x1250] sm:$0xff]
    %v1554 = vld [vmem:[#allocation8 + $0x1258] sm:$0xff]
    %v1555 = vld [vmem:[#allocation8 + $0x1260] sm:$0xff]
    %v1556 = vld [vmem:[#allocation8 + $0x1268] sm:$0xff]
    %v1557 = vld [vmem:[#allocation8 + $0x1270] sm:$0xff]
    %v1558 = vld [vmem:[#allocation8 + $0x1278] sm:$0xff]
    %v1559 = vld [vmem:[#allocation8 + $0x1280] sm:$0xff]
    %v1560 = vld [vmem:[#allocation8 + $0x1288] sm:$0xff]
    %v1561 = vld [vmem:[#allocation8 + $0x1290] sm:$0xff]
    %v1562 = vld [vmem:[#allocation8 + $0x1298] sm:$0xff]
    %v1563 = vld [vmem:[#allocation8 + $0x12a0] sm:$0xff]
    %v1564 = vld [vmem:[#allocation8 + $0x12a8] sm:$0xff]
    %v1565 = vld [vmem:[#allocation8 + $0x12b0] sm:$0xff]
    %v1566 = vld [vmem:[#allocation8 + $0x12b8] sm:$0xff]
    %v1567 = vld [vmem:[#allocation8 + $0x12c0] sm:$0xff]
    %v1568 = vld [vmem:[#allocation8 + $0x12c8] sm:$0xff]
    %v1569 = vld [vmem:[#allocation8 + $0x12d0] sm:$0xff]
    %v1570 = vld [vmem:[#allocation8 + $0x12d8] sm:$0xff]
    %v1571 = vld [vmem:[#allocation8 + $0x12e0] sm:$0xff]
    %v1572 = vld [vmem:[#allocation8 + $0x12e8] sm:$0xff]
    %v1573 = vld [vmem:[#allocation8 + $0x12f0] sm:$0xff]
    %v1574 = vld [vmem:[#allocation8 + $0x12f8] sm:$0xff]
    %v1575 = vld [vmem:[#allocation8 + $0x1300] sm:$0xff]
    %v1576 = vld [vmem:[#allocation8 + $0x1308] sm:$0xff]
    %v1577 = vld [vmem:[#allocation8 + $0x1310] sm:$0xff]
    %v1578 = vld [vmem:[#allocation8 + $0x1318] sm:$0xff]
    %v1579 = vld [vmem:[#allocation8 + $0x1320] sm:$0xff]
    %v1580 = vld [vmem:[#allocation8 + $0x1328] sm:$0xff]
    %v1581 = vld [vmem:[#allocation8 + $0x1330] sm:$0xff]
    %v1582 = vld [vmem:[#allocation8 + $0x1338] sm:$0xff]
    %v1583 = vld [vmem:[#allocation8 + $0x1340] sm:$0xff]
    %v1584 = vld [vmem:[#allocation8 + $0x1348] sm:$0xff]
    %v1585 = vld [vmem:[#allocation8 + $0x1350] sm:$0xff]
    %v1586 = vld [vmem:[#allocation8 + $0x1358] sm:$0xff]
    %v1587 = vld [vmem:[#allocation8 + $0x1360] sm:$0xff]
    %v1588 = vld [vmem:[#allocation8 + $0x1368] sm:$0xff]
    %v1589 = vld [vmem:[#allocation8 + $0x1370] sm:$0xff]
    %v1590 = vld [vmem:[#allocation8 + $0x1378] sm:$0xff]
    %v1591 = vld [vmem:[#allocation8 + $0x1380] sm:$0xff]
    %v1592 = vld [vmem:[#allocation8 + $0x1388] sm:$0xff]
    %v1593 = vld [vmem:[#allocation8 + $0x1390] sm:$0xff]
    %v1594 = vld [vmem:[#allocation8 + $0x1398] sm:$0xff]
    %v1595 = vld [vmem:[#allocation8 + $0x13a0] sm:$0xff]
    %v1596 = vld [vmem:[#allocation8 + $0x13a8] sm:$0xff]
    %v1597 = vld [vmem:[#allocation8 + $0x13b0] sm:$0xff]
    %v1598 = vld [vmem:[#allocation8 + $0x13b8] sm:$0xff]
    %v1599 = vld [vmem:[#allocation8 + $0x13c0] sm:$0xff]
    %v1600 = vld [vmem:[#allocation8 + $0x13c8] sm:$0xff]
    %v1601 = vld [vmem:[#allocation8 + $0x13d0] sm:$0xff]
    %v1602 = vld [vmem:[#allocation8 + $0x13d8] sm:$0xff]
    %v1603 = vld [vmem:[#allocation8 + $0x13e0] sm:$0xff]
    %v1604 = vld [vmem:[#allocation8 + $0x13e8] sm:$0xff]
    %v1605 = vld [vmem:[#allocation8 + $0x13f0] sm:$0xff]
    %v1606 = vld [vmem:[#allocation8 + $0x13f8] sm:$0xff]
    %v1607 = vld [vmem:[#allocation8 + $0x1400] sm:$0xff]
    %v1608 = vld [vmem:[#allocation8 + $0x1408] sm:$0xff]
    %v1609 = vld [vmem:[#allocation8 + $0x1410] sm:$0xff]
    %v1610 = vld [vmem:[#allocation8 + $0x1418] sm:$0xff]
    %v1611 = vld [vmem:[#allocation8 + $0x1420] sm:$0xff]
    %v1612 = vld [vmem:[#allocation8 + $0x1428] sm:$0xff]
    %v1613 = vld [vmem:[#allocation8 + $0x1430] sm:$0xff]
    %v1614 = vld [vmem:[#allocation8 + $0x1438] sm:$0xff]
    %v1615 = vld [vmem:[#allocation8 + $0x1440] sm:$0xff]
    %v1616 = vld [vmem:[#allocation8 + $0x1448] sm:$0xff]
    %v1617 = vld [vmem:[#allocation8 + $0x1450] sm:$0xff]
    %v1618 = vld [vmem:[#allocation8 + $0x1458] sm:$0xff]
    %v1619 = vld [vmem:[#allocation8 + $0x1460] sm:$0xff]
    %v1620 = vld [vmem:[#allocation8 + $0x1468] sm:$0xff]
    %v1621 = vld [vmem:[#allocation8 + $0x1470] sm:$0xff]
    %v1622 = vld [vmem:[#allocation8 + $0x1478] sm:$0xff]
    %v1623 = vld [vmem:[#allocation8 + $0x1480] sm:$0xff]
    %v1624 = vld [vmem:[#allocation8 + $0x1488] sm:$0xff]
    %v1625 = vld [vmem:[#allocation8 + $0x1490] sm:$0xff]
    %v1626 = vld [vmem:[#allocation8 + $0x1498] sm:$0xff]
    %v1627 = vld [vmem:[#allocation8 + $0x14a0] sm:$0xff]
    %v1628 = vld [vmem:[#allocation8 + $0x14a8] sm:$0xff]
    %v1629 = vld [vmem:[#allocation8 + $0x14b0] sm:$0xff]
    %v1630 = vld [vmem:[#allocation8 + $0x14b8] sm:$0xff]
    %v1631 = vld [vmem:[#allocation8 + $0x14c0] sm:$0xff]
    %v1632 = vld [vmem:[#allocation8 + $0x14c8] sm:$0xff]
    %v1633 = vld [vmem:[#allocation8 + $0x14d0] sm:$0xff]
    %v1634 = vld [vmem:[#allocation8 + $0x14d8] sm:$0xff]
    %v1635 = vld [vmem:[#allocation8 + $0x14e0] sm:$0xff]
    %v1636 = vld [vmem:[#allocation8 + $0x14e8] sm:$0xff]
    %v1637 = vld [vmem:[#allocation8 + $0x14f0] sm:$0xff]
    %v1638 = vld [vmem:[#allocation8 + $0x14f8] sm:$0xff]
    %v1639 = vld [vmem:[#allocation8 + $0x1500] sm:$0xff]
    %v1640 = vld [vmem:[#allocation8 + $0x1508] sm:$0xff]
    %v1641 = vld [vmem:[#allocation8 + $0x1510] sm:$0xff]
    %v1642 = vld [vmem:[#allocation8 + $0x1518] sm:$0xff]
    %v1643 = vld [vmem:[#allocation8 + $0x1520] sm:$0xff]
    %v1644 = vld [vmem:[#allocation8 + $0x1528] sm:$0xff]
    %v1645 = vld [vmem:[#allocation8 + $0x1530] sm:$0xff]
    %v1646 = vld [vmem:[#allocation8 + $0x1538] sm:$0xff]
    %v1647 = vld [vmem:[#allocation8 + $0x1540] sm:$0xff]
    %v1648 = vld [vmem:[#allocation8 + $0x1548] sm:$0xff]
    %v1649 = vld [vmem:[#allocation8 + $0x1550] sm:$0xff]
    %v1650 = vld [vmem:[#allocation8 + $0x1558] sm:$0xff]
    %v1651 = vld [vmem:[#allocation8 + $0x1560] sm:$0xff]
    %v1652 = vld [vmem:[#allocation8 + $0x1568] sm:$0xff]
    %v1653 = vld [vmem:[#allocation8 + $0x1570] sm:$0xff]
    %v1654 = vld [vmem:[#allocation8 + $0x1578] sm:$0xff]
    %v1655 = vld [vmem:[#allocation8 + $0x1580] sm:$0xff]
    %v1656 = vld [vmem:[#allocation8 + $0x1588] sm:$0xff]
    %v1657 = vld [vmem:[#allocation8 + $0x1590] sm:$0xff]
    %v1658 = vld [vmem:[#allocation8 + $0x1598] sm:$0xff]
    %v1659 = vld [vmem:[#allocation8 + $0x15a0] sm:$0xff]
    %v1660 = vld [vmem:[#allocation8 + $0x15a8] sm:$0xff]
    %v1661 = vld [vmem:[#allocation8 + $0x15b0] sm:$0xff]
    %v1662 = vld [vmem:[#allocation8 + $0x15b8] sm:$0xff]
    %v1663 = vld [vmem:[#allocation8 + $0x15c0] sm:$0xff]
    %v1664 = vld [vmem:[#allocation8 + $0x15c8] sm:$0xff]
    %v1665 = vld [vmem:[#allocation8 + $0x15d0] sm:$0xff]
    %v1666 = vld [vmem:[#allocation8 + $0x15d8] sm:$0xff]
    %v1667 = vld [vmem:[#allocation8 + $0x15e0] sm:$0xff]
    %v1668 = vld [vmem:[#allocation8 + $0x15e8] sm:$0xff]
    %v1669 = vld [vmem:[#allocation8 + $0x15f0] sm:$0xff]
    %v1670 = vld [vmem:[#allocation8 + $0x15f8] sm:$0xff]
    %v1671 = vld [vmem:[#allocation8 + $0x1600] sm:$0xff]
    %v1672 = vld [vmem:[#allocation8 + $0x1608] sm:$0xff]
    %v1673 = vld [vmem:[#allocation8 + $0x1610] sm:$0xff]
    %v1674 = vld [vmem:[#allocation8 + $0x1618] sm:$0xff]
    %v1675 = vld [vmem:[#allocation8 + $0x1620] sm:$0xff]
    %v1676 = vld [vmem:[#allocation8 + $0x1628] sm:$0xff]
    %v1677 = vld [vmem:[#allocation8 + $0x1630] sm:$0xff]
    %v1678 = vld [vmem:[#allocation8 + $0x1638] sm:$0xff]
    %v1679 = vld [vmem:[#allocation8 + $0x1640] sm:$0xff]
    %v1680 = vld [vmem:[#allocation8 + $0x1648] sm:$0xff]
    %v1681 = vld [vmem:[#allocation8 + $0x1650] sm:$0xff]
    %v1682 = vld [vmem:[#allocation8 + $0x1658] sm:$0xff]
    %v1683 = vld [vmem:[#allocation8 + $0x1660] sm:$0xff]
    %v1684 = vld [vmem:[#allocation8 + $0x1668] sm:$0xff]
    %v1685 = vld [vmem:[#allocation8 + $0x1670] sm:$0xff]
    %v1686 = vld [vmem:[#allocation8 + $0x1678] sm:$0xff]
    %v1687 = vld [vmem:[#allocation8 + $0x1680] sm:$0xff]
    %v1688 = vld [vmem:[#allocation8 + $0x1688] sm:$0xff]
    %v1689 = vld [vmem:[#allocation8 + $0x1690] sm:$0xff]
    %v1690 = vld [vmem:[#allocation8 + $0x1698] sm:$0xff]
    %v1691 = vld [vmem:[#allocation8 + $0x16a0] sm:$0xff]
    %v1692 = vld [vmem:[#allocation8 + $0x16a8] sm:$0xff]
    %v1693 = vld [vmem:[#allocation8 + $0x16b0] sm:$0xff]
    %v1694 = vld [vmem:[#allocation8 + $0x16b8] sm:$0xff]
    %v1695 = vld [vmem:[#allocation8 + $0x16c0] sm:$0xff]
    %v1696 = vld [vmem:[#allocation8 + $0x16c8] sm:$0xff]
    %v1697 = vld [vmem:[#allocation8 + $0x16d0] sm:$0xff]
    %v1698 = vld [vmem:[#allocation8 + $0x16d8] sm:$0xff]
    %v1699 = vld [vmem:[#allocation8 + $0x16e0] sm:$0xff]
    %v1700 = vld [vmem:[#allocation8 + $0x16e8] sm:$0xff]
    %v1701 = vld [vmem:[#allocation8 + $0x16f0] sm:$0xff]
    %v1702 = vld [vmem:[#allocation8 + $0x16f8] sm:$0xff]
    %v1703 = vld [vmem:[#allocation8 + $0x1700] sm:$0xff]
    %v1704 = vld [vmem:[#allocation8 + $0x1708] sm:$0xff]
    %v1705 = vld [vmem:[#allocation8 + $0x1710] sm:$0xff]
    %v1706 = vld [vmem:[#allocation8 + $0x1718] sm:$0xff]
    %v1707 = vld [vmem:[#allocation8 + $0x1720] sm:$0xff]
    %v1708 = vld [vmem:[#allocation8 + $0x1728] sm:$0xff]
    %v1709 = vld [vmem:[#allocation8 + $0x1730] sm:$0xff]
    %v1710 = vld [vmem:[#allocation8 + $0x1738] sm:$0xff]
    %v1711 = vld [vmem:[#allocation8 + $0x1740] sm:$0xff]
    %v1712 = vld [vmem:[#allocation8 + $0x1748] sm:$0xff]
    %v1713 = vld [vmem:[#allocation8 + $0x1750] sm:$0xff]
    %v1714 = vld [vmem:[#allocation8 + $0x1758] sm:$0xff]
    %v1715 = vld [vmem:[#allocation8 + $0x1760] sm:$0xff]
    %v1716 = vld [vmem:[#allocation8 + $0x1768] sm:$0xff]
    %v1717 = vld [vmem:[#allocation8 + $0x1770] sm:$0xff]
    %v1718 = vld [vmem:[#allocation8 + $0x1778] sm:$0xff]
    %v1719 = vld [vmem:[#allocation8 + $0x1780] sm:$0xff]
    %v1720 = vld [vmem:[#allocation8 + $0x1788] sm:$0xff]
    %v1721 = vld [vmem:[#allocation8 + $0x1790] sm:$0xff]
    %v1722 = vld [vmem:[#allocation8 + $0x1798] sm:$0xff]
    %v1723 = vld [vmem:[#allocation8 + $0x17a0] sm:$0xff]
    %v1724 = vld [vmem:[#allocation8 + $0x17a8] sm:$0xff]
    %v1725 = vld [vmem:[#allocation8 + $0x17b0] sm:$0xff]
    %v1726 = vld [vmem:[#allocation8 + $0x17b8] sm:$0xff]
    %v1727 = vld [vmem:[#allocation8 + $0x17c0] sm:$0xff]
    %v1728 = vld [vmem:[#allocation8 + $0x17c8] sm:$0xff]
    %v1729 = vld [vmem:[#allocation8 + $0x17d0] sm:$0xff]
    %v1730 = vld [vmem:[#allocation8 + $0x17d8] sm:$0xff]
    %v1731 = vld [vmem:[#allocation8 + $0x17e0] sm:$0xff]
    %v1732 = vld [vmem:[#allocation8 + $0x17e8] sm:$0xff]
    %v1733 = vld [vmem:[#allocation8 + $0x17f0] sm:$0xff]
    %v1734 = vld [vmem:[#allocation8 + $0x17f8] sm:$0xff]
    %v1735 = vld [vmem:[#allocation8 + $0x1800] sm:$0xff]
    %v1736 = vld [vmem:[#allocation8 + $0x1808] sm:$0xff]
    %v1737 = vld [vmem:[#allocation8 + $0x1810] sm:$0xff]
    %v1738 = vld [vmem:[#allocation8 + $0x1818] sm:$0xff]
    %v1739 = vld [vmem:[#allocation8 + $0x1820] sm:$0xff]
    %v1740 = vld [vmem:[#allocation8 + $0x1828] sm:$0xff]
    %v1741 = vld [vmem:[#allocation8 + $0x1830] sm:$0xff]
    %v1742 = vld [vmem:[#allocation8 + $0x1838] sm:$0xff]
    %v1743 = vld [vmem:[#allocation8 + $0x1840] sm:$0xff]
    %v1744 = vld [vmem:[#allocation8 + $0x1848] sm:$0xff]
    %v1745 = vld [vmem:[#allocation8 + $0x1850] sm:$0xff]
    %v1746 = vld [vmem:[#allocation8 + $0x1858] sm:$0xff]
    %v1747 = vld [vmem:[#allocation8 + $0x1860] sm:$0xff]
    %v1748 = vld [vmem:[#allocation8 + $0x1868] sm:$0xff]
    %v1749 = vld [vmem:[#allocation8 + $0x1870] sm:$0xff]
    %v1750 = vld [vmem:[#allocation8 + $0x1878] sm:$0xff]
    %v1751 = vld [vmem:[#allocation8 + $0x1880] sm:$0xff]
    %v1752 = vld [vmem:[#allocation8 + $0x1888] sm:$0xff]
    %v1753 = vld [vmem:[#allocation8 + $0x1890] sm:$0xff]
    %v1754 = vld [vmem:[#allocation8 + $0x1898] sm:$0xff]
    %v1755 = vld [vmem:[#allocation8 + $0x18a0] sm:$0xff]
    %v1756 = vld [vmem:[#allocation8 + $0x18a8] sm:$0xff]
    %v1757 = vld [vmem:[#allocation8 + $0x18b0] sm:$0xff]
    %v1758 = vld [vmem:[#allocation8 + $0x18b8] sm:$0xff]
    %v1759 = vld [vmem:[#allocation8 + $0x18c0] sm:$0xff]
    %v1760 = vld [vmem:[#allocation8 + $0x18c8] sm:$0xff]
    %v1761 = vld [vmem:[#allocation8 + $0x18d0] sm:$0xff]
    %v1762 = vld [vmem:[#allocation8 + $0x18d8] sm:$0xff]
    %v1763 = vld [vmem:[#allocation8 + $0x18e0] sm:$0xff]
    %v1764 = vld [vmem:[#allocation8 + $0x18e8] sm:$0xff]
    %v1765 = vld [vmem:[#allocation8 + $0x18f0] sm:$0xff]
    %v1766 = vld [vmem:[#allocation8 + $0x18f8] sm:$0xff]
    %v1767 = vld [vmem:[#allocation8 + $0x1900] sm:$0xff]
    %v1768 = vld [vmem:[#allocation8 + $0x1908] sm:$0xff]
    %v1769 = vld [vmem:[#allocation8 + $0x1910] sm:$0xff]
    %v1770 = vld [vmem:[#allocation8 + $0x1918] sm:$0xff]
    %v1771 = vld [vmem:[#allocation8 + $0x1920] sm:$0xff]
    %v1772 = vld [vmem:[#allocation8 + $0x1928] sm:$0xff]
    %v1773 = vld [vmem:[#allocation8 + $0x1930] sm:$0xff]
    %v1774 = vld [vmem:[#allocation8 + $0x1938] sm:$0xff]
    %v1775 = vld [vmem:[#allocation8 + $0x1940] sm:$0xff]
    %v1776 = vld [vmem:[#allocation8 + $0x1948] sm:$0xff]
    %v1777 = vld [vmem:[#allocation8 + $0x1950] sm:$0xff]
    %v1778 = vld [vmem:[#allocation8 + $0x1958] sm:$0xff]
    %v1779 = vld [vmem:[#allocation8 + $0x1960] sm:$0xff]
    %v1780 = vld [vmem:[#allocation8 + $0x1968] sm:$0xff]
    %v1781 = vld [vmem:[#allocation8 + $0x1970] sm:$0xff]
    %v1782 = vld [vmem:[#allocation8 + $0x1978] sm:$0xff]
    %v1783 = vld [vmem:[#allocation8 + $0x1980] sm:$0xff]
    %v1784 = vld [vmem:[#allocation8 + $0x1988] sm:$0xff]
    %v1785 = vld [vmem:[#allocation8 + $0x1990] sm:$0xff]
    %v1786 = vld [vmem:[#allocation8 + $0x1998] sm:$0xff]
    %v1787 = vld [vmem:[#allocation8 + $0x19a0] sm:$0xff]
    %v1788 = vld [vmem:[#allocation8 + $0x19a8] sm:$0xff]
    %v1789 = vld [vmem:[#allocation8 + $0x19b0] sm:$0xff]
    %v1790 = vld [vmem:[#allocation8 + $0x19b8] sm:$0xff]
    %v1791 = vld [vmem:[#allocation8 + $0x19c0] sm:$0xff]
    %v1792 = vld [vmem:[#allocation8 + $0x19c8] sm:$0xff]
    %v1793 = vld [vmem:[#allocation8 + $0x19d0] sm:$0xff]
    %v1794 = vld [vmem:[#allocation8 + $0x19d8] sm:$0xff]
    %v1795 = vld [vmem:[#allocation8 + $0x19e0] sm:$0xff]
    %v1796 = vld [vmem:[#allocation8 + $0x19e8] sm:$0xff]
    %v1797 = vld [vmem:[#allocation8 + $0x19f0] sm:$0xff]
    %v1798 = vld [vmem:[#allocation8 + $0x19f8] sm:$0xff]
    %v1799 = vld [vmem:[#allocation8 + $0x1a00] sm:$0xff]
    %v1800 = vld [vmem:[#allocation8 + $0x1a08] sm:$0xff]
    %v1801 = vld [vmem:[#allocation8 + $0x1a10] sm:$0xff]
    %v1802 = vld [vmem:[#allocation8 + $0x1a18] sm:$0xff]
    %v1803 = vld [vmem:[#allocation8 + $0x1a20] sm:$0xff]
    %v1804 = vld [vmem:[#allocation8 + $0x1a28] sm:$0xff]
    %v1805 = vld [vmem:[#allocation8 + $0x1a30] sm:$0xff]
    %v1806 = vld [vmem:[#allocation8 + $0x1a38] sm:$0xff]
    %v1807 = vld [vmem:[#allocation8 + $0x1a40] sm:$0xff]
    %v1808 = vld [vmem:[#allocation8 + $0x1a48] sm:$0xff]
    %v1809 = vld [vmem:[#allocation8 + $0x1a50] sm:$0xff]
    %v1810 = vld [vmem:[#allocation8 + $0x1a58] sm:$0xff]
    %v1811 = vld [vmem:[#allocation8 + $0x1a60] sm:$0xff]
    %v1812 = vld [vmem:[#allocation8 + $0x1a68] sm:$0xff]
    %v1813 = vld [vmem:[#allocation8 + $0x1a70] sm:$0xff]
    %v1814 = vld [vmem:[#allocation8 + $0x1a78] sm:$0xff]
    %v1815 = vld [vmem:[#allocation8 + $0x1a80] sm:$0xff]
    %v1816 = vld [vmem:[#allocation8 + $0x1a88] sm:$0xff]
    %v1817 = vld [vmem:[#allocation8 + $0x1a90] sm:$0xff]
    %v1818 = vld [vmem:[#allocation8 + $0x1a98] sm:$0xff]
    %v1819 = vld [vmem:[#allocation8 + $0x1aa0] sm:$0xff]
    %v1820 = vld [vmem:[#allocation8 + $0x1aa8] sm:$0xff]
    %v1821 = vld [vmem:[#allocation8 + $0x1ab0] sm:$0xff]
    %v1822 = vld [vmem:[#allocation8 + $0x1ab8] sm:$0xff]
    %v1823 = vld [vmem:[#allocation8 + $0x1ac0] sm:$0xff]
    %v1824 = vld [vmem:[#allocation8 + $0x1ac8] sm:$0xff]
    %v1825 = vld [vmem:[#allocation8 + $0x1ad0] sm:$0xff]
    %v1826 = vld [vmem:[#allocation8 + $0x1ad8] sm:$0xff]
    %v1827 = vld [vmem:[#allocation8 + $0x1ae0] sm:$0xff]
    %v1828 = vld [vmem:[#allocation8 + $0x1ae8] sm:$0xff]
    %v1829 = vld [vmem:[#allocation8 + $0x1af0] sm:$0xff]
    %v1830 = vld [vmem:[#allocation8 + $0x1af8] sm:$0xff]
    %v1831 = vld [vmem:[#allocation8 + $0x1b00] sm:$0xff]
    %v1832 = vld [vmem:[#allocation8 + $0x1b08] sm:$0xff]
    %v1833 = vld [vmem:[#allocation8 + $0x1b10] sm:$0xff]
    %v1834 = vld [vmem:[#allocation8 + $0x1b18] sm:$0xff]
    %v1835 = vld [vmem:[#allocation8 + $0x1b20] sm:$0xff]
    %v1836 = vld [vmem:[#allocation8 + $0x1b28] sm:$0xff]
    %v1837 = vld [vmem:[#allocation8 + $0x1b30] sm:$0xff]
    %v1838 = vld [vmem:[#allocation8 + $0x1b38] sm:$0xff]
    %v1839 = vld [vmem:[#allocation8 + $0x1b40] sm:$0xff]
    %v1840 = vld [vmem:[#allocation8 + $0x1b48] sm:$0xff]
    %v1841 = vld [vmem:[#allocation8 + $0x1b50] sm:$0xff]
    %v1842 = vld [vmem:[#allocation8 + $0x1b58] sm:$0xff]
    %v1843 = vld [vmem:[#allocation8 + $0x1b60] sm:$0xff]
    %v1844 = vld [vmem:[#allocation8 + $0x1b68] sm:$0xff]
    %v1845 = vld [vmem:[#allocation8 + $0x1b70] sm:$0xff]
    %v1846 = vld [vmem:[#allocation8 + $0x1b78] sm:$0xff]
    %v1847 = vld [vmem:[#allocation8 + $0x1b80] sm:$0xff]
    %v1848 = vld [vmem:[#allocation8 + $0x1b88] sm:$0xff]
    %v1849 = vld [vmem:[#allocation8 + $0x1b90] sm:$0xff]
    %v1850 = vld [vmem:[#allocation8 + $0x1b98] sm:$0xff]
    %v1851 = vld [vmem:[#allocation8 + $0x1ba0] sm:$0xff]
    %v1852 = vld [vmem:[#allocation8 + $0x1ba8] sm:$0xff]
    %v1853 = vld [vmem:[#allocation8 + $0x1bb0] sm:$0xff]
    %v1854 = vld [vmem:[#allocation8 + $0x1bb8] sm:$0xff]
    %v1855 = vld [vmem:[#allocation8 + $0x1bc0] sm:$0xff]
    %v1856 = vld [vmem:[#allocation8 + $0x1bc8] sm:$0xff]
    %v1857 = vld [vmem:[#allocation8 + $0x1bd0] sm:$0xff]
    %v1858 = vld [vmem:[#allocation8 + $0x1bd8] sm:$0xff]
    %v1859 = vld [vmem:[#allocation8 + $0x1be0] sm:$0xff]
    %v1860 = vld [vmem:[#allocation8 + $0x1be8] sm:$0xff]
    %v1861 = vld [vmem:[#allocation8 + $0x1bf0] sm:$0xff]
    %v1862 = vld [vmem:[#allocation8 + $0x1bf8] sm:$0xff]
    %v1863 = vld [vmem:[#allocation8 + $0x1c00] sm:$0xff]
    %v1864 = vld [vmem:[#allocation8 + $0x1c08] sm:$0xff]
    %v1865 = vld [vmem:[#allocation8 + $0x1c10] sm:$0xff]
    %v1866 = vld [vmem:[#allocation8 + $0x1c18] sm:$0xff]
    %v1867 = vld [vmem:[#allocation8 + $0x1c20] sm:$0xff]
    %v1868 = vld [vmem:[#allocation8 + $0x1c28] sm:$0xff]
    %v1869 = vld [vmem:[#allocation8 + $0x1c30] sm:$0xff]
    %v1870 = vld [vmem:[#allocation8 + $0x1c38] sm:$0xff]
    %v1871 = vld [vmem:[#allocation8 + $0x1c40] sm:$0xff]
    %v1872 = vld [vmem:[#allocation8 + $0x1c48] sm:$0xff]
    %v1873 = vld [vmem:[#allocation8 + $0x1c50] sm:$0xff]
    %v1874 = vld [vmem:[#allocation8 + $0x1c58] sm:$0xff]
    %v1875 = vld [vmem:[#allocation8 + $0x1c60] sm:$0xff]
    %v1876 = vld [vmem:[#allocation8 + $0x1c68] sm:$0xff]
    %v1877 = vld [vmem:[#allocation8 + $0x1c70] sm:$0xff]
    %v1878 = vld [vmem:[#allocation8 + $0x1c78] sm:$0xff]
    %v1879 = vld [vmem:[#allocation8 + $0x1c80] sm:$0xff]
    %v1880 = vld [vmem:[#allocation8 + $0x1c88] sm:$0xff]
    %v1881 = vld [vmem:[#allocation8 + $0x1c90] sm:$0xff]
    %v1882 = vld [vmem:[#allocation8 + $0x1c98] sm:$0xff]
    %v1883 = vld [vmem:[#allocation8 + $0x1ca0] sm:$0xff]
    %v1884 = vld [vmem:[#allocation8 + $0x1ca8] sm:$0xff]
    %v1885 = vld [vmem:[#allocation8 + $0x1cb0] sm:$0xff]
    %v1886 = vld [vmem:[#allocation8 + $0x1cb8] sm:$0xff]
    %v1887 = vld [vmem:[#allocation8 + $0x1cc0] sm:$0xff]
    %v1888 = vld [vmem:[#allocation8 + $0x1cc8] sm:$0xff]
    %v1889 = vld [vmem:[#allocation8 + $0x1cd0] sm:$0xff]
    %v1890 = vld [vmem:[#allocation8 + $0x1cd8] sm:$0xff]
    %v1891 = vld [vmem:[#allocation8 + $0x1ce0] sm:$0xff]
    %v1892 = vld [vmem:[#allocation8 + $0x1ce8] sm:$0xff]
    %v1893 = vld [vmem:[#allocation8 + $0x1cf0] sm:$0xff]
    %v1894 = vld [vmem:[#allocation8 + $0x1cf8] sm:$0xff]
    %v1895 = vld [vmem:[#allocation8 + $0x1d00] sm:$0xff]
    %v1896 = vld [vmem:[#allocation8 + $0x1d08] sm:$0xff]
    %v1897 = vld [vmem:[#allocation8 + $0x1d10] sm:$0xff]
    %v1898 = vld [vmem:[#allocation8 + $0x1d18] sm:$0xff]
    %v1899 = vld [vmem:[#allocation8 + $0x1d20] sm:$0xff]
    %v1900 = vld [vmem:[#allocation8 + $0x1d28] sm:$0xff]
    %v1901 = vld [vmem:[#allocation8 + $0x1d30] sm:$0xff]
    %v1902 = vld [vmem:[#allocation8 + $0x1d38] sm:$0xff]
    %v1903 = vld [vmem:[#allocation8 + $0x1d40] sm:$0xff]
    %v1904 = vld [vmem:[#allocation8 + $0x1d48] sm:$0xff]
    %v1905 = vld [vmem:[#allocation8 + $0x1d50] sm:$0xff]
    %v1906 = vld [vmem:[#allocation8 + $0x1d58] sm:$0xff]
    %v1907 = vld [vmem:[#allocation8 + $0x1d60] sm:$0xff]
    %v1908 = vld [vmem:[#allocation8 + $0x1d68] sm:$0xff]
    %v1909 = vld [vmem:[#allocation8 + $0x1d70] sm:$0xff]
    %v1910 = vld [vmem:[#allocation8 + $0x1d78] sm:$0xff]
    %v1911 = vld [vmem:[#allocation8 + $0x1d80] sm:$0xff]
    %v1912 = vld [vmem:[#allocation8 + $0x1d88] sm:$0xff]
    %v1913 = vld [vmem:[#allocation8 + $0x1d90] sm:$0xff]
    %v1914 = vld [vmem:[#allocation8 + $0x1d98] sm:$0xff]
    %v1915 = vld [vmem:[#allocation8 + $0x1da0] sm:$0xff]
    %v1916 = vld [vmem:[#allocation8 + $0x1da8] sm:$0xff]
    %v1917 = vld [vmem:[#allocation8 + $0x1db0] sm:$0xff]
    %v1918 = vld [vmem:[#allocation8 + $0x1db8] sm:$0xff]
    %v1919 = vld [vmem:[#allocation8 + $0x1dc0] sm:$0xff]
    %v1920 = vld [vmem:[#allocation8 + $0x1dc8] sm:$0xff]
    %v1921 = vld [vmem:[#allocation8 + $0x1dd0] sm:$0xff]
    %v1922 = vld [vmem:[#allocation8 + $0x1dd8] sm:$0xff]
    %v1923 = vld [vmem:[#allocation8 + $0x1de0] sm:$0xff]
    %v1924 = vld [vmem:[#allocation8 + $0x1de8] sm:$0xff]
    %v1925 = vld [vmem:[#allocation8 + $0x1df0] sm:$0xff]
    %v1926 = vld [vmem:[#allocation8 + $0x1df8] sm:$0xff]
    %v1927 = vld [vmem:[#allocation8 + $0x1e00] sm:$0xff]
    %v1928 = vld [vmem:[#allocation8 + $0x1e08] sm:$0xff]
    %v1929 = vld [vmem:[#allocation8 + $0x1e10] sm:$0xff]
    %v1930 = vld [vmem:[#allocation8 + $0x1e18] sm:$0xff]
    %v1931 = vld [vmem:[#allocation8 + $0x1e20] sm:$0xff]
    %v1932 = vld [vmem:[#allocation8 + $0x1e28] sm:$0xff]
    %v1933 = vld [vmem:[#allocation8 + $0x1e30] sm:$0xff]
    %v1934 = vld [vmem:[#allocation8 + $0x1e38] sm:$0xff]
    %v1935 = vld [vmem:[#allocation8 + $0x1e40] sm:$0xff]
    %v1936 = vld [vmem:[#allocation8 + $0x1e48] sm:$0xff]
    %v1937 = vld [vmem:[#allocation8 + $0x1e50] sm:$0xff]
    %v1938 = vld [vmem:[#allocation8 + $0x1e58] sm:$0xff]
    %v1939 = vld [vmem:[#allocation8 + $0x1e60] sm:$0xff]
    %v1940 = vld [vmem:[#allocation8 + $0x1e68] sm:$0xff]
    %v1941 = vld [vmem:[#allocation8 + $0x1e70] sm:$0xff]
    %v1942 = vld [vmem:[#allocation8 + $0x1e78] sm:$0xff]
    %v1943 = vld [vmem:[#allocation8 + $0x1e80] sm:$0xff]
    %v1944 = vld [vmem:[#allocation8 + $0x1e88] sm:$0xff]
    %v1945 = vld [vmem:[#allocation8 + $0x1e90] sm:$0xff]
    %v1946 = vld [vmem:[#allocation8 + $0x1e98] sm:$0xff]
    %v1947 = vld [vmem:[#allocation8 + $0x1ea0] sm:$0xff]
    %v1948 = vld [vmem:[#allocation8 + $0x1ea8] sm:$0xff]
    %v1949 = vld [vmem:[#allocation8 + $0x1eb0] sm:$0xff]
    %v1950 = vld [vmem:[#allocation8 + $0x1eb8] sm:$0xff]
    %v1951 = vld [vmem:[#allocation8 + $0x1ec0] sm:$0xff]
    %v1952 = vld [vmem:[#allocation8 + $0x1ec8] sm:$0xff]
    %v1953 = vld [vmem:[#allocation8 + $0x1ed0] sm:$0xff]
    %v1954 = vld [vmem:[#allocation8 + $0x1ed8] sm:$0xff]
    %v1955 = vld [vmem:[#allocation8 + $0x1ee0] sm:$0xff]
    %v1956 = vld [vmem:[#allocation8 + $0x1ee8] sm:$0xff]
    %v1957 = vld [vmem:[#allocation8 + $0x1ef0] sm:$0xff]
    %v1958 = vld [vmem:[#allocation8 + $0x1ef8] sm:$0xff]
    %v1959 = vld [vmem:[#allocation8 + $0x1f00] sm:$0xff]
    %v1960 = vld [vmem:[#allocation8 + $0x1f08] sm:$0xff]
    %v1961 = vld [vmem:[#allocation8 + $0x1f10] sm:$0xff]
    %v1962 = vld [vmem:[#allocation8 + $0x1f18] sm:$0xff]
    %v1963 = vld [vmem:[#allocation8 + $0x1f20] sm:$0xff]
    %v1964 = vld [vmem:[#allocation8 + $0x1f28] sm:$0xff]
    %v1965 = vld [vmem:[#allocation8 + $0x1f30] sm:$0xff]
    %v1966 = vld [vmem:[#allocation8 + $0x1f38] sm:$0xff]
    %v1967 = vld [vmem:[#allocation8 + $0x1f40] sm:$0xff]
    %v1968 = vld [vmem:[#allocation8 + $0x1f48] sm:$0xff]
    %v1969 = vld [vmem:[#allocation8 + $0x1f50] sm:$0xff]
    %v1970 = vld [vmem:[#allocation8 + $0x1f58] sm:$0xff]
    %v1971 = vld [vmem:[#allocation8 + $0x1f60] sm:$0xff]
    %v1972 = vld [vmem:[#allocation8 + $0x1f68] sm:$0xff]
    %v1973 = vld [vmem:[#allocation8 + $0x1f70] sm:$0xff]
    %v1974 = vld [vmem:[#allocation8 + $0x1f78] sm:$0xff]
    %v1975 = vld [vmem:[#allocation8 + $0x1f80] sm:$0xff]
    %v1976 = vld [vmem:[#allocation8 + $0x1f88] sm:$0xff]
    %v1977 = vld [vmem:[#allocation8 + $0x1f90] sm:$0xff]
    %v1978 = vld [vmem:[#allocation8 + $0x1f98] sm:$0xff]
    %v1979 = vld [vmem:[#allocation8 + $0x1fa0] sm:$0xff]
    %v1980 = vld [vmem:[#allocation8 + $0x1fa8] sm:$0xff]
    %v1981 = vld [vmem:[#allocation8 + $0x1fb0] sm:$0xff]
    %v1982 = vld [vmem:[#allocation8 + $0x1fb8] sm:$0xff]
    %v1983 = vld [vmem:[#allocation8 + $0x1fc0] sm:$0xff]
    %v1984 = vld [vmem:[#allocation8 + $0x1fc8] sm:$0xff]
    %v1985 = vld [vmem:[#allocation8 + $0x1fd0] sm:$0xff]
    %v1986 = vld [vmem:[#allocation8 + $0x1fd8] sm:$0xff]
    %v1987 = vld [vmem:[#allocation8 + $0x1fe0] sm:$0xff]
    %v1988 = vld [vmem:[#allocation8 + $0x1fe8] sm:$0xff]
    %v1989 = vld [vmem:[#allocation8 + $0x1ff0] sm:$0xff]
    %v1990 = vld [vmem:[#allocation8 + $0x1ff8] sm:$0xff]
    %v1991 = vld [vmem:[#allocation10] sm:$0xff]
    %v1993 = vlaneseq
    %v1994 = vshrl.u32 %v1993, 7
    %v1995 = vsub.s32 0, %v1994
    %v1996 = vrot.slane %v1991, %v1995
    %v1997 = vlaneseq
    %v1998 = vshrl.u32 %v1997, 7
    %v1999 = vsub.s32 1, %v1998
    %v2000 = vrot.slane %v1991, %v1999
    %v2001 = vlaneseq
    %v2002 = vshrl.u32 %v2001, 7
    %v2003 = vsub.s32 2, %v2002
    %v2004 = vrot.slane %v1991, %v2003
    %v2005 = vlaneseq
    %v2006 = vshrl.u32 %v2005, 7
    %v2007 = vsub.s32 3, %v2006
    %v2008 = vrot.slane %v1991, %v2007
    %v2009 = vlaneseq
    %v2010 = vshrl.u32 %v2009, 7
    %v2011 = vsub.s32 4, %v2010
    %v2012 = vrot.slane %v1991, %v2011
    %v2013 = vlaneseq
    %v2014 = vshrl.u32 %v2013, 7
    %v2015 = vsub.s32 5, %v2014
    %v2016 = vrot.slane %v1991, %v2015
    %v2017 = vlaneseq
    %v2018 = vshrl.u32 %v2017, 7
    %v2019 = vsub.s32 6, %v2018
    %v2020 = vrot.slane %v1991, %v2019
    %v2021 = vlaneseq
    %v2022 = vshrl.u32 %v2021, 7
    %v2023 = vsub.s32 7, %v2022
    %v2024 = vrot.slane %v1991, %v2023
    %v3057 = vunpack.c.l.b16 %v967
    %v3058 = vunpack.c.h.b16 %v967
    %v3059 = vunpack.c.l.b16 %v968
    %v3060 = vunpack.c.h.b16 %v968
    %v3061 = vunpack.c.l.b16 %v969
    %v3062 = vunpack.c.h.b16 %v969
    %v3063 = vunpack.c.l.b16 %v970
    %v3064 = vunpack.c.h.b16 %v970
    %v3065 = vunpack.c.l.b16 %v971
    %v3066 = vunpack.c.h.b16 %v971
    %v3067 = vunpack.c.l.b16 %v972
    %v3068 = vunpack.c.h.b16 %v972
    %v3069 = vunpack.c.l.b16 %v973
    %v3070 = vunpack.c.h.b16 %v973
    %v3071 = vunpack.c.l.b16 %v974
    %v3072 = vunpack.c.h.b16 %v974
    %v3073 = vunpack.c.l.b16 %v975
    %v3074 = vunpack.c.h.b16 %v975
    %v3075 = vunpack.c.l.b16 %v976
    %v3076 = vunpack.c.h.b16 %v976
    %v3077 = vunpack.c.l.b16 %v977
    %v3078 = vunpack.c.h.b16 %v977
    %v3079 = vunpack.c.l.b16 %v978
    %v3080 = vunpack.c.h.b16 %v978
    %v3081 = vunpack.c.l.b16 %v979
    %v3082 = vunpack.c.h.b16 %v979
    %v3083 = vunpack.c.l.b16 %v980
    %v3084 = vunpack.c.h.b16 %v980
    %v3085 = vunpack.c.l.b16 %v981
    %v3086 = vunpack.c.h.b16 %v981
    %v3087 = vunpack.c.l.b16 %v982
    %v3088 = vunpack.c.h.b16 %v982
    %v3089 = vunpack.c.l.b16 %v983
    %v3090 = vunpack.c.h.b16 %v983
    %v3091 = vunpack.c.l.b16 %v984
    %v3092 = vunpack.c.h.b16 %v984
    %v3093 = vunpack.c.l.b16 %v985
    %v3094 = vunpack.c.h.b16 %v985
    %v3095 = vunpack.c.l.b16 %v986
    %v3096 = vunpack.c.h.b16 %v986
    %v3097 = vunpack.c.l.b16 %v987
    %v3098 = vunpack.c.h.b16 %v987
    %v3099 = vunpack.c.l.b16 %v988
    %v3100 = vunpack.c.h.b16 %v988
    %v3101 = vunpack.c.l.b16 %v989
    %v3102 = vunpack.c.h.b16 %v989
    %v3103 = vunpack.c.l.b16 %v990
    %v3104 = vunpack.c.h.b16 %v990
    %v3105 = vunpack.c.l.b16 %v991
    %v3106 = vunpack.c.h.b16 %v991
    %v3107 = vunpack.c.l.b16 %v992
    %v3108 = vunpack.c.h.b16 %v992
    %v3109 = vunpack.c.l.b16 %v993
    %v3110 = vunpack.c.h.b16 %v993
    %v3111 = vunpack.c.l.b16 %v994
    %v3112 = vunpack.c.h.b16 %v994
    %v3113 = vunpack.c.l.b16 %v995
    %v3114 = vunpack.c.h.b16 %v995
    %v3115 = vunpack.c.l.b16 %v996
    %v3116 = vunpack.c.h.b16 %v996
    %v3117 = vunpack.c.l.b16 %v997
    %v3118 = vunpack.c.h.b16 %v997
    %v3119 = vunpack.c.l.b16 %v998
    %v3120 = vunpack.c.h.b16 %v998
    %v3121 = vunpack.c.l.b16 %v999
    %v3122 = vunpack.c.h.b16 %v999
    %v3123 = vunpack.c.l.b16 %v1000
    %v3124 = vunpack.c.h.b16 %v1000
    %v3125 = vunpack.c.l.b16 %v1001
    %v3126 = vunpack.c.h.b16 %v1001
    %v3127 = vunpack.c.l.b16 %v1002
    %v3128 = vunpack.c.h.b16 %v1002
    %v3129 = vunpack.c.l.b16 %v1003
    %v3130 = vunpack.c.h.b16 %v1003
    %v3131 = vunpack.c.l.b16 %v1004
    %v3132 = vunpack.c.h.b16 %v1004
    %v3133 = vunpack.c.l.b16 %v1005
    %v3134 = vunpack.c.h.b16 %v1005
    %v3135 = vunpack.c.l.b16 %v1006
    %v3136 = vunpack.c.h.b16 %v1006
    %v3137 = vunpack.c.l.b16 %v1007
    %v3138 = vunpack.c.h.b16 %v1007
    %v3139 = vunpack.c.l.b16 %v1008
    %v3140 = vunpack.c.h.b16 %v1008
    %v3141 = vunpack.c.l.b16 %v1009
    %v3142 = vunpack.c.h.b16 %v1009
    %v3143 = vunpack.c.l.b16 %v1010
    %v3144 = vunpack.c.h.b16 %v1010
    %v3145 = vunpack.c.l.b16 %v1011
    %v3146 = vunpack.c.h.b16 %v1011
    %v3147 = vunpack.c.l.b16 %v1012
    %v3148 = vunpack.c.h.b16 %v1012
    %v3149 = vunpack.c.l.b16 %v1013
    %v3150 = vunpack.c.h.b16 %v1013
    %v3151 = vunpack.c.l.b16 %v1014
    %v3152 = vunpack.c.h.b16 %v1014
    %v3153 = vunpack.c.l.b16 %v1015
    %v3154 = vunpack.c.h.b16 %v1015
    %v3155 = vunpack.c.l.b16 %v1016
    %v3156 = vunpack.c.h.b16 %v1016
    %v3157 = vunpack.c.l.b16 %v1017
    %v3158 = vunpack.c.h.b16 %v1017
    %v3159 = vunpack.c.l.b16 %v1018
    %v3160 = vunpack.c.h.b16 %v1018
    %v3161 = vunpack.c.l.b16 %v1019
    %v3162 = vunpack.c.h.b16 %v1019
    %v3163 = vunpack.c.l.b16 %v1020
    %v3164 = vunpack.c.h.b16 %v1020
    %v3165 = vunpack.c.l.b16 %v1021
    %v3166 = vunpack.c.h.b16 %v1021
    %v3167 = vunpack.c.l.b16 %v1022
    %v3168 = vunpack.c.h.b16 %v1022
    %v3169 = vunpack.c.l.b16 %v1023
    %v3170 = vunpack.c.h.b16 %v1023
    %v3171 = vunpack.c.l.b16 %v1024
    %v3172 = vunpack.c.h.b16 %v1024
    %v3173 = vunpack.c.l.b16 %v1025
    %v3174 = vunpack.c.h.b16 %v1025
    %v3175 = vunpack.c.l.b16 %v1026
    %v3176 = vunpack.c.h.b16 %v1026
    %v3177 = vunpack.c.l.b16 %v1027
    %v3178 = vunpack.c.h.b16 %v1027
    %v3179 = vunpack.c.l.b16 %v1028
    %v3180 = vunpack.c.h.b16 %v1028
    %v3181 = vunpack.c.l.b16 %v1029
    %v3182 = vunpack.c.h.b16 %v1029
    %v3183 = vunpack.c.l.b16 %v1030
    %v3184 = vunpack.c.h.b16 %v1030
    %v3185 = vunpack.c.l.b16 %v1031
    %v3186 = vunpack.c.h.b16 %v1031
    %v3187 = vunpack.c.l.b16 %v1032
    %v3188 = vunpack.c.h.b16 %v1032
    %v3189 = vunpack.c.l.b16 %v1033
    %v3190 = vunpack.c.h.b16 %v1033
    %v3191 = vunpack.c.l.b16 %v1034
    %v3192 = vunpack.c.h.b16 %v1034
    %v3193 = vunpack.c.l.b16 %v1035
    %v3194 = vunpack.c.h.b16 %v1035
    %v3195 = vunpack.c.l.b16 %v1036
    %v3196 = vunpack.c.h.b16 %v1036
    %v3197 = vunpack.c.l.b16 %v1037
    %v3198 = vunpack.c.h.b16 %v1037
    %v3199 = vunpack.c.l.b16 %v1038
    %v3200 = vunpack.c.h.b16 %v1038
    %v3201 = vunpack.c.l.b16 %v1039
    %v3202 = vunpack.c.h.b16 %v1039
    %v3203 = vunpack.c.l.b16 %v1040
    %v3204 = vunpack.c.h.b16 %v1040
    %v3205 = vunpack.c.l.b16 %v1041
    %v3206 = vunpack.c.h.b16 %v1041
    %v3207 = vunpack.c.l.b16 %v1042
    %v3208 = vunpack.c.h.b16 %v1042
    %v3209 = vunpack.c.l.b16 %v1043
    %v3210 = vunpack.c.h.b16 %v1043
    %v3211 = vunpack.c.l.b16 %v1044
    %v3212 = vunpack.c.h.b16 %v1044
    %v3213 = vunpack.c.l.b16 %v1045
    %v3214 = vunpack.c.h.b16 %v1045
    %v3215 = vunpack.c.l.b16 %v1046
    %v3216 = vunpack.c.h.b16 %v1046
    %v3217 = vunpack.c.l.b16 %v1047
    %v3218 = vunpack.c.h.b16 %v1047
    %v3219 = vunpack.c.l.b16 %v1048
    %v3220 = vunpack.c.h.b16 %v1048
    %v3221 = vunpack.c.l.b16 %v1049
    %v3222 = vunpack.c.h.b16 %v1049
    %v3223 = vunpack.c.l.b16 %v1050
    %v3224 = vunpack.c.h.b16 %v1050
    %v3225 = vunpack.c.l.b16 %v1051
    %v3226 = vunpack.c.h.b16 %v1051
    %v3227 = vunpack.c.l.b16 %v1052
    %v3228 = vunpack.c.h.b16 %v1052
    %v3229 = vunpack.c.l.b16 %v1053
    %v3230 = vunpack.c.h.b16 %v1053
    %v3231 = vunpack.c.l.b16 %v1054
    %v3232 = vunpack.c.h.b16 %v1054
    %v3233 = vunpack.c.l.b16 %v1055
    %v3234 = vunpack.c.h.b16 %v1055
    %v3235 = vunpack.c.l.b16 %v1056
    %v3236 = vunpack.c.h.b16 %v1056
    %v3237 = vunpack.c.l.b16 %v1057
    %v3238 = vunpack.c.h.b16 %v1057
    %v3239 = vunpack.c.l.b16 %v1058
    %v3240 = vunpack.c.h.b16 %v1058
    %v3241 = vunpack.c.l.b16 %v1059
    %v3242 = vunpack.c.h.b16 %v1059
    %v3243 = vunpack.c.l.b16 %v1060
    %v3244 = vunpack.c.h.b16 %v1060
    %v3245 = vunpack.c.l.b16 %v1061
    %v3246 = vunpack.c.h.b16 %v1061
    %v3247 = vunpack.c.l.b16 %v1062
    %v3248 = vunpack.c.h.b16 %v1062
    %v3249 = vunpack.c.l.b16 %v1063
    %v3250 = vunpack.c.h.b16 %v1063
    %v3251 = vunpack.c.l.b16 %v1064
    %v3252 = vunpack.c.h.b16 %v1064
    %v3253 = vunpack.c.l.b16 %v1065
    %v3254 = vunpack.c.h.b16 %v1065
    %v3255 = vunpack.c.l.b16 %v1066
    %v3256 = vunpack.c.h.b16 %v1066
    %v3257 = vunpack.c.l.b16 %v1067
    %v3258 = vunpack.c.h.b16 %v1067
    %v3259 = vunpack.c.l.b16 %v1068
    %v3260 = vunpack.c.h.b16 %v1068
    %v3261 = vunpack.c.l.b16 %v1069
    %v3262 = vunpack.c.h.b16 %v1069
    %v3263 = vunpack.c.l.b16 %v1070
    %v3264 = vunpack.c.h.b16 %v1070
    %v3265 = vunpack.c.l.b16 %v1071
    %v3266 = vunpack.c.h.b16 %v1071
    %v3267 = vunpack.c.l.b16 %v1072
    %v3268 = vunpack.c.h.b16 %v1072
    %v3269 = vunpack.c.l.b16 %v1073
    %v3270 = vunpack.c.h.b16 %v1073
    %v3271 = vunpack.c.l.b16 %v1074
    %v3272 = vunpack.c.h.b16 %v1074
    %v3273 = vunpack.c.l.b16 %v1075
    %v3274 = vunpack.c.h.b16 %v1075
    %v3275 = vunpack.c.l.b16 %v1076
    %v3276 = vunpack.c.h.b16 %v1076
    %v3277 = vunpack.c.l.b16 %v1077
    %v3278 = vunpack.c.h.b16 %v1077
    %v3279 = vunpack.c.l.b16 %v1078
    %v3280 = vunpack.c.h.b16 %v1078
    %v3281 = vunpack.c.l.b16 %v1079
    %v3282 = vunpack.c.h.b16 %v1079
    %v3283 = vunpack.c.l.b16 %v1080
    %v3284 = vunpack.c.h.b16 %v1080
    %v3285 = vunpack.c.l.b16 %v1081
    %v3286 = vunpack.c.h.b16 %v1081
    %v3287 = vunpack.c.l.b16 %v1082
    %v3288 = vunpack.c.h.b16 %v1082
    %v3289 = vunpack.c.l.b16 %v1083
    %v3290 = vunpack.c.h.b16 %v1083
    %v3291 = vunpack.c.l.b16 %v1084
    %v3292 = vunpack.c.h.b16 %v1084
    %v3293 = vunpack.c.l.b16 %v1085
    %v3294 = vunpack.c.h.b16 %v1085
    %v3295 = vunpack.c.l.b16 %v1086
    %v3296 = vunpack.c.h.b16 %v1086
    %v3297 = vunpack.c.l.b16 %v1087
    %v3298 = vunpack.c.h.b16 %v1087
    %v3299 = vunpack.c.l.b16 %v1088
    %v3300 = vunpack.c.h.b16 %v1088
    %v3301 = vunpack.c.l.b16 %v1089
    %v3302 = vunpack.c.h.b16 %v1089
    %v3303 = vunpack.c.l.b16 %v1090
    %v3304 = vunpack.c.h.b16 %v1090
    %v3305 = vunpack.c.l.b16 %v1091
    %v3306 = vunpack.c.h.b16 %v1091
    %v3307 = vunpack.c.l.b16 %v1092
    %v3308 = vunpack.c.h.b16 %v1092
    %v3309 = vunpack.c.l.b16 %v1093
    %v3310 = vunpack.c.h.b16 %v1093
    %v3311 = vunpack.c.l.b16 %v1094
    %v3312 = vunpack.c.h.b16 %v1094
    %v3313 = vunpack.c.l.b16 %v1095
    %v3314 = vunpack.c.h.b16 %v1095
    %v3315 = vunpack.c.l.b16 %v1096
    %v3316 = vunpack.c.h.b16 %v1096
    %v3317 = vunpack.c.l.b16 %v1097
    %v3318 = vunpack.c.h.b16 %v1097
    %v3319 = vunpack.c.l.b16 %v1098
    %v3320 = vunpack.c.h.b16 %v1098
    %v3321 = vunpack.c.l.b16 %v1099
    %v3322 = vunpack.c.h.b16 %v1099
    %v3323 = vunpack.c.l.b16 %v1100
    %v3324 = vunpack.c.h.b16 %v1100
    %v3325 = vunpack.c.l.b16 %v1101
    %v3326 = vunpack.c.h.b16 %v1101
    %v3327 = vunpack.c.l.b16 %v1102
    %v3328 = vunpack.c.h.b16 %v1102
    %v3329 = vunpack.c.l.b16 %v1103
    %v3330 = vunpack.c.h.b16 %v1103
    %v3331 = vunpack.c.l.b16 %v1104
    %v3332 = vunpack.c.h.b16 %v1104
    %v3333 = vunpack.c.l.b16 %v1105
    %v3334 = vunpack.c.h.b16 %v1105
    %v3335 = vunpack.c.l.b16 %v1106
    %v3336 = vunpack.c.h.b16 %v1106
    %v3337 = vunpack.c.l.b16 %v1107
    %v3338 = vunpack.c.h.b16 %v1107
    %v3339 = vunpack.c.l.b16 %v1108
    %v3340 = vunpack.c.h.b16 %v1108
    %v3341 = vunpack.c.l.b16 %v1109
    %v3342 = vunpack.c.h.b16 %v1109
    %v3343 = vunpack.c.l.b16 %v1110
    %v3344 = vunpack.c.h.b16 %v1110
    %v3345 = vunpack.c.l.b16 %v1111
    %v3346 = vunpack.c.h.b16 %v1111
    %v3347 = vunpack.c.l.b16 %v1112
    %v3348 = vunpack.c.h.b16 %v1112
    %v3349 = vunpack.c.l.b16 %v1113
    %v3350 = vunpack.c.h.b16 %v1113
    %v3351 = vunpack.c.l.b16 %v1114
    %v3352 = vunpack.c.h.b16 %v1114
    %v3353 = vunpack.c.l.b16 %v1115
    %v3354 = vunpack.c.h.b16 %v1115
    %v3355 = vunpack.c.l.b16 %v1116
    %v3356 = vunpack.c.h.b16 %v1116
    %v3357 = vunpack.c.l.b16 %v1117
    %v3358 = vunpack.c.h.b16 %v1117
    %v3359 = vunpack.c.l.b16 %v1118
    %v3360 = vunpack.c.h.b16 %v1118
    %v3361 = vunpack.c.l.b16 %v1119
    %v3362 = vunpack.c.h.b16 %v1119
    %v3363 = vunpack.c.l.b16 %v1120
    %v3364 = vunpack.c.h.b16 %v1120
    %v3365 = vunpack.c.l.b16 %v1121
    %v3366 = vunpack.c.h.b16 %v1121
    %v3367 = vunpack.c.l.b16 %v1122
    %v3368 = vunpack.c.h.b16 %v1122
    %v3369 = vunpack.c.l.b16 %v1123
    %v3370 = vunpack.c.h.b16 %v1123
    %v3371 = vunpack.c.l.b16 %v1124
    %v3372 = vunpack.c.h.b16 %v1124
    %v3373 = vunpack.c.l.b16 %v1125
    %v3374 = vunpack.c.h.b16 %v1125
    %v3375 = vunpack.c.l.b16 %v1126
    %v3376 = vunpack.c.h.b16 %v1126
    %v3377 = vunpack.c.l.b16 %v1127
    %v3378 = vunpack.c.h.b16 %v1127
    %v3379 = vunpack.c.l.b16 %v1128
    %v3380 = vunpack.c.h.b16 %v1128
    %v3381 = vunpack.c.l.b16 %v1129
    %v3382 = vunpack.c.h.b16 %v1129
    %v3383 = vunpack.c.l.b16 %v1130
    %v3384 = vunpack.c.h.b16 %v1130
    %v3385 = vunpack.c.l.b16 %v1131
    %v3386 = vunpack.c.h.b16 %v1131
    %v3387 = vunpack.c.l.b16 %v1132
    %v3388 = vunpack.c.h.b16 %v1132
    %v3389 = vunpack.c.l.b16 %v1133
    %v3390 = vunpack.c.h.b16 %v1133
    %v3391 = vunpack.c.l.b16 %v1134
    %v3392 = vunpack.c.h.b16 %v1134
    %v3393 = vunpack.c.l.b16 %v1135
    %v3394 = vunpack.c.h.b16 %v1135
    %v3395 = vunpack.c.l.b16 %v1136
    %v3396 = vunpack.c.h.b16 %v1136
    %v3397 = vunpack.c.l.b16 %v1137
    %v3398 = vunpack.c.h.b16 %v1137
    %v3399 = vunpack.c.l.b16 %v1138
    %v3400 = vunpack.c.h.b16 %v1138
    %v3401 = vunpack.c.l.b16 %v1139
    %v3402 = vunpack.c.h.b16 %v1139
    %v3403 = vunpack.c.l.b16 %v1140
    %v3404 = vunpack.c.h.b16 %v1140
    %v3405 = vunpack.c.l.b16 %v1141
    %v3406 = vunpack.c.h.b16 %v1141
    %v3407 = vunpack.c.l.b16 %v1142
    %v3408 = vunpack.c.h.b16 %v1142
    %v3409 = vunpack.c.l.b16 %v1143
    %v3410 = vunpack.c.h.b16 %v1143
    %v3411 = vunpack.c.l.b16 %v1144
    %v3412 = vunpack.c.h.b16 %v1144
    %v3413 = vunpack.c.l.b16 %v1145
    %v3414 = vunpack.c.h.b16 %v1145
    %v3415 = vunpack.c.l.b16 %v1146
    %v3416 = vunpack.c.h.b16 %v1146
    %v3417 = vunpack.c.l.b16 %v1147
    %v3418 = vunpack.c.h.b16 %v1147
    %v3419 = vunpack.c.l.b16 %v1148
    %v3420 = vunpack.c.h.b16 %v1148
    %v3421 = vunpack.c.l.b16 %v1149
    %v3422 = vunpack.c.h.b16 %v1149
    %v3423 = vunpack.c.l.b16 %v1150
    %v3424 = vunpack.c.h.b16 %v1150
    %v3425 = vunpack.c.l.b16 %v1151
    %v3426 = vunpack.c.h.b16 %v1151
    %v3427 = vunpack.c.l.b16 %v1152
    %v3428 = vunpack.c.h.b16 %v1152
    %v3429 = vunpack.c.l.b16 %v1153
    %v3430 = vunpack.c.h.b16 %v1153
    %v3431 = vunpack.c.l.b16 %v1154
    %v3432 = vunpack.c.h.b16 %v1154
    %v3433 = vunpack.c.l.b16 %v1155
    %v3434 = vunpack.c.h.b16 %v1155
    %v3435 = vunpack.c.l.b16 %v1156
    %v3436 = vunpack.c.h.b16 %v1156
    %v3437 = vunpack.c.l.b16 %v1157
    %v3438 = vunpack.c.h.b16 %v1157
    %v3439 = vunpack.c.l.b16 %v1158
    %v3440 = vunpack.c.h.b16 %v1158
    %v3441 = vunpack.c.l.b16 %v1159
    %v3442 = vunpack.c.h.b16 %v1159
    %v3443 = vunpack.c.l.b16 %v1160
    %v3444 = vunpack.c.h.b16 %v1160
    %v3445 = vunpack.c.l.b16 %v1161
    %v3446 = vunpack.c.h.b16 %v1161
    %v3447 = vunpack.c.l.b16 %v1162
    %v3448 = vunpack.c.h.b16 %v1162
    %v3449 = vunpack.c.l.b16 %v1163
    %v3450 = vunpack.c.h.b16 %v1163
    %v3451 = vunpack.c.l.b16 %v1164
    %v3452 = vunpack.c.h.b16 %v1164
    %v3453 = vunpack.c.l.b16 %v1165
    %v3454 = vunpack.c.h.b16 %v1165
    %v3455 = vunpack.c.l.b16 %v1166
    %v3456 = vunpack.c.h.b16 %v1166
    %v3457 = vunpack.c.l.b16 %v1167
    %v3458 = vunpack.c.h.b16 %v1167
    %v3459 = vunpack.c.l.b16 %v1168
    %v3460 = vunpack.c.h.b16 %v1168
    %v3461 = vunpack.c.l.b16 %v1169
    %v3462 = vunpack.c.h.b16 %v1169
    %v3463 = vunpack.c.l.b16 %v1170
    %v3464 = vunpack.c.h.b16 %v1170
    %v3465 = vunpack.c.l.b16 %v1171
    %v3466 = vunpack.c.h.b16 %v1171
    %v3467 = vunpack.c.l.b16 %v1172
    %v3468 = vunpack.c.h.b16 %v1172
    %v3469 = vunpack.c.l.b16 %v1173
    %v3470 = vunpack.c.h.b16 %v1173
    %v3471 = vunpack.c.l.b16 %v1174
    %v3472 = vunpack.c.h.b16 %v1174
    %v3473 = vunpack.c.l.b16 %v1175
    %v3474 = vunpack.c.h.b16 %v1175
    %v3475 = vunpack.c.l.b16 %v1176
    %v3476 = vunpack.c.h.b16 %v1176
    %v3477 = vunpack.c.l.b16 %v1177
    %v3478 = vunpack.c.h.b16 %v1177
    %v3479 = vunpack.c.l.b16 %v1178
    %v3480 = vunpack.c.h.b16 %v1178
    %v3481 = vunpack.c.l.b16 %v1179
    %v3482 = vunpack.c.h.b16 %v1179
    %v3483 = vunpack.c.l.b16 %v1180
    %v3484 = vunpack.c.h.b16 %v1180
    %v3485 = vunpack.c.l.b16 %v1181
    %v3486 = vunpack.c.h.b16 %v1181
    %v3487 = vunpack.c.l.b16 %v1182
    %v3488 = vunpack.c.h.b16 %v1182
    %v3489 = vunpack.c.l.b16 %v1183
    %v3490 = vunpack.c.h.b16 %v1183
    %v3491 = vunpack.c.l.b16 %v1184
    %v3492 = vunpack.c.h.b16 %v1184
    %v3493 = vunpack.c.l.b16 %v1185
    %v3494 = vunpack.c.h.b16 %v1185
    %v3495 = vunpack.c.l.b16 %v1186
    %v3496 = vunpack.c.h.b16 %v1186
    %v3497 = vunpack.c.l.b16 %v1187
    %v3498 = vunpack.c.h.b16 %v1187
    %v3499 = vunpack.c.l.b16 %v1188
    %v3500 = vunpack.c.h.b16 %v1188
    %v3501 = vunpack.c.l.b16 %v1189
    %v3502 = vunpack.c.h.b16 %v1189
    %v3503 = vunpack.c.l.b16 %v1190
    %v3504 = vunpack.c.h.b16 %v1190
    %v3505 = vunpack.c.l.b16 %v1191
    %v3506 = vunpack.c.h.b16 %v1191
    %v3507 = vunpack.c.l.b16 %v1192
    %v3508 = vunpack.c.h.b16 %v1192
    %v3509 = vunpack.c.l.b16 %v1193
    %v3510 = vunpack.c.h.b16 %v1193
    %v3511 = vunpack.c.l.b16 %v1194
    %v3512 = vunpack.c.h.b16 %v1194
    %v3513 = vunpack.c.l.b16 %v1195
    %v3514 = vunpack.c.h.b16 %v1195
    %v3515 = vunpack.c.l.b16 %v1196
    %v3516 = vunpack.c.h.b16 %v1196
    %v3517 = vunpack.c.l.b16 %v1197
    %v3518 = vunpack.c.h.b16 %v1197
    %v3519 = vunpack.c.l.b16 %v1198
    %v3520 = vunpack.c.h.b16 %v1198
    %v3521 = vunpack.c.l.b16 %v1199
    %v3522 = vunpack.c.h.b16 %v1199
    %v3523 = vunpack.c.l.b16 %v1200
    %v3524 = vunpack.c.h.b16 %v1200
    %v3525 = vunpack.c.l.b16 %v1201
    %v3526 = vunpack.c.h.b16 %v1201
    %v3527 = vunpack.c.l.b16 %v1202
    %v3528 = vunpack.c.h.b16 %v1202
    %v3529 = vunpack.c.l.b16 %v1203
    %v3530 = vunpack.c.h.b16 %v1203
    %v3531 = vunpack.c.l.b16 %v1204
    %v3532 = vunpack.c.h.b16 %v1204
    %v3533 = vunpack.c.l.b16 %v1205
    %v3534 = vunpack.c.h.b16 %v1205
    %v3535 = vunpack.c.l.b16 %v1206
    %v3536 = vunpack.c.h.b16 %v1206
    %v3537 = vunpack.c.l.b16 %v1207
    %v3538 = vunpack.c.h.b16 %v1207
    %v3539 = vunpack.c.l.b16 %v1208
    %v3540 = vunpack.c.h.b16 %v1208
    %v3541 = vunpack.c.l.b16 %v1209
    %v3542 = vunpack.c.h.b16 %v1209
    %v3543 = vunpack.c.l.b16 %v1210
    %v3544 = vunpack.c.h.b16 %v1210
    %v3545 = vunpack.c.l.b16 %v1211
    %v3546 = vunpack.c.h.b16 %v1211
    %v3547 = vunpack.c.l.b16 %v1212
    %v3548 = vunpack.c.h.b16 %v1212
    %v3549 = vunpack.c.l.b16 %v1213
    %v3550 = vunpack.c.h.b16 %v1213
    %v3551 = vunpack.c.l.b16 %v1214
    %v3552 = vunpack.c.h.b16 %v1214
    %v3553 = vunpack.c.l.b16 %v1215
    %v3554 = vunpack.c.h.b16 %v1215
    %v3555 = vunpack.c.l.b16 %v1216
    %v3556 = vunpack.c.h.b16 %v1216
    %v3557 = vunpack.c.l.b16 %v1217
    %v3558 = vunpack.c.h.b16 %v1217
    %v3559 = vunpack.c.l.b16 %v1218
    %v3560 = vunpack.c.h.b16 %v1218
    %v3561 = vunpack.c.l.b16 %v1219
    %v3562 = vunpack.c.h.b16 %v1219
    %v3563 = vunpack.c.l.b16 %v1220
    %v3564 = vunpack.c.h.b16 %v1220
    %v3565 = vunpack.c.l.b16 %v1221
    %v3566 = vunpack.c.h.b16 %v1221
    %v3567 = vunpack.c.l.b16 %v1222
    %v3568 = vunpack.c.h.b16 %v1222
    %v3569 = vunpack.c.l.b16 %v1223
    %v3570 = vunpack.c.h.b16 %v1223
    %v3571 = vunpack.c.l.b16 %v1224
    %v3572 = vunpack.c.h.b16 %v1224
    %v3573 = vunpack.c.l.b16 %v1225
    %v3574 = vunpack.c.h.b16 %v1225
    %v3575 = vunpack.c.l.b16 %v1226
    %v3576 = vunpack.c.h.b16 %v1226
    %v3577 = vunpack.c.l.b16 %v1227
    %v3578 = vunpack.c.h.b16 %v1227
    %v3579 = vunpack.c.l.b16 %v1228
    %v3580 = vunpack.c.h.b16 %v1228
    %v3581 = vunpack.c.l.b16 %v1229
    %v3582 = vunpack.c.h.b16 %v1229
    %v3583 = vunpack.c.l.b16 %v1230
    %v3584 = vunpack.c.h.b16 %v1230
    %v3585 = vunpack.c.l.b16 %v1231
    %v3586 = vunpack.c.h.b16 %v1231
    %v3587 = vunpack.c.l.b16 %v1232
    %v3588 = vunpack.c.h.b16 %v1232
    %v3589 = vunpack.c.l.b16 %v1233
    %v3590 = vunpack.c.h.b16 %v1233
    %v3591 = vunpack.c.l.b16 %v1234
    %v3592 = vunpack.c.h.b16 %v1234
    %v3593 = vunpack.c.l.b16 %v1235
    %v3594 = vunpack.c.h.b16 %v1235
    %v3595 = vunpack.c.l.b16 %v1236
    %v3596 = vunpack.c.h.b16 %v1236
    %v3597 = vunpack.c.l.b16 %v1237
    %v3598 = vunpack.c.h.b16 %v1237
    %v3599 = vunpack.c.l.b16 %v1238
    %v3600 = vunpack.c.h.b16 %v1238
    %v3601 = vunpack.c.l.b16 %v1239
    %v3602 = vunpack.c.h.b16 %v1239
    %v3603 = vunpack.c.l.b16 %v1240
    %v3604 = vunpack.c.h.b16 %v1240
    %v3605 = vunpack.c.l.b16 %v1241
    %v3606 = vunpack.c.h.b16 %v1241
    %v3607 = vunpack.c.l.b16 %v1242
    %v3608 = vunpack.c.h.b16 %v1242
    %v3609 = vunpack.c.l.b16 %v1243
    %v3610 = vunpack.c.h.b16 %v1243
    %v3611 = vunpack.c.l.b16 %v1244
    %v3612 = vunpack.c.h.b16 %v1244
    %v3613 = vunpack.c.l.b16 %v1245
    %v3614 = vunpack.c.h.b16 %v1245
    %v3615 = vunpack.c.l.b16 %v1246
    %v3616 = vunpack.c.h.b16 %v1246
    %v3617 = vunpack.c.l.b16 %v1247
    %v3618 = vunpack.c.h.b16 %v1247
    %v3619 = vunpack.c.l.b16 %v1248
    %v3620 = vunpack.c.h.b16 %v1248
    %v3621 = vunpack.c.l.b16 %v1249
    %v3622 = vunpack.c.h.b16 %v1249
    %v3623 = vunpack.c.l.b16 %v1250
    %v3624 = vunpack.c.h.b16 %v1250
    %v3625 = vunpack.c.l.b16 %v1251
    %v3626 = vunpack.c.h.b16 %v1251
    %v3627 = vunpack.c.l.b16 %v1252
    %v3628 = vunpack.c.h.b16 %v1252
    %v3629 = vunpack.c.l.b16 %v1253
    %v3630 = vunpack.c.h.b16 %v1253
    %v3631 = vunpack.c.l.b16 %v1254
    %v3632 = vunpack.c.h.b16 %v1254
    %v3633 = vunpack.c.l.b16 %v1255
    %v3634 = vunpack.c.h.b16 %v1255
    %v3635 = vunpack.c.l.b16 %v1256
    %v3636 = vunpack.c.h.b16 %v1256
    %v3637 = vunpack.c.l.b16 %v1257
    %v3638 = vunpack.c.h.b16 %v1257
    %v3639 = vunpack.c.l.b16 %v1258
    %v3640 = vunpack.c.h.b16 %v1258
    %v3641 = vunpack.c.l.b16 %v1259
    %v3642 = vunpack.c.h.b16 %v1259
    %v3643 = vunpack.c.l.b16 %v1260
    %v3644 = vunpack.c.h.b16 %v1260
    %v3645 = vunpack.c.l.b16 %v1261
    %v3646 = vunpack.c.h.b16 %v1261
    %v3647 = vunpack.c.l.b16 %v1262
    %v3648 = vunpack.c.h.b16 %v1262
    %v3649 = vunpack.c.l.b16 %v1263
    %v3650 = vunpack.c.h.b16 %v1263
    %v3651 = vunpack.c.l.b16 %v1264
    %v3652 = vunpack.c.h.b16 %v1264
    %v3653 = vunpack.c.l.b16 %v1265
    %v3654 = vunpack.c.h.b16 %v1265
    %v3655 = vunpack.c.l.b16 %v1266
    %v3656 = vunpack.c.h.b16 %v1266
    %v3657 = vunpack.c.l.b16 %v1267
    %v3658 = vunpack.c.h.b16 %v1267
    %v3659 = vunpack.c.l.b16 %v1268
    %v3660 = vunpack.c.h.b16 %v1268
    %v3661 = vunpack.c.l.b16 %v1269
    %v3662 = vunpack.c.h.b16 %v1269
    %v3663 = vunpack.c.l.b16 %v1270
    %v3664 = vunpack.c.h.b16 %v1270
    %v3665 = vunpack.c.l.b16 %v1271
    %v3666 = vunpack.c.h.b16 %v1271
    %v3667 = vunpack.c.l.b16 %v1272
    %v3668 = vunpack.c.h.b16 %v1272
    %v3669 = vunpack.c.l.b16 %v1273
    %v3670 = vunpack.c.h.b16 %v1273
    %v3671 = vunpack.c.l.b16 %v1274
    %v3672 = vunpack.c.h.b16 %v1274
    %v3673 = vunpack.c.l.b16 %v1275
    %v3674 = vunpack.c.h.b16 %v1275
    %v3675 = vunpack.c.l.b16 %v1276
    %v3676 = vunpack.c.h.b16 %v1276
    %v3677 = vunpack.c.l.b16 %v1277
    %v3678 = vunpack.c.h.b16 %v1277
    %v3679 = vunpack.c.l.b16 %v1278
    %v3680 = vunpack.c.h.b16 %v1278
    %v3681 = vunpack.c.l.b16 %v1279
    %v3682 = vunpack.c.h.b16 %v1279
    %v3683 = vunpack.c.l.b16 %v1280
    %v3684 = vunpack.c.h.b16 %v1280
    %v3685 = vunpack.c.l.b16 %v1281
    %v3686 = vunpack.c.h.b16 %v1281
    %v3687 = vunpack.c.l.b16 %v1282
    %v3688 = vunpack.c.h.b16 %v1282
    %v3689 = vunpack.c.l.b16 %v1283
    %v3690 = vunpack.c.h.b16 %v1283
    %v3691 = vunpack.c.l.b16 %v1284
    %v3692 = vunpack.c.h.b16 %v1284
    %v3693 = vunpack.c.l.b16 %v1285
    %v3694 = vunpack.c.h.b16 %v1285
    %v3695 = vunpack.c.l.b16 %v1286
    %v3696 = vunpack.c.h.b16 %v1286
    %v3697 = vunpack.c.l.b16 %v1287
    %v3698 = vunpack.c.h.b16 %v1287
    %v3699 = vunpack.c.l.b16 %v1288
    %v3700 = vunpack.c.h.b16 %v1288
    %v3701 = vunpack.c.l.b16 %v1289
    %v3702 = vunpack.c.h.b16 %v1289
    %v3703 = vunpack.c.l.b16 %v1290
    %v3704 = vunpack.c.h.b16 %v1290
    %v3705 = vunpack.c.l.b16 %v1291
    %v3706 = vunpack.c.h.b16 %v1291
    %v3707 = vunpack.c.l.b16 %v1292
    %v3708 = vunpack.c.h.b16 %v1292
    %v3709 = vunpack.c.l.b16 %v1293
    %v3710 = vunpack.c.h.b16 %v1293
    %v3711 = vunpack.c.l.b16 %v1294
    %v3712 = vunpack.c.h.b16 %v1294
    %v3713 = vunpack.c.l.b16 %v1295
    %v3714 = vunpack.c.h.b16 %v1295
    %v3715 = vunpack.c.l.b16 %v1296
    %v3716 = vunpack.c.h.b16 %v1296
    %v3717 = vunpack.c.l.b16 %v1297
    %v3718 = vunpack.c.h.b16 %v1297
    %v3719 = vunpack.c.l.b16 %v1298
    %v3720 = vunpack.c.h.b16 %v1298
    %v3721 = vunpack.c.l.b16 %v1299
    %v3722 = vunpack.c.h.b16 %v1299
    %v3723 = vunpack.c.l.b16 %v1300
    %v3724 = vunpack.c.h.b16 %v1300
    %v3725 = vunpack.c.l.b16 %v1301
    %v3726 = vunpack.c.h.b16 %v1301
    %v3727 = vunpack.c.l.b16 %v1302
    %v3728 = vunpack.c.h.b16 %v1302
    %v3729 = vunpack.c.l.b16 %v1303
    %v3730 = vunpack.c.h.b16 %v1303
    %v3731 = vunpack.c.l.b16 %v1304
    %v3732 = vunpack.c.h.b16 %v1304
    %v3733 = vunpack.c.l.b16 %v1305
    %v3734 = vunpack.c.h.b16 %v1305
    %v3735 = vunpack.c.l.b16 %v1306
    %v3736 = vunpack.c.h.b16 %v1306
    %v3737 = vunpack.c.l.b16 %v1307
    %v3738 = vunpack.c.h.b16 %v1307
    %v3739 = vunpack.c.l.b16 %v1308
    %v3740 = vunpack.c.h.b16 %v1308
    %v3741 = vunpack.c.l.b16 %v1309
    %v3742 = vunpack.c.h.b16 %v1309
    %v3743 = vunpack.c.l.b16 %v1310
    %v3744 = vunpack.c.h.b16 %v1310
    %v3745 = vunpack.c.l.b16 %v1311
    %v3746 = vunpack.c.h.b16 %v1311
    %v3747 = vunpack.c.l.b16 %v1312
    %v3748 = vunpack.c.h.b16 %v1312
    %v3749 = vunpack.c.l.b16 %v1313
    %v3750 = vunpack.c.h.b16 %v1313
    %v3751 = vunpack.c.l.b16 %v1314
    %v3752 = vunpack.c.h.b16 %v1314
    %v3753 = vunpack.c.l.b16 %v1315
    %v3754 = vunpack.c.h.b16 %v1315
    %v3755 = vunpack.c.l.b16 %v1316
    %v3756 = vunpack.c.h.b16 %v1316
    %v3757 = vunpack.c.l.b16 %v1317
    %v3758 = vunpack.c.h.b16 %v1317
    %v3759 = vunpack.c.l.b16 %v1318
    %v3760 = vunpack.c.h.b16 %v1318
    %v3761 = vunpack.c.l.b16 %v1319
    %v3762 = vunpack.c.h.b16 %v1319
    %v3763 = vunpack.c.l.b16 %v1320
    %v3764 = vunpack.c.h.b16 %v1320
    %v3765 = vunpack.c.l.b16 %v1321
    %v3766 = vunpack.c.h.b16 %v1321
    %v3767 = vunpack.c.l.b16 %v1322
    %v3768 = vunpack.c.h.b16 %v1322
    %v3769 = vunpack.c.l.b16 %v1323
    %v3770 = vunpack.c.h.b16 %v1323
    %v3771 = vunpack.c.l.b16 %v1324
    %v3772 = vunpack.c.h.b16 %v1324
    %v3773 = vunpack.c.l.b16 %v1325
    %v3774 = vunpack.c.h.b16 %v1325
    %v3775 = vunpack.c.l.b16 %v1326
    %v3776 = vunpack.c.h.b16 %v1326
    %v3777 = vunpack.c.l.b16 %v1327
    %v3778 = vunpack.c.h.b16 %v1327
    %v3779 = vunpack.c.l.b16 %v1328
    %v3780 = vunpack.c.h.b16 %v1328
    %v3781 = vunpack.c.l.b16 %v1329
    %v3782 = vunpack.c.h.b16 %v1329
    %v3783 = vunpack.c.l.b16 %v1330
    %v3784 = vunpack.c.h.b16 %v1330
    %v3785 = vunpack.c.l.b16 %v1331
    %v3786 = vunpack.c.h.b16 %v1331
    %v3787 = vunpack.c.l.b16 %v1332
    %v3788 = vunpack.c.h.b16 %v1332
    %v3789 = vunpack.c.l.b16 %v1333
    %v3790 = vunpack.c.h.b16 %v1333
    %v3791 = vunpack.c.l.b16 %v1334
    %v3792 = vunpack.c.h.b16 %v1334
    %v3793 = vunpack.c.l.b16 %v1335
    %v3794 = vunpack.c.h.b16 %v1335
    %v3795 = vunpack.c.l.b16 %v1336
    %v3796 = vunpack.c.h.b16 %v1336
    %v3797 = vunpack.c.l.b16 %v1337
    %v3798 = vunpack.c.h.b16 %v1337
    %v3799 = vunpack.c.l.b16 %v1338
    %v3800 = vunpack.c.h.b16 %v1338
    %v3801 = vunpack.c.l.b16 %v1339
    %v3802 = vunpack.c.h.b16 %v1339
    %v3803 = vunpack.c.l.b16 %v1340
    %v3804 = vunpack.c.h.b16 %v1340
    %v3805 = vunpack.c.l.b16 %v1341
    %v3806 = vunpack.c.h.b16 %v1341
    %v3807 = vunpack.c.l.b16 %v1342
    %v3808 = vunpack.c.h.b16 %v1342
    %v3809 = vunpack.c.l.b16 %v1343
    %v3810 = vunpack.c.h.b16 %v1343
    %v3811 = vunpack.c.l.b16 %v1344
    %v3812 = vunpack.c.h.b16 %v1344
    %v3813 = vunpack.c.l.b16 %v1345
    %v3814 = vunpack.c.h.b16 %v1345
    %v3815 = vunpack.c.l.b16 %v1346
    %v3816 = vunpack.c.h.b16 %v1346
    %v3817 = vunpack.c.l.b16 %v1347
    %v3818 = vunpack.c.h.b16 %v1347
    %v3819 = vunpack.c.l.b16 %v1348
    %v3820 = vunpack.c.h.b16 %v1348
    %v3821 = vunpack.c.l.b16 %v1349
    %v3822 = vunpack.c.h.b16 %v1349
    %v3823 = vunpack.c.l.b16 %v1350
    %v3824 = vunpack.c.h.b16 %v1350
    %v3825 = vunpack.c.l.b16 %v1351
    %v3826 = vunpack.c.h.b16 %v1351
    %v3827 = vunpack.c.l.b16 %v1352
    %v3828 = vunpack.c.h.b16 %v1352
    %v3829 = vunpack.c.l.b16 %v1353
    %v3830 = vunpack.c.h.b16 %v1353
    %v3831 = vunpack.c.l.b16 %v1354
    %v3832 = vunpack.c.h.b16 %v1354
    %v3833 = vunpack.c.l.b16 %v1355
    %v3834 = vunpack.c.h.b16 %v1355
    %v3835 = vunpack.c.l.b16 %v1356
    %v3836 = vunpack.c.h.b16 %v1356
    %v3837 = vunpack.c.l.b16 %v1357
    %v3838 = vunpack.c.h.b16 %v1357
    %v3839 = vunpack.c.l.b16 %v1358
    %v3840 = vunpack.c.h.b16 %v1358
    %v3841 = vunpack.c.l.b16 %v1359
    %v3842 = vunpack.c.h.b16 %v1359
    %v3843 = vunpack.c.l.b16 %v1360
    %v3844 = vunpack.c.h.b16 %v1360
    %v3845 = vunpack.c.l.b16 %v1361
    %v3846 = vunpack.c.h.b16 %v1361
    %v3847 = vunpack.c.l.b16 %v1362
    %v3848 = vunpack.c.h.b16 %v1362
    %v3849 = vunpack.c.l.b16 %v1363
    %v3850 = vunpack.c.h.b16 %v1363
    %v3851 = vunpack.c.l.b16 %v1364
    %v3852 = vunpack.c.h.b16 %v1364
    %v3853 = vunpack.c.l.b16 %v1365
    %v3854 = vunpack.c.h.b16 %v1365
    %v3855 = vunpack.c.l.b16 %v1366
    %v3856 = vunpack.c.h.b16 %v1366
    %v3857 = vunpack.c.l.b16 %v1367
    %v3858 = vunpack.c.h.b16 %v1367
    %v3859 = vunpack.c.l.b16 %v1368
    %v3860 = vunpack.c.h.b16 %v1368
    %v3861 = vunpack.c.l.b16 %v1369
    %v3862 = vunpack.c.h.b16 %v1369
    %v3863 = vunpack.c.l.b16 %v1370
    %v3864 = vunpack.c.h.b16 %v1370
    %v3865 = vunpack.c.l.b16 %v1371
    %v3866 = vunpack.c.h.b16 %v1371
    %v3867 = vunpack.c.l.b16 %v1372
    %v3868 = vunpack.c.h.b16 %v1372
    %v3869 = vunpack.c.l.b16 %v1373
    %v3870 = vunpack.c.h.b16 %v1373
    %v3871 = vunpack.c.l.b16 %v1374
    %v3872 = vunpack.c.h.b16 %v1374
    %v3873 = vunpack.c.l.b16 %v1375
    %v3874 = vunpack.c.h.b16 %v1375
    %v3875 = vunpack.c.l.b16 %v1376
    %v3876 = vunpack.c.h.b16 %v1376
    %v3877 = vunpack.c.l.b16 %v1377
    %v3878 = vunpack.c.h.b16 %v1377
    %v3879 = vunpack.c.l.b16 %v1378
    %v3880 = vunpack.c.h.b16 %v1378
    %v3881 = vunpack.c.l.b16 %v1379
    %v3882 = vunpack.c.h.b16 %v1379
    %v3883 = vunpack.c.l.b16 %v1380
    %v3884 = vunpack.c.h.b16 %v1380
    %v3885 = vunpack.c.l.b16 %v1381
    %v3886 = vunpack.c.h.b16 %v1381
    %v3887 = vunpack.c.l.b16 %v1382
    %v3888 = vunpack.c.h.b16 %v1382
    %v3889 = vunpack.c.l.b16 %v1383
    %v3890 = vunpack.c.h.b16 %v1383
    %v3891 = vunpack.c.l.b16 %v1384
    %v3892 = vunpack.c.h.b16 %v1384
    %v3893 = vunpack.c.l.b16 %v1385
    %v3894 = vunpack.c.h.b16 %v1385
    %v3895 = vunpack.c.l.b16 %v1386
    %v3896 = vunpack.c.h.b16 %v1386
    %v3897 = vunpack.c.l.b16 %v1387
    %v3898 = vunpack.c.h.b16 %v1387
    %v3899 = vunpack.c.l.b16 %v1388
    %v3900 = vunpack.c.h.b16 %v1388
    %v3901 = vunpack.c.l.b16 %v1389
    %v3902 = vunpack.c.h.b16 %v1389
    %v3903 = vunpack.c.l.b16 %v1390
    %v3904 = vunpack.c.h.b16 %v1390
    %v3905 = vunpack.c.l.b16 %v1391
    %v3906 = vunpack.c.h.b16 %v1391
    %v3907 = vunpack.c.l.b16 %v1392
    %v3908 = vunpack.c.h.b16 %v1392
    %v3909 = vunpack.c.l.b16 %v1393
    %v3910 = vunpack.c.h.b16 %v1393
    %v3911 = vunpack.c.l.b16 %v1394
    %v3912 = vunpack.c.h.b16 %v1394
    %v3913 = vunpack.c.l.b16 %v1395
    %v3914 = vunpack.c.h.b16 %v1395
    %v3915 = vunpack.c.l.b16 %v1396
    %v3916 = vunpack.c.h.b16 %v1396
    %v3917 = vunpack.c.l.b16 %v1397
    %v3918 = vunpack.c.h.b16 %v1397
    %v3919 = vunpack.c.l.b16 %v1398
    %v3920 = vunpack.c.h.b16 %v1398
    %v3921 = vunpack.c.l.b16 %v1399
    %v3922 = vunpack.c.h.b16 %v1399
    %v3923 = vunpack.c.l.b16 %v1400
    %v3924 = vunpack.c.h.b16 %v1400
    %v3925 = vunpack.c.l.b16 %v1401
    %v3926 = vunpack.c.h.b16 %v1401
    %v3927 = vunpack.c.l.b16 %v1402
    %v3928 = vunpack.c.h.b16 %v1402
    %v3929 = vunpack.c.l.b16 %v1403
    %v3930 = vunpack.c.h.b16 %v1403
    %v3931 = vunpack.c.l.b16 %v1404
    %v3932 = vunpack.c.h.b16 %v1404
    %v3933 = vunpack.c.l.b16 %v1405
    %v3934 = vunpack.c.h.b16 %v1405
    %v3935 = vunpack.c.l.b16 %v1406
    %v3936 = vunpack.c.h.b16 %v1406
    %v3937 = vunpack.c.l.b16 %v1407
    %v3938 = vunpack.c.h.b16 %v1407
    %v3939 = vunpack.c.l.b16 %v1408
    %v3940 = vunpack.c.h.b16 %v1408
    %v3941 = vunpack.c.l.b16 %v1409
    %v3942 = vunpack.c.h.b16 %v1409
    %v3943 = vunpack.c.l.b16 %v1410
    %v3944 = vunpack.c.h.b16 %v1410
    %v3945 = vunpack.c.l.b16 %v1411
    %v3946 = vunpack.c.h.b16 %v1411
    %v3947 = vunpack.c.l.b16 %v1412
    %v3948 = vunpack.c.h.b16 %v1412
    %v3949 = vunpack.c.l.b16 %v1413
    %v3950 = vunpack.c.h.b16 %v1413
    %v3951 = vunpack.c.l.b16 %v1414
    %v3952 = vunpack.c.h.b16 %v1414
    %v3953 = vunpack.c.l.b16 %v1415
    %v3954 = vunpack.c.h.b16 %v1415
    %v3955 = vunpack.c.l.b16 %v1416
    %v3956 = vunpack.c.h.b16 %v1416
    %v3957 = vunpack.c.l.b16 %v1417
    %v3958 = vunpack.c.h.b16 %v1417
    %v3959 = vunpack.c.l.b16 %v1418
    %v3960 = vunpack.c.h.b16 %v1418
    %v3961 = vunpack.c.l.b16 %v1419
    %v3962 = vunpack.c.h.b16 %v1419
    %v3963 = vunpack.c.l.b16 %v1420
    %v3964 = vunpack.c.h.b16 %v1420
    %v3965 = vunpack.c.l.b16 %v1421
    %v3966 = vunpack.c.h.b16 %v1421
    %v3967 = vunpack.c.l.b16 %v1422
    %v3968 = vunpack.c.h.b16 %v1422
    %v3969 = vunpack.c.l.b16 %v1423
    %v3970 = vunpack.c.h.b16 %v1423
    %v3971 = vunpack.c.l.b16 %v1424
    %v3972 = vunpack.c.h.b16 %v1424
    %v3973 = vunpack.c.l.b16 %v1425
    %v3974 = vunpack.c.h.b16 %v1425
    %v3975 = vunpack.c.l.b16 %v1426
    %v3976 = vunpack.c.h.b16 %v1426
    %v3977 = vunpack.c.l.b16 %v1427
    %v3978 = vunpack.c.h.b16 %v1427
    %v3979 = vunpack.c.l.b16 %v1428
    %v3980 = vunpack.c.h.b16 %v1428
    %v3981 = vunpack.c.l.b16 %v1429
    %v3982 = vunpack.c.h.b16 %v1429
    %v3983 = vunpack.c.l.b16 %v1430
    %v3984 = vunpack.c.h.b16 %v1430
    %v3985 = vunpack.c.l.b16 %v1431
    %v3986 = vunpack.c.h.b16 %v1431
    %v3987 = vunpack.c.l.b16 %v1432
    %v3988 = vunpack.c.h.b16 %v1432
    %v3989 = vunpack.c.l.b16 %v1433
    %v3990 = vunpack.c.h.b16 %v1433
    %v3991 = vunpack.c.l.b16 %v1434
    %v3992 = vunpack.c.h.b16 %v1434
    %v3993 = vunpack.c.l.b16 %v1435
    %v3994 = vunpack.c.h.b16 %v1435
    %v3995 = vunpack.c.l.b16 %v1436
    %v3996 = vunpack.c.h.b16 %v1436
    %v3997 = vunpack.c.l.b16 %v1437
    %v3998 = vunpack.c.h.b16 %v1437
    %v3999 = vunpack.c.l.b16 %v1438
    %v4000 = vunpack.c.h.b16 %v1438
    %v4001 = vunpack.c.l.b16 %v1439
    %v4002 = vunpack.c.h.b16 %v1439
    %v4003 = vunpack.c.l.b16 %v1440
    %v4004 = vunpack.c.h.b16 %v1440
    %v4005 = vunpack.c.l.b16 %v1441
    %v4006 = vunpack.c.h.b16 %v1441
    %v4007 = vunpack.c.l.b16 %v1442
    %v4008 = vunpack.c.h.b16 %v1442
    %v4009 = vunpack.c.l.b16 %v1443
    %v4010 = vunpack.c.h.b16 %v1443
    %v4011 = vunpack.c.l.b16 %v1444
    %v4012 = vunpack.c.h.b16 %v1444
    %v4013 = vunpack.c.l.b16 %v1445
    %v4014 = vunpack.c.h.b16 %v1445
    %v4015 = vunpack.c.l.b16 %v1446
    %v4016 = vunpack.c.h.b16 %v1446
    %v4017 = vunpack.c.l.b16 %v1447
    %v4018 = vunpack.c.h.b16 %v1447
    %v4019 = vunpack.c.l.b16 %v1448
    %v4020 = vunpack.c.h.b16 %v1448
    %v4021 = vunpack.c.l.b16 %v1449
    %v4022 = vunpack.c.h.b16 %v1449
    %v4023 = vunpack.c.l.b16 %v1450
    %v4024 = vunpack.c.h.b16 %v1450
    %v4025 = vunpack.c.l.b16 %v1451
    %v4026 = vunpack.c.h.b16 %v1451
    %v4027 = vunpack.c.l.b16 %v1452
    %v4028 = vunpack.c.h.b16 %v1452
    %v4029 = vunpack.c.l.b16 %v1453
    %v4030 = vunpack.c.h.b16 %v1453
    %v4031 = vunpack.c.l.b16 %v1454
    %v4032 = vunpack.c.h.b16 %v1454
    %v4033 = vunpack.c.l.b16 %v1455
    %v4034 = vunpack.c.h.b16 %v1455
    %v4035 = vunpack.c.l.b16 %v1456
    %v4036 = vunpack.c.h.b16 %v1456
    %v4037 = vunpack.c.l.b16 %v1457
    %v4038 = vunpack.c.h.b16 %v1457
    %v4039 = vunpack.c.l.b16 %v1458
    %v4040 = vunpack.c.h.b16 %v1458
    %v4041 = vunpack.c.l.b16 %v1459
    %v4042 = vunpack.c.h.b16 %v1459
    %v4043 = vunpack.c.l.b16 %v1460
    %v4044 = vunpack.c.h.b16 %v1460
    %v4045 = vunpack.c.l.b16 %v1461
    %v4046 = vunpack.c.h.b16 %v1461
    %v4047 = vunpack.c.l.b16 %v1462
    %v4048 = vunpack.c.h.b16 %v1462
    %v4049 = vunpack.c.l.b16 %v1463
    %v4050 = vunpack.c.h.b16 %v1463
    %v4051 = vunpack.c.l.b16 %v1464
    %v4052 = vunpack.c.h.b16 %v1464
    %v4053 = vunpack.c.l.b16 %v1465
    %v4054 = vunpack.c.h.b16 %v1465
    %v4055 = vunpack.c.l.b16 %v1466
    %v4056 = vunpack.c.h.b16 %v1466
    %v4057 = vunpack.c.l.b16 %v1467
    %v4058 = vunpack.c.h.b16 %v1467
    %v4059 = vunpack.c.l.b16 %v1468
    %v4060 = vunpack.c.h.b16 %v1468
    %v4061 = vunpack.c.l.b16 %v1469
    %v4062 = vunpack.c.h.b16 %v1469
    %v4063 = vunpack.c.l.b16 %v1470
    %v4064 = vunpack.c.h.b16 %v1470
    %v4065 = vunpack.c.l.b16 %v1471
    %v4066 = vunpack.c.h.b16 %v1471
    %v4067 = vunpack.c.l.b16 %v1472
    %v4068 = vunpack.c.h.b16 %v1472
    %v4069 = vunpack.c.l.b16 %v1473
    %v4070 = vunpack.c.h.b16 %v1473
    %v4071 = vunpack.c.l.b16 %v1474
    %v4072 = vunpack.c.h.b16 %v1474
    %v4073 = vunpack.c.l.b16 %v1475
    %v4074 = vunpack.c.h.b16 %v1475
    %v4075 = vunpack.c.l.b16 %v1476
    %v4076 = vunpack.c.h.b16 %v1476
    %v4077 = vunpack.c.l.b16 %v1477
    %v4078 = vunpack.c.h.b16 %v1477
    %v4079 = vunpack.c.l.b16 %v1478
    %v4080 = vunpack.c.h.b16 %v1478
    %v4081 = vunpack.c.l.b16 %v1479
    %v4082 = vunpack.c.h.b16 %v1479
    %v4083 = vunpack.c.l.b16 %v1480
    %v4084 = vunpack.c.h.b16 %v1480
    %v4085 = vunpack.c.l.b16 %v1481
    %v4086 = vunpack.c.h.b16 %v1481
    %v4087 = vunpack.c.l.b16 %v1482
    %v4088 = vunpack.c.h.b16 %v1482
    %v4089 = vunpack.c.l.b16 %v1483
    %v4090 = vunpack.c.h.b16 %v1483
    %v4091 = vunpack.c.l.b16 %v1484
    %v4092 = vunpack.c.h.b16 %v1484
    %v4093 = vunpack.c.l.b16 %v1485
    %v4094 = vunpack.c.h.b16 %v1485
    %v4095 = vunpack.c.l.b16 %v1486
    %v4096 = vunpack.c.h.b16 %v1486
    %v4097 = vunpack.c.l.b16 %v1487
    %v4098 = vunpack.c.h.b16 %v1487
    %v4099 = vunpack.c.l.b16 %v1488
    %v4100 = vunpack.c.h.b16 %v1488
    %v4101 = vunpack.c.l.b16 %v1489
    %v4102 = vunpack.c.h.b16 %v1489
    %v4103 = vunpack.c.l.b16 %v1490
    %v4104 = vunpack.c.h.b16 %v1490
    %v4105 = vunpack.c.l.b16 %v1491
    %v4106 = vunpack.c.h.b16 %v1491
    %v4107 = vunpack.c.l.b16 %v1492
    %v4108 = vunpack.c.h.b16 %v1492
    %v4109 = vunpack.c.l.b16 %v1493
    %v4110 = vunpack.c.h.b16 %v1493
    %v4111 = vunpack.c.l.b16 %v1494
    %v4112 = vunpack.c.h.b16 %v1494
    %v4113 = vunpack.c.l.b16 %v1495
    %v4114 = vunpack.c.h.b16 %v1495
    %v4115 = vunpack.c.l.b16 %v1496
    %v4116 = vunpack.c.h.b16 %v1496
    %v4117 = vunpack.c.l.b16 %v1497
    %v4118 = vunpack.c.h.b16 %v1497
    %v4119 = vunpack.c.l.b16 %v1498
    %v4120 = vunpack.c.h.b16 %v1498
    %v4121 = vunpack.c.l.b16 %v1499
    %v4122 = vunpack.c.h.b16 %v1499
    %v4123 = vunpack.c.l.b16 %v1500
    %v4124 = vunpack.c.h.b16 %v1500
    %v4125 = vunpack.c.l.b16 %v1501
    %v4126 = vunpack.c.h.b16 %v1501
    %v4127 = vunpack.c.l.b16 %v1502
    %v4128 = vunpack.c.h.b16 %v1502
    %v4129 = vunpack.c.l.b16 %v1503
    %v4130 = vunpack.c.h.b16 %v1503
    %v4131 = vunpack.c.l.b16 %v1504
    %v4132 = vunpack.c.h.b16 %v1504
    %v4133 = vunpack.c.l.b16 %v1505
    %v4134 = vunpack.c.h.b16 %v1505
    %v4135 = vunpack.c.l.b16 %v1506
    %v4136 = vunpack.c.h.b16 %v1506
    %v4137 = vunpack.c.l.b16 %v1507
    %v4138 = vunpack.c.h.b16 %v1507
    %v4139 = vunpack.c.l.b16 %v1508
    %v4140 = vunpack.c.h.b16 %v1508
    %v4141 = vunpack.c.l.b16 %v1509
    %v4142 = vunpack.c.h.b16 %v1509
    %v4143 = vunpack.c.l.b16 %v1510
    %v4144 = vunpack.c.h.b16 %v1510
    %v4145 = vunpack.c.l.b16 %v1511
    %v4146 = vunpack.c.h.b16 %v1511
    %v4147 = vunpack.c.l.b16 %v1512
    %v4148 = vunpack.c.h.b16 %v1512
    %v4149 = vunpack.c.l.b16 %v1513
    %v4150 = vunpack.c.h.b16 %v1513
    %v4151 = vunpack.c.l.b16 %v1514
    %v4152 = vunpack.c.h.b16 %v1514
    %v4153 = vunpack.c.l.b16 %v1515
    %v4154 = vunpack.c.h.b16 %v1515
    %v4155 = vunpack.c.l.b16 %v1516
    %v4156 = vunpack.c.h.b16 %v1516
    %v4157 = vunpack.c.l.b16 %v1517
    %v4158 = vunpack.c.h.b16 %v1517
    %v4159 = vunpack.c.l.b16 %v1518
    %v4160 = vunpack.c.h.b16 %v1518
    %v4161 = vunpack.c.l.b16 %v1519
    %v4162 = vunpack.c.h.b16 %v1519
    %v4163 = vunpack.c.l.b16 %v1520
    %v4164 = vunpack.c.h.b16 %v1520
    %v4165 = vunpack.c.l.b16 %v1521
    %v4166 = vunpack.c.h.b16 %v1521
    %v4167 = vunpack.c.l.b16 %v1522
    %v4168 = vunpack.c.h.b16 %v1522
    %v4169 = vunpack.c.l.b16 %v1523
    %v4170 = vunpack.c.h.b16 %v1523
    %v4171 = vunpack.c.l.b16 %v1524
    %v4172 = vunpack.c.h.b16 %v1524
    %v4173 = vunpack.c.l.b16 %v1525
    %v4174 = vunpack.c.h.b16 %v1525
    %v4175 = vunpack.c.l.b16 %v1526
    %v4176 = vunpack.c.h.b16 %v1526
    %v4177 = vunpack.c.l.b16 %v1527
    %v4178 = vunpack.c.h.b16 %v1527
    %v4179 = vunpack.c.l.b16 %v1528
    %v4180 = vunpack.c.h.b16 %v1528
    %v4181 = vunpack.c.l.b16 %v1529
    %v4182 = vunpack.c.h.b16 %v1529
    %v4183 = vunpack.c.l.b16 %v1530
    %v4184 = vunpack.c.h.b16 %v1530
    %v4185 = vunpack.c.l.b16 %v1531
    %v4186 = vunpack.c.h.b16 %v1531
    %v4187 = vunpack.c.l.b16 %v1532
    %v4188 = vunpack.c.h.b16 %v1532
    %v4189 = vunpack.c.l.b16 %v1533
    %v4190 = vunpack.c.h.b16 %v1533
    %v4191 = vunpack.c.l.b16 %v1534
    %v4192 = vunpack.c.h.b16 %v1534
    %v4193 = vunpack.c.l.b16 %v1535
    %v4194 = vunpack.c.h.b16 %v1535
    %v4195 = vunpack.c.l.b16 %v1536
    %v4196 = vunpack.c.h.b16 %v1536
    %v4197 = vunpack.c.l.b16 %v1537
    %v4198 = vunpack.c.h.b16 %v1537
    %v4199 = vunpack.c.l.b16 %v1538
    %v4200 = vunpack.c.h.b16 %v1538
    %v4201 = vunpack.c.l.b16 %v1539
    %v4202 = vunpack.c.h.b16 %v1539
    %v4203 = vunpack.c.l.b16 %v1540
    %v4204 = vunpack.c.h.b16 %v1540
    %v4205 = vunpack.c.l.b16 %v1541
    %v4206 = vunpack.c.h.b16 %v1541
    %v4207 = vunpack.c.l.b16 %v1542
    %v4208 = vunpack.c.h.b16 %v1542
    %v4209 = vunpack.c.l.b16 %v1543
    %v4210 = vunpack.c.h.b16 %v1543
    %v4211 = vunpack.c.l.b16 %v1544
    %v4212 = vunpack.c.h.b16 %v1544
    %v4213 = vunpack.c.l.b16 %v1545
    %v4214 = vunpack.c.h.b16 %v1545
    %v4215 = vunpack.c.l.b16 %v1546
    %v4216 = vunpack.c.h.b16 %v1546
    %v4217 = vunpack.c.l.b16 %v1547
    %v4218 = vunpack.c.h.b16 %v1547
    %v4219 = vunpack.c.l.b16 %v1548
    %v4220 = vunpack.c.h.b16 %v1548
    %v4221 = vunpack.c.l.b16 %v1549
    %v4222 = vunpack.c.h.b16 %v1549
    %v4223 = vunpack.c.l.b16 %v1550
    %v4224 = vunpack.c.h.b16 %v1550
    %v4225 = vunpack.c.l.b16 %v1551
    %v4226 = vunpack.c.h.b16 %v1551
    %v4227 = vunpack.c.l.b16 %v1552
    %v4228 = vunpack.c.h.b16 %v1552
    %v4229 = vunpack.c.l.b16 %v1553
    %v4230 = vunpack.c.h.b16 %v1553
    %v4231 = vunpack.c.l.b16 %v1554
    %v4232 = vunpack.c.h.b16 %v1554
    %v4233 = vunpack.c.l.b16 %v1555
    %v4234 = vunpack.c.h.b16 %v1555
    %v4235 = vunpack.c.l.b16 %v1556
    %v4236 = vunpack.c.h.b16 %v1556
    %v4237 = vunpack.c.l.b16 %v1557
    %v4238 = vunpack.c.h.b16 %v1557
    %v4239 = vunpack.c.l.b16 %v1558
    %v4240 = vunpack.c.h.b16 %v1558
    %v4241 = vunpack.c.l.b16 %v1559
    %v4242 = vunpack.c.h.b16 %v1559
    %v4243 = vunpack.c.l.b16 %v1560
    %v4244 = vunpack.c.h.b16 %v1560
    %v4245 = vunpack.c.l.b16 %v1561
    %v4246 = vunpack.c.h.b16 %v1561
    %v4247 = vunpack.c.l.b16 %v1562
    %v4248 = vunpack.c.h.b16 %v1562
    %v4249 = vunpack.c.l.b16 %v1563
    %v4250 = vunpack.c.h.b16 %v1563
    %v4251 = vunpack.c.l.b16 %v1564
    %v4252 = vunpack.c.h.b16 %v1564
    %v4253 = vunpack.c.l.b16 %v1565
    %v4254 = vunpack.c.h.b16 %v1565
    %v4255 = vunpack.c.l.b16 %v1566
    %v4256 = vunpack.c.h.b16 %v1566
    %v4257 = vunpack.c.l.b16 %v1567
    %v4258 = vunpack.c.h.b16 %v1567
    %v4259 = vunpack.c.l.b16 %v1568
    %v4260 = vunpack.c.h.b16 %v1568
    %v4261 = vunpack.c.l.b16 %v1569
    %v4262 = vunpack.c.h.b16 %v1569
    %v4263 = vunpack.c.l.b16 %v1570
    %v4264 = vunpack.c.h.b16 %v1570
    %v4265 = vunpack.c.l.b16 %v1571
    %v4266 = vunpack.c.h.b16 %v1571
    %v4267 = vunpack.c.l.b16 %v1572
    %v4268 = vunpack.c.h.b16 %v1572
    %v4269 = vunpack.c.l.b16 %v1573
    %v4270 = vunpack.c.h.b16 %v1573
    %v4271 = vunpack.c.l.b16 %v1574
    %v4272 = vunpack.c.h.b16 %v1574
    %v4273 = vunpack.c.l.b16 %v1575
    %v4274 = vunpack.c.h.b16 %v1575
    %v4275 = vunpack.c.l.b16 %v1576
    %v4276 = vunpack.c.h.b16 %v1576
    %v4277 = vunpack.c.l.b16 %v1577
    %v4278 = vunpack.c.h.b16 %v1577
    %v4279 = vunpack.c.l.b16 %v1578
    %v4280 = vunpack.c.h.b16 %v1578
    %v4281 = vunpack.c.l.b16 %v1579
    %v4282 = vunpack.c.h.b16 %v1579
    %v4283 = vunpack.c.l.b16 %v1580
    %v4284 = vunpack.c.h.b16 %v1580
    %v4285 = vunpack.c.l.b16 %v1581
    %v4286 = vunpack.c.h.b16 %v1581
    %v4287 = vunpack.c.l.b16 %v1582
    %v4288 = vunpack.c.h.b16 %v1582
    %v4289 = vunpack.c.l.b16 %v1583
    %v4290 = vunpack.c.h.b16 %v1583
    %v4291 = vunpack.c.l.b16 %v1584
    %v4292 = vunpack.c.h.b16 %v1584
    %v4293 = vunpack.c.l.b16 %v1585
    %v4294 = vunpack.c.h.b16 %v1585
    %v4295 = vunpack.c.l.b16 %v1586
    %v4296 = vunpack.c.h.b16 %v1586
    %v4297 = vunpack.c.l.b16 %v1587
    %v4298 = vunpack.c.h.b16 %v1587
    %v4299 = vunpack.c.l.b16 %v1588
    %v4300 = vunpack.c.h.b16 %v1588
    %v4301 = vunpack.c.l.b16 %v1589
    %v4302 = vunpack.c.h.b16 %v1589
    %v4303 = vunpack.c.l.b16 %v1590
    %v4304 = vunpack.c.h.b16 %v1590
    %v4305 = vunpack.c.l.b16 %v1591
    %v4306 = vunpack.c.h.b16 %v1591
    %v4307 = vunpack.c.l.b16 %v1592
    %v4308 = vunpack.c.h.b16 %v1592
    %v4309 = vunpack.c.l.b16 %v1593
    %v4310 = vunpack.c.h.b16 %v1593
    %v4311 = vunpack.c.l.b16 %v1594
    %v4312 = vunpack.c.h.b16 %v1594
    %v4313 = vunpack.c.l.b16 %v1595
    %v4314 = vunpack.c.h.b16 %v1595
    %v4315 = vunpack.c.l.b16 %v1596
    %v4316 = vunpack.c.h.b16 %v1596
    %v4317 = vunpack.c.l.b16 %v1597
    %v4318 = vunpack.c.h.b16 %v1597
    %v4319 = vunpack.c.l.b16 %v1598
    %v4320 = vunpack.c.h.b16 %v1598
    %v4321 = vunpack.c.l.b16 %v1599
    %v4322 = vunpack.c.h.b16 %v1599
    %v4323 = vunpack.c.l.b16 %v1600
    %v4324 = vunpack.c.h.b16 %v1600
    %v4325 = vunpack.c.l.b16 %v1601
    %v4326 = vunpack.c.h.b16 %v1601
    %v4327 = vunpack.c.l.b16 %v1602
    %v4328 = vunpack.c.h.b16 %v1602
    %v4329 = vunpack.c.l.b16 %v1603
    %v4330 = vunpack.c.h.b16 %v1603
    %v4331 = vunpack.c.l.b16 %v1604
    %v4332 = vunpack.c.h.b16 %v1604
    %v4333 = vunpack.c.l.b16 %v1605
    %v4334 = vunpack.c.h.b16 %v1605
    %v4335 = vunpack.c.l.b16 %v1606
    %v4336 = vunpack.c.h.b16 %v1606
    %v4337 = vunpack.c.l.b16 %v1607
    %v4338 = vunpack.c.h.b16 %v1607
    %v4339 = vunpack.c.l.b16 %v1608
    %v4340 = vunpack.c.h.b16 %v1608
    %v4341 = vunpack.c.l.b16 %v1609
    %v4342 = vunpack.c.h.b16 %v1609
    %v4343 = vunpack.c.l.b16 %v1610
    %v4344 = vunpack.c.h.b16 %v1610
    %v4345 = vunpack.c.l.b16 %v1611
    %v4346 = vunpack.c.h.b16 %v1611
    %v4347 = vunpack.c.l.b16 %v1612
    %v4348 = vunpack.c.h.b16 %v1612
    %v4349 = vunpack.c.l.b16 %v1613
    %v4350 = vunpack.c.h.b16 %v1613
    %v4351 = vunpack.c.l.b16 %v1614
    %v4352 = vunpack.c.h.b16 %v1614
    %v4353 = vunpack.c.l.b16 %v1615
    %v4354 = vunpack.c.h.b16 %v1615
    %v4355 = vunpack.c.l.b16 %v1616
    %v4356 = vunpack.c.h.b16 %v1616
    %v4357 = vunpack.c.l.b16 %v1617
    %v4358 = vunpack.c.h.b16 %v1617
    %v4359 = vunpack.c.l.b16 %v1618
    %v4360 = vunpack.c.h.b16 %v1618
    %v4361 = vunpack.c.l.b16 %v1619
    %v4362 = vunpack.c.h.b16 %v1619
    %v4363 = vunpack.c.l.b16 %v1620
    %v4364 = vunpack.c.h.b16 %v1620
    %v4365 = vunpack.c.l.b16 %v1621
    %v4366 = vunpack.c.h.b16 %v1621
    %v4367 = vunpack.c.l.b16 %v1622
    %v4368 = vunpack.c.h.b16 %v1622
    %v4369 = vunpack.c.l.b16 %v1623
    %v4370 = vunpack.c.h.b16 %v1623
    %v4371 = vunpack.c.l.b16 %v1624
    %v4372 = vunpack.c.h.b16 %v1624
    %v4373 = vunpack.c.l.b16 %v1625
    %v4374 = vunpack.c.h.b16 %v1625
    %v4375 = vunpack.c.l.b16 %v1626
    %v4376 = vunpack.c.h.b16 %v1626
    %v4377 = vunpack.c.l.b16 %v1627
    %v4378 = vunpack.c.h.b16 %v1627
    %v4379 = vunpack.c.l.b16 %v1628
    %v4380 = vunpack.c.h.b16 %v1628
    %v4381 = vunpack.c.l.b16 %v1629
    %v4382 = vunpack.c.h.b16 %v1629
    %v4383 = vunpack.c.l.b16 %v1630
    %v4384 = vunpack.c.h.b16 %v1630
    %v4385 = vunpack.c.l.b16 %v1631
    %v4386 = vunpack.c.h.b16 %v1631
    %v4387 = vunpack.c.l.b16 %v1632
    %v4388 = vunpack.c.h.b16 %v1632
    %v4389 = vunpack.c.l.b16 %v1633
    %v4390 = vunpack.c.h.b16 %v1633
    %v4391 = vunpack.c.l.b16 %v1634
    %v4392 = vunpack.c.h.b16 %v1634
    %v4393 = vunpack.c.l.b16 %v1635
    %v4394 = vunpack.c.h.b16 %v1635
    %v4395 = vunpack.c.l.b16 %v1636
    %v4396 = vunpack.c.h.b16 %v1636
    %v4397 = vunpack.c.l.b16 %v1637
    %v4398 = vunpack.c.h.b16 %v1637
    %v4399 = vunpack.c.l.b16 %v1638
    %v4400 = vunpack.c.h.b16 %v1638
    %v4401 = vunpack.c.l.b16 %v1639
    %v4402 = vunpack.c.h.b16 %v1639
    %v4403 = vunpack.c.l.b16 %v1640
    %v4404 = vunpack.c.h.b16 %v1640
    %v4405 = vunpack.c.l.b16 %v1641
    %v4406 = vunpack.c.h.b16 %v1641
    %v4407 = vunpack.c.l.b16 %v1642
    %v4408 = vunpack.c.h.b16 %v1642
    %v4409 = vunpack.c.l.b16 %v1643
    %v4410 = vunpack.c.h.b16 %v1643
    %v4411 = vunpack.c.l.b16 %v1644
    %v4412 = vunpack.c.h.b16 %v1644
    %v4413 = vunpack.c.l.b16 %v1645
    %v4414 = vunpack.c.h.b16 %v1645
    %v4415 = vunpack.c.l.b16 %v1646
    %v4416 = vunpack.c.h.b16 %v1646
    %v4417 = vunpack.c.l.b16 %v1647
    %v4418 = vunpack.c.h.b16 %v1647
    %v4419 = vunpack.c.l.b16 %v1648
    %v4420 = vunpack.c.h.b16 %v1648
    %v4421 = vunpack.c.l.b16 %v1649
    %v4422 = vunpack.c.h.b16 %v1649
    %v4423 = vunpack.c.l.b16 %v1650
    %v4424 = vunpack.c.h.b16 %v1650
    %v4425 = vunpack.c.l.b16 %v1651
    %v4426 = vunpack.c.h.b16 %v1651
    %v4427 = vunpack.c.l.b16 %v1652
    %v4428 = vunpack.c.h.b16 %v1652
    %v4429 = vunpack.c.l.b16 %v1653
    %v4430 = vunpack.c.h.b16 %v1653
    %v4431 = vunpack.c.l.b16 %v1654
    %v4432 = vunpack.c.h.b16 %v1654
    %v4433 = vunpack.c.l.b16 %v1655
    %v4434 = vunpack.c.h.b16 %v1655
    %v4435 = vunpack.c.l.b16 %v1656
    %v4436 = vunpack.c.h.b16 %v1656
    %v4437 = vunpack.c.l.b16 %v1657
    %v4438 = vunpack.c.h.b16 %v1657
    %v4439 = vunpack.c.l.b16 %v1658
    %v4440 = vunpack.c.h.b16 %v1658
    %v4441 = vunpack.c.l.b16 %v1659
    %v4442 = vunpack.c.h.b16 %v1659
    %v4443 = vunpack.c.l.b16 %v1660
    %v4444 = vunpack.c.h.b16 %v1660
    %v4445 = vunpack.c.l.b16 %v1661
    %v4446 = vunpack.c.h.b16 %v1661
    %v4447 = vunpack.c.l.b16 %v1662
    %v4448 = vunpack.c.h.b16 %v1662
    %v4449 = vunpack.c.l.b16 %v1663
    %v4450 = vunpack.c.h.b16 %v1663
    %v4451 = vunpack.c.l.b16 %v1664
    %v4452 = vunpack.c.h.b16 %v1664
    %v4453 = vunpack.c.l.b16 %v1665
    %v4454 = vunpack.c.h.b16 %v1665
    %v4455 = vunpack.c.l.b16 %v1666
    %v4456 = vunpack.c.h.b16 %v1666
    %v4457 = vunpack.c.l.b16 %v1667
    %v4458 = vunpack.c.h.b16 %v1667
    %v4459 = vunpack.c.l.b16 %v1668
    %v4460 = vunpack.c.h.b16 %v1668
    %v4461 = vunpack.c.l.b16 %v1669
    %v4462 = vunpack.c.h.b16 %v1669
    %v4463 = vunpack.c.l.b16 %v1670
    %v4464 = vunpack.c.h.b16 %v1670
    %v4465 = vunpack.c.l.b16 %v1671
    %v4466 = vunpack.c.h.b16 %v1671
    %v4467 = vunpack.c.l.b16 %v1672
    %v4468 = vunpack.c.h.b16 %v1672
    %v4469 = vunpack.c.l.b16 %v1673
    %v4470 = vunpack.c.h.b16 %v1673
    %v4471 = vunpack.c.l.b16 %v1674
    %v4472 = vunpack.c.h.b16 %v1674
    %v4473 = vunpack.c.l.b16 %v1675
    %v4474 = vunpack.c.h.b16 %v1675
    %v4475 = vunpack.c.l.b16 %v1676
    %v4476 = vunpack.c.h.b16 %v1676
    %v4477 = vunpack.c.l.b16 %v1677
    %v4478 = vunpack.c.h.b16 %v1677
    %v4479 = vunpack.c.l.b16 %v1678
    %v4480 = vunpack.c.h.b16 %v1678
    %v4481 = vunpack.c.l.b16 %v1679
    %v4482 = vunpack.c.h.b16 %v1679
    %v4483 = vunpack.c.l.b16 %v1680
    %v4484 = vunpack.c.h.b16 %v1680
    %v4485 = vunpack.c.l.b16 %v1681
    %v4486 = vunpack.c.h.b16 %v1681
    %v4487 = vunpack.c.l.b16 %v1682
    %v4488 = vunpack.c.h.b16 %v1682
    %v4489 = vunpack.c.l.b16 %v1683
    %v4490 = vunpack.c.h.b16 %v1683
    %v4491 = vunpack.c.l.b16 %v1684
    %v4492 = vunpack.c.h.b16 %v1684
    %v4493 = vunpack.c.l.b16 %v1685
    %v4494 = vunpack.c.h.b16 %v1685
    %v4495 = vunpack.c.l.b16 %v1686
    %v4496 = vunpack.c.h.b16 %v1686
    %v4497 = vunpack.c.l.b16 %v1687
    %v4498 = vunpack.c.h.b16 %v1687
    %v4499 = vunpack.c.l.b16 %v1688
    %v4500 = vunpack.c.h.b16 %v1688
    %v4501 = vunpack.c.l.b16 %v1689
    %v4502 = vunpack.c.h.b16 %v1689
    %v4503 = vunpack.c.l.b16 %v1690
    %v4504 = vunpack.c.h.b16 %v1690
    %v4505 = vunpack.c.l.b16 %v1691
    %v4506 = vunpack.c.h.b16 %v1691
    %v4507 = vunpack.c.l.b16 %v1692
    %v4508 = vunpack.c.h.b16 %v1692
    %v4509 = vunpack.c.l.b16 %v1693
    %v4510 = vunpack.c.h.b16 %v1693
    %v4511 = vunpack.c.l.b16 %v1694
    %v4512 = vunpack.c.h.b16 %v1694
    %v4513 = vunpack.c.l.b16 %v1695
    %v4514 = vunpack.c.h.b16 %v1695
    %v4515 = vunpack.c.l.b16 %v1696
    %v4516 = vunpack.c.h.b16 %v1696
    %v4517 = vunpack.c.l.b16 %v1697
    %v4518 = vunpack.c.h.b16 %v1697
    %v4519 = vunpack.c.l.b16 %v1698
    %v4520 = vunpack.c.h.b16 %v1698
    %v4521 = vunpack.c.l.b16 %v1699
    %v4522 = vunpack.c.h.b16 %v1699
    %v4523 = vunpack.c.l.b16 %v1700
    %v4524 = vunpack.c.h.b16 %v1700
    %v4525 = vunpack.c.l.b16 %v1701
    %v4526 = vunpack.c.h.b16 %v1701
    %v4527 = vunpack.c.l.b16 %v1702
    %v4528 = vunpack.c.h.b16 %v1702
    %v4529 = vunpack.c.l.b16 %v1703
    %v4530 = vunpack.c.h.b16 %v1703
    %v4531 = vunpack.c.l.b16 %v1704
    %v4532 = vunpack.c.h.b16 %v1704
    %v4533 = vunpack.c.l.b16 %v1705
    %v4534 = vunpack.c.h.b16 %v1705
    %v4535 = vunpack.c.l.b16 %v1706
    %v4536 = vunpack.c.h.b16 %v1706
    %v4537 = vunpack.c.l.b16 %v1707
    %v4538 = vunpack.c.h.b16 %v1707
    %v4539 = vunpack.c.l.b16 %v1708
    %v4540 = vunpack.c.h.b16 %v1708
    %v4541 = vunpack.c.l.b16 %v1709
    %v4542 = vunpack.c.h.b16 %v1709
    %v4543 = vunpack.c.l.b16 %v1710
    %v4544 = vunpack.c.h.b16 %v1710
    %v4545 = vunpack.c.l.b16 %v1711
    %v4546 = vunpack.c.h.b16 %v1711
    %v4547 = vunpack.c.l.b16 %v1712
    %v4548 = vunpack.c.h.b16 %v1712
    %v4549 = vunpack.c.l.b16 %v1713
    %v4550 = vunpack.c.h.b16 %v1713
    %v4551 = vunpack.c.l.b16 %v1714
    %v4552 = vunpack.c.h.b16 %v1714
    %v4553 = vunpack.c.l.b16 %v1715
    %v4554 = vunpack.c.h.b16 %v1715
    %v4555 = vunpack.c.l.b16 %v1716
    %v4556 = vunpack.c.h.b16 %v1716
    %v4557 = vunpack.c.l.b16 %v1717
    %v4558 = vunpack.c.h.b16 %v1717
    %v4559 = vunpack.c.l.b16 %v1718
    %v4560 = vunpack.c.h.b16 %v1718
    %v4561 = vunpack.c.l.b16 %v1719
    %v4562 = vunpack.c.h.b16 %v1719
    %v4563 = vunpack.c.l.b16 %v1720
    %v4564 = vunpack.c.h.b16 %v1720
    %v4565 = vunpack.c.l.b16 %v1721
    %v4566 = vunpack.c.h.b16 %v1721
    %v4567 = vunpack.c.l.b16 %v1722
    %v4568 = vunpack.c.h.b16 %v1722
    %v4569 = vunpack.c.l.b16 %v1723
    %v4570 = vunpack.c.h.b16 %v1723
    %v4571 = vunpack.c.l.b16 %v1724
    %v4572 = vunpack.c.h.b16 %v1724
    %v4573 = vunpack.c.l.b16 %v1725
    %v4574 = vunpack.c.h.b16 %v1725
    %v4575 = vunpack.c.l.b16 %v1726
    %v4576 = vunpack.c.h.b16 %v1726
    %v4577 = vunpack.c.l.b16 %v1727
    %v4578 = vunpack.c.h.b16 %v1727
    %v4579 = vunpack.c.l.b16 %v1728
    %v4580 = vunpack.c.h.b16 %v1728
    %v4581 = vunpack.c.l.b16 %v1729
    %v4582 = vunpack.c.h.b16 %v1729
    %v4583 = vunpack.c.l.b16 %v1730
    %v4584 = vunpack.c.h.b16 %v1730
    %v4585 = vunpack.c.l.b16 %v1731
    %v4586 = vunpack.c.h.b16 %v1731
    %v4587 = vunpack.c.l.b16 %v1732
    %v4588 = vunpack.c.h.b16 %v1732
    %v4589 = vunpack.c.l.b16 %v1733
    %v4590 = vunpack.c.h.b16 %v1733
    %v4591 = vunpack.c.l.b16 %v1734
    %v4592 = vunpack.c.h.b16 %v1734
    %v4593 = vunpack.c.l.b16 %v1735
    %v4594 = vunpack.c.h.b16 %v1735
    %v4595 = vunpack.c.l.b16 %v1736
    %v4596 = vunpack.c.h.b16 %v1736
    %v4597 = vunpack.c.l.b16 %v1737
    %v4598 = vunpack.c.h.b16 %v1737
    %v4599 = vunpack.c.l.b16 %v1738
    %v4600 = vunpack.c.h.b16 %v1738
    %v4601 = vunpack.c.l.b16 %v1739
    %v4602 = vunpack.c.h.b16 %v1739
    %v4603 = vunpack.c.l.b16 %v1740
    %v4604 = vunpack.c.h.b16 %v1740
    %v4605 = vunpack.c.l.b16 %v1741
    %v4606 = vunpack.c.h.b16 %v1741
    %v4607 = vunpack.c.l.b16 %v1742
    %v4608 = vunpack.c.h.b16 %v1742
    %v4609 = vunpack.c.l.b16 %v1743
    %v4610 = vunpack.c.h.b16 %v1743
    %v4611 = vunpack.c.l.b16 %v1744
    %v4612 = vunpack.c.h.b16 %v1744
    %v4613 = vunpack.c.l.b16 %v1745
    %v4614 = vunpack.c.h.b16 %v1745
    %v4615 = vunpack.c.l.b16 %v1746
    %v4616 = vunpack.c.h.b16 %v1746
    %v4617 = vunpack.c.l.b16 %v1747
    %v4618 = vunpack.c.h.b16 %v1747
    %v4619 = vunpack.c.l.b16 %v1748
    %v4620 = vunpack.c.h.b16 %v1748
    %v4621 = vunpack.c.l.b16 %v1749
    %v4622 = vunpack.c.h.b16 %v1749
    %v4623 = vunpack.c.l.b16 %v1750
    %v4624 = vunpack.c.h.b16 %v1750
    %v4625 = vunpack.c.l.b16 %v1751
    %v4626 = vunpack.c.h.b16 %v1751
    %v4627 = vunpack.c.l.b16 %v1752
    %v4628 = vunpack.c.h.b16 %v1752
    %v4629 = vunpack.c.l.b16 %v1753
    %v4630 = vunpack.c.h.b16 %v1753
    %v4631 = vunpack.c.l.b16 %v1754
    %v4632 = vunpack.c.h.b16 %v1754
    %v4633 = vunpack.c.l.b16 %v1755
    %v4634 = vunpack.c.h.b16 %v1755
    %v4635 = vunpack.c.l.b16 %v1756
    %v4636 = vunpack.c.h.b16 %v1756
    %v4637 = vunpack.c.l.b16 %v1757
    %v4638 = vunpack.c.h.b16 %v1757
    %v4639 = vunpack.c.l.b16 %v1758
    %v4640 = vunpack.c.h.b16 %v1758
    %v4641 = vunpack.c.l.b16 %v1759
    %v4642 = vunpack.c.h.b16 %v1759
    %v4643 = vunpack.c.l.b16 %v1760
    %v4644 = vunpack.c.h.b16 %v1760
    %v4645 = vunpack.c.l.b16 %v1761
    %v4646 = vunpack.c.h.b16 %v1761
    %v4647 = vunpack.c.l.b16 %v1762
    %v4648 = vunpack.c.h.b16 %v1762
    %v4649 = vunpack.c.l.b16 %v1763
    %v4650 = vunpack.c.h.b16 %v1763
    %v4651 = vunpack.c.l.b16 %v1764
    %v4652 = vunpack.c.h.b16 %v1764
    %v4653 = vunpack.c.l.b16 %v1765
    %v4654 = vunpack.c.h.b16 %v1765
    %v4655 = vunpack.c.l.b16 %v1766
    %v4656 = vunpack.c.h.b16 %v1766
    %v4657 = vunpack.c.l.b16 %v1767
    %v4658 = vunpack.c.h.b16 %v1767
    %v4659 = vunpack.c.l.b16 %v1768
    %v4660 = vunpack.c.h.b16 %v1768
    %v4661 = vunpack.c.l.b16 %v1769
    %v4662 = vunpack.c.h.b16 %v1769
    %v4663 = vunpack.c.l.b16 %v1770
    %v4664 = vunpack.c.h.b16 %v1770
    %v4665 = vunpack.c.l.b16 %v1771
    %v4666 = vunpack.c.h.b16 %v1771
    %v4667 = vunpack.c.l.b16 %v1772
    %v4668 = vunpack.c.h.b16 %v1772
    %v4669 = vunpack.c.l.b16 %v1773
    %v4670 = vunpack.c.h.b16 %v1773
    %v4671 = vunpack.c.l.b16 %v1774
    %v4672 = vunpack.c.h.b16 %v1774
    %v4673 = vunpack.c.l.b16 %v1775
    %v4674 = vunpack.c.h.b16 %v1775
    %v4675 = vunpack.c.l.b16 %v1776
    %v4676 = vunpack.c.h.b16 %v1776
    %v4677 = vunpack.c.l.b16 %v1777
    %v4678 = vunpack.c.h.b16 %v1777
    %v4679 = vunpack.c.l.b16 %v1778
    %v4680 = vunpack.c.h.b16 %v1778
    %v4681 = vunpack.c.l.b16 %v1779
    %v4682 = vunpack.c.h.b16 %v1779
    %v4683 = vunpack.c.l.b16 %v1780
    %v4684 = vunpack.c.h.b16 %v1780
    %v4685 = vunpack.c.l.b16 %v1781
    %v4686 = vunpack.c.h.b16 %v1781
    %v4687 = vunpack.c.l.b16 %v1782
    %v4688 = vunpack.c.h.b16 %v1782
    %v4689 = vunpack.c.l.b16 %v1783
    %v4690 = vunpack.c.h.b16 %v1783
    %v4691 = vunpack.c.l.b16 %v1784
    %v4692 = vunpack.c.h.b16 %v1784
    %v4693 = vunpack.c.l.b16 %v1785
    %v4694 = vunpack.c.h.b16 %v1785
    %v4695 = vunpack.c.l.b16 %v1786
    %v4696 = vunpack.c.h.b16 %v1786
    %v4697 = vunpack.c.l.b16 %v1787
    %v4698 = vunpack.c.h.b16 %v1787
    %v4699 = vunpack.c.l.b16 %v1788
    %v4700 = vunpack.c.h.b16 %v1788
    %v4701 = vunpack.c.l.b16 %v1789
    %v4702 = vunpack.c.h.b16 %v1789
    %v4703 = vunpack.c.l.b16 %v1790
    %v4704 = vunpack.c.h.b16 %v1790
    %v4705 = vunpack.c.l.b16 %v1791
    %v4706 = vunpack.c.h.b16 %v1791
    %v4707 = vunpack.c.l.b16 %v1792
    %v4708 = vunpack.c.h.b16 %v1792
    %v4709 = vunpack.c.l.b16 %v1793
    %v4710 = vunpack.c.h.b16 %v1793
    %v4711 = vunpack.c.l.b16 %v1794
    %v4712 = vunpack.c.h.b16 %v1794
    %v4713 = vunpack.c.l.b16 %v1795
    %v4714 = vunpack.c.h.b16 %v1795
    %v4715 = vunpack.c.l.b16 %v1796
    %v4716 = vunpack.c.h.b16 %v1796
    %v4717 = vunpack.c.l.b16 %v1797
    %v4718 = vunpack.c.h.b16 %v1797
    %v4719 = vunpack.c.l.b16 %v1798
    %v4720 = vunpack.c.h.b16 %v1798
    %v4721 = vunpack.c.l.b16 %v1799
    %v4722 = vunpack.c.h.b16 %v1799
    %v4723 = vunpack.c.l.b16 %v1800
    %v4724 = vunpack.c.h.b16 %v1800
    %v4725 = vunpack.c.l.b16 %v1801
    %v4726 = vunpack.c.h.b16 %v1801
    %v4727 = vunpack.c.l.b16 %v1802
    %v4728 = vunpack.c.h.b16 %v1802
    %v4729 = vunpack.c.l.b16 %v1803
    %v4730 = vunpack.c.h.b16 %v1803
    %v4731 = vunpack.c.l.b16 %v1804
    %v4732 = vunpack.c.h.b16 %v1804
    %v4733 = vunpack.c.l.b16 %v1805
    %v4734 = vunpack.c.h.b16 %v1805
    %v4735 = vunpack.c.l.b16 %v1806
    %v4736 = vunpack.c.h.b16 %v1806
    %v4737 = vunpack.c.l.b16 %v1807
    %v4738 = vunpack.c.h.b16 %v1807
    %v4739 = vunpack.c.l.b16 %v1808
    %v4740 = vunpack.c.h.b16 %v1808
    %v4741 = vunpack.c.l.b16 %v1809
    %v4742 = vunpack.c.h.b16 %v1809
    %v4743 = vunpack.c.l.b16 %v1810
    %v4744 = vunpack.c.h.b16 %v1810
    %v4745 = vunpack.c.l.b16 %v1811
    %v4746 = vunpack.c.h.b16 %v1811
    %v4747 = vunpack.c.l.b16 %v1812
    %v4748 = vunpack.c.h.b16 %v1812
    %v4749 = vunpack.c.l.b16 %v1813
    %v4750 = vunpack.c.h.b16 %v1813
    %v4751 = vunpack.c.l.b16 %v1814
    %v4752 = vunpack.c.h.b16 %v1814
    %v4753 = vunpack.c.l.b16 %v1815
    %v4754 = vunpack.c.h.b16 %v1815
    %v4755 = vunpack.c.l.b16 %v1816
    %v4756 = vunpack.c.h.b16 %v1816
    %v4757 = vunpack.c.l.b16 %v1817
    %v4758 = vunpack.c.h.b16 %v1817
    %v4759 = vunpack.c.l.b16 %v1818
    %v4760 = vunpack.c.h.b16 %v1818
    %v4761 = vunpack.c.l.b16 %v1819
    %v4762 = vunpack.c.h.b16 %v1819
    %v4763 = vunpack.c.l.b16 %v1820
    %v4764 = vunpack.c.h.b16 %v1820
    %v4765 = vunpack.c.l.b16 %v1821
    %v4766 = vunpack.c.h.b16 %v1821
    %v4767 = vunpack.c.l.b16 %v1822
    %v4768 = vunpack.c.h.b16 %v1822
    %v4769 = vunpack.c.l.b16 %v1823
    %v4770 = vunpack.c.h.b16 %v1823
    %v4771 = vunpack.c.l.b16 %v1824
    %v4772 = vunpack.c.h.b16 %v1824
    %v4773 = vunpack.c.l.b16 %v1825
    %v4774 = vunpack.c.h.b16 %v1825
    %v4775 = vunpack.c.l.b16 %v1826
    %v4776 = vunpack.c.h.b16 %v1826
    %v4777 = vunpack.c.l.b16 %v1827
    %v4778 = vunpack.c.h.b16 %v1827
    %v4779 = vunpack.c.l.b16 %v1828
    %v4780 = vunpack.c.h.b16 %v1828
    %v4781 = vunpack.c.l.b16 %v1829
    %v4782 = vunpack.c.h.b16 %v1829
    %v4783 = vunpack.c.l.b16 %v1830
    %v4784 = vunpack.c.h.b16 %v1830
    %v4785 = vunpack.c.l.b16 %v1831
    %v4786 = vunpack.c.h.b16 %v1831
    %v4787 = vunpack.c.l.b16 %v1832
    %v4788 = vunpack.c.h.b16 %v1832
    %v4789 = vunpack.c.l.b16 %v1833
    %v4790 = vunpack.c.h.b16 %v1833
    %v4791 = vunpack.c.l.b16 %v1834
    %v4792 = vunpack.c.h.b16 %v1834
    %v4793 = vunpack.c.l.b16 %v1835
    %v4794 = vunpack.c.h.b16 %v1835
    %v4795 = vunpack.c.l.b16 %v1836
    %v4796 = vunpack.c.h.b16 %v1836
    %v4797 = vunpack.c.l.b16 %v1837
    %v4798 = vunpack.c.h.b16 %v1837
    %v4799 = vunpack.c.l.b16 %v1838
    %v4800 = vunpack.c.h.b16 %v1838
    %v4801 = vunpack.c.l.b16 %v1839
    %v4802 = vunpack.c.h.b16 %v1839
    %v4803 = vunpack.c.l.b16 %v1840
    %v4804 = vunpack.c.h.b16 %v1840
    %v4805 = vunpack.c.l.b16 %v1841
    %v4806 = vunpack.c.h.b16 %v1841
    %v4807 = vunpack.c.l.b16 %v1842
    %v4808 = vunpack.c.h.b16 %v1842
    %v4809 = vunpack.c.l.b16 %v1843
    %v4810 = vunpack.c.h.b16 %v1843
    %v4811 = vunpack.c.l.b16 %v1844
    %v4812 = vunpack.c.h.b16 %v1844
    %v4813 = vunpack.c.l.b16 %v1845
    %v4814 = vunpack.c.h.b16 %v1845
    %v4815 = vunpack.c.l.b16 %v1846
    %v4816 = vunpack.c.h.b16 %v1846
    %v4817 = vunpack.c.l.b16 %v1847
    %v4818 = vunpack.c.h.b16 %v1847
    %v4819 = vunpack.c.l.b16 %v1848
    %v4820 = vunpack.c.h.b16 %v1848
    %v4821 = vunpack.c.l.b16 %v1849
    %v4822 = vunpack.c.h.b16 %v1849
    %v4823 = vunpack.c.l.b16 %v1850
    %v4824 = vunpack.c.h.b16 %v1850
    %v4825 = vunpack.c.l.b16 %v1851
    %v4826 = vunpack.c.h.b16 %v1851
    %v4827 = vunpack.c.l.b16 %v1852
    %v4828 = vunpack.c.h.b16 %v1852
    %v4829 = vunpack.c.l.b16 %v1853
    %v4830 = vunpack.c.h.b16 %v1853
    %v4831 = vunpack.c.l.b16 %v1854
    %v4832 = vunpack.c.h.b16 %v1854
    %v4833 = vunpack.c.l.b16 %v1855
    %v4834 = vunpack.c.h.b16 %v1855
    %v4835 = vunpack.c.l.b16 %v1856
    %v4836 = vunpack.c.h.b16 %v1856
    %v4837 = vunpack.c.l.b16 %v1857
    %v4838 = vunpack.c.h.b16 %v1857
    %v4839 = vunpack.c.l.b16 %v1858
    %v4840 = vunpack.c.h.b16 %v1858
    %v4841 = vunpack.c.l.b16 %v1859
    %v4842 = vunpack.c.h.b16 %v1859
    %v4843 = vunpack.c.l.b16 %v1860
    %v4844 = vunpack.c.h.b16 %v1860
    %v4845 = vunpack.c.l.b16 %v1861
    %v4846 = vunpack.c.h.b16 %v1861
    %v4847 = vunpack.c.l.b16 %v1862
    %v4848 = vunpack.c.h.b16 %v1862
    %v4849 = vunpack.c.l.b16 %v1863
    %v4850 = vunpack.c.h.b16 %v1863
    %v4851 = vunpack.c.l.b16 %v1864
    %v4852 = vunpack.c.h.b16 %v1864
    %v4853 = vunpack.c.l.b16 %v1865
    %v4854 = vunpack.c.h.b16 %v1865
    %v4855 = vunpack.c.l.b16 %v1866
    %v4856 = vunpack.c.h.b16 %v1866
    %v4857 = vunpack.c.l.b16 %v1867
    %v4858 = vunpack.c.h.b16 %v1867
    %v4859 = vunpack.c.l.b16 %v1868
    %v4860 = vunpack.c.h.b16 %v1868
    %v4861 = vunpack.c.l.b16 %v1869
    %v4862 = vunpack.c.h.b16 %v1869
    %v4863 = vunpack.c.l.b16 %v1870
    %v4864 = vunpack.c.h.b16 %v1870
    %v4865 = vunpack.c.l.b16 %v1871
    %v4866 = vunpack.c.h.b16 %v1871
    %v4867 = vunpack.c.l.b16 %v1872
    %v4868 = vunpack.c.h.b16 %v1872
    %v4869 = vunpack.c.l.b16 %v1873
    %v4870 = vunpack.c.h.b16 %v1873
    %v4871 = vunpack.c.l.b16 %v1874
    %v4872 = vunpack.c.h.b16 %v1874
    %v4873 = vunpack.c.l.b16 %v1875
    %v4874 = vunpack.c.h.b16 %v1875
    %v4875 = vunpack.c.l.b16 %v1876
    %v4876 = vunpack.c.h.b16 %v1876
    %v4877 = vunpack.c.l.b16 %v1877
    %v4878 = vunpack.c.h.b16 %v1877
    %v4879 = vunpack.c.l.b16 %v1878
    %v4880 = vunpack.c.h.b16 %v1878
    %v4881 = vunpack.c.l.b16 %v1879
    %v4882 = vunpack.c.h.b16 %v1879
    %v4883 = vunpack.c.l.b16 %v1880
    %v4884 = vunpack.c.h.b16 %v1880
    %v4885 = vunpack.c.l.b16 %v1881
    %v4886 = vunpack.c.h.b16 %v1881
    %v4887 = vunpack.c.l.b16 %v1882
    %v4888 = vunpack.c.h.b16 %v1882
    %v4889 = vunpack.c.l.b16 %v1883
    %v4890 = vunpack.c.h.b16 %v1883
    %v4891 = vunpack.c.l.b16 %v1884
    %v4892 = vunpack.c.h.b16 %v1884
    %v4893 = vunpack.c.l.b16 %v1885
    %v4894 = vunpack.c.h.b16 %v1885
    %v4895 = vunpack.c.l.b16 %v1886
    %v4896 = vunpack.c.h.b16 %v1886
    %v4897 = vunpack.c.l.b16 %v1887
    %v4898 = vunpack.c.h.b16 %v1887
    %v4899 = vunpack.c.l.b16 %v1888
    %v4900 = vunpack.c.h.b16 %v1888
    %v4901 = vunpack.c.l.b16 %v1889
    %v4902 = vunpack.c.h.b16 %v1889
    %v4903 = vunpack.c.l.b16 %v1890
    %v4904 = vunpack.c.h.b16 %v1890
    %v4905 = vunpack.c.l.b16 %v1891
    %v4906 = vunpack.c.h.b16 %v1891
    %v4907 = vunpack.c.l.b16 %v1892
    %v4908 = vunpack.c.h.b16 %v1892
    %v4909 = vunpack.c.l.b16 %v1893
    %v4910 = vunpack.c.h.b16 %v1893
    %v4911 = vunpack.c.l.b16 %v1894
    %v4912 = vunpack.c.h.b16 %v1894
    %v4913 = vunpack.c.l.b16 %v1895
    %v4914 = vunpack.c.h.b16 %v1895
    %v4915 = vunpack.c.l.b16 %v1896
    %v4916 = vunpack.c.h.b16 %v1896
    %v4917 = vunpack.c.l.b16 %v1897
    %v4918 = vunpack.c.h.b16 %v1897
    %v4919 = vunpack.c.l.b16 %v1898
    %v4920 = vunpack.c.h.b16 %v1898
    %v4921 = vunpack.c.l.b16 %v1899
    %v4922 = vunpack.c.h.b16 %v1899
    %v4923 = vunpack.c.l.b16 %v1900
    %v4924 = vunpack.c.h.b16 %v1900
    %v4925 = vunpack.c.l.b16 %v1901
    %v4926 = vunpack.c.h.b16 %v1901
    %v4927 = vunpack.c.l.b16 %v1902
    %v4928 = vunpack.c.h.b16 %v1902
    %v4929 = vunpack.c.l.b16 %v1903
    %v4930 = vunpack.c.h.b16 %v1903
    %v4931 = vunpack.c.l.b16 %v1904
    %v4932 = vunpack.c.h.b16 %v1904
    %v4933 = vunpack.c.l.b16 %v1905
    %v4934 = vunpack.c.h.b16 %v1905
    %v4935 = vunpack.c.l.b16 %v1906
    %v4936 = vunpack.c.h.b16 %v1906
    %v4937 = vunpack.c.l.b16 %v1907
    %v4938 = vunpack.c.h.b16 %v1907
    %v4939 = vunpack.c.l.b16 %v1908
    %v4940 = vunpack.c.h.b16 %v1908
    %v4941 = vunpack.c.l.b16 %v1909
    %v4942 = vunpack.c.h.b16 %v1909
    %v4943 = vunpack.c.l.b16 %v1910
    %v4944 = vunpack.c.h.b16 %v1910
    %v4945 = vunpack.c.l.b16 %v1911
    %v4946 = vunpack.c.h.b16 %v1911
    %v4947 = vunpack.c.l.b16 %v1912
    %v4948 = vunpack.c.h.b16 %v1912
    %v4949 = vunpack.c.l.b16 %v1913
    %v4950 = vunpack.c.h.b16 %v1913
    %v4951 = vunpack.c.l.b16 %v1914
    %v4952 = vunpack.c.h.b16 %v1914
    %v4953 = vunpack.c.l.b16 %v1915
    %v4954 = vunpack.c.h.b16 %v1915
    %v4955 = vunpack.c.l.b16 %v1916
    %v4956 = vunpack.c.h.b16 %v1916
    %v4957 = vunpack.c.l.b16 %v1917
    %v4958 = vunpack.c.h.b16 %v1917
    %v4959 = vunpack.c.l.b16 %v1918
    %v4960 = vunpack.c.h.b16 %v1918
    %v4961 = vunpack.c.l.b16 %v1919
    %v4962 = vunpack.c.h.b16 %v1919
    %v4963 = vunpack.c.l.b16 %v1920
    %v4964 = vunpack.c.h.b16 %v1920
    %v4965 = vunpack.c.l.b16 %v1921
    %v4966 = vunpack.c.h.b16 %v1921
    %v4967 = vunpack.c.l.b16 %v1922
    %v4968 = vunpack.c.h.b16 %v1922
    %v4969 = vunpack.c.l.b16 %v1923
    %v4970 = vunpack.c.h.b16 %v1923
    %v4971 = vunpack.c.l.b16 %v1924
    %v4972 = vunpack.c.h.b16 %v1924
    %v4973 = vunpack.c.l.b16 %v1925
    %v4974 = vunpack.c.h.b16 %v1925
    %v4975 = vunpack.c.l.b16 %v1926
    %v4976 = vunpack.c.h.b16 %v1926
    %v4977 = vunpack.c.l.b16 %v1927
    %v4978 = vunpack.c.h.b16 %v1927
    %v4979 = vunpack.c.l.b16 %v1928
    %v4980 = vunpack.c.h.b16 %v1928
    %v4981 = vunpack.c.l.b16 %v1929
    %v4982 = vunpack.c.h.b16 %v1929
    %v4983 = vunpack.c.l.b16 %v1930
    %v4984 = vunpack.c.h.b16 %v1930
    %v4985 = vunpack.c.l.b16 %v1931
    %v4986 = vunpack.c.h.b16 %v1931
    %v4987 = vunpack.c.l.b16 %v1932
    %v4988 = vunpack.c.h.b16 %v1932
    %v4989 = vunpack.c.l.b16 %v1933
    %v4990 = vunpack.c.h.b16 %v1933
    %v4991 = vunpack.c.l.b16 %v1934
    %v4992 = vunpack.c.h.b16 %v1934
    %v4993 = vunpack.c.l.b16 %v1935
    %v4994 = vunpack.c.h.b16 %v1935
    %v4995 = vunpack.c.l.b16 %v1936
    %v4996 = vunpack.c.h.b16 %v1936
    %v4997 = vunpack.c.l.b16 %v1937
    %v4998 = vunpack.c.h.b16 %v1937
    %v4999 = vunpack.c.l.b16 %v1938
    %v5000 = vunpack.c.h.b16 %v1938
    %v5001 = vunpack.c.l.b16 %v1939
    %v5002 = vunpack.c.h.b16 %v1939
    %v5003 = vunpack.c.l.b16 %v1940
    %v5004 = vunpack.c.h.b16 %v1940
    %v5005 = vunpack.c.l.b16 %v1941
    %v5006 = vunpack.c.h.b16 %v1941
    %v5007 = vunpack.c.l.b16 %v1942
    %v5008 = vunpack.c.h.b16 %v1942
    %v5009 = vunpack.c.l.b16 %v1943
    %v5010 = vunpack.c.h.b16 %v1943
    %v5011 = vunpack.c.l.b16 %v1944
    %v5012 = vunpack.c.h.b16 %v1944
    %v5013 = vunpack.c.l.b16 %v1945
    %v5014 = vunpack.c.h.b16 %v1945
    %v5015 = vunpack.c.l.b16 %v1946
    %v5016 = vunpack.c.h.b16 %v1946
    %v5017 = vunpack.c.l.b16 %v1947
    %v5018 = vunpack.c.h.b16 %v1947
    %v5019 = vunpack.c.l.b16 %v1948
    %v5020 = vunpack.c.h.b16 %v1948
    %v5021 = vunpack.c.l.b16 %v1949
    %v5022 = vunpack.c.h.b16 %v1949
    %v5023 = vunpack.c.l.b16 %v1950
    %v5024 = vunpack.c.h.b16 %v1950
    %v5025 = vunpack.c.l.b16 %v1951
    %v5026 = vunpack.c.h.b16 %v1951
    %v5027 = vunpack.c.l.b16 %v1952
    %v5028 = vunpack.c.h.b16 %v1952
    %v5029 = vunpack.c.l.b16 %v1953
    %v5030 = vunpack.c.h.b16 %v1953
    %v5031 = vunpack.c.l.b16 %v1954
    %v5032 = vunpack.c.h.b16 %v1954
    %v5033 = vunpack.c.l.b16 %v1955
    %v5034 = vunpack.c.h.b16 %v1955
    %v5035 = vunpack.c.l.b16 %v1956
    %v5036 = vunpack.c.h.b16 %v1956
    %v5037 = vunpack.c.l.b16 %v1957
    %v5038 = vunpack.c.h.b16 %v1957
    %v5039 = vunpack.c.l.b16 %v1958
    %v5040 = vunpack.c.h.b16 %v1958
    %v5041 = vunpack.c.l.b16 %v1959
    %v5042 = vunpack.c.h.b16 %v1959
    %v5043 = vunpack.c.l.b16 %v1960
    %v5044 = vunpack.c.h.b16 %v1960
    %v5045 = vunpack.c.l.b16 %v1961
    %v5046 = vunpack.c.h.b16 %v1961
    %v5047 = vunpack.c.l.b16 %v1962
    %v5048 = vunpack.c.h.b16 %v1962
    %v5049 = vunpack.c.l.b16 %v1963
    %v5050 = vunpack.c.h.b16 %v1963
    %v5051 = vunpack.c.l.b16 %v1964
    %v5052 = vunpack.c.h.b16 %v1964
    %v5053 = vunpack.c.l.b16 %v1965
    %v5054 = vunpack.c.h.b16 %v1965
    %v5055 = vunpack.c.l.b16 %v1966
    %v5056 = vunpack.c.h.b16 %v1966
    %v5057 = vunpack.c.l.b16 %v1967
    %v5058 = vunpack.c.h.b16 %v1967
    %v5059 = vunpack.c.l.b16 %v1968
    %v5060 = vunpack.c.h.b16 %v1968
    %v5061 = vunpack.c.l.b16 %v1969
    %v5062 = vunpack.c.h.b16 %v1969
    %v5063 = vunpack.c.l.b16 %v1970
    %v5064 = vunpack.c.h.b16 %v1970
    %v5065 = vunpack.c.l.b16 %v1971
    %v5066 = vunpack.c.h.b16 %v1971
    %v5067 = vunpack.c.l.b16 %v1972
    %v5068 = vunpack.c.h.b16 %v1972
    %v5069 = vunpack.c.l.b16 %v1973
    %v5070 = vunpack.c.h.b16 %v1973
    %v5071 = vunpack.c.l.b16 %v1974
    %v5072 = vunpack.c.h.b16 %v1974
    %v5073 = vunpack.c.l.b16 %v1975
    %v5074 = vunpack.c.h.b16 %v1975
    %v5075 = vunpack.c.l.b16 %v1976
    %v5076 = vunpack.c.h.b16 %v1976
    %v5077 = vunpack.c.l.b16 %v1977
    %v5078 = vunpack.c.h.b16 %v1977
    %v5079 = vunpack.c.l.b16 %v1978
    %v5080 = vunpack.c.h.b16 %v1978
    %v5081 = vunpack.c.l.b16 %v1979
    %v5082 = vunpack.c.h.b16 %v1979
    %v5083 = vunpack.c.l.b16 %v1980
    %v5084 = vunpack.c.h.b16 %v1980
    %v5085 = vunpack.c.l.b16 %v1981
    %v5086 = vunpack.c.h.b16 %v1981
    %v5087 = vunpack.c.l.b16 %v1982
    %v5088 = vunpack.c.h.b16 %v1982
    %v5089 = vunpack.c.l.b16 %v1983
    %v5090 = vunpack.c.h.b16 %v1983
    %v5091 = vunpack.c.l.b16 %v1984
    %v5092 = vunpack.c.h.b16 %v1984
    %v5093 = vunpack.c.l.b16 %v1985
    %v5094 = vunpack.c.h.b16 %v1985
    %v5095 = vunpack.c.l.b16 %v1986
    %v5096 = vunpack.c.h.b16 %v1986
    %v5097 = vunpack.c.l.b16 %v1987
    %v5098 = vunpack.c.h.b16 %v1987
    %v5099 = vunpack.c.l.b16 %v1988
    %v5100 = vunpack.c.h.b16 %v1988
    %v5101 = vunpack.c.l.b16 %v1989
    %v5102 = vunpack.c.h.b16 %v1989
    %v5103 = vunpack.c.l.b16 %v1990
    %v5104 = vunpack.c.h.b16 %v1990
    %v5105 = vpack.c.b16 %v3065, %v3057
    %v5106 = vpack.c.b16 %v3066, %v3058
    %v5107 = vpack.c.b16 %v3067, %v3059
    %v5108 = vpack.c.b16 %v3068, %v3060
    %v5109 = vpack.c.b16 %v3069, %v3061
    %v5110 = vpack.c.b16 %v3070, %v3062
    %v5111 = vpack.c.b16 %v3071, %v3063
    %v5112 = vpack.c.b16 %v3072, %v3064
    %v5113 = vpack.c.b16 %v3081, %v3073
    %v5114 = vpack.c.b16 %v3082, %v3074
    %v5115 = vpack.c.b16 %v3083, %v3075
    %v5116 = vpack.c.b16 %v3084, %v3076
    %v5117 = vpack.c.b16 %v3085, %v3077
    %v5118 = vpack.c.b16 %v3086, %v3078
    %v5119 = vpack.c.b16 %v3087, %v3079
    %v5120 = vpack.c.b16 %v3088, %v3080
    %v5121 = vpack.c.b16 %v3097, %v3089
    %v5122 = vpack.c.b16 %v3098, %v3090
    %v5123 = vpack.c.b16 %v3099, %v3091
    %v5124 = vpack.c.b16 %v3100, %v3092
    %v5125 = vpack.c.b16 %v3101, %v3093
    %v5126 = vpack.c.b16 %v3102, %v3094
    %v5127 = vpack.c.b16 %v3103, %v3095
    %v5128 = vpack.c.b16 %v3104, %v3096
    %v5129 = vpack.c.b16 %v3113, %v3105
    %v5130 = vpack.c.b16 %v3114, %v3106
    %v5131 = vpack.c.b16 %v3115, %v3107
    %v5132 = vpack.c.b16 %v3116, %v3108
    %v5133 = vpack.c.b16 %v3117, %v3109
    %v5134 = vpack.c.b16 %v3118, %v3110
    %v5135 = vpack.c.b16 %v3119, %v3111
    %v5136 = vpack.c.b16 %v3120, %v3112
    %v5137 = vpack.c.b16 %v3129, %v3121
    %v5138 = vpack.c.b16 %v3130, %v3122
    %v5139 = vpack.c.b16 %v3131, %v3123
    %v5140 = vpack.c.b16 %v3132, %v3124
    %v5141 = vpack.c.b16 %v3133, %v3125
    %v5142 = vpack.c.b16 %v3134, %v3126
    %v5143 = vpack.c.b16 %v3135, %v3127
    %v5144 = vpack.c.b16 %v3136, %v3128
    %v5145 = vpack.c.b16 %v3145, %v3137
    %v5146 = vpack.c.b16 %v3146, %v3138
    %v5147 = vpack.c.b16 %v3147, %v3139
    %v5148 = vpack.c.b16 %v3148, %v3140
    %v5149 = vpack.c.b16 %v3149, %v3141
    %v5150 = vpack.c.b16 %v3150, %v3142
    %v5151 = vpack.c.b16 %v3151, %v3143
    %v5152 = vpack.c.b16 %v3152, %v3144
    %v5153 = vpack.c.b16 %v3161, %v3153
    %v5154 = vpack.c.b16 %v3162, %v3154
    %v5155 = vpack.c.b16 %v3163, %v3155
    %v5156 = vpack.c.b16 %v3164, %v3156
    %v5157 = vpack.c.b16 %v3165, %v3157
    %v5158 = vpack.c.b16 %v3166, %v3158
    %v5159 = vpack.c.b16 %v3167, %v3159
    %v5160 = vpack.c.b16 %v3168, %v3160
    %v5161 = vpack.c.b16 %v3177, %v3169
    %v5162 = vpack.c.b16 %v3178, %v3170
    %v5163 = vpack.c.b16 %v3179, %v3171
    %v5164 = vpack.c.b16 %v3180, %v3172
    %v5165 = vpack.c.b16 %v3181, %v3173
    %v5166 = vpack.c.b16 %v3182, %v3174
    %v5167 = vpack.c.b16 %v3183, %v3175
    %v5168 = vpack.c.b16 %v3184, %v3176
    %v5169 = vpack.c.b16 %v3193, %v3185
    %v5170 = vpack.c.b16 %v3194, %v3186
    %v5171 = vpack.c.b16 %v3195, %v3187
    %v5172 = vpack.c.b16 %v3196, %v3188
    %v5173 = vpack.c.b16 %v3197, %v3189
    %v5174 = vpack.c.b16 %v3198, %v3190
    %v5175 = vpack.c.b16 %v3199, %v3191
    %v5176 = vpack.c.b16 %v3200, %v3192
    %v5177 = vpack.c.b16 %v3209, %v3201
    %v5178 = vpack.c.b16 %v3210, %v3202
    %v5179 = vpack.c.b16 %v3211, %v3203
    %v5180 = vpack.c.b16 %v3212, %v3204
    %v5181 = vpack.c.b16 %v3213, %v3205
    %v5182 = vpack.c.b16 %v3214, %v3206
    %v5183 = vpack.c.b16 %v3215, %v3207
    %v5184 = vpack.c.b16 %v3216, %v3208
    %v5185 = vpack.c.b16 %v3225, %v3217
    %v5186 = vpack.c.b16 %v3226, %v3218
    %v5187 = vpack.c.b16 %v3227, %v3219
    %v5188 = vpack.c.b16 %v3228, %v3220
    %v5189 = vpack.c.b16 %v3229, %v3221
    %v5190 = vpack.c.b16 %v3230, %v3222
    %v5191 = vpack.c.b16 %v3231, %v3223
    %v5192 = vpack.c.b16 %v3232, %v3224
    %v5193 = vpack.c.b16 %v3241, %v3233
    %v5194 = vpack.c.b16 %v3242, %v3234
    %v5195 = vpack.c.b16 %v3243, %v3235
    %v5196 = vpack.c.b16 %v3244, %v3236
    %v5197 = vpack.c.b16 %v3245, %v3237
    %v5198 = vpack.c.b16 %v3246, %v3238
    %v5199 = vpack.c.b16 %v3247, %v3239
    %v5200 = vpack.c.b16 %v3248, %v3240
    %v5201 = vpack.c.b16 %v3257, %v3249
    %v5202 = vpack.c.b16 %v3258, %v3250
    %v5203 = vpack.c.b16 %v3259, %v3251
    %v5204 = vpack.c.b16 %v3260, %v3252
    %v5205 = vpack.c.b16 %v3261, %v3253
    %v5206 = vpack.c.b16 %v3262, %v3254
    %v5207 = vpack.c.b16 %v3263, %v3255
    %v5208 = vpack.c.b16 %v3264, %v3256
    %v5209 = vpack.c.b16 %v3273, %v3265
    %v5210 = vpack.c.b16 %v3274, %v3266
    %v5211 = vpack.c.b16 %v3275, %v3267
    %v5212 = vpack.c.b16 %v3276, %v3268
    %v5213 = vpack.c.b16 %v3277, %v3269
    %v5214 = vpack.c.b16 %v3278, %v3270
    %v5215 = vpack.c.b16 %v3279, %v3271
    %v5216 = vpack.c.b16 %v3280, %v3272
    %v5217 = vpack.c.b16 %v3289, %v3281
    %v5218 = vpack.c.b16 %v3290, %v3282
    %v5219 = vpack.c.b16 %v3291, %v3283
    %v5220 = vpack.c.b16 %v3292, %v3284
    %v5221 = vpack.c.b16 %v3293, %v3285
    %v5222 = vpack.c.b16 %v3294, %v3286
    %v5223 = vpack.c.b16 %v3295, %v3287
    %v5224 = vpack.c.b16 %v3296, %v3288
    %v5225 = vpack.c.b16 %v3305, %v3297
    %v5226 = vpack.c.b16 %v3306, %v3298
    %v5227 = vpack.c.b16 %v3307, %v3299
    %v5228 = vpack.c.b16 %v3308, %v3300
    %v5229 = vpack.c.b16 %v3309, %v3301
    %v5230 = vpack.c.b16 %v3310, %v3302
    %v5231 = vpack.c.b16 %v3311, %v3303
    %v5232 = vpack.c.b16 %v3312, %v3304
    %v5233 = vpack.c.b16 %v3321, %v3313
    %v5234 = vpack.c.b16 %v3322, %v3314
    %v5235 = vpack.c.b16 %v3323, %v3315
    %v5236 = vpack.c.b16 %v3324, %v3316
    %v5237 = vpack.c.b16 %v3325, %v3317
    %v5238 = vpack.c.b16 %v3326, %v3318
    %v5239 = vpack.c.b16 %v3327, %v3319
    %v5240 = vpack.c.b16 %v3328, %v3320
    %v5241 = vpack.c.b16 %v3337, %v3329
    %v5242 = vpack.c.b16 %v3338, %v3330
    %v5243 = vpack.c.b16 %v3339, %v3331
    %v5244 = vpack.c.b16 %v3340, %v3332
    %v5245 = vpack.c.b16 %v3341, %v3333
    %v5246 = vpack.c.b16 %v3342, %v3334
    %v5247 = vpack.c.b16 %v3343, %v3335
    %v5248 = vpack.c.b16 %v3344, %v3336
    %v5249 = vpack.c.b16 %v3353, %v3345
    %v5250 = vpack.c.b16 %v3354, %v3346
    %v5251 = vpack.c.b16 %v3355, %v3347
    %v5252 = vpack.c.b16 %v3356, %v3348
    %v5253 = vpack.c.b16 %v3357, %v3349
    %v5254 = vpack.c.b16 %v3358, %v3350
    %v5255 = vpack.c.b16 %v3359, %v3351
    %v5256 = vpack.c.b16 %v3360, %v3352
    %v5257 = vpack.c.b16 %v3369, %v3361
    %v5258 = vpack.c.b16 %v3370, %v3362
    %v5259 = vpack.c.b16 %v3371, %v3363
    %v5260 = vpack.c.b16 %v3372, %v3364
    %v5261 = vpack.c.b16 %v3373, %v3365
    %v5262 = vpack.c.b16 %v3374, %v3366
    %v5263 = vpack.c.b16 %v3375, %v3367
    %v5264 = vpack.c.b16 %v3376, %v3368
    %v5265 = vpack.c.b16 %v3385, %v3377
    %v5266 = vpack.c.b16 %v3386, %v3378
    %v5267 = vpack.c.b16 %v3387, %v3379
    %v5268 = vpack.c.b16 %v3388, %v3380
    %v5269 = vpack.c.b16 %v3389, %v3381
    %v5270 = vpack.c.b16 %v3390, %v3382
    %v5271 = vpack.c.b16 %v3391, %v3383
    %v5272 = vpack.c.b16 %v3392, %v3384
    %v5273 = vpack.c.b16 %v3401, %v3393
    %v5274 = vpack.c.b16 %v3402, %v3394
    %v5275 = vpack.c.b16 %v3403, %v3395
    %v5276 = vpack.c.b16 %v3404, %v3396
    %v5277 = vpack.c.b16 %v3405, %v3397
    %v5278 = vpack.c.b16 %v3406, %v3398
    %v5279 = vpack.c.b16 %v3407, %v3399
    %v5280 = vpack.c.b16 %v3408, %v3400
    %v5281 = vpack.c.b16 %v3417, %v3409
    %v5282 = vpack.c.b16 %v3418, %v3410
    %v5283 = vpack.c.b16 %v3419, %v3411
    %v5284 = vpack.c.b16 %v3420, %v3412
    %v5285 = vpack.c.b16 %v3421, %v3413
    %v5286 = vpack.c.b16 %v3422, %v3414
    %v5287 = vpack.c.b16 %v3423, %v3415
    %v5288 = vpack.c.b16 %v3424, %v3416
    %v5289 = vpack.c.b16 %v3433, %v3425
    %v5290 = vpack.c.b16 %v3434, %v3426
    %v5291 = vpack.c.b16 %v3435, %v3427
    %v5292 = vpack.c.b16 %v3436, %v3428
    %v5293 = vpack.c.b16 %v3437, %v3429
    %v5294 = vpack.c.b16 %v3438, %v3430
    %v5295 = vpack.c.b16 %v3439, %v3431
    %v5296 = vpack.c.b16 %v3440, %v3432
    %v5297 = vpack.c.b16 %v3449, %v3441
    %v5298 = vpack.c.b16 %v3450, %v3442
    %v5299 = vpack.c.b16 %v3451, %v3443
    %v5300 = vpack.c.b16 %v3452, %v3444
    %v5301 = vpack.c.b16 %v3453, %v3445
    %v5302 = vpack.c.b16 %v3454, %v3446
    %v5303 = vpack.c.b16 %v3455, %v3447
    %v5304 = vpack.c.b16 %v3456, %v3448
    %v5305 = vpack.c.b16 %v3465, %v3457
    %v5306 = vpack.c.b16 %v3466, %v3458
    %v5307 = vpack.c.b16 %v3467, %v3459
    %v5308 = vpack.c.b16 %v3468, %v3460
    %v5309 = vpack.c.b16 %v3469, %v3461
    %v5310 = vpack.c.b16 %v3470, %v3462
    %v5311 = vpack.c.b16 %v3471, %v3463
    %v5312 = vpack.c.b16 %v3472, %v3464
    %v5313 = vpack.c.b16 %v3481, %v3473
    %v5314 = vpack.c.b16 %v3482, %v3474
    %v5315 = vpack.c.b16 %v3483, %v3475
    %v5316 = vpack.c.b16 %v3484, %v3476
    %v5317 = vpack.c.b16 %v3485, %v3477
    %v5318 = vpack.c.b16 %v3486, %v3478
    %v5319 = vpack.c.b16 %v3487, %v3479
    %v5320 = vpack.c.b16 %v3488, %v3480
    %v5321 = vpack.c.b16 %v3497, %v3489
    %v5322 = vpack.c.b16 %v3498, %v3490
    %v5323 = vpack.c.b16 %v3499, %v3491
    %v5324 = vpack.c.b16 %v3500, %v3492
    %v5325 = vpack.c.b16 %v3501, %v3493
    %v5326 = vpack.c.b16 %v3502, %v3494
    %v5327 = vpack.c.b16 %v3503, %v3495
    %v5328 = vpack.c.b16 %v3504, %v3496
    %v5329 = vpack.c.b16 %v3513, %v3505
    %v5330 = vpack.c.b16 %v3514, %v3506
    %v5331 = vpack.c.b16 %v3515, %v3507
    %v5332 = vpack.c.b16 %v3516, %v3508
    %v5333 = vpack.c.b16 %v3517, %v3509
    %v5334 = vpack.c.b16 %v3518, %v3510
    %v5335 = vpack.c.b16 %v3519, %v3511
    %v5336 = vpack.c.b16 %v3520, %v3512
    %v5337 = vpack.c.b16 %v3529, %v3521
    %v5338 = vpack.c.b16 %v3530, %v3522
    %v5339 = vpack.c.b16 %v3531, %v3523
    %v5340 = vpack.c.b16 %v3532, %v3524
    %v5341 = vpack.c.b16 %v3533, %v3525
    %v5342 = vpack.c.b16 %v3534, %v3526
    %v5343 = vpack.c.b16 %v3535, %v3527
    %v5344 = vpack.c.b16 %v3536, %v3528
    %v5345 = vpack.c.b16 %v3545, %v3537
    %v5346 = vpack.c.b16 %v3546, %v3538
    %v5347 = vpack.c.b16 %v3547, %v3539
    %v5348 = vpack.c.b16 %v3548, %v3540
    %v5349 = vpack.c.b16 %v3549, %v3541
    %v5350 = vpack.c.b16 %v3550, %v3542
    %v5351 = vpack.c.b16 %v3551, %v3543
    %v5352 = vpack.c.b16 %v3552, %v3544
    %v5353 = vpack.c.b16 %v3561, %v3553
    %v5354 = vpack.c.b16 %v3562, %v3554
    %v5355 = vpack.c.b16 %v3563, %v3555
    %v5356 = vpack.c.b16 %v3564, %v3556
    %v5357 = vpack.c.b16 %v3565, %v3557
    %v5358 = vpack.c.b16 %v3566, %v3558
    %v5359 = vpack.c.b16 %v3567, %v3559
    %v5360 = vpack.c.b16 %v3568, %v3560
    %v5361 = vpack.c.b16 %v3577, %v3569
    %v5362 = vpack.c.b16 %v3578, %v3570
    %v5363 = vpack.c.b16 %v3579, %v3571
    %v5364 = vpack.c.b16 %v3580, %v3572
    %v5365 = vpack.c.b16 %v3581, %v3573
    %v5366 = vpack.c.b16 %v3582, %v3574
    %v5367 = vpack.c.b16 %v3583, %v3575
    %v5368 = vpack.c.b16 %v3584, %v3576
    %v5369 = vpack.c.b16 %v3593, %v3585
    %v5370 = vpack.c.b16 %v3594, %v3586
    %v5371 = vpack.c.b16 %v3595, %v3587
    %v5372 = vpack.c.b16 %v3596, %v3588
    %v5373 = vpack.c.b16 %v3597, %v3589
    %v5374 = vpack.c.b16 %v3598, %v3590
    %v5375 = vpack.c.b16 %v3599, %v3591
    %v5376 = vpack.c.b16 %v3600, %v3592
    %v5377 = vpack.c.b16 %v3609, %v3601
    %v5378 = vpack.c.b16 %v3610, %v3602
    %v5379 = vpack.c.b16 %v3611, %v3603
    %v5380 = vpack.c.b16 %v3612, %v3604
    %v5381 = vpack.c.b16 %v3613, %v3605
    %v5382 = vpack.c.b16 %v3614, %v3606
    %v5383 = vpack.c.b16 %v3615, %v3607
    %v5384 = vpack.c.b16 %v3616, %v3608
    %v5385 = vpack.c.b16 %v3625, %v3617
    %v5386 = vpack.c.b16 %v3626, %v3618
    %v5387 = vpack.c.b16 %v3627, %v3619
    %v5388 = vpack.c.b16 %v3628, %v3620
    %v5389 = vpack.c.b16 %v3629, %v3621
    %v5390 = vpack.c.b16 %v3630, %v3622
    %v5391 = vpack.c.b16 %v3631, %v3623
    %v5392 = vpack.c.b16 %v3632, %v3624
    %v5393 = vpack.c.b16 %v3641, %v3633
    %v5394 = vpack.c.b16 %v3642, %v3634
    %v5395 = vpack.c.b16 %v3643, %v3635
    %v5396 = vpack.c.b16 %v3644, %v3636
    %v5397 = vpack.c.b16 %v3645, %v3637
    %v5398 = vpack.c.b16 %v3646, %v3638
    %v5399 = vpack.c.b16 %v3647, %v3639
    %v5400 = vpack.c.b16 %v3648, %v3640
    %v5401 = vpack.c.b16 %v3657, %v3649
    %v5402 = vpack.c.b16 %v3658, %v3650
    %v5403 = vpack.c.b16 %v3659, %v3651
    %v5404 = vpack.c.b16 %v3660, %v3652
    %v5405 = vpack.c.b16 %v3661, %v3653
    %v5406 = vpack.c.b16 %v3662, %v3654
    %v5407 = vpack.c.b16 %v3663, %v3655
    %v5408 = vpack.c.b16 %v3664, %v3656
    %v5409 = vpack.c.b16 %v3673, %v3665
    %v5410 = vpack.c.b16 %v3674, %v3666
    %v5411 = vpack.c.b16 %v3675, %v3667
    %v5412 = vpack.c.b16 %v3676, %v3668
    %v5413 = vpack.c.b16 %v3677, %v3669
    %v5414 = vpack.c.b16 %v3678, %v3670
    %v5415 = vpack.c.b16 %v3679, %v3671
    %v5416 = vpack.c.b16 %v3680, %v3672
    %v5417 = vpack.c.b16 %v3689, %v3681
    %v5418 = vpack.c.b16 %v3690, %v3682
    %v5419 = vpack.c.b16 %v3691, %v3683
    %v5420 = vpack.c.b16 %v3692, %v3684
    %v5421 = vpack.c.b16 %v3693, %v3685
    %v5422 = vpack.c.b16 %v3694, %v3686
    %v5423 = vpack.c.b16 %v3695, %v3687
    %v5424 = vpack.c.b16 %v3696, %v3688
    %v5425 = vpack.c.b16 %v3705, %v3697
    %v5426 = vpack.c.b16 %v3706, %v3698
    %v5427 = vpack.c.b16 %v3707, %v3699
    %v5428 = vpack.c.b16 %v3708, %v3700
    %v5429 = vpack.c.b16 %v3709, %v3701
    %v5430 = vpack.c.b16 %v3710, %v3702
    %v5431 = vpack.c.b16 %v3711, %v3703
    %v5432 = vpack.c.b16 %v3712, %v3704
    %v5433 = vpack.c.b16 %v3721, %v3713
    %v5434 = vpack.c.b16 %v3722, %v3714
    %v5435 = vpack.c.b16 %v3723, %v3715
    %v5436 = vpack.c.b16 %v3724, %v3716
    %v5437 = vpack.c.b16 %v3725, %v3717
    %v5438 = vpack.c.b16 %v3726, %v3718
    %v5439 = vpack.c.b16 %v3727, %v3719
    %v5440 = vpack.c.b16 %v3728, %v3720
    %v5441 = vpack.c.b16 %v3737, %v3729
    %v5442 = vpack.c.b16 %v3738, %v3730
    %v5443 = vpack.c.b16 %v3739, %v3731
    %v5444 = vpack.c.b16 %v3740, %v3732
    %v5445 = vpack.c.b16 %v3741, %v3733
    %v5446 = vpack.c.b16 %v3742, %v3734
    %v5447 = vpack.c.b16 %v3743, %v3735
    %v5448 = vpack.c.b16 %v3744, %v3736
    %v5449 = vpack.c.b16 %v3753, %v3745
    %v5450 = vpack.c.b16 %v3754, %v3746
    %v5451 = vpack.c.b16 %v3755, %v3747
    %v5452 = vpack.c.b16 %v3756, %v3748
    %v5453 = vpack.c.b16 %v3757, %v3749
    %v5454 = vpack.c.b16 %v3758, %v3750
    %v5455 = vpack.c.b16 %v3759, %v3751
    %v5456 = vpack.c.b16 %v3760, %v3752
    %v5457 = vpack.c.b16 %v3769, %v3761
    %v5458 = vpack.c.b16 %v3770, %v3762
    %v5459 = vpack.c.b16 %v3771, %v3763
    %v5460 = vpack.c.b16 %v3772, %v3764
    %v5461 = vpack.c.b16 %v3773, %v3765
    %v5462 = vpack.c.b16 %v3774, %v3766
    %v5463 = vpack.c.b16 %v3775, %v3767
    %v5464 = vpack.c.b16 %v3776, %v3768
    %v5465 = vpack.c.b16 %v3785, %v3777
    %v5466 = vpack.c.b16 %v3786, %v3778
    %v5467 = vpack.c.b16 %v3787, %v3779
    %v5468 = vpack.c.b16 %v3788, %v3780
    %v5469 = vpack.c.b16 %v3789, %v3781
    %v5470 = vpack.c.b16 %v3790, %v3782
    %v5471 = vpack.c.b16 %v3791, %v3783
    %v5472 = vpack.c.b16 %v3792, %v3784
    %v5473 = vpack.c.b16 %v3801, %v3793
    %v5474 = vpack.c.b16 %v3802, %v3794
    %v5475 = vpack.c.b16 %v3803, %v3795
    %v5476 = vpack.c.b16 %v3804, %v3796
    %v5477 = vpack.c.b16 %v3805, %v3797
    %v5478 = vpack.c.b16 %v3806, %v3798
    %v5479 = vpack.c.b16 %v3807, %v3799
    %v5480 = vpack.c.b16 %v3808, %v3800
    %v5481 = vpack.c.b16 %v3817, %v3809
    %v5482 = vpack.c.b16 %v3818, %v3810
    %v5483 = vpack.c.b16 %v3819, %v3811
    %v5484 = vpack.c.b16 %v3820, %v3812
    %v5485 = vpack.c.b16 %v3821, %v3813
    %v5486 = vpack.c.b16 %v3822, %v3814
    %v5487 = vpack.c.b16 %v3823, %v3815
    %v5488 = vpack.c.b16 %v3824, %v3816
    %v5489 = vpack.c.b16 %v3833, %v3825
    %v5490 = vpack.c.b16 %v3834, %v3826
    %v5491 = vpack.c.b16 %v3835, %v3827
    %v5492 = vpack.c.b16 %v3836, %v3828
    %v5493 = vpack.c.b16 %v3837, %v3829
    %v5494 = vpack.c.b16 %v3838, %v3830
    %v5495 = vpack.c.b16 %v3839, %v3831
    %v5496 = vpack.c.b16 %v3840, %v3832
    %v5497 = vpack.c.b16 %v3849, %v3841
    %v5498 = vpack.c.b16 %v3850, %v3842
    %v5499 = vpack.c.b16 %v3851, %v3843
    %v5500 = vpack.c.b16 %v3852, %v3844
    %v5501 = vpack.c.b16 %v3853, %v3845
    %v5502 = vpack.c.b16 %v3854, %v3846
    %v5503 = vpack.c.b16 %v3855, %v3847
    %v5504 = vpack.c.b16 %v3856, %v3848
    %v5505 = vpack.c.b16 %v3865, %v3857
    %v5506 = vpack.c.b16 %v3866, %v3858
    %v5507 = vpack.c.b16 %v3867, %v3859
    %v5508 = vpack.c.b16 %v3868, %v3860
    %v5509 = vpack.c.b16 %v3869, %v3861
    %v5510 = vpack.c.b16 %v3870, %v3862
    %v5511 = vpack.c.b16 %v3871, %v3863
    %v5512 = vpack.c.b16 %v3872, %v3864
    %v5513 = vpack.c.b16 %v3881, %v3873
    %v5514 = vpack.c.b16 %v3882, %v3874
    %v5515 = vpack.c.b16 %v3883, %v3875
    %v5516 = vpack.c.b16 %v3884, %v3876
    %v5517 = vpack.c.b16 %v3885, %v3877
    %v5518 = vpack.c.b16 %v3886, %v3878
    %v5519 = vpack.c.b16 %v3887, %v3879
    %v5520 = vpack.c.b16 %v3888, %v3880
    %v5521 = vpack.c.b16 %v3897, %v3889
    %v5522 = vpack.c.b16 %v3898, %v3890
    %v5523 = vpack.c.b16 %v3899, %v3891
    %v5524 = vpack.c.b16 %v3900, %v3892
    %v5525 = vpack.c.b16 %v3901, %v3893
    %v5526 = vpack.c.b16 %v3902, %v3894
    %v5527 = vpack.c.b16 %v3903, %v3895
    %v5528 = vpack.c.b16 %v3904, %v3896
    %v5529 = vpack.c.b16 %v3913, %v3905
    %v5530 = vpack.c.b16 %v3914, %v3906
    %v5531 = vpack.c.b16 %v3915, %v3907
    %v5532 = vpack.c.b16 %v3916, %v3908
    %v5533 = vpack.c.b16 %v3917, %v3909
    %v5534 = vpack.c.b16 %v3918, %v3910
    %v5535 = vpack.c.b16 %v3919, %v3911
    %v5536 = vpack.c.b16 %v3920, %v3912
    %v5537 = vpack.c.b16 %v3929, %v3921
    %v5538 = vpack.c.b16 %v3930, %v3922
    %v5539 = vpack.c.b16 %v3931, %v3923
    %v5540 = vpack.c.b16 %v3932, %v3924
    %v5541 = vpack.c.b16 %v3933, %v3925
    %v5542 = vpack.c.b16 %v3934, %v3926
    %v5543 = vpack.c.b16 %v3935, %v3927
    %v5544 = vpack.c.b16 %v3936, %v3928
    %v5545 = vpack.c.b16 %v3945, %v3937
    %v5546 = vpack.c.b16 %v3946, %v3938
    %v5547 = vpack.c.b16 %v3947, %v3939
    %v5548 = vpack.c.b16 %v3948, %v3940
    %v5549 = vpack.c.b16 %v3949, %v3941
    %v5550 = vpack.c.b16 %v3950, %v3942
    %v5551 = vpack.c.b16 %v3951, %v3943
    %v5552 = vpack.c.b16 %v3952, %v3944
    %v5553 = vpack.c.b16 %v3961, %v3953
    %v5554 = vpack.c.b16 %v3962, %v3954
    %v5555 = vpack.c.b16 %v3963, %v3955
    %v5556 = vpack.c.b16 %v3964, %v3956
    %v5557 = vpack.c.b16 %v3965, %v3957
    %v5558 = vpack.c.b16 %v3966, %v3958
    %v5559 = vpack.c.b16 %v3967, %v3959
    %v5560 = vpack.c.b16 %v3968, %v3960
    %v5561 = vpack.c.b16 %v3977, %v3969
    %v5562 = vpack.c.b16 %v3978, %v3970
    %v5563 = vpack.c.b16 %v3979, %v3971
    %v5564 = vpack.c.b16 %v3980, %v3972
    %v5565 = vpack.c.b16 %v3981, %v3973
    %v5566 = vpack.c.b16 %v3982, %v3974
    %v5567 = vpack.c.b16 %v3983, %v3975
    %v5568 = vpack.c.b16 %v3984, %v3976
    %v5569 = vpack.c.b16 %v3993, %v3985
    %v5570 = vpack.c.b16 %v3994, %v3986
    %v5571 = vpack.c.b16 %v3995, %v3987
    %v5572 = vpack.c.b16 %v3996, %v3988
    %v5573 = vpack.c.b16 %v3997, %v3989
    %v5574 = vpack.c.b16 %v3998, %v3990
    %v5575 = vpack.c.b16 %v3999, %v3991
    %v5576 = vpack.c.b16 %v4000, %v3992
    %v5577 = vpack.c.b16 %v4009, %v4001
    %v5578 = vpack.c.b16 %v4010, %v4002
    %v5579 = vpack.c.b16 %v4011, %v4003
    %v5580 = vpack.c.b16 %v4012, %v4004
    %v5581 = vpack.c.b16 %v4013, %v4005
    %v5582 = vpack.c.b16 %v4014, %v4006
    %v5583 = vpack.c.b16 %v4015, %v4007
    %v5584 = vpack.c.b16 %v4016, %v4008
    %v5585 = vpack.c.b16 %v4025, %v4017
    %v5586 = vpack.c.b16 %v4026, %v4018
    %v5587 = vpack.c.b16 %v4027, %v4019
    %v5588 = vpack.c.b16 %v4028, %v4020
    %v5589 = vpack.c.b16 %v4029, %v4021
    %v5590 = vpack.c.b16 %v4030, %v4022
    %v5591 = vpack.c.b16 %v4031, %v4023
    %v5592 = vpack.c.b16 %v4032, %v4024
    %v5593 = vpack.c.b16 %v4041, %v4033
    %v5594 = vpack.c.b16 %v4042, %v4034
    %v5595 = vpack.c.b16 %v4043, %v4035
    %v5596 = vpack.c.b16 %v4044, %v4036
    %v5597 = vpack.c.b16 %v4045, %v4037
    %v5598 = vpack.c.b16 %v4046, %v4038
    %v5599 = vpack.c.b16 %v4047, %v4039
    %v5600 = vpack.c.b16 %v4048, %v4040
    %v5601 = vpack.c.b16 %v4057, %v4049
    %v5602 = vpack.c.b16 %v4058, %v4050
    %v5603 = vpack.c.b16 %v4059, %v4051
    %v5604 = vpack.c.b16 %v4060, %v4052
    %v5605 = vpack.c.b16 %v4061, %v4053
    %v5606 = vpack.c.b16 %v4062, %v4054
    %v5607 = vpack.c.b16 %v4063, %v4055
    %v5608 = vpack.c.b16 %v4064, %v4056
    %v5609 = vpack.c.b16 %v4073, %v4065
    %v5610 = vpack.c.b16 %v4074, %v4066
    %v5611 = vpack.c.b16 %v4075, %v4067
    %v5612 = vpack.c.b16 %v4076, %v4068
    %v5613 = vpack.c.b16 %v4077, %v4069
    %v5614 = vpack.c.b16 %v4078, %v4070
    %v5615 = vpack.c.b16 %v4079, %v4071
    %v5616 = vpack.c.b16 %v4080, %v4072
    %v5617 = vpack.c.b16 %v4089, %v4081
    %v5618 = vpack.c.b16 %v4090, %v4082
    %v5619 = vpack.c.b16 %v4091, %v4083
    %v5620 = vpack.c.b16 %v4092, %v4084
    %v5621 = vpack.c.b16 %v4093, %v4085
    %v5622 = vpack.c.b16 %v4094, %v4086
    %v5623 = vpack.c.b16 %v4095, %v4087
    %v5624 = vpack.c.b16 %v4096, %v4088
    %v5625 = vpack.c.b16 %v4105, %v4097
    %v5626 = vpack.c.b16 %v4106, %v4098
    %v5627 = vpack.c.b16 %v4107, %v4099
    %v5628 = vpack.c.b16 %v4108, %v4100
    %v5629 = vpack.c.b16 %v4109, %v4101
    %v5630 = vpack.c.b16 %v4110, %v4102
    %v5631 = vpack.c.b16 %v4111, %v4103
    %v5632 = vpack.c.b16 %v4112, %v4104
    %v5633 = vpack.c.b16 %v4121, %v4113
    %v5634 = vpack.c.b16 %v4122, %v4114
    %v5635 = vpack.c.b16 %v4123, %v4115
    %v5636 = vpack.c.b16 %v4124, %v4116
    %v5637 = vpack.c.b16 %v4125, %v4117
    %v5638 = vpack.c.b16 %v4126, %v4118
    %v5639 = vpack.c.b16 %v4127, %v4119
    %v5640 = vpack.c.b16 %v4128, %v4120
    %v5641 = vpack.c.b16 %v4137, %v4129
    %v5642 = vpack.c.b16 %v4138, %v4130
    %v5643 = vpack.c.b16 %v4139, %v4131
    %v5644 = vpack.c.b16 %v4140, %v4132
    %v5645 = vpack.c.b16 %v4141, %v4133
    %v5646 = vpack.c.b16 %v4142, %v4134
    %v5647 = vpack.c.b16 %v4143, %v4135
    %v5648 = vpack.c.b16 %v4144, %v4136
    %v5649 = vpack.c.b16 %v4153, %v4145
    %v5650 = vpack.c.b16 %v4154, %v4146
    %v5651 = vpack.c.b16 %v4155, %v4147
    %v5652 = vpack.c.b16 %v4156, %v4148
    %v5653 = vpack.c.b16 %v4157, %v4149
    %v5654 = vpack.c.b16 %v4158, %v4150
    %v5655 = vpack.c.b16 %v4159, %v4151
    %v5656 = vpack.c.b16 %v4160, %v4152
    %v5657 = vpack.c.b16 %v4169, %v4161
    %v5658 = vpack.c.b16 %v4170, %v4162
    %v5659 = vpack.c.b16 %v4171, %v4163
    %v5660 = vpack.c.b16 %v4172, %v4164
    %v5661 = vpack.c.b16 %v4173, %v4165
    %v5662 = vpack.c.b16 %v4174, %v4166
    %v5663 = vpack.c.b16 %v4175, %v4167
    %v5664 = vpack.c.b16 %v4176, %v4168
    %v5665 = vpack.c.b16 %v4185, %v4177
    %v5666 = vpack.c.b16 %v4186, %v4178
    %v5667 = vpack.c.b16 %v4187, %v4179
    %v5668 = vpack.c.b16 %v4188, %v4180
    %v5669 = vpack.c.b16 %v4189, %v4181
    %v5670 = vpack.c.b16 %v4190, %v4182
    %v5671 = vpack.c.b16 %v4191, %v4183
    %v5672 = vpack.c.b16 %v4192, %v4184
    %v5673 = vpack.c.b16 %v4201, %v4193
    %v5674 = vpack.c.b16 %v4202, %v4194
    %v5675 = vpack.c.b16 %v4203, %v4195
    %v5676 = vpack.c.b16 %v4204, %v4196
    %v5677 = vpack.c.b16 %v4205, %v4197
    %v5678 = vpack.c.b16 %v4206, %v4198
    %v5679 = vpack.c.b16 %v4207, %v4199
    %v5680 = vpack.c.b16 %v4208, %v4200
    %v5681 = vpack.c.b16 %v4217, %v4209
    %v5682 = vpack.c.b16 %v4218, %v4210
    %v5683 = vpack.c.b16 %v4219, %v4211
    %v5684 = vpack.c.b16 %v4220, %v4212
    %v5685 = vpack.c.b16 %v4221, %v4213
    %v5686 = vpack.c.b16 %v4222, %v4214
    %v5687 = vpack.c.b16 %v4223, %v4215
    %v5688 = vpack.c.b16 %v4224, %v4216
    %v5689 = vpack.c.b16 %v4233, %v4225
    %v5690 = vpack.c.b16 %v4234, %v4226
    %v5691 = vpack.c.b16 %v4235, %v4227
    %v5692 = vpack.c.b16 %v4236, %v4228
    %v5693 = vpack.c.b16 %v4237, %v4229
    %v5694 = vpack.c.b16 %v4238, %v4230
    %v5695 = vpack.c.b16 %v4239, %v4231
    %v5696 = vpack.c.b16 %v4240, %v4232
    %v5697 = vpack.c.b16 %v4249, %v4241
    %v5698 = vpack.c.b16 %v4250, %v4242
    %v5699 = vpack.c.b16 %v4251, %v4243
    %v5700 = vpack.c.b16 %v4252, %v4244
    %v5701 = vpack.c.b16 %v4253, %v4245
    %v5702 = vpack.c.b16 %v4254, %v4246
    %v5703 = vpack.c.b16 %v4255, %v4247
    %v5704 = vpack.c.b16 %v4256, %v4248
    %v5705 = vpack.c.b16 %v4265, %v4257
    %v5706 = vpack.c.b16 %v4266, %v4258
    %v5707 = vpack.c.b16 %v4267, %v4259
    %v5708 = vpack.c.b16 %v4268, %v4260
    %v5709 = vpack.c.b16 %v4269, %v4261
    %v5710 = vpack.c.b16 %v4270, %v4262
    %v5711 = vpack.c.b16 %v4271, %v4263
    %v5712 = vpack.c.b16 %v4272, %v4264
    %v5713 = vpack.c.b16 %v4281, %v4273
    %v5714 = vpack.c.b16 %v4282, %v4274
    %v5715 = vpack.c.b16 %v4283, %v4275
    %v5716 = vpack.c.b16 %v4284, %v4276
    %v5717 = vpack.c.b16 %v4285, %v4277
    %v5718 = vpack.c.b16 %v4286, %v4278
    %v5719 = vpack.c.b16 %v4287, %v4279
    %v5720 = vpack.c.b16 %v4288, %v4280
    %v5721 = vpack.c.b16 %v4297, %v4289
    %v5722 = vpack.c.b16 %v4298, %v4290
    %v5723 = vpack.c.b16 %v4299, %v4291
    %v5724 = vpack.c.b16 %v4300, %v4292
    %v5725 = vpack.c.b16 %v4301, %v4293
    %v5726 = vpack.c.b16 %v4302, %v4294
    %v5727 = vpack.c.b16 %v4303, %v4295
    %v5728 = vpack.c.b16 %v4304, %v4296
    %v5729 = vpack.c.b16 %v4313, %v4305
    %v5730 = vpack.c.b16 %v4314, %v4306
    %v5731 = vpack.c.b16 %v4315, %v4307
    %v5732 = vpack.c.b16 %v4316, %v4308
    %v5733 = vpack.c.b16 %v4317, %v4309
    %v5734 = vpack.c.b16 %v4318, %v4310
    %v5735 = vpack.c.b16 %v4319, %v4311
    %v5736 = vpack.c.b16 %v4320, %v4312
    %v5737 = vpack.c.b16 %v4329, %v4321
    %v5738 = vpack.c.b16 %v4330, %v4322
    %v5739 = vpack.c.b16 %v4331, %v4323
    %v5740 = vpack.c.b16 %v4332, %v4324
    %v5741 = vpack.c.b16 %v4333, %v4325
    %v5742 = vpack.c.b16 %v4334, %v4326
    %v5743 = vpack.c.b16 %v4335, %v4327
    %v5744 = vpack.c.b16 %v4336, %v4328
    %v5745 = vpack.c.b16 %v4345, %v4337
    %v5746 = vpack.c.b16 %v4346, %v4338
    %v5747 = vpack.c.b16 %v4347, %v4339
    %v5748 = vpack.c.b16 %v4348, %v4340
    %v5749 = vpack.c.b16 %v4349, %v4341
    %v5750 = vpack.c.b16 %v4350, %v4342
    %v5751 = vpack.c.b16 %v4351, %v4343
    %v5752 = vpack.c.b16 %v4352, %v4344
    %v5753 = vpack.c.b16 %v4361, %v4353
    %v5754 = vpack.c.b16 %v4362, %v4354
    %v5755 = vpack.c.b16 %v4363, %v4355
    %v5756 = vpack.c.b16 %v4364, %v4356
    %v5757 = vpack.c.b16 %v4365, %v4357
    %v5758 = vpack.c.b16 %v4366, %v4358
    %v5759 = vpack.c.b16 %v4367, %v4359
    %v5760 = vpack.c.b16 %v4368, %v4360
    %v5761 = vpack.c.b16 %v4377, %v4369
    %v5762 = vpack.c.b16 %v4378, %v4370
    %v5763 = vpack.c.b16 %v4379, %v4371
    %v5764 = vpack.c.b16 %v4380, %v4372
    %v5765 = vpack.c.b16 %v4381, %v4373
    %v5766 = vpack.c.b16 %v4382, %v4374
    %v5767 = vpack.c.b16 %v4383, %v4375
    %v5768 = vpack.c.b16 %v4384, %v4376
    %v5769 = vpack.c.b16 %v4393, %v4385
    %v5770 = vpack.c.b16 %v4394, %v4386
    %v5771 = vpack.c.b16 %v4395, %v4387
    %v5772 = vpack.c.b16 %v4396, %v4388
    %v5773 = vpack.c.b16 %v4397, %v4389
    %v5774 = vpack.c.b16 %v4398, %v4390
    %v5775 = vpack.c.b16 %v4399, %v4391
    %v5776 = vpack.c.b16 %v4400, %v4392
    %v5777 = vpack.c.b16 %v4409, %v4401
    %v5778 = vpack.c.b16 %v4410, %v4402
    %v5779 = vpack.c.b16 %v4411, %v4403
    %v5780 = vpack.c.b16 %v4412, %v4404
    %v5781 = vpack.c.b16 %v4413, %v4405
    %v5782 = vpack.c.b16 %v4414, %v4406
    %v5783 = vpack.c.b16 %v4415, %v4407
    %v5784 = vpack.c.b16 %v4416, %v4408
    %v5785 = vpack.c.b16 %v4425, %v4417
    %v5786 = vpack.c.b16 %v4426, %v4418
    %v5787 = vpack.c.b16 %v4427, %v4419
    %v5788 = vpack.c.b16 %v4428, %v4420
    %v5789 = vpack.c.b16 %v4429, %v4421
    %v5790 = vpack.c.b16 %v4430, %v4422
    %v5791 = vpack.c.b16 %v4431, %v4423
    %v5792 = vpack.c.b16 %v4432, %v4424
    %v5793 = vpack.c.b16 %v4441, %v4433
    %v5794 = vpack.c.b16 %v4442, %v4434
    %v5795 = vpack.c.b16 %v4443, %v4435
    %v5796 = vpack.c.b16 %v4444, %v4436
    %v5797 = vpack.c.b16 %v4445, %v4437
    %v5798 = vpack.c.b16 %v4446, %v4438
    %v5799 = vpack.c.b16 %v4447, %v4439
    %v5800 = vpack.c.b16 %v4448, %v4440
    %v5801 = vpack.c.b16 %v4457, %v4449
    %v5802 = vpack.c.b16 %v4458, %v4450
    %v5803 = vpack.c.b16 %v4459, %v4451
    %v5804 = vpack.c.b16 %v4460, %v4452
    %v5805 = vpack.c.b16 %v4461, %v4453
    %v5806 = vpack.c.b16 %v4462, %v4454
    %v5807 = vpack.c.b16 %v4463, %v4455
    %v5808 = vpack.c.b16 %v4464, %v4456
    %v5809 = vpack.c.b16 %v4473, %v4465
    %v5810 = vpack.c.b16 %v4474, %v4466
    %v5811 = vpack.c.b16 %v4475, %v4467
    %v5812 = vpack.c.b16 %v4476, %v4468
    %v5813 = vpack.c.b16 %v4477, %v4469
    %v5814 = vpack.c.b16 %v4478, %v4470
    %v5815 = vpack.c.b16 %v4479, %v4471
    %v5816 = vpack.c.b16 %v4480, %v4472
    %v5817 = vpack.c.b16 %v4489, %v4481
    %v5818 = vpack.c.b16 %v4490, %v4482
    %v5819 = vpack.c.b16 %v4491, %v4483
    %v5820 = vpack.c.b16 %v4492, %v4484
    %v5821 = vpack.c.b16 %v4493, %v4485
    %v5822 = vpack.c.b16 %v4494, %v4486
    %v5823 = vpack.c.b16 %v4495, %v4487
    %v5824 = vpack.c.b16 %v4496, %v4488
    %v5825 = vpack.c.b16 %v4505, %v4497
    %v5826 = vpack.c.b16 %v4506, %v4498
    %v5827 = vpack.c.b16 %v4507, %v4499
    %v5828 = vpack.c.b16 %v4508, %v4500
    %v5829 = vpack.c.b16 %v4509, %v4501
    %v5830 = vpack.c.b16 %v4510, %v4502
    %v5831 = vpack.c.b16 %v4511, %v4503
    %v5832 = vpack.c.b16 %v4512, %v4504
    %v5833 = vpack.c.b16 %v4521, %v4513
    %v5834 = vpack.c.b16 %v4522, %v4514
    %v5835 = vpack.c.b16 %v4523, %v4515
    %v5836 = vpack.c.b16 %v4524, %v4516
    %v5837 = vpack.c.b16 %v4525, %v4517
    %v5838 = vpack.c.b16 %v4526, %v4518
    %v5839 = vpack.c.b16 %v4527, %v4519
    %v5840 = vpack.c.b16 %v4528, %v4520
    %v5841 = vpack.c.b16 %v4537, %v4529
    %v5842 = vpack.c.b16 %v4538, %v4530
    %v5843 = vpack.c.b16 %v4539, %v4531
    %v5844 = vpack.c.b16 %v4540, %v4532
    %v5845 = vpack.c.b16 %v4541, %v4533
    %v5846 = vpack.c.b16 %v4542, %v4534
    %v5847 = vpack.c.b16 %v4543, %v4535
    %v5848 = vpack.c.b16 %v4544, %v4536
    %v5849 = vpack.c.b16 %v4553, %v4545
    %v5850 = vpack.c.b16 %v4554, %v4546
    %v5851 = vpack.c.b16 %v4555, %v4547
    %v5852 = vpack.c.b16 %v4556, %v4548
    %v5853 = vpack.c.b16 %v4557, %v4549
    %v5854 = vpack.c.b16 %v4558, %v4550
    %v5855 = vpack.c.b16 %v4559, %v4551
    %v5856 = vpack.c.b16 %v4560, %v4552
    %v5857 = vpack.c.b16 %v4569, %v4561
    %v5858 = vpack.c.b16 %v4570, %v4562
    %v5859 = vpack.c.b16 %v4571, %v4563
    %v5860 = vpack.c.b16 %v4572, %v4564
    %v5861 = vpack.c.b16 %v4573, %v4565
    %v5862 = vpack.c.b16 %v4574, %v4566
    %v5863 = vpack.c.b16 %v4575, %v4567
    %v5864 = vpack.c.b16 %v4576, %v4568
    %v5865 = vpack.c.b16 %v4585, %v4577
    %v5866 = vpack.c.b16 %v4586, %v4578
    %v5867 = vpack.c.b16 %v4587, %v4579
    %v5868 = vpack.c.b16 %v4588, %v4580
    %v5869 = vpack.c.b16 %v4589, %v4581
    %v5870 = vpack.c.b16 %v4590, %v4582
    %v5871 = vpack.c.b16 %v4591, %v4583
    %v5872 = vpack.c.b16 %v4592, %v4584
    %v5873 = vpack.c.b16 %v4601, %v4593
    %v5874 = vpack.c.b16 %v4602, %v4594
    %v5875 = vpack.c.b16 %v4603, %v4595
    %v5876 = vpack.c.b16 %v4604, %v4596
    %v5877 = vpack.c.b16 %v4605, %v4597
    %v5878 = vpack.c.b16 %v4606, %v4598
    %v5879 = vpack.c.b16 %v4607, %v4599
    %v5880 = vpack.c.b16 %v4608, %v4600
    %v5881 = vpack.c.b16 %v4617, %v4609
    %v5882 = vpack.c.b16 %v4618, %v4610
    %v5883 = vpack.c.b16 %v4619, %v4611
    %v5884 = vpack.c.b16 %v4620, %v4612
    %v5885 = vpack.c.b16 %v4621, %v4613
    %v5886 = vpack.c.b16 %v4622, %v4614
    %v5887 = vpack.c.b16 %v4623, %v4615
    %v5888 = vpack.c.b16 %v4624, %v4616
    %v5889 = vpack.c.b16 %v4633, %v4625
    %v5890 = vpack.c.b16 %v4634, %v4626
    %v5891 = vpack.c.b16 %v4635, %v4627
    %v5892 = vpack.c.b16 %v4636, %v4628
    %v5893 = vpack.c.b16 %v4637, %v4629
    %v5894 = vpack.c.b16 %v4638, %v4630
    %v5895 = vpack.c.b16 %v4639, %v4631
    %v5896 = vpack.c.b16 %v4640, %v4632
    %v5897 = vpack.c.b16 %v4649, %v4641
    %v5898 = vpack.c.b16 %v4650, %v4642
    %v5899 = vpack.c.b16 %v4651, %v4643
    %v5900 = vpack.c.b16 %v4652, %v4644
    %v5901 = vpack.c.b16 %v4653, %v4645
    %v5902 = vpack.c.b16 %v4654, %v4646
    %v5903 = vpack.c.b16 %v4655, %v4647
    %v5904 = vpack.c.b16 %v4656, %v4648
    %v5905 = vpack.c.b16 %v4665, %v4657
    %v5906 = vpack.c.b16 %v4666, %v4658
    %v5907 = vpack.c.b16 %v4667, %v4659
    %v5908 = vpack.c.b16 %v4668, %v4660
    %v5909 = vpack.c.b16 %v4669, %v4661
    %v5910 = vpack.c.b16 %v4670, %v4662
    %v5911 = vpack.c.b16 %v4671, %v4663
    %v5912 = vpack.c.b16 %v4672, %v4664
    %v5913 = vpack.c.b16 %v4681, %v4673
    %v5914 = vpack.c.b16 %v4682, %v4674
    %v5915 = vpack.c.b16 %v4683, %v4675
    %v5916 = vpack.c.b16 %v4684, %v4676
    %v5917 = vpack.c.b16 %v4685, %v4677
    %v5918 = vpack.c.b16 %v4686, %v4678
    %v5919 = vpack.c.b16 %v4687, %v4679
    %v5920 = vpack.c.b16 %v4688, %v4680
    %v5921 = vpack.c.b16 %v4697, %v4689
    %v5922 = vpack.c.b16 %v4698, %v4690
    %v5923 = vpack.c.b16 %v4699, %v4691
    %v5924 = vpack.c.b16 %v4700, %v4692
    %v5925 = vpack.c.b16 %v4701, %v4693
    %v5926 = vpack.c.b16 %v4702, %v4694
    %v5927 = vpack.c.b16 %v4703, %v4695
    %v5928 = vpack.c.b16 %v4704, %v4696
    %v5929 = vpack.c.b16 %v4713, %v4705
    %v5930 = vpack.c.b16 %v4714, %v4706
    %v5931 = vpack.c.b16 %v4715, %v4707
    %v5932 = vpack.c.b16 %v4716, %v4708
    %v5933 = vpack.c.b16 %v4717, %v4709
    %v5934 = vpack.c.b16 %v4718, %v4710
    %v5935 = vpack.c.b16 %v4719, %v4711
    %v5936 = vpack.c.b16 %v4720, %v4712
    %v5937 = vpack.c.b16 %v4729, %v4721
    %v5938 = vpack.c.b16 %v4730, %v4722
    %v5939 = vpack.c.b16 %v4731, %v4723
    %v5940 = vpack.c.b16 %v4732, %v4724
    %v5941 = vpack.c.b16 %v4733, %v4725
    %v5942 = vpack.c.b16 %v4734, %v4726
    %v5943 = vpack.c.b16 %v4735, %v4727
    %v5944 = vpack.c.b16 %v4736, %v4728
    %v5945 = vpack.c.b16 %v4745, %v4737
    %v5946 = vpack.c.b16 %v4746, %v4738
    %v5947 = vpack.c.b16 %v4747, %v4739
    %v5948 = vpack.c.b16 %v4748, %v4740
    %v5949 = vpack.c.b16 %v4749, %v4741
    %v5950 = vpack.c.b16 %v4750, %v4742
    %v5951 = vpack.c.b16 %v4751, %v4743
    %v5952 = vpack.c.b16 %v4752, %v4744
    %v5953 = vpack.c.b16 %v4761, %v4753
    %v5954 = vpack.c.b16 %v4762, %v4754
    %v5955 = vpack.c.b16 %v4763, %v4755
    %v5956 = vpack.c.b16 %v4764, %v4756
    %v5957 = vpack.c.b16 %v4765, %v4757
    %v5958 = vpack.c.b16 %v4766, %v4758
    %v5959 = vpack.c.b16 %v4767, %v4759
    %v5960 = vpack.c.b16 %v4768, %v4760
    %v5961 = vpack.c.b16 %v4777, %v4769
    %v5962 = vpack.c.b16 %v4778, %v4770
    %v5963 = vpack.c.b16 %v4779, %v4771
    %v5964 = vpack.c.b16 %v4780, %v4772
    %v5965 = vpack.c.b16 %v4781, %v4773
    %v5966 = vpack.c.b16 %v4782, %v4774
    %v5967 = vpack.c.b16 %v4783, %v4775
    %v5968 = vpack.c.b16 %v4784, %v4776
    %v5969 = vpack.c.b16 %v4793, %v4785
    %v5970 = vpack.c.b16 %v4794, %v4786
    %v5971 = vpack.c.b16 %v4795, %v4787
    %v5972 = vpack.c.b16 %v4796, %v4788
    %v5973 = vpack.c.b16 %v4797, %v4789
    %v5974 = vpack.c.b16 %v4798, %v4790
    %v5975 = vpack.c.b16 %v4799, %v4791
    %v5976 = vpack.c.b16 %v4800, %v4792
    %v5977 = vpack.c.b16 %v4809, %v4801
    %v5978 = vpack.c.b16 %v4810, %v4802
    %v5979 = vpack.c.b16 %v4811, %v4803
    %v5980 = vpack.c.b16 %v4812, %v4804
    %v5981 = vpack.c.b16 %v4813, %v4805
    %v5982 = vpack.c.b16 %v4814, %v4806
    %v5983 = vpack.c.b16 %v4815, %v4807
    %v5984 = vpack.c.b16 %v4816, %v4808
    %v5985 = vpack.c.b16 %v4825, %v4817
    %v5986 = vpack.c.b16 %v4826, %v4818
    %v5987 = vpack.c.b16 %v4827, %v4819
    %v5988 = vpack.c.b16 %v4828, %v4820
    %v5989 = vpack.c.b16 %v4829, %v4821
    %v5990 = vpack.c.b16 %v4830, %v4822
    %v5991 = vpack.c.b16 %v4831, %v4823
    %v5992 = vpack.c.b16 %v4832, %v4824
    %v5993 = vpack.c.b16 %v4841, %v4833
    %v5994 = vpack.c.b16 %v4842, %v4834
    %v5995 = vpack.c.b16 %v4843, %v4835
    %v5996 = vpack.c.b16 %v4844, %v4836
    %v5997 = vpack.c.b16 %v4845, %v4837
    %v5998 = vpack.c.b16 %v4846, %v4838
    %v5999 = vpack.c.b16 %v4847, %v4839
    %v6000 = vpack.c.b16 %v4848, %v4840
    %v6001 = vpack.c.b16 %v4857, %v4849
    %v6002 = vpack.c.b16 %v4858, %v4850
    %v6003 = vpack.c.b16 %v4859, %v4851
    %v6004 = vpack.c.b16 %v4860, %v4852
    %v6005 = vpack.c.b16 %v4861, %v4853
    %v6006 = vpack.c.b16 %v4862, %v4854
    %v6007 = vpack.c.b16 %v4863, %v4855
    %v6008 = vpack.c.b16 %v4864, %v4856
    %v6009 = vpack.c.b16 %v4873, %v4865
    %v6010 = vpack.c.b16 %v4874, %v4866
    %v6011 = vpack.c.b16 %v4875, %v4867
    %v6012 = vpack.c.b16 %v4876, %v4868
    %v6013 = vpack.c.b16 %v4877, %v4869
    %v6014 = vpack.c.b16 %v4878, %v4870
    %v6015 = vpack.c.b16 %v4879, %v4871
    %v6016 = vpack.c.b16 %v4880, %v4872
    %v6017 = vpack.c.b16 %v4889, %v4881
    %v6018 = vpack.c.b16 %v4890, %v4882
    %v6019 = vpack.c.b16 %v4891, %v4883
    %v6020 = vpack.c.b16 %v4892, %v4884
    %v6021 = vpack.c.b16 %v4893, %v4885
    %v6022 = vpack.c.b16 %v4894, %v4886
    %v6023 = vpack.c.b16 %v4895, %v4887
    %v6024 = vpack.c.b16 %v4896, %v4888
    %v6025 = vpack.c.b16 %v4905, %v4897
    %v6026 = vpack.c.b16 %v4906, %v4898
    %v6027 = vpack.c.b16 %v4907, %v4899
    %v6028 = vpack.c.b16 %v4908, %v4900
    %v6029 = vpack.c.b16 %v4909, %v4901
    %v6030 = vpack.c.b16 %v4910, %v4902
    %v6031 = vpack.c.b16 %v4911, %v4903
    %v6032 = vpack.c.b16 %v4912, %v4904
    %v6033 = vpack.c.b16 %v4921, %v4913
    %v6034 = vpack.c.b16 %v4922, %v4914
    %v6035 = vpack.c.b16 %v4923, %v4915
    %v6036 = vpack.c.b16 %v4924, %v4916
    %v6037 = vpack.c.b16 %v4925, %v4917
    %v6038 = vpack.c.b16 %v4926, %v4918
    %v6039 = vpack.c.b16 %v4927, %v4919
    %v6040 = vpack.c.b16 %v4928, %v4920
    %v6041 = vpack.c.b16 %v4937, %v4929
    %v6042 = vpack.c.b16 %v4938, %v4930
    %v6043 = vpack.c.b16 %v4939, %v4931
    %v6044 = vpack.c.b16 %v4940, %v4932
    %v6045 = vpack.c.b16 %v4941, %v4933
    %v6046 = vpack.c.b16 %v4942, %v4934
    %v6047 = vpack.c.b16 %v4943, %v4935
    %v6048 = vpack.c.b16 %v4944, %v4936
    %v6049 = vpack.c.b16 %v4953, %v4945
    %v6050 = vpack.c.b16 %v4954, %v4946
    %v6051 = vpack.c.b16 %v4955, %v4947
    %v6052 = vpack.c.b16 %v4956, %v4948
    %v6053 = vpack.c.b16 %v4957, %v4949
    %v6054 = vpack.c.b16 %v4958, %v4950
    %v6055 = vpack.c.b16 %v4959, %v4951
    %v6056 = vpack.c.b16 %v4960, %v4952
    %v6057 = vpack.c.b16 %v4969, %v4961
    %v6058 = vpack.c.b16 %v4970, %v4962
    %v6059 = vpack.c.b16 %v4971, %v4963
    %v6060 = vpack.c.b16 %v4972, %v4964
    %v6061 = vpack.c.b16 %v4973, %v4965
    %v6062 = vpack.c.b16 %v4974, %v4966
    %v6063 = vpack.c.b16 %v4975, %v4967
    %v6064 = vpack.c.b16 %v4976, %v4968
    %v6065 = vpack.c.b16 %v4985, %v4977
    %v6066 = vpack.c.b16 %v4986, %v4978
    %v6067 = vpack.c.b16 %v4987, %v4979
    %v6068 = vpack.c.b16 %v4988, %v4980
    %v6069 = vpack.c.b16 %v4989, %v4981
    %v6070 = vpack.c.b16 %v4990, %v4982
    %v6071 = vpack.c.b16 %v4991, %v4983
    %v6072 = vpack.c.b16 %v4992, %v4984
    %v6073 = vpack.c.b16 %v5001, %v4993
    %v6074 = vpack.c.b16 %v5002, %v4994
    %v6075 = vpack.c.b16 %v5003, %v4995
    %v6076 = vpack.c.b16 %v5004, %v4996
    %v6077 = vpack.c.b16 %v5005, %v4997
    %v6078 = vpack.c.b16 %v5006, %v4998
    %v6079 = vpack.c.b16 %v5007, %v4999
    %v6080 = vpack.c.b16 %v5008, %v5000
    %v6081 = vpack.c.b16 %v5017, %v5009
    %v6082 = vpack.c.b16 %v5018, %v5010
    %v6083 = vpack.c.b16 %v5019, %v5011
    %v6084 = vpack.c.b16 %v5020, %v5012
    %v6085 = vpack.c.b16 %v5021, %v5013
    %v6086 = vpack.c.b16 %v5022, %v5014
    %v6087 = vpack.c.b16 %v5023, %v5015
    %v6088 = vpack.c.b16 %v5024, %v5016
    %v6089 = vpack.c.b16 %v5033, %v5025
    %v6090 = vpack.c.b16 %v5034, %v5026
    %v6091 = vpack.c.b16 %v5035, %v5027
    %v6092 = vpack.c.b16 %v5036, %v5028
    %v6093 = vpack.c.b16 %v5037, %v5029
    %v6094 = vpack.c.b16 %v5038, %v5030
    %v6095 = vpack.c.b16 %v5039, %v5031
    %v6096 = vpack.c.b16 %v5040, %v5032
    %v6097 = vpack.c.b16 %v5049, %v5041
    %v6098 = vpack.c.b16 %v5050, %v5042
    %v6099 = vpack.c.b16 %v5051, %v5043
    %v6100 = vpack.c.b16 %v5052, %v5044
    %v6101 = vpack.c.b16 %v5053, %v5045
    %v6102 = vpack.c.b16 %v5054, %v5046
    %v6103 = vpack.c.b16 %v5055, %v5047
    %v6104 = vpack.c.b16 %v5056, %v5048
    %v6105 = vpack.c.b16 %v5065, %v5057
    %v6106 = vpack.c.b16 %v5066, %v5058
    %v6107 = vpack.c.b16 %v5067, %v5059
    %v6108 = vpack.c.b16 %v5068, %v5060
    %v6109 = vpack.c.b16 %v5069, %v5061
    %v6110 = vpack.c.b16 %v5070, %v5062
    %v6111 = vpack.c.b16 %v5071, %v5063
    %v6112 = vpack.c.b16 %v5072, %v5064
    %v6113 = vpack.c.b16 %v5081, %v5073
    %v6114 = vpack.c.b16 %v5082, %v5074
    %v6115 = vpack.c.b16 %v5083, %v5075
    %v6116 = vpack.c.b16 %v5084, %v5076
    %v6117 = vpack.c.b16 %v5085, %v5077
    %v6118 = vpack.c.b16 %v5086, %v5078
    %v6119 = vpack.c.b16 %v5087, %v5079
    %v6120 = vpack.c.b16 %v5088, %v5080
    %v6121 = vpack.c.b16 %v5097, %v5089
    %v6122 = vpack.c.b16 %v5098, %v5090
    %v6123 = vpack.c.b16 %v5099, %v5091
    %v6124 = vpack.c.b16 %v5100, %v5092
    %v6125 = vpack.c.b16 %v5101, %v5093
    %v6126 = vpack.c.b16 %v5102, %v5094
    %v6127 = vpack.c.b16 %v5103, %v5095
    %v6128 = vpack.c.b16 %v5104, %v5096
    %7153 = vmatprep.subr.bf16.mxu0 %v5162
    %7154 = vmatpush1.bf16.msra.mxu0 %v5161
    %7155 = vmatprep.subr.bf16.mxu0 %v5154
    %7156 = vmatpush1.bf16.msra.mxu0 %v5153
    %7157 = vmatprep.subr.bf16.mxu0 %v5146
    %7158 = vmatpush1.bf16.msra.mxu0 %v5145
    %7159 = vmatprep.subr.bf16.mxu0 %v5138
    %7160 = vmatpush1.bf16.msra.mxu0 %v5137
    %7161 = vmatprep.subr.bf16.mxu0 %v5130
    %7162 = vmatpush1.bf16.msra.mxu0 %v5129
    %7163 = vmatprep.subr.bf16.mxu0 %v5122
    %7164 = vmatpush1.bf16.msra.mxu0 %v5121
    %7165 = vmatprep.subr.bf16.mxu0 %v5114
    %7166 = vmatpush1.bf16.msra.mxu0 %v5113
    %7167 = vmatprep.subr.bf16.mxu0 %v5106
    %7168 = vmatpush1.bf16.msra.mxu0 %v5105
    %7169 = vmatprep.subr.bf16.mxu0 %v5226
    %7170 = vmatpush2.bf16.msra.mxu0 %v5225
    %7171 = vmatprep.subr.bf16.mxu0 %v5218
    %7172 = vmatpush2.bf16.msra.mxu0 %v5217
    %7173 = vmatprep.subr.bf16.mxu0 %v5210
    %7174 = vmatpush2.bf16.msra.mxu0 %v5209
    %7175 = vmatprep.subr.bf16.mxu0 %v5202
    %7176 = vmatpush2.bf16.msra.mxu0 %v5201
    %7177 = vmatprep.subr.bf16.mxu0 %v5194
    %7178 = vmatpush2.bf16.msra.mxu0 %v5193
    %7179 = vmatprep.subr.bf16.mxu0 %v5186
    %7180 = vmatpush2.bf16.msra.mxu0 %v5185
    %7181 = vmatprep.subr.bf16.mxu0 %v5178
    %7182 = vmatpush2.bf16.msra.mxu0 %v5177
    %7183 = vmatprep.subr.bf16.mxu0 %v5170
    %7184 = vmatpush2.bf16.msra.mxu0 %v5169
    %7185 = vmatprep.mubr.bf16.mxu0 %v952
    %7186 = vmatmul.mubr.bf16.gmra.mxu0 %v951
    %v7187 = vpop.f32.mrf.mxu0
    %v7188 = vadd.f32 %v1996, %v7187
    %v7189 = vpop.f32.mrf.mxu0
    %v7190 = vadd.f32 %v2000, %v7189
    %v7191 = vpop.f32.mrf.mxu0
    %v7192 = vpop.f32.mrf.mxu0
    %7193 = vdwg.mxu0
    %7194 = vmatprep.subr.bf16.mxu0 %v5290
    %7195 = vmatpush1.bf16.msra.mxu0 %v5289
    %7196 = vmatprep.subr.bf16.mxu0 %v5282
    %7197 = vmatpush1.bf16.msra.mxu0 %v5281
    %7198 = vmatprep.subr.bf16.mxu0 %v5274
    %7199 = vmatpush1.bf16.msra.mxu0 %v5273
    %7200 = vmatprep.subr.bf16.mxu0 %v5266
    %7201 = vmatpush1.bf16.msra.mxu0 %v5265
    %7202 = vmatprep.subr.bf16.mxu0 %v5258
    %7203 = vmatpush1.bf16.msra.mxu0 %v5257
    %7204 = vmatprep.subr.bf16.mxu0 %v5250
    %7205 = vmatpush1.bf16.msra.mxu0 %v5249
    %7206 = vmatprep.subr.bf16.mxu0 %v5242
    %7207 = vmatpush1.bf16.msra.mxu0 %v5241
    %7208 = vmatprep.subr.bf16.mxu0 %v5234
    %7209 = vmatpush1.bf16.msra.mxu0 %v5233
    %7210 = vmatprep.subr.bf16.mxu0 %v5354
    %7211 = vmatpush2.bf16.msra.mxu0 %v5353
    %7212 = vmatprep.subr.bf16.mxu0 %v5346
    %7213 = vmatpush2.bf16.msra.mxu0 %v5345
    %7214 = vmatprep.subr.bf16.mxu0 %v5338
    %7215 = vmatpush2.bf16.msra.mxu0 %v5337
    %7216 = vmatprep.subr.bf16.mxu0 %v5330
    %7217 = vmatpush2.bf16.msra.mxu0 %v5329
    %7218 = vmatprep.subr.bf16.mxu0 %v5322
    %7219 = vmatpush2.bf16.msra.mxu0 %v5321
    %7220 = vmatprep.subr.bf16.mxu0 %v5314
    %7221 = vmatpush2.bf16.msra.mxu0 %v5313
    %7222 = vmatprep.subr.bf16.mxu0 %v5306
    %7223 = vmatpush2.bf16.msra.mxu0 %v5305
    %7224 = vmatprep.subr.bf16.mxu0 %v5298
    %7225 = vmatpush2.bf16.msra.mxu0 %v5297
    %7226 = vmatprep.mubr.bf16.mxu0 %v954
    %7227 = vmatmul.mubr.bf16.gmra.mxu0 %v953
    %v7228 = vpop.f32.mrf.mxu0
    %v7229 = vadd.f32 %v7188, %v7228
    %v7230 = vpop.f32.mrf.mxu0
    %v7231 = vadd.f32 %v7190, %v7230
    %v7232 = vpop.f32.mrf.mxu0
    %v7233 = vpop.f32.mrf.mxu0
    %7234 = vdwg.mxu0
    %7235 = vmatprep.subr.bf16.mxu0 %v5418
    %7236 = vmatpush1.bf16.msra.mxu0 %v5417
    %7237 = vmatprep.subr.bf16.mxu0 %v5410
    %7238 = vmatpush1.bf16.msra.mxu0 %v5409
    %7239 = vmatprep.subr.bf16.mxu0 %v5402
    %7240 = vmatpush1.bf16.msra.mxu0 %v5401
    %7241 = vmatprep.subr.bf16.mxu0 %v5394
    %7242 = vmatpush1.bf16.msra.mxu0 %v5393
    %7243 = vmatprep.subr.bf16.mxu0 %v5386
    %7244 = vmatpush1.bf16.msra.mxu0 %v5385
    %7245 = vmatprep.subr.bf16.mxu0 %v5378
    %7246 = vmatpush1.bf16.msra.mxu0 %v5377
    %7247 = vmatprep.subr.bf16.mxu0 %v5370
    %7248 = vmatpush1.bf16.msra.mxu0 %v5369
    %7249 = vmatprep.subr.bf16.mxu0 %v5362
    %7250 = vmatpush1.bf16.msra.mxu0 %v5361
    %7251 = vmatprep.subr.bf16.mxu0 %v5482
    %7252 = vmatpush2.bf16.msra.mxu0 %v5481
    %7253 = vmatprep.subr.bf16.mxu0 %v5474
    %7254 = vmatpush2.bf16.msra.mxu0 %v5473
    %7255 = vmatprep.subr.bf16.mxu0 %v5466
    %7256 = vmatpush2.bf16.msra.mxu0 %v5465
    %7257 = vmatprep.subr.bf16.mxu0 %v5458
    %7258 = vmatpush2.bf16.msra.mxu0 %v5457
    %7259 = vmatprep.subr.bf16.mxu0 %v5450
    %7260 = vmatpush2.bf16.msra.mxu0 %v5449
    %7261 = vmatprep.subr.bf16.mxu0 %v5442
    %7262 = vmatpush2.bf16.msra.mxu0 %v5441
    %7263 = vmatprep.subr.bf16.mxu0 %v5434
    %7264 = vmatpush2.bf16.msra.mxu0 %v5433
    %7265 = vmatprep.subr.bf16.mxu0 %v5426
    %7266 = vmatpush2.bf16.msra.mxu0 %v5425
    %7267 = vmatprep.mubr.bf16.mxu0 %v956
    %7268 = vmatmul.mubr.bf16.gmra.mxu0 %v955
    %v7269 = vpop.f32.mrf.mxu0
    %v7270 = vadd.f32 %v7229, %v7269
    %v7271 = vpop.f32.mrf.mxu0
    %v7272 = vadd.f32 %v7231, %v7271
    %v7273 = vpop.f32.mrf.mxu0
    %v7274 = vpop.f32.mrf.mxu0
    %7275 = vdwg.mxu0
    %7276 = vmatprep.subr.bf16.mxu0 %v5546
    %7277 = vmatpush1.bf16.msra.mxu0 %v5545
    %7278 = vmatprep.subr.bf16.mxu0 %v5538
    %7279 = vmatpush1.bf16.msra.mxu0 %v5537
    %7280 = vmatprep.subr.bf16.mxu0 %v5530
    %7281 = vmatpush1.bf16.msra.mxu0 %v5529
    %7282 = vmatprep.subr.bf16.mxu0 %v5522
    %7283 = vmatpush1.bf16.msra.mxu0 %v5521
    %7284 = vmatprep.subr.bf16.mxu0 %v5514
    %7285 = vmatpush1.bf16.msra.mxu0 %v5513
    %7286 = vmatprep.subr.bf16.mxu0 %v5506
    %7287 = vmatpush1.bf16.msra.mxu0 %v5505
    %7288 = vmatprep.subr.bf16.mxu0 %v5498
    %7289 = vmatpush1.bf16.msra.mxu0 %v5497
    %7290 = vmatprep.subr.bf16.mxu0 %v5490
    %7291 = vmatpush1.bf16.msra.mxu0 %v5489
    %7292 = vmatprep.subr.bf16.mxu0 %v5610
    %7293 = vmatpush2.bf16.msra.mxu0 %v5609
    %7294 = vmatprep.subr.bf16.mxu0 %v5602
    %7295 = vmatpush2.bf16.msra.mxu0 %v5601
    %7296 = vmatprep.subr.bf16.mxu0 %v5594
    %7297 = vmatpush2.bf16.msra.mxu0 %v5593
    %7298 = vmatprep.subr.bf16.mxu0 %v5586
    %7299 = vmatpush2.bf16.msra.mxu0 %v5585
    %7300 = vmatprep.subr.bf16.mxu0 %v5578
    %7301 = vmatpush2.bf16.msra.mxu0 %v5577
    %7302 = vmatprep.subr.bf16.mxu0 %v5570
    %7303 = vmatpush2.bf16.msra.mxu0 %v5569
    %7304 = vmatprep.subr.bf16.mxu0 %v5562
    %7305 = vmatpush2.bf16.msra.mxu0 %v5561
    %7306 = vmatprep.subr.bf16.mxu0 %v5554
    %7307 = vmatpush2.bf16.msra.mxu0 %v5553
    %7308 = vmatprep.mubr.bf16.mxu0 %v958
    %7309 = vmatmul.mubr.bf16.gmra.mxu0 %v957
    %v7310 = vpop.f32.mrf.mxu0
    %v7311 = vadd.f32 %v7270, %v7310
    %v7312 = vpop.f32.mrf.mxu0
    %v7313 = vadd.f32 %v7272, %v7312
    %v7314 = vpop.f32.mrf.mxu0
    %v7315 = vpop.f32.mrf.mxu0
    %7316 = vdwg.mxu0
    %7317 = vmatprep.subr.bf16.mxu0 %v5674
    %7318 = vmatpush1.bf16.msra.mxu0 %v5673
    %7319 = vmatprep.subr.bf16.mxu0 %v5666
    %7320 = vmatpush1.bf16.msra.mxu0 %v5665
    %7321 = vmatprep.subr.bf16.mxu0 %v5658
    %7322 = vmatpush1.bf16.msra.mxu0 %v5657
    %7323 = vmatprep.subr.bf16.mxu0 %v5650
    %7324 = vmatpush1.bf16.msra.mxu0 %v5649
    %7325 = vmatprep.subr.bf16.mxu0 %v5642
    %7326 = vmatpush1.bf16.msra.mxu0 %v5641
    %7327 = vmatprep.subr.bf16.mxu0 %v5634
    %7328 = vmatpush1.bf16.msra.mxu0 %v5633
    %7329 = vmatprep.subr.bf16.mxu0 %v5626
    %7330 = vmatpush1.bf16.msra.mxu0 %v5625
    %7331 = vmatprep.subr.bf16.mxu0 %v5618
    %7332 = vmatpush1.bf16.msra.mxu0 %v5617
    %7333 = vmatprep.subr.bf16.mxu0 %v5738
    %7334 = vmatpush2.bf16.msra.mxu0 %v5737
    %7335 = vmatprep.subr.bf16.mxu0 %v5730
    %7336 = vmatpush2.bf16.msra.mxu0 %v5729
    %7337 = vmatprep.subr.bf16.mxu0 %v5722
    %7338 = vmatpush2.bf16.msra.mxu0 %v5721
    %7339 = vmatprep.subr.bf16.mxu0 %v5714
    %7340 = vmatpush2.bf16.msra.mxu0 %v5713
    %7341 = vmatprep.subr.bf16.mxu0 %v5706
    %7342 = vmatpush2.bf16.msra.mxu0 %v5705
    %7343 = vmatprep.subr.bf16.mxu0 %v5698
    %7344 = vmatpush2.bf16.msra.mxu0 %v5697
    %7345 = vmatprep.subr.bf16.mxu0 %v5690
    %7346 = vmatpush2.bf16.msra.mxu0 %v5689
    %7347 = vmatprep.subr.bf16.mxu0 %v5682
    %7348 = vmatpush2.bf16.msra.mxu0 %v5681
    %7349 = vmatprep.mubr.bf16.mxu0 %v960
    %7350 = vmatmul.mubr.bf16.gmra.mxu0 %v959
    %v7351 = vpop.f32.mrf.mxu0
    %v7352 = vadd.f32 %v7311, %v7351
    %v7353 = vpop.f32.mrf.mxu0
    %v7354 = vadd.f32 %v7313, %v7353
    %v7355 = vpop.f32.mrf.mxu0
    %v7356 = vpop.f32.mrf.mxu0
    %7357 = vdwg.mxu0
    %7358 = vmatprep.subr.bf16.mxu0 %v5802
    %7359 = vmatpush1.bf16.msra.mxu0 %v5801
    %7360 = vmatprep.subr.bf16.mxu0 %v5794
    %7361 = vmatpush1.bf16.msra.mxu0 %v5793
    %7362 = vmatprep.subr.bf16.mxu0 %v5786
    %7363 = vmatpush1.bf16.msra.mxu0 %v5785
    %7364 = vmatprep.subr.bf16.mxu0 %v5778
    %7365 = vmatpush1.bf16.msra.mxu0 %v5777
    %7366 = vmatprep.subr.bf16.mxu0 %v5770
    %7367 = vmatpush1.bf16.msra.mxu0 %v5769
    %7368 = vmatprep.subr.bf16.mxu0 %v5762
    %7369 = vmatpush1.bf16.msra.mxu0 %v5761
    %7370 = vmatprep.subr.bf16.mxu0 %v5754
    %7371 = vmatpush1.bf16.msra.mxu0 %v5753
    %7372 = vmatprep.subr.bf16.mxu0 %v5746
    %7373 = vmatpush1.bf16.msra.mxu0 %v5745
    %7374 = vmatprep.subr.bf16.mxu0 %v5866
    %7375 = vmatpush2.bf16.msra.mxu0 %v5865
    %7376 = vmatprep.subr.bf16.mxu0 %v5858
    %7377 = vmatpush2.bf16.msra.mxu0 %v5857
    %7378 = vmatprep.subr.bf16.mxu0 %v5850
    %7379 = vmatpush2.bf16.msra.mxu0 %v5849
    %7380 = vmatprep.subr.bf16.mxu0 %v5842
    %7381 = vmatpush2.bf16.msra.mxu0 %v5841
    %7382 = vmatprep.subr.bf16.mxu0 %v5834
    %7383 = vmatpush2.bf16.msra.mxu0 %v5833
    %7384 = vmatprep.subr.bf16.mxu0 %v5826
    %7385 = vmatpush2.bf16.msra.mxu0 %v5825
    %7386 = vmatprep.subr.bf16.mxu0 %v5818
    %7387 = vmatpush2.bf16.msra.mxu0 %v5817
    %7388 = vmatprep.subr.bf16.mxu0 %v5810
    %7389 = vmatpush2.bf16.msra.mxu0 %v5809
    %7390 = vmatprep.mubr.bf16.mxu0 %v962
    %7391 = vmatmul.mubr.bf16.gmra.mxu0 %v961
    %v7392 = vpop.f32.mrf.mxu0
    %v7393 = vadd.f32 %v7352, %v7392
    %v7394 = vpop.f32.mrf.mxu0
    %v7395 = vadd.f32 %v7354, %v7394
    %v7396 = vpop.f32.mrf.mxu0
    %v7397 = vpop.f32.mrf.mxu0
    %7398 = vdwg.mxu0
    %7399 = vmatprep.subr.bf16.mxu0 %v5930
    %7400 = vmatpush1.bf16.msra.mxu0 %v5929
    %7401 = vmatprep.subr.bf16.mxu0 %v5922
    %7402 = vmatpush1.bf16.msra.mxu0 %v5921
    %7403 = vmatprep.subr.bf16.mxu0 %v5914
    %7404 = vmatpush1.bf16.msra.mxu0 %v5913
    %7405 = vmatprep.subr.bf16.mxu0 %v5906
    %7406 = vmatpush1.bf16.msra.mxu0 %v5905
    %7407 = vmatprep.subr.bf16.mxu0 %v5898
    %7408 = vmatpush1.bf16.msra.mxu0 %v5897
    %7409 = vmatprep.subr.bf16.mxu0 %v5890
    %7410 = vmatpush1.bf16.msra.mxu0 %v5889
    %7411 = vmatprep.subr.bf16.mxu0 %v5882
    %7412 = vmatpush1.bf16.msra.mxu0 %v5881
    %7413 = vmatprep.subr.bf16.mxu0 %v5874
    %7414 = vmatpush1.bf16.msra.mxu0 %v5873
    %7415 = vmatprep.subr.bf16.mxu0 %v5994
    %7416 = vmatpush2.bf16.msra.mxu0 %v5993
    %7417 = vmatprep.subr.bf16.mxu0 %v5986
    %7418 = vmatpush2.bf16.msra.mxu0 %v5985
    %7419 = vmatprep.subr.bf16.mxu0 %v5978
    %7420 = vmatpush2.bf16.msra.mxu0 %v5977
    %7421 = vmatprep.subr.bf16.mxu0 %v5970
    %7422 = vmatpush2.bf16.msra.mxu0 %v5969
    %7423 = vmatprep.subr.bf16.mxu0 %v5962
    %7424 = vmatpush2.bf16.msra.mxu0 %v5961
    %7425 = vmatprep.subr.bf16.mxu0 %v5954
    %7426 = vmatpush2.bf16.msra.mxu0 %v5953
    %7427 = vmatprep.subr.bf16.mxu0 %v5946
    %7428 = vmatpush2.bf16.msra.mxu0 %v5945
    %7429 = vmatprep.subr.bf16.mxu0 %v5938
    %7430 = vmatpush2.bf16.msra.mxu0 %v5937
    %7431 = vmatprep.mubr.bf16.mxu0 %v964
    %7432 = vmatmul.mubr.bf16.gmra.mxu0 %v963
    %v7433 = vpop.f32.mrf.mxu0
    %v7434 = vadd.f32 %v7393, %v7433
    %v7435 = vpop.f32.mrf.mxu0
    %v7436 = vadd.f32 %v7395, %v7435
    %v7437 = vpop.f32.mrf.mxu0
    %v7438 = vpop.f32.mrf.mxu0
    %7439 = vdwg.mxu0
    %7440 = vmatprep.subr.bf16.mxu0 %v6058
    %7441 = vmatpush1.bf16.msra.mxu0 %v6057
    %7442 = vmatprep.subr.bf16.mxu0 %v6050
    %7443 = vmatpush1.bf16.msra.mxu0 %v6049
    %7444 = vmatprep.subr.bf16.mxu0 %v6042
    %7445 = vmatpush1.bf16.msra.mxu0 %v6041
    %7446 = vmatprep.subr.bf16.mxu0 %v6034
    %7447 = vmatpush1.bf16.msra.mxu0 %v6033
    %7448 = vmatprep.subr.bf16.mxu0 %v6026
    %7449 = vmatpush1.bf16.msra.mxu0 %v6025
    %7450 = vmatprep.subr.bf16.mxu0 %v6018
    %7451 = vmatpush1.bf16.msra.mxu0 %v6017
    %7452 = vmatprep.subr.bf16.mxu0 %v6010
    %7453 = vmatpush1.bf16.msra.mxu0 %v6009
    %7454 = vmatprep.subr.bf16.mxu0 %v6002
    %7455 = vmatpush1.bf16.msra.mxu0 %v6001
    %7456 = vmatprep.subr.bf16.mxu0 %v6122
    %7457 = vmatpush2.bf16.msra.mxu0 %v6121
    %7458 = vmatprep.subr.bf16.mxu0 %v6114
    %7459 = vmatpush2.bf16.msra.mxu0 %v6113
    %7460 = vmatprep.subr.bf16.mxu0 %v6106
    %7461 = vmatpush2.bf16.msra.mxu0 %v6105
    %7462 = vmatprep.subr.bf16.mxu0 %v6098
    %7463 = vmatpush2.bf16.msra.mxu0 %v6097
    %7464 = vmatprep.subr.bf16.mxu0 %v6090
    %7465 = vmatpush2.bf16.msra.mxu0 %v6089
    %7466 = vmatprep.subr.bf16.mxu0 %v6082
    %7467 = vmatpush2.bf16.msra.mxu0 %v6081
    %7468 = vmatprep.subr.bf16.mxu0 %v6074
    %7469 = vmatpush2.bf16.msra.mxu0 %v6073
    %7470 = vmatprep.subr.bf16.mxu0 %v6066
    %7471 = vmatpush2.bf16.msra.mxu0 %v6065
    %7472 = vmatprep.mubr.bf16.mxu0 %v966
    %7473 = vmatmul.mubr.bf16.gmra.mxu0 %v965
    %v7474 = vpop.f32.mrf.mxu0
    %v7475 = vadd.f32 %v7434, %v7474
    %v7476 = vpop.f32.mrf.mxu0
    %v7477 = vadd.f32 %v7436, %v7476
    %v7478 = vpop.f32.mrf.mxu0
    %v7479 = vpop.f32.mrf.mxu0
    %7480 = vdwg.mxu0
    %7481 = vmatprep.subr.bf16.mxu0 %v5164
    %7482 = vmatpush1.bf16.msra.mxu0 %v5163
    %7483 = vmatprep.subr.bf16.mxu0 %v5156
    %7484 = vmatpush1.bf16.msra.mxu0 %v5155
    %7485 = vmatprep.subr.bf16.mxu0 %v5148
    %7486 = vmatpush1.bf16.msra.mxu0 %v5147
    %7487 = vmatprep.subr.bf16.mxu0 %v5140
    %7488 = vmatpush1.bf16.msra.mxu0 %v5139
    %7489 = vmatprep.subr.bf16.mxu0 %v5132
    %7490 = vmatpush1.bf16.msra.mxu0 %v5131
    %7491 = vmatprep.subr.bf16.mxu0 %v5124
    %7492 = vmatpush1.bf16.msra.mxu0 %v5123
    %7493 = vmatprep.subr.bf16.mxu0 %v5116
    %7494 = vmatpush1.bf16.msra.mxu0 %v5115
    %7495 = vmatprep.subr.bf16.mxu0 %v5108
    %7496 = vmatpush1.bf16.msra.mxu0 %v5107
    %7497 = vmatprep.subr.bf16.mxu0 %v5228
    %7498 = vmatpush2.bf16.msra.mxu0 %v5227
    %7499 = vmatprep.subr.bf16.mxu0 %v5220
    %7500 = vmatpush2.bf16.msra.mxu0 %v5219
    %7501 = vmatprep.subr.bf16.mxu0 %v5212
    %7502 = vmatpush2.bf16.msra.mxu0 %v5211
    %7503 = vmatprep.subr.bf16.mxu0 %v5204
    %7504 = vmatpush2.bf16.msra.mxu0 %v5203
    %7505 = vmatprep.subr.bf16.mxu0 %v5196
    %7506 = vmatpush2.bf16.msra.mxu0 %v5195
    %7507 = vmatprep.subr.bf16.mxu0 %v5188
    %7508 = vmatpush2.bf16.msra.mxu0 %v5187
    %7509 = vmatprep.subr.bf16.mxu0 %v5180
    %7510 = vmatpush2.bf16.msra.mxu0 %v5179
    %7511 = vmatprep.subr.bf16.mxu0 %v5172
    %7512 = vmatpush2.bf16.msra.mxu0 %v5171
    %7513 = vmatprep.mubr.bf16.mxu0 %v952
    %7514 = vmatmul.mubr.bf16.gmra.mxu0 %v951
    %v7515 = vpop.f32.mrf.mxu0
    %v7516 = vadd.f32 %v2004, %v7515
    %v7517 = vpop.f32.mrf.mxu0
    %v7518 = vadd.f32 %v2008, %v7517
    %v7519 = vpop.f32.mrf.mxu0
    %v7520 = vpop.f32.mrf.mxu0
    %7521 = vdwg.mxu0
    %7522 = vmatprep.subr.bf16.mxu0 %v5292
    %7523 = vmatpush1.bf16.msra.mxu0 %v5291
    %7524 = vmatprep.subr.bf16.mxu0 %v5284
    %7525 = vmatpush1.bf16.msra.mxu0 %v5283
    %7526 = vmatprep.subr.bf16.mxu0 %v5276
    %7527 = vmatpush1.bf16.msra.mxu0 %v5275
    %7528 = vmatprep.subr.bf16.mxu0 %v5268
    %7529 = vmatpush1.bf16.msra.mxu0 %v5267
    %7530 = vmatprep.subr.bf16.mxu0 %v5260
    %7531 = vmatpush1.bf16.msra.mxu0 %v5259
    %7532 = vmatprep.subr.bf16.mxu0 %v5252
    %7533 = vmatpush1.bf16.msra.mxu0 %v5251
    %7534 = vmatprep.subr.bf16.mxu0 %v5244
    %7535 = vmatpush1.bf16.msra.mxu0 %v5243
    %7536 = vmatprep.subr.bf16.mxu0 %v5236
    %7537 = vmatpush1.bf16.msra.mxu0 %v5235
    %7538 = vmatprep.subr.bf16.mxu0 %v5356
    %7539 = vmatpush2.bf16.msra.mxu0 %v5355
    %7540 = vmatprep.subr.bf16.mxu0 %v5348
    %7541 = vmatpush2.bf16.msra.mxu0 %v5347
    %7542 = vmatprep.subr.bf16.mxu0 %v5340
    %7543 = vmatpush2.bf16.msra.mxu0 %v5339
    %7544 = vmatprep.subr.bf16.mxu0 %v5332
    %7545 = vmatpush2.bf16.msra.mxu0 %v5331
    %7546 = vmatprep.subr.bf16.mxu0 %v5324
    %7547 = vmatpush2.bf16.msra.mxu0 %v5323
    %7548 = vmatprep.subr.bf16.mxu0 %v5316
    %7549 = vmatpush2.bf16.msra.mxu0 %v5315
    %7550 = vmatprep.subr.bf16.mxu0 %v5308
    %7551 = vmatpush2.bf16.msra.mxu0 %v5307
    %7552 = vmatprep.subr.bf16.mxu0 %v5300
    %7553 = vmatpush2.bf16.msra.mxu0 %v5299
    %7554 = vmatprep.mubr.bf16.mxu0 %v954
    %7555 = vmatmul.mubr.bf16.gmra.mxu0 %v953
    %v7556 = vpop.f32.mrf.mxu0
    %v7557 = vadd.f32 %v7516, %v7556
    %v7558 = vpop.f32.mrf.mxu0
    %v7559 = vadd.f32 %v7518, %v7558
    %v7560 = vpop.f32.mrf.mxu0
    %v7561 = vpop.f32.mrf.mxu0
    %7562 = vdwg.mxu0
    %7563 = vmatprep.subr.bf16.mxu0 %v5420
    %7564 = vmatpush1.bf16.msra.mxu0 %v5419
    %7565 = vmatprep.subr.bf16.mxu0 %v5412
    %7566 = vmatpush1.bf16.msra.mxu0 %v5411
    %7567 = vmatprep.subr.bf16.mxu0 %v5404
    %7568 = vmatpush1.bf16.msra.mxu0 %v5403
    %7569 = vmatprep.subr.bf16.mxu0 %v5396
    %7570 = vmatpush1.bf16.msra.mxu0 %v5395
    %7571 = vmatprep.subr.bf16.mxu0 %v5388
    %7572 = vmatpush1.bf16.msra.mxu0 %v5387
    %7573 = vmatprep.subr.bf16.mxu0 %v5380
    %7574 = vmatpush1.bf16.msra.mxu0 %v5379
    %7575 = vmatprep.subr.bf16.mxu0 %v5372
    %7576 = vmatpush1.bf16.msra.mxu0 %v5371
    %7577 = vmatprep.subr.bf16.mxu0 %v5364
    %7578 = vmatpush1.bf16.msra.mxu0 %v5363
    %7579 = vmatprep.subr.bf16.mxu0 %v5484
    %7580 = vmatpush2.bf16.msra.mxu0 %v5483
    %7581 = vmatprep.subr.bf16.mxu0 %v5476
    %7582 = vmatpush2.bf16.msra.mxu0 %v5475
    %7583 = vmatprep.subr.bf16.mxu0 %v5468
    %7584 = vmatpush2.bf16.msra.mxu0 %v5467
    %7585 = vmatprep.subr.bf16.mxu0 %v5460
    %7586 = vmatpush2.bf16.msra.mxu0 %v5459
    %7587 = vmatprep.subr.bf16.mxu0 %v5452
    %7588 = vmatpush2.bf16.msra.mxu0 %v5451
    %7589 = vmatprep.subr.bf16.mxu0 %v5444
    %7590 = vmatpush2.bf16.msra.mxu0 %v5443
    %7591 = vmatprep.subr.bf16.mxu0 %v5436
    %7592 = vmatpush2.bf16.msra.mxu0 %v5435
    %7593 = vmatprep.subr.bf16.mxu0 %v5428
    %7594 = vmatpush2.bf16.msra.mxu0 %v5427
    %7595 = vmatprep.mubr.bf16.mxu0 %v956
    %7596 = vmatmul.mubr.bf16.gmra.mxu0 %v955
    %v7597 = vpop.f32.mrf.mxu0
    %v7598 = vadd.f32 %v7557, %v7597
    %v7599 = vpop.f32.mrf.mxu0
    %v7600 = vadd.f32 %v7559, %v7599
    %v7601 = vpop.f32.mrf.mxu0
    %v7602 = vpop.f32.mrf.mxu0
    %7603 = vdwg.mxu0
    %7604 = vmatprep.subr.bf16.mxu0 %v5548
    %7605 = vmatpush1.bf16.msra.mxu0 %v5547
    %7606 = vmatprep.subr.bf16.mxu0 %v5540
    %7607 = vmatpush1.bf16.msra.mxu0 %v5539
    %7608 = vmatprep.subr.bf16.mxu0 %v5532
    %7609 = vmatpush1.bf16.msra.mxu0 %v5531
    %7610 = vmatprep.subr.bf16.mxu0 %v5524
    %7611 = vmatpush1.bf16.msra.mxu0 %v5523
    %7612 = vmatprep.subr.bf16.mxu0 %v5516
    %7613 = vmatpush1.bf16.msra.mxu0 %v5515
    %7614 = vmatprep.subr.bf16.mxu0 %v5508
    %7615 = vmatpush1.bf16.msra.mxu0 %v5507
    %7616 = vmatprep.subr.bf16.mxu0 %v5500
    %7617 = vmatpush1.bf16.msra.mxu0 %v5499
    %7618 = vmatprep.subr.bf16.mxu0 %v5492
    %7619 = vmatpush1.bf16.msra.mxu0 %v5491
    %7620 = vmatprep.subr.bf16.mxu0 %v5612
    %7621 = vmatpush2.bf16.msra.mxu0 %v5611
    %7622 = vmatprep.subr.bf16.mxu0 %v5604
    %7623 = vmatpush2.bf16.msra.mxu0 %v5603
    %7624 = vmatprep.subr.bf16.mxu0 %v5596
    %7625 = vmatpush2.bf16.msra.mxu0 %v5595
    %7626 = vmatprep.subr.bf16.mxu0 %v5588
    %7627 = vmatpush2.bf16.msra.mxu0 %v5587
    %7628 = vmatprep.subr.bf16.mxu0 %v5580
    %7629 = vmatpush2.bf16.msra.mxu0 %v5579
    %7630 = vmatprep.subr.bf16.mxu0 %v5572
    %7631 = vmatpush2.bf16.msra.mxu0 %v5571
    %7632 = vmatprep.subr.bf16.mxu0 %v5564
    %7633 = vmatpush2.bf16.msra.mxu0 %v5563
    %7634 = vmatprep.subr.bf16.mxu0 %v5556
    %7635 = vmatpush2.bf16.msra.mxu0 %v5555
    %7636 = vmatprep.mubr.bf16.mxu0 %v958
    %7637 = vmatmul.mubr.bf16.gmra.mxu0 %v957
    %v7638 = vpop.f32.mrf.mxu0
    %v7639 = vadd.f32 %v7598, %v7638
    %v7640 = vpop.f32.mrf.mxu0
    %v7641 = vadd.f32 %v7600, %v7640
    %v7642 = vpop.f32.mrf.mxu0
    %v7643 = vpop.f32.mrf.mxu0
    %7644 = vdwg.mxu0
    %7645 = vmatprep.subr.bf16.mxu0 %v5676
    %7646 = vmatpush1.bf16.msra.mxu0 %v5675
    %7647 = vmatprep.subr.bf16.mxu0 %v5668
    %7648 = vmatpush1.bf16.msra.mxu0 %v5667
    %7649 = vmatprep.subr.bf16.mxu0 %v5660
    %7650 = vmatpush1.bf16.msra.mxu0 %v5659
    %7651 = vmatprep.subr.bf16.mxu0 %v5652
    %7652 = vmatpush1.bf16.msra.mxu0 %v5651
    %7653 = vmatprep.subr.bf16.mxu0 %v5644
    %7654 = vmatpush1.bf16.msra.mxu0 %v5643
    %7655 = vmatprep.subr.bf16.mxu0 %v5636
    %7656 = vmatpush1.bf16.msra.mxu0 %v5635
    %7657 = vmatprep.subr.bf16.mxu0 %v5628
    %7658 = vmatpush1.bf16.msra.mxu0 %v5627
    %7659 = vmatprep.subr.bf16.mxu0 %v5620
    %7660 = vmatpush1.bf16.msra.mxu0 %v5619
    %7661 = vmatprep.subr.bf16.mxu0 %v5740
    %7662 = vmatpush2.bf16.msra.mxu0 %v5739
    %7663 = vmatprep.subr.bf16.mxu0 %v5732
    %7664 = vmatpush2.bf16.msra.mxu0 %v5731
    %7665 = vmatprep.subr.bf16.mxu0 %v5724
    %7666 = vmatpush2.bf16.msra.mxu0 %v5723
    %7667 = vmatprep.subr.bf16.mxu0 %v5716
    %7668 = vmatpush2.bf16.msra.mxu0 %v5715
    %7669 = vmatprep.subr.bf16.mxu0 %v5708
    %7670 = vmatpush2.bf16.msra.mxu0 %v5707
    %7671 = vmatprep.subr.bf16.mxu0 %v5700
    %7672 = vmatpush2.bf16.msra.mxu0 %v5699
    %7673 = vmatprep.subr.bf16.mxu0 %v5692
    %7674 = vmatpush2.bf16.msra.mxu0 %v5691
    %7675 = vmatprep.subr.bf16.mxu0 %v5684
    %7676 = vmatpush2.bf16.msra.mxu0 %v5683
    %7677 = vmatprep.mubr.bf16.mxu0 %v960
    %7678 = vmatmul.mubr.bf16.gmra.mxu0 %v959
    %v7679 = vpop.f32.mrf.mxu0
    %v7680 = vadd.f32 %v7639, %v7679
    %v7681 = vpop.f32.mrf.mxu0
    %v7682 = vadd.f32 %v7641, %v7681
    %v7683 = vpop.f32.mrf.mxu0
    %v7684 = vpop.f32.mrf.mxu0
    %7685 = vdwg.mxu0
    %7686 = vmatprep.subr.bf16.mxu0 %v5804
    %7687 = vmatpush1.bf16.msra.mxu0 %v5803
    %7688 = vmatprep.subr.bf16.mxu0 %v5796
    %7689 = vmatpush1.bf16.msra.mxu0 %v5795
    %7690 = vmatprep.subr.bf16.mxu0 %v5788
    %7691 = vmatpush1.bf16.msra.mxu0 %v5787
    %7692 = vmatprep.subr.bf16.mxu0 %v5780
    %7693 = vmatpush1.bf16.msra.mxu0 %v5779
    %7694 = vmatprep.subr.bf16.mxu0 %v5772
    %7695 = vmatpush1.bf16.msra.mxu0 %v5771
    %7696 = vmatprep.subr.bf16.mxu0 %v5764
    %7697 = vmatpush1.bf16.msra.mxu0 %v5763
    %7698 = vmatprep.subr.bf16.mxu0 %v5756
    %7699 = vmatpush1.bf16.msra.mxu0 %v5755
    %7700 = vmatprep.subr.bf16.mxu0 %v5748
    %7701 = vmatpush1.bf16.msra.mxu0 %v5747
    %7702 = vmatprep.subr.bf16.mxu0 %v5868
    %7703 = vmatpush2.bf16.msra.mxu0 %v5867
    %7704 = vmatprep.subr.bf16.mxu0 %v5860
    %7705 = vmatpush2.bf16.msra.mxu0 %v5859
    %7706 = vmatprep.subr.bf16.mxu0 %v5852
    %7707 = vmatpush2.bf16.msra.mxu0 %v5851
    %7708 = vmatprep.subr.bf16.mxu0 %v5844
    %7709 = vmatpush2.bf16.msra.mxu0 %v5843
    %7710 = vmatprep.subr.bf16.mxu0 %v5836
    %7711 = vmatpush2.bf16.msra.mxu0 %v5835
    %7712 = vmatprep.subr.bf16.mxu0 %v5828
    %7713 = vmatpush2.bf16.msra.mxu0 %v5827
    %7714 = vmatprep.subr.bf16.mxu0 %v5820
    %7715 = vmatpush2.bf16.msra.mxu0 %v5819
    %7716 = vmatprep.subr.bf16.mxu0 %v5812
    %7717 = vmatpush2.bf16.msra.mxu0 %v5811
    %7718 = vmatprep.mubr.bf16.mxu0 %v962
    %7719 = vmatmul.mubr.bf16.gmra.mxu0 %v961
    %v7720 = vpop.f32.mrf.mxu0
    %v7721 = vadd.f32 %v7680, %v7720
    %v7722 = vpop.f32.mrf.mxu0
    %v7723 = vadd.f32 %v7682, %v7722
    %v7724 = vpop.f32.mrf.mxu0
    %v7725 = vpop.f32.mrf.mxu0
    %7726 = vdwg.mxu0
    %7727 = vmatprep.subr.bf16.mxu0 %v5932
    %7728 = vmatpush1.bf16.msra.mxu0 %v5931
    %7729 = vmatprep.subr.bf16.mxu0 %v5924
    %7730 = vmatpush1.bf16.msra.mxu0 %v5923
    %7731 = vmatprep.subr.bf16.mxu0 %v5916
    %7732 = vmatpush1.bf16.msra.mxu0 %v5915
    %7733 = vmatprep.subr.bf16.mxu0 %v5908
    %7734 = vmatpush1.bf16.msra.mxu0 %v5907
    %7735 = vmatprep.subr.bf16.mxu0 %v5900
    %7736 = vmatpush1.bf16.msra.mxu0 %v5899
    %7737 = vmatprep.subr.bf16.mxu0 %v5892
    %7738 = vmatpush1.bf16.msra.mxu0 %v5891
    %7739 = vmatprep.subr.bf16.mxu0 %v5884
    %7740 = vmatpush1.bf16.msra.mxu0 %v5883
    %7741 = vmatprep.subr.bf16.mxu0 %v5876
    %7742 = vmatpush1.bf16.msra.mxu0 %v5875
    %7743 = vmatprep.subr.bf16.mxu0 %v5996
    %7744 = vmatpush2.bf16.msra.mxu0 %v5995
    %7745 = vmatprep.subr.bf16.mxu0 %v5988
    %7746 = vmatpush2.bf16.msra.mxu0 %v5987
    %7747 = vmatprep.subr.bf16.mxu0 %v5980
    %7748 = vmatpush2.bf16.msra.mxu0 %v5979
    %7749 = vmatprep.subr.bf16.mxu0 %v5972
    %7750 = vmatpush2.bf16.msra.mxu0 %v5971
    %7751 = vmatprep.subr.bf16.mxu0 %v5964
    %7752 = vmatpush2.bf16.msra.mxu0 %v5963
    %7753 = vmatprep.subr.bf16.mxu0 %v5956
    %7754 = vmatpush2.bf16.msra.mxu0 %v5955
    %7755 = vmatprep.subr.bf16.mxu0 %v5948
    %7756 = vmatpush2.bf16.msra.mxu0 %v5947
    %7757 = vmatprep.subr.bf16.mxu0 %v5940
    %7758 = vmatpush2.bf16.msra.mxu0 %v5939
    %7759 = vmatprep.mubr.bf16.mxu0 %v964
    %7760 = vmatmul.mubr.bf16.gmra.mxu0 %v963
    %v7761 = vpop.f32.mrf.mxu0
    %v7762 = vadd.f32 %v7721, %v7761
    %v7763 = vpop.f32.mrf.mxu0
    %v7764 = vadd.f32 %v7723, %v7763
    %v7765 = vpop.f32.mrf.mxu0
    %v7766 = vpop.f32.mrf.mxu0
    %7767 = vdwg.mxu0
    %7768 = vmatprep.subr.bf16.mxu0 %v6060
    %7769 = vmatpush1.bf16.msra.mxu0 %v6059
    %7770 = vmatprep.subr.bf16.mxu0 %v6052
    %7771 = vmatpush1.bf16.msra.mxu0 %v6051
    %7772 = vmatprep.subr.bf16.mxu0 %v6044
    %7773 = vmatpush1.bf16.msra.mxu0 %v6043
    %7774 = vmatprep.subr.bf16.mxu0 %v6036
    %7775 = vmatpush1.bf16.msra.mxu0 %v6035
    %7776 = vmatprep.subr.bf16.mxu0 %v6028
    %7777 = vmatpush1.bf16.msra.mxu0 %v6027
    %7778 = vmatprep.subr.bf16.mxu0 %v6020
    %7779 = vmatpush1.bf16.msra.mxu0 %v6019
    %7780 = vmatprep.subr.bf16.mxu0 %v6012
    %7781 = vmatpush1.bf16.msra.mxu0 %v6011
    %7782 = vmatprep.subr.bf16.mxu0 %v6004
    %7783 = vmatpush1.bf16.msra.mxu0 %v6003
    %7784 = vmatprep.subr.bf16.mxu0 %v6124
    %7785 = vmatpush2.bf16.msra.mxu0 %v6123
    %7786 = vmatprep.subr.bf16.mxu0 %v6116
    %7787 = vmatpush2.bf16.msra.mxu0 %v6115
    %7788 = vmatprep.subr.bf16.mxu0 %v6108
    %7789 = vmatpush2.bf16.msra.mxu0 %v6107
    %7790 = vmatprep.subr.bf16.mxu0 %v6100
    %7791 = vmatpush2.bf16.msra.mxu0 %v6099
    %7792 = vmatprep.subr.bf16.mxu0 %v6092
    %7793 = vmatpush2.bf16.msra.mxu0 %v6091
    %7794 = vmatprep.subr.bf16.mxu0 %v6084
    %7795 = vmatpush2.bf16.msra.mxu0 %v6083
    %7796 = vmatprep.subr.bf16.mxu0 %v6076
    %7797 = vmatpush2.bf16.msra.mxu0 %v6075
    %7798 = vmatprep.subr.bf16.mxu0 %v6068
    %7799 = vmatpush2.bf16.msra.mxu0 %v6067
    %7800 = vmatprep.mubr.bf16.mxu0 %v966
    %7801 = vmatmul.mubr.bf16.gmra.mxu0 %v965
    %v7802 = vpop.f32.mrf.mxu0
    %v7803 = vadd.f32 %v7762, %v7802
    %v7804 = vpop.f32.mrf.mxu0
    %v7805 = vadd.f32 %v7764, %v7804
    %v7806 = vpop.f32.mrf.mxu0
    %v7807 = vpop.f32.mrf.mxu0
    %7808 = vdwg.mxu0
    %7809 = vmatprep.subr.bf16.mxu0 %v5166
    %7810 = vmatpush1.bf16.msra.mxu0 %v5165
    %7811 = vmatprep.subr.bf16.mxu0 %v5158
    %7812 = vmatpush1.bf16.msra.mxu0 %v5157
    %7813 = vmatprep.subr.bf16.mxu0 %v5150
    %7814 = vmatpush1.bf16.msra.mxu0 %v5149
    %7815 = vmatprep.subr.bf16.mxu0 %v5142
    %7816 = vmatpush1.bf16.msra.mxu0 %v5141
    %7817 = vmatprep.subr.bf16.mxu0 %v5134
    %7818 = vmatpush1.bf16.msra.mxu0 %v5133
    %7819 = vmatprep.subr.bf16.mxu0 %v5126
    %7820 = vmatpush1.bf16.msra.mxu0 %v5125
    %7821 = vmatprep.subr.bf16.mxu0 %v5118
    %7822 = vmatpush1.bf16.msra.mxu0 %v5117
    %7823 = vmatprep.subr.bf16.mxu0 %v5110
    %7824 = vmatpush1.bf16.msra.mxu0 %v5109
    %7825 = vmatprep.subr.bf16.mxu0 %v5230
    %7826 = vmatpush2.bf16.msra.mxu0 %v5229
    %7827 = vmatprep.subr.bf16.mxu0 %v5222
    %7828 = vmatpush2.bf16.msra.mxu0 %v5221
    %7829 = vmatprep.subr.bf16.mxu0 %v5214
    %7830 = vmatpush2.bf16.msra.mxu0 %v5213
    %7831 = vmatprep.subr.bf16.mxu0 %v5206
    %7832 = vmatpush2.bf16.msra.mxu0 %v5205
    %7833 = vmatprep.subr.bf16.mxu0 %v5198
    %7834 = vmatpush2.bf16.msra.mxu0 %v5197
    %7835 = vmatprep.subr.bf16.mxu0 %v5190
    %7836 = vmatpush2.bf16.msra.mxu0 %v5189
    %7837 = vmatprep.subr.bf16.mxu0 %v5182
    %7838 = vmatpush2.bf16.msra.mxu0 %v5181
    %7839 = vmatprep.subr.bf16.mxu0 %v5174
    %7840 = vmatpush2.bf16.msra.mxu0 %v5173
    %7841 = vmatprep.mubr.bf16.mxu0 %v952
    %7842 = vmatmul.mubr.bf16.gmra.mxu0 %v951
    %v7843 = vpop.f32.mrf.mxu0
    %v7844 = vadd.f32 %v2012, %v7843
    %v7845 = vpop.f32.mrf.mxu0
    %v7846 = vadd.f32 %v2016, %v7845
    %v7847 = vpop.f32.mrf.mxu0
    %v7848 = vpop.f32.mrf.mxu0
    %7849 = vdwg.mxu0
    %7850 = vmatprep.subr.bf16.mxu0 %v5294
    %7851 = vmatpush1.bf16.msra.mxu0 %v5293
    %7852 = vmatprep.subr.bf16.mxu0 %v5286
    %7853 = vmatpush1.bf16.msra.mxu0 %v5285
    %7854 = vmatprep.subr.bf16.mxu0 %v5278
    %7855 = vmatpush1.bf16.msra.mxu0 %v5277
    %7856 = vmatprep.subr.bf16.mxu0 %v5270
    %7857 = vmatpush1.bf16.msra.mxu0 %v5269
    %7858 = vmatprep.subr.bf16.mxu0 %v5262
    %7859 = vmatpush1.bf16.msra.mxu0 %v5261
    %7860 = vmatprep.subr.bf16.mxu0 %v5254
    %7861 = vmatpush1.bf16.msra.mxu0 %v5253
    %7862 = vmatprep.subr.bf16.mxu0 %v5246
    %7863 = vmatpush1.bf16.msra.mxu0 %v5245
    %7864 = vmatprep.subr.bf16.mxu0 %v5238
    %7865 = vmatpush1.bf16.msra.mxu0 %v5237
    %7866 = vmatprep.subr.bf16.mxu0 %v5358
    %7867 = vmatpush2.bf16.msra.mxu0 %v5357
    %7868 = vmatprep.subr.bf16.mxu0 %v5350
    %7869 = vmatpush2.bf16.msra.mxu0 %v5349
    %7870 = vmatprep.subr.bf16.mxu0 %v5342
    %7871 = vmatpush2.bf16.msra.mxu0 %v5341
    %7872 = vmatprep.subr.bf16.mxu0 %v5334
    %7873 = vmatpush2.bf16.msra.mxu0 %v5333
    %7874 = vmatprep.subr.bf16.mxu0 %v5326
    %7875 = vmatpush2.bf16.msra.mxu0 %v5325
    %7876 = vmatprep.subr.bf16.mxu0 %v5318
    %7877 = vmatpush2.bf16.msra.mxu0 %v5317
    %7878 = vmatprep.subr.bf16.mxu0 %v5310
    %7879 = vmatpush2.bf16.msra.mxu0 %v5309
    %7880 = vmatprep.subr.bf16.mxu0 %v5302
    %7881 = vmatpush2.bf16.msra.mxu0 %v5301
    %7882 = vmatprep.mubr.bf16.mxu0 %v954
    %7883 = vmatmul.mubr.bf16.gmra.mxu0 %v953
    %v7884 = vpop.f32.mrf.mxu0
    %v7885 = vadd.f32 %v7844, %v7884
    %v7886 = vpop.f32.mrf.mxu0
    %v7887 = vadd.f32 %v7846, %v7886
    %v7888 = vpop.f32.mrf.mxu0
    %v7889 = vpop.f32.mrf.mxu0
    %7890 = vdwg.mxu0
    %7891 = vmatprep.subr.bf16.mxu0 %v5422
    %7892 = vmatpush1.bf16.msra.mxu0 %v5421
    %7893 = vmatprep.subr.bf16.mxu0 %v5414
    %7894 = vmatpush1.bf16.msra.mxu0 %v5413
    %7895 = vmatprep.subr.bf16.mxu0 %v5406
    %7896 = vmatpush1.bf16.msra.mxu0 %v5405
    %7897 = vmatprep.subr.bf16.mxu0 %v5398
    %7898 = vmatpush1.bf16.msra.mxu0 %v5397
    %7899 = vmatprep.subr.bf16.mxu0 %v5390
    %7900 = vmatpush1.bf16.msra.mxu0 %v5389
    %7901 = vmatprep.subr.bf16.mxu0 %v5382
    %7902 = vmatpush1.bf16.msra.mxu0 %v5381
    %7903 = vmatprep.subr.bf16.mxu0 %v5374
    %7904 = vmatpush1.bf16.msra.mxu0 %v5373
    %7905 = vmatprep.subr.bf16.mxu0 %v5366
    %7906 = vmatpush1.bf16.msra.mxu0 %v5365
    %7907 = vmatprep.subr.bf16.mxu0 %v5486
    %7908 = vmatpush2.bf16.msra.mxu0 %v5485
    %7909 = vmatprep.subr.bf16.mxu0 %v5478
    %7910 = vmatpush2.bf16.msra.mxu0 %v5477
    %7911 = vmatprep.subr.bf16.mxu0 %v5470
    %7912 = vmatpush2.bf16.msra.mxu0 %v5469
    %7913 = vmatprep.subr.bf16.mxu0 %v5462
    %7914 = vmatpush2.bf16.msra.mxu0 %v5461
    %7915 = vmatprep.subr.bf16.mxu0 %v5454
    %7916 = vmatpush2.bf16.msra.mxu0 %v5453
    %7917 = vmatprep.subr.bf16.mxu0 %v5446
    %7918 = vmatpush2.bf16.msra.mxu0 %v5445
    %7919 = vmatprep.subr.bf16.mxu0 %v5438
    %7920 = vmatpush2.bf16.msra.mxu0 %v5437
    %7921 = vmatprep.subr.bf16.mxu0 %v5430
    %7922 = vmatpush2.bf16.msra.mxu0 %v5429
    %7923 = vmatprep.mubr.bf16.mxu0 %v956
    %7924 = vmatmul.mubr.bf16.gmra.mxu0 %v955
    %v7925 = vpop.f32.mrf.mxu0
    %v7926 = vadd.f32 %v7885, %v7925
    %v7927 = vpop.f32.mrf.mxu0
    %v7928 = vadd.f32 %v7887, %v7927
    %v7929 = vpop.f32.mrf.mxu0
    %v7930 = vpop.f32.mrf.mxu0
    %7931 = vdwg.mxu0
    %7932 = vmatprep.subr.bf16.mxu0 %v5550
    %7933 = vmatpush1.bf16.msra.mxu0 %v5549
    %7934 = vmatprep.subr.bf16.mxu0 %v5542
    %7935 = vmatpush1.bf16.msra.mxu0 %v5541
    %7936 = vmatprep.subr.bf16.mxu0 %v5534
    %7937 = vmatpush1.bf16.msra.mxu0 %v5533
    %7938 = vmatprep.subr.bf16.mxu0 %v5526
    %7939 = vmatpush1.bf16.msra.mxu0 %v5525
    %7940 = vmatprep.subr.bf16.mxu0 %v5518
    %7941 = vmatpush1.bf16.msra.mxu0 %v5517
    %7942 = vmatprep.subr.bf16.mxu0 %v5510
    %7943 = vmatpush1.bf16.msra.mxu0 %v5509
    %7944 = vmatprep.subr.bf16.mxu0 %v5502
    %7945 = vmatpush1.bf16.msra.mxu0 %v5501
    %7946 = vmatprep.subr.bf16.mxu0 %v5494
    %7947 = vmatpush1.bf16.msra.mxu0 %v5493
    %7948 = vmatprep.subr.bf16.mxu0 %v5614
    %7949 = vmatpush2.bf16.msra.mxu0 %v5613
    %7950 = vmatprep.subr.bf16.mxu0 %v5606
    %7951 = vmatpush2.bf16.msra.mxu0 %v5605
    %7952 = vmatprep.subr.bf16.mxu0 %v5598
    %7953 = vmatpush2.bf16.msra.mxu0 %v5597
    %7954 = vmatprep.subr.bf16.mxu0 %v5590
    %7955 = vmatpush2.bf16.msra.mxu0 %v5589
    %7956 = vmatprep.subr.bf16.mxu0 %v5582
    %7957 = vmatpush2.bf16.msra.mxu0 %v5581
    %7958 = vmatprep.subr.bf16.mxu0 %v5574
    %7959 = vmatpush2.bf16.msra.mxu0 %v5573
    %7960 = vmatprep.subr.bf16.mxu0 %v5566
    %7961 = vmatpush2.bf16.msra.mxu0 %v5565
    %7962 = vmatprep.subr.bf16.mxu0 %v5558
    %7963 = vmatpush2.bf16.msra.mxu0 %v5557
    %7964 = vmatprep.mubr.bf16.mxu0 %v958
    %7965 = vmatmul.mubr.bf16.gmra.mxu0 %v957
    %v7966 = vpop.f32.mrf.mxu0
    %v7967 = vadd.f32 %v7926, %v7966
    %v7968 = vpop.f32.mrf.mxu0
    %v7969 = vadd.f32 %v7928, %v7968
    %v7970 = vpop.f32.mrf.mxu0
    %v7971 = vpop.f32.mrf.mxu0
    %7972 = vdwg.mxu0
    %7973 = vmatprep.subr.bf16.mxu0 %v5678
    %7974 = vmatpush1.bf16.msra.mxu0 %v5677
    %7975 = vmatprep.subr.bf16.mxu0 %v5670
    %7976 = vmatpush1.bf16.msra.mxu0 %v5669
    %7977 = vmatprep.subr.bf16.mxu0 %v5662
    %7978 = vmatpush1.bf16.msra.mxu0 %v5661
    %7979 = vmatprep.subr.bf16.mxu0 %v5654
    %7980 = vmatpush1.bf16.msra.mxu0 %v5653
    %7981 = vmatprep.subr.bf16.mxu0 %v5646
    %7982 = vmatpush1.bf16.msra.mxu0 %v5645
    %7983 = vmatprep.subr.bf16.mxu0 %v5638
    %7984 = vmatpush1.bf16.msra.mxu0 %v5637
    %7985 = vmatprep.subr.bf16.mxu0 %v5630
    %7986 = vmatpush1.bf16.msra.mxu0 %v5629
    %7987 = vmatprep.subr.bf16.mxu0 %v5622
    %7988 = vmatpush1.bf16.msra.mxu0 %v5621
    %7989 = vmatprep.subr.bf16.mxu0 %v5742
    %7990 = vmatpush2.bf16.msra.mxu0 %v5741
    %7991 = vmatprep.subr.bf16.mxu0 %v5734
    %7992 = vmatpush2.bf16.msra.mxu0 %v5733
    %7993 = vmatprep.subr.bf16.mxu0 %v5726
    %7994 = vmatpush2.bf16.msra.mxu0 %v5725
    %7995 = vmatprep.subr.bf16.mxu0 %v5718
    %7996 = vmatpush2.bf16.msra.mxu0 %v5717
    %7997 = vmatprep.subr.bf16.mxu0 %v5710
    %7998 = vmatpush2.bf16.msra.mxu0 %v5709
    %7999 = vmatprep.subr.bf16.mxu0 %v5702
    %8000 = vmatpush2.bf16.msra.mxu0 %v5701
    %8001 = vmatprep.subr.bf16.mxu0 %v5694
    %8002 = vmatpush2.bf16.msra.mxu0 %v5693
    %8003 = vmatprep.subr.bf16.mxu0 %v5686
    %8004 = vmatpush2.bf16.msra.mxu0 %v5685
    %8005 = vmatprep.mubr.bf16.mxu0 %v960
    %8006 = vmatmul.mubr.bf16.gmra.mxu0 %v959
    %v8007 = vpop.f32.mrf.mxu0
    %v8008 = vadd.f32 %v7967, %v8007
    %v8009 = vpop.f32.mrf.mxu0
    %v8010 = vadd.f32 %v7969, %v8009
    %v8011 = vpop.f32.mrf.mxu0
    %v8012 = vpop.f32.mrf.mxu0
    %8013 = vdwg.mxu0
    %8014 = vmatprep.subr.bf16.mxu0 %v5806
    %8015 = vmatpush1.bf16.msra.mxu0 %v5805
    %8016 = vmatprep.subr.bf16.mxu0 %v5798
    %8017 = vmatpush1.bf16.msra.mxu0 %v5797
    %8018 = vmatprep.subr.bf16.mxu0 %v5790
    %8019 = vmatpush1.bf16.msra.mxu0 %v5789
    %8020 = vmatprep.subr.bf16.mxu0 %v5782
    %8021 = vmatpush1.bf16.msra.mxu0 %v5781
    %8022 = vmatprep.subr.bf16.mxu0 %v5774
    %8023 = vmatpush1.bf16.msra.mxu0 %v5773
    %8024 = vmatprep.subr.bf16.mxu0 %v5766
    %8025 = vmatpush1.bf16.msra.mxu0 %v5765
    %8026 = vmatprep.subr.bf16.mxu0 %v5758
    %8027 = vmatpush1.bf16.msra.mxu0 %v5757
    %8028 = vmatprep.subr.bf16.mxu0 %v5750
    %8029 = vmatpush1.bf16.msra.mxu0 %v5749
    %8030 = vmatprep.subr.bf16.mxu0 %v5870
    %8031 = vmatpush2.bf16.msra.mxu0 %v5869
    %8032 = vmatprep.subr.bf16.mxu0 %v5862
    %8033 = vmatpush2.bf16.msra.mxu0 %v5861
    %8034 = vmatprep.subr.bf16.mxu0 %v5854
    %8035 = vmatpush2.bf16.msra.mxu0 %v5853
    %8036 = vmatprep.subr.bf16.mxu0 %v5846
    %8037 = vmatpush2.bf16.msra.mxu0 %v5845
    %8038 = vmatprep.subr.bf16.mxu0 %v5838
    %8039 = vmatpush2.bf16.msra.mxu0 %v5837
    %8040 = vmatprep.subr.bf16.mxu0 %v5830
    %8041 = vmatpush2.bf16.msra.mxu0 %v5829
    %8042 = vmatprep.subr.bf16.mxu0 %v5822
    %8043 = vmatpush2.bf16.msra.mxu0 %v5821
    %8044 = vmatprep.subr.bf16.mxu0 %v5814
    %8045 = vmatpush2.bf16.msra.mxu0 %v5813
    %8046 = vmatprep.mubr.bf16.mxu0 %v962
    %8047 = vmatmul.mubr.bf16.gmra.mxu0 %v961
    %v8048 = vpop.f32.mrf.mxu0
    %v8049 = vadd.f32 %v8008, %v8048
    %v8050 = vpop.f32.mrf.mxu0
    %v8051 = vadd.f32 %v8010, %v8050
    %v8052 = vpop.f32.mrf.mxu0
    %v8053 = vpop.f32.mrf.mxu0
    %8054 = vdwg.mxu0
    %8055 = vmatprep.subr.bf16.mxu0 %v5934
    %8056 = vmatpush1.bf16.msra.mxu0 %v5933
    %8057 = vmatprep.subr.bf16.mxu0 %v5926
    %8058 = vmatpush1.bf16.msra.mxu0 %v5925
    %8059 = vmatprep.subr.bf16.mxu0 %v5918
    %8060 = vmatpush1.bf16.msra.mxu0 %v5917
    %8061 = vmatprep.subr.bf16.mxu0 %v5910
    %8062 = vmatpush1.bf16.msra.mxu0 %v5909
    %8063 = vmatprep.subr.bf16.mxu0 %v5902
    %8064 = vmatpush1.bf16.msra.mxu0 %v5901
    %8065 = vmatprep.subr.bf16.mxu0 %v5894
    %8066 = vmatpush1.bf16.msra.mxu0 %v5893
    %8067 = vmatprep.subr.bf16.mxu0 %v5886
    %8068 = vmatpush1.bf16.msra.mxu0 %v5885
    %8069 = vmatprep.subr.bf16.mxu0 %v5878
    %8070 = vmatpush1.bf16.msra.mxu0 %v5877
    %8071 = vmatprep.subr.bf16.mxu0 %v5998
    %8072 = vmatpush2.bf16.msra.mxu0 %v5997
    %8073 = vmatprep.subr.bf16.mxu0 %v5990
    %8074 = vmatpush2.bf16.msra.mxu0 %v5989
    %8075 = vmatprep.subr.bf16.mxu0 %v5982
    %8076 = vmatpush2.bf16.msra.mxu0 %v5981
    %8077 = vmatprep.subr.bf16.mxu0 %v5974
    %8078 = vmatpush2.bf16.msra.mxu0 %v5973
    %8079 = vmatprep.subr.bf16.mxu0 %v5966
    %8080 = vmatpush2.bf16.msra.mxu0 %v5965
    %8081 = vmatprep.subr.bf16.mxu0 %v5958
    %8082 = vmatpush2.bf16.msra.mxu0 %v5957
    %8083 = vmatprep.subr.bf16.mxu0 %v5950
    %8084 = vmatpush2.bf16.msra.mxu0 %v5949
    %8085 = vmatprep.subr.bf16.mxu0 %v5942
    %8086 = vmatpush2.bf16.msra.mxu0 %v5941
    %8087 = vmatprep.mubr.bf16.mxu0 %v964
    %8088 = vmatmul.mubr.bf16.gmra.mxu0 %v963
    %v8089 = vpop.f32.mrf.mxu0
    %v8090 = vadd.f32 %v8049, %v8089
    %v8091 = vpop.f32.mrf.mxu0
    %v8092 = vadd.f32 %v8051, %v8091
    %v8093 = vpop.f32.mrf.mxu0
    %v8094 = vpop.f32.mrf.mxu0
    %8095 = vdwg.mxu0
    %8096 = vmatprep.subr.bf16.mxu0 %v6062
    %8097 = vmatpush1.bf16.msra.mxu0 %v6061
    %8098 = vmatprep.subr.bf16.mxu0 %v6054
    %8099 = vmatpush1.bf16.msra.mxu0 %v6053
    %8100 = vmatprep.subr.bf16.mxu0 %v6046
    %8101 = vmatpush1.bf16.msra.mxu0 %v6045
    %8102 = vmatprep.subr.bf16.mxu0 %v6038
    %8103 = vmatpush1.bf16.msra.mxu0 %v6037
    %8104 = vmatprep.subr.bf16.mxu0 %v6030
    %8105 = vmatpush1.bf16.msra.mxu0 %v6029
    %8106 = vmatprep.subr.bf16.mxu0 %v6022
    %8107 = vmatpush1.bf16.msra.mxu0 %v6021
    %8108 = vmatprep.subr.bf16.mxu0 %v6014
    %8109 = vmatpush1.bf16.msra.mxu0 %v6013
    %8110 = vmatprep.subr.bf16.mxu0 %v6006
    %8111 = vmatpush1.bf16.msra.mxu0 %v6005
    %8112 = vmatprep.subr.bf16.mxu0 %v6126
    %8113 = vmatpush2.bf16.msra.mxu0 %v6125
    %8114 = vmatprep.subr.bf16.mxu0 %v6118
    %8115 = vmatpush2.bf16.msra.mxu0 %v6117
    %8116 = vmatprep.subr.bf16.mxu0 %v6110
    %8117 = vmatpush2.bf16.msra.mxu0 %v6109
    %8118 = vmatprep.subr.bf16.mxu0 %v6102
    %8119 = vmatpush2.bf16.msra.mxu0 %v6101
    %8120 = vmatprep.subr.bf16.mxu0 %v6094
    %8121 = vmatpush2.bf16.msra.mxu0 %v6093
    %8122 = vmatprep.subr.bf16.mxu0 %v6086
    %8123 = vmatpush2.bf16.msra.mxu0 %v6085
    %8124 = vmatprep.subr.bf16.mxu0 %v6078
    %8125 = vmatpush2.bf16.msra.mxu0 %v6077
    %8126 = vmatprep.subr.bf16.mxu0 %v6070
    %8127 = vmatpush2.bf16.msra.mxu0 %v6069
    %8128 = vmatprep.mubr.bf16.mxu0 %v966
    %8129 = vmatmul.mubr.bf16.gmra.mxu0 %v965
    %v8130 = vpop.f32.mrf.mxu0
    %v8131 = vadd.f32 %v8090, %v8130
    %v8132 = vpop.f32.mrf.mxu0
    %v8133 = vadd.f32 %v8092, %v8132
    %v8134 = vpop.f32.mrf.mxu0
    %v8135 = vpop.f32.mrf.mxu0
    %8136 = vdwg.mxu0
    %8137 = vmatprep.subr.bf16.mxu0 %v5168
    %8138 = vmatpush1.bf16.msra.mxu0 %v5167
    %8139 = vmatprep.subr.bf16.mxu0 %v5160
    %8140 = vmatpush1.bf16.msra.mxu0 %v5159
    %8141 = vmatprep.subr.bf16.mxu0 %v5152
    %8142 = vmatpush1.bf16.msra.mxu0 %v5151
    %8143 = vmatprep.subr.bf16.mxu0 %v5144
    %8144 = vmatpush1.bf16.msra.mxu0 %v5143
    %8145 = vmatprep.subr.bf16.mxu0 %v5136
    %8146 = vmatpush1.bf16.msra.mxu0 %v5135
    %8147 = vmatprep.subr.bf16.mxu0 %v5128
    %8148 = vmatpush1.bf16.msra.mxu0 %v5127
    %8149 = vmatprep.subr.bf16.mxu0 %v5120
    %8150 = vmatpush1.bf16.msra.mxu0 %v5119
    %8151 = vmatprep.subr.bf16.mxu0 %v5112
    %8152 = vmatpush1.bf16.msra.mxu0 %v5111
    %8153 = vmatprep.subr.bf16.mxu0 %v5232
    %8154 = vmatpush2.bf16.msra.mxu0 %v5231
    %8155 = vmatprep.subr.bf16.mxu0 %v5224
    %8156 = vmatpush2.bf16.msra.mxu0 %v5223
    %8157 = vmatprep.subr.bf16.mxu0 %v5216
    %8158 = vmatpush2.bf16.msra.mxu0 %v5215
    %8159 = vmatprep.subr.bf16.mxu0 %v5208
    %8160 = vmatpush2.bf16.msra.mxu0 %v5207
    %8161 = vmatprep.subr.bf16.mxu0 %v5200
    %8162 = vmatpush2.bf16.msra.mxu0 %v5199
    %8163 = vmatprep.subr.bf16.mxu0 %v5192
    %8164 = vmatpush2.bf16.msra.mxu0 %v5191
    %8165 = vmatprep.subr.bf16.mxu0 %v5184
    %8166 = vmatpush2.bf16.msra.mxu0 %v5183
    %8167 = vmatprep.subr.bf16.mxu0 %v5176
    %8168 = vmatpush2.bf16.msra.mxu0 %v5175
    %8169 = vmatprep.mubr.bf16.mxu0 %v952
    %8170 = vmatmul.mubr.bf16.gmra.mxu0 %v951
    %v8171 = vpop.f32.mrf.mxu0
    %v8172 = vadd.f32 %v2020, %v8171
    %v8173 = vpop.f32.mrf.mxu0
    %v8174 = vadd.f32 %v2024, %v8173
    %v8175 = vpop.f32.mrf.mxu0
    %v8176 = vpop.f32.mrf.mxu0
    %8177 = vdwg.mxu0
    %8178 = vmatprep.subr.bf16.mxu0 %v5296
    %8179 = vmatpush1.bf16.msra.mxu0 %v5295
    %8180 = vmatprep.subr.bf16.mxu0 %v5288
    %8181 = vmatpush1.bf16.msra.mxu0 %v5287
    %8182 = vmatprep.subr.bf16.mxu0 %v5280
    %8183 = vmatpush1.bf16.msra.mxu0 %v5279
    %8184 = vmatprep.subr.bf16.mxu0 %v5272
    %8185 = vmatpush1.bf16.msra.mxu0 %v5271
    %8186 = vmatprep.subr.bf16.mxu0 %v5264
    %8187 = vmatpush1.bf16.msra.mxu0 %v5263
    %8188 = vmatprep.subr.bf16.mxu0 %v5256
    %8189 = vmatpush1.bf16.msra.mxu0 %v5255
    %8190 = vmatprep.subr.bf16.mxu0 %v5248
    %8191 = vmatpush1.bf16.msra.mxu0 %v5247
    %8192 = vmatprep.subr.bf16.mxu0 %v5240
    %8193 = vmatpush1.bf16.msra.mxu0 %v5239
    %8194 = vmatprep.subr.bf16.mxu0 %v5360
    %8195 = vmatpush2.bf16.msra.mxu0 %v5359
    %8196 = vmatprep.subr.bf16.mxu0 %v5352
    %8197 = vmatpush2.bf16.msra.mxu0 %v5351
    %8198 = vmatprep.subr.bf16.mxu0 %v5344
    %8199 = vmatpush2.bf16.msra.mxu0 %v5343
    %8200 = vmatprep.subr.bf16.mxu0 %v5336
    %8201 = vmatpush2.bf16.msra.mxu0 %v5335
    %8202 = vmatprep.subr.bf16.mxu0 %v5328
    %8203 = vmatpush2.bf16.msra.mxu0 %v5327
    %8204 = vmatprep.subr.bf16.mxu0 %v5320
    %8205 = vmatpush2.bf16.msra.mxu0 %v5319
    %8206 = vmatprep.subr.bf16.mxu0 %v5312
    %8207 = vmatpush2.bf16.msra.mxu0 %v5311
    %8208 = vmatprep.subr.bf16.mxu0 %v5304
    %8209 = vmatpush2.bf16.msra.mxu0 %v5303
    %8210 = vmatprep.mubr.bf16.mxu0 %v954
    %8211 = vmatmul.mubr.bf16.gmra.mxu0 %v953
    %v8212 = vpop.f32.mrf.mxu0
    %v8213 = vadd.f32 %v8172, %v8212
    %v8214 = vpop.f32.mrf.mxu0
    %v8215 = vadd.f32 %v8174, %v8214
    %v8216 = vpop.f32.mrf.mxu0
    %v8217 = vpop.f32.mrf.mxu0
    %8218 = vdwg.mxu0
    %8219 = vmatprep.subr.bf16.mxu0 %v5424
    %8220 = vmatpush1.bf16.msra.mxu0 %v5423
    %8221 = vmatprep.subr.bf16.mxu0 %v5416
    %8222 = vmatpush1.bf16.msra.mxu0 %v5415
    %8223 = vmatprep.subr.bf16.mxu0 %v5408
    %8224 = vmatpush1.bf16.msra.mxu0 %v5407
    %8225 = vmatprep.subr.bf16.mxu0 %v5400
    %8226 = vmatpush1.bf16.msra.mxu0 %v5399
    %8227 = vmatprep.subr.bf16.mxu0 %v5392
    %8228 = vmatpush1.bf16.msra.mxu0 %v5391
    %8229 = vmatprep.subr.bf16.mxu0 %v5384
    %8230 = vmatpush1.bf16.msra.mxu0 %v5383
    %8231 = vmatprep.subr.bf16.mxu0 %v5376
    %8232 = vmatpush1.bf16.msra.mxu0 %v5375
    %8233 = vmatprep.subr.bf16.mxu0 %v5368
    %8234 = vmatpush1.bf16.msra.mxu0 %v5367
    %8235 = vmatprep.subr.bf16.mxu0 %v5488
    %8236 = vmatpush2.bf16.msra.mxu0 %v5487
    %8237 = vmatprep.subr.bf16.mxu0 %v5480
    %8238 = vmatpush2.bf16.msra.mxu0 %v5479
    %8239 = vmatprep.subr.bf16.mxu0 %v5472
    %8240 = vmatpush2.bf16.msra.mxu0 %v5471
    %8241 = vmatprep.subr.bf16.mxu0 %v5464
    %8242 = vmatpush2.bf16.msra.mxu0 %v5463
    %8243 = vmatprep.subr.bf16.mxu0 %v5456
    %8244 = vmatpush2.bf16.msra.mxu0 %v5455
    %8245 = vmatprep.subr.bf16.mxu0 %v5448
    %8246 = vmatpush2.bf16.msra.mxu0 %v5447
    %8247 = vmatprep.subr.bf16.mxu0 %v5440
    %8248 = vmatpush2.bf16.msra.mxu0 %v5439
    %8249 = vmatprep.subr.bf16.mxu0 %v5432
    %8250 = vmatpush2.bf16.msra.mxu0 %v5431
    %8251 = vmatprep.mubr.bf16.mxu0 %v956
    %8252 = vmatmul.mubr.bf16.gmra.mxu0 %v955
    %v8253 = vpop.f32.mrf.mxu0
    %v8254 = vadd.f32 %v8213, %v8253
    %v8255 = vpop.f32.mrf.mxu0
    %v8256 = vadd.f32 %v8215, %v8255
    %v8257 = vpop.f32.mrf.mxu0
    %v8258 = vpop.f32.mrf.mxu0
    %8259 = vdwg.mxu0
    %8260 = vmatprep.subr.bf16.mxu0 %v5552
    %8261 = vmatpush1.bf16.msra.mxu0 %v5551
    %8262 = vmatprep.subr.bf16.mxu0 %v5544
    %8263 = vmatpush1.bf16.msra.mxu0 %v5543
    %8264 = vmatprep.subr.bf16.mxu0 %v5536
    %8265 = vmatpush1.bf16.msra.mxu0 %v5535
    %8266 = vmatprep.subr.bf16.mxu0 %v5528
    %8267 = vmatpush1.bf16.msra.mxu0 %v5527
    %8268 = vmatprep.subr.bf16.mxu0 %v5520
    %8269 = vmatpush1.bf16.msra.mxu0 %v5519
    %8270 = vmatprep.subr.bf16.mxu0 %v5512
    %8271 = vmatpush1.bf16.msra.mxu0 %v5511
    %8272 = vmatprep.subr.bf16.mxu0 %v5504
    %8273 = vmatpush1.bf16.msra.mxu0 %v5503
    %8274 = vmatprep.subr.bf16.mxu0 %v5496
    %8275 = vmatpush1.bf16.msra.mxu0 %v5495
    %8276 = vmatprep.subr.bf16.mxu0 %v5616
    %8277 = vmatpush2.bf16.msra.mxu0 %v5615
    %8278 = vmatprep.subr.bf16.mxu0 %v5608
    %8279 = vmatpush2.bf16.msra.mxu0 %v5607
    %8280 = vmatprep.subr.bf16.mxu0 %v5600
    %8281 = vmatpush2.bf16.msra.mxu0 %v5599
    %8282 = vmatprep.subr.bf16.mxu0 %v5592
    %8283 = vmatpush2.bf16.msra.mxu0 %v5591
    %8284 = vmatprep.subr.bf16.mxu0 %v5584
    %8285 = vmatpush2.bf16.msra.mxu0 %v5583
    %8286 = vmatprep.subr.bf16.mxu0 %v5576
    %8287 = vmatpush2.bf16.msra.mxu0 %v5575
    %8288 = vmatprep.subr.bf16.mxu0 %v5568
    %8289 = vmatpush2.bf16.msra.mxu0 %v5567
    %8290 = vmatprep.subr.bf16.mxu0 %v5560
    %8291 = vmatpush2.bf16.msra.mxu0 %v5559
    %8292 = vmatprep.mubr.bf16.mxu0 %v958
    %8293 = vmatmul.mubr.bf16.gmra.mxu0 %v957
    %v8294 = vpop.f32.mrf.mxu0
    %v8295 = vadd.f32 %v8254, %v8294
    %v8296 = vpop.f32.mrf.mxu0
    %v8297 = vadd.f32 %v8256, %v8296
    %v8298 = vpop.f32.mrf.mxu0
    %v8299 = vpop.f32.mrf.mxu0
    %8300 = vdwg.mxu0
    %8301 = vmatprep.subr.bf16.mxu0 %v5680
    %8302 = vmatpush1.bf16.msra.mxu0 %v5679
    %8303 = vmatprep.subr.bf16.mxu0 %v5672
    %8304 = vmatpush1.bf16.msra.mxu0 %v5671
    %8305 = vmatprep.subr.bf16.mxu0 %v5664
    %8306 = vmatpush1.bf16.msra.mxu0 %v5663
    %8307 = vmatprep.subr.bf16.mxu0 %v5656
    %8308 = vmatpush1.bf16.msra.mxu0 %v5655
    %8309 = vmatprep.subr.bf16.mxu0 %v5648
    %8310 = vmatpush1.bf16.msra.mxu0 %v5647
    %8311 = vmatprep.subr.bf16.mxu0 %v5640
    %8312 = vmatpush1.bf16.msra.mxu0 %v5639
    %8313 = vmatprep.subr.bf16.mxu0 %v5632
    %8314 = vmatpush1.bf16.msra.mxu0 %v5631
    %8315 = vmatprep.subr.bf16.mxu0 %v5624
    %8316 = vmatpush1.bf16.msra.mxu0 %v5623
    %8317 = vmatprep.subr.bf16.mxu0 %v5744
    %8318 = vmatpush2.bf16.msra.mxu0 %v5743
    %8319 = vmatprep.subr.bf16.mxu0 %v5736
    %8320 = vmatpush2.bf16.msra.mxu0 %v5735
    %8321 = vmatprep.subr.bf16.mxu0 %v5728
    %8322 = vmatpush2.bf16.msra.mxu0 %v5727
    %8323 = vmatprep.subr.bf16.mxu0 %v5720
    %8324 = vmatpush2.bf16.msra.mxu0 %v5719
    %8325 = vmatprep.subr.bf16.mxu0 %v5712
    %8326 = vmatpush2.bf16.msra.mxu0 %v5711
    %8327 = vmatprep.subr.bf16.mxu0 %v5704
    %8328 = vmatpush2.bf16.msra.mxu0 %v5703
    %8329 = vmatprep.subr.bf16.mxu0 %v5696
    %8330 = vmatpush2.bf16.msra.mxu0 %v5695
    %8331 = vmatprep.subr.bf16.mxu0 %v5688
    %8332 = vmatpush2.bf16.msra.mxu0 %v5687
    %8333 = vmatprep.mubr.bf16.mxu0 %v960
    %8334 = vmatmul.mubr.bf16.gmra.mxu0 %v959
    %v8335 = vpop.f32.mrf.mxu0
    %v8336 = vadd.f32 %v8295, %v8335
    %v8337 = vpop.f32.mrf.mxu0
    %v8338 = vadd.f32 %v8297, %v8337
    %v8339 = vpop.f32.mrf.mxu0
    %v8340 = vpop.f32.mrf.mxu0
    %8341 = vdwg.mxu0
    %8342 = vmatprep.subr.bf16.mxu0 %v5808
    %8343 = vmatpush1.bf16.msra.mxu0 %v5807
    %8344 = vmatprep.subr.bf16.mxu0 %v5800
    %8345 = vmatpush1.bf16.msra.mxu0 %v5799
    %8346 = vmatprep.subr.bf16.mxu0 %v5792
    %8347 = vmatpush1.bf16.msra.mxu0 %v5791
    %8348 = vmatprep.subr.bf16.mxu0 %v5784
    %8349 = vmatpush1.bf16.msra.mxu0 %v5783
    %8350 = vmatprep.subr.bf16.mxu0 %v5776
    %8351 = vmatpush1.bf16.msra.mxu0 %v5775
    %8352 = vmatprep.subr.bf16.mxu0 %v5768
    %8353 = vmatpush1.bf16.msra.mxu0 %v5767
    %8354 = vmatprep.subr.bf16.mxu0 %v5760
    %8355 = vmatpush1.bf16.msra.mxu0 %v5759
    %8356 = vmatprep.subr.bf16.mxu0 %v5752
    %8357 = vmatpush1.bf16.msra.mxu0 %v5751
    %8358 = vmatprep.subr.bf16.mxu0 %v5872
    %8359 = vmatpush2.bf16.msra.mxu0 %v5871
    %8360 = vmatprep.subr.bf16.mxu0 %v5864
    %8361 = vmatpush2.bf16.msra.mxu0 %v5863
    %8362 = vmatprep.subr.bf16.mxu0 %v5856
    %8363 = vmatpush2.bf16.msra.mxu0 %v5855
    %8364 = vmatprep.subr.bf16.mxu0 %v5848
    %8365 = vmatpush2.bf16.msra.mxu0 %v5847
    %8366 = vmatprep.subr.bf16.mxu0 %v5840
    %8367 = vmatpush2.bf16.msra.mxu0 %v5839
    %8368 = vmatprep.subr.bf16.mxu0 %v5832
    %8369 = vmatpush2.bf16.msra.mxu0 %v5831
    %8370 = vmatprep.subr.bf16.mxu0 %v5824
    %8371 = vmatpush2.bf16.msra.mxu0 %v5823
    %8372 = vmatprep.subr.bf16.mxu0 %v5816
    %8373 = vmatpush2.bf16.msra.mxu0 %v5815
    %8374 = vmatprep.mubr.bf16.mxu0 %v962
    %8375 = vmatmul.mubr.bf16.gmra.mxu0 %v961
    %v8376 = vpop.f32.mrf.mxu0
    %v8377 = vadd.f32 %v8336, %v8376
    %v8378 = vpop.f32.mrf.mxu0
    %v8379 = vadd.f32 %v8338, %v8378
    %v8380 = vpop.f32.mrf.mxu0
    %v8381 = vpop.f32.mrf.mxu0
    %8382 = vdwg.mxu0
    %8383 = vmatprep.subr.bf16.mxu0 %v5936
    %8384 = vmatpush1.bf16.msra.mxu0 %v5935
    %8385 = vmatprep.subr.bf16.mxu0 %v5928
    %8386 = vmatpush1.bf16.msra.mxu0 %v5927
    %8387 = vmatprep.subr.bf16.mxu0 %v5920
    %8388 = vmatpush1.bf16.msra.mxu0 %v5919
    %8389 = vmatprep.subr.bf16.mxu0 %v5912
    %8390 = vmatpush1.bf16.msra.mxu0 %v5911
    %8391 = vmatprep.subr.bf16.mxu0 %v5904
    %8392 = vmatpush1.bf16.msra.mxu0 %v5903
    %8393 = vmatprep.subr.bf16.mxu0 %v5896
    %8394 = vmatpush1.bf16.msra.mxu0 %v5895
    %8395 = vmatprep.subr.bf16.mxu0 %v5888
    %8396 = vmatpush1.bf16.msra.mxu0 %v5887
    %8397 = vmatprep.subr.bf16.mxu0 %v5880
    %8398 = vmatpush1.bf16.msra.mxu0 %v5879
    %8399 = vmatprep.subr.bf16.mxu0 %v6000
    %8400 = vmatpush2.bf16.msra.mxu0 %v5999
    %8401 = vmatprep.subr.bf16.mxu0 %v5992
    %8402 = vmatpush2.bf16.msra.mxu0 %v5991
    %8403 = vmatprep.subr.bf16.mxu0 %v5984
    %8404 = vmatpush2.bf16.msra.mxu0 %v5983
    %8405 = vmatprep.subr.bf16.mxu0 %v5976
    %8406 = vmatpush2.bf16.msra.mxu0 %v5975
    %8407 = vmatprep.subr.bf16.mxu0 %v5968
    %8408 = vmatpush2.bf16.msra.mxu0 %v5967
    %8409 = vmatprep.subr.bf16.mxu0 %v5960
    %8410 = vmatpush2.bf16.msra.mxu0 %v5959
    %8411 = vmatprep.subr.bf16.mxu0 %v5952
    %8412 = vmatpush2.bf16.msra.mxu0 %v5951
    %8413 = vmatprep.subr.bf16.mxu0 %v5944
    %8414 = vmatpush2.bf16.msra.mxu0 %v5943
    %8415 = vmatprep.mubr.bf16.mxu0 %v964
    %8416 = vmatmul.mubr.bf16.gmra.mxu0 %v963
    %v8417 = vpop.f32.mrf.mxu0
    %v8418 = vadd.f32 %v8377, %v8417
    %v8419 = vpop.f32.mrf.mxu0
    %v8420 = vadd.f32 %v8379, %v8419
    %v8421 = vpop.f32.mrf.mxu0
    %v8422 = vpop.f32.mrf.mxu0
    %8423 = vdwg.mxu0
    %8424 = vmatprep.subr.bf16.mxu0 %v6064
    %8425 = vmatpush1.bf16.msra.mxu0 %v6063
    %8426 = vmatprep.subr.bf16.mxu0 %v6056
    %8427 = vmatpush1.bf16.msra.mxu0 %v6055
    %8428 = vmatprep.subr.bf16.mxu0 %v6048
    %8429 = vmatpush1.bf16.msra.mxu0 %v6047
    %8430 = vmatprep.subr.bf16.mxu0 %v6040
    %8431 = vmatpush1.bf16.msra.mxu0 %v6039
    %8432 = vmatprep.subr.bf16.mxu0 %v6032
    %8433 = vmatpush1.bf16.msra.mxu0 %v6031
    %8434 = vmatprep.subr.bf16.mxu0 %v6024
    %8435 = vmatpush1.bf16.msra.mxu0 %v6023
    %8436 = vmatprep.subr.bf16.mxu0 %v6016
    %8437 = vmatpush1.bf16.msra.mxu0 %v6015
    %8438 = vmatprep.subr.bf16.mxu0 %v6008
    %8439 = vmatpush1.bf16.msra.mxu0 %v6007
    %8440 = vmatprep.subr.bf16.mxu0 %v6128
    %8441 = vmatpush2.bf16.msra.mxu0 %v6127
    %8442 = vmatprep.subr.bf16.mxu0 %v6120
    %8443 = vmatpush2.bf16.msra.mxu0 %v6119
    %8444 = vmatprep.subr.bf16.mxu0 %v6112
    %8445 = vmatpush2.bf16.msra.mxu0 %v6111
    %8446 = vmatprep.subr.bf16.mxu0 %v6104
    %8447 = vmatpush2.bf16.msra.mxu0 %v6103
    %8448 = vmatprep.subr.bf16.mxu0 %v6096
    %8449 = vmatpush2.bf16.msra.mxu0 %v6095
    %8450 = vmatprep.subr.bf16.mxu0 %v6088
    %8451 = vmatpush2.bf16.msra.mxu0 %v6087
    %8452 = vmatprep.subr.bf16.mxu0 %v6080
    %8453 = vmatpush2.bf16.msra.mxu0 %v6079
    %8454 = vmatprep.subr.bf16.mxu0 %v6072
    %8455 = vmatpush2.bf16.msra.mxu0 %v6071
    %8456 = vmatprep.mubr.bf16.mxu0 %v966
    %8457 = vmatmul.mubr.bf16.gmra.mxu0 %v965
    %v8458 = vpop.f32.mrf.mxu0
    %v8459 = vadd.f32 %v8418, %v8458
    %v8460 = vpop.f32.mrf.mxu0
    %v8461 = vadd.f32 %v8420, %v8460
    %v8462 = vpop.f32.mrf.mxu0
    %v8463 = vpop.f32.mrf.mxu0
    %8464 = vdwg.mxu0
    %v8465 = vmax.f32 %v7475, 0.0
    %v8466 = vmax.f32 %v7477, 0.0
    %v8467 = vmax.f32 %v7803, 0.0
    %v8468 = vmax.f32 %v7805, 0.0
    %v8469 = vmax.f32 %v8131, 0.0
    %v8470 = vmax.f32 %v8133, 0.0
    %v8471 = vmax.f32 %v8459, 0.0
    %v8472 = vmax.f32 %v8461, 0.0
    %v8473 = vpack.c.bf16 %v8465, %v8465
    %v8474 = vpack.c.bf16 %v8466, %v8466
    %v8475 = vpack.c.bf16 %v8467, %v8467
    %v8476 = vpack.c.bf16 %v8468, %v8468
    %v8477 = vpack.c.bf16 %v8469, %v8469
    %v8478 = vpack.c.bf16 %v8470, %v8470
    %v8479 = vpack.c.bf16 %v8471, %v8471
    %v8480 = vpack.c.bf16 %v8472, %v8472
    %v8481 = vld [vmem:[#allocation11] sm:$0xff]
    %v8482 = vld [vmem:[#allocation11 + $0x8] sm:$0xff]
    %v8483 = vld [vmem:[#allocation11 + $0x10] sm:$0xff]
    %v8484 = vld [vmem:[#allocation11 + $0x18] sm:$0xff]
    %v8485 = vld [vmem:[#allocation11 + $0x20] sm:$0xff]
    %v8486 = vld [vmem:[#allocation11 + $0x28] sm:$0xff]
    %v8487 = vld [vmem:[#allocation11 + $0x30] sm:$0xff]
    %v8488 = vld [vmem:[#allocation11 + $0x38] sm:$0xff]
    %v8489 = vld [vmem:[#allocation11 + $0x40] sm:$0xff]
    %v8490 = vld [vmem:[#allocation11 + $0x48] sm:$0xff]
    %v8491 = vld [vmem:[#allocation11 + $0x50] sm:$0xff]
    %v8492 = vld [vmem:[#allocation11 + $0x58] sm:$0xff]
    %v8493 = vld [vmem:[#allocation11 + $0x60] sm:$0xff]
    %v8494 = vld [vmem:[#allocation11 + $0x68] sm:$0xff]
    %v8495 = vld [vmem:[#allocation11 + $0x70] sm:$0xff]
    %v8496 = vld [vmem:[#allocation11 + $0x78] sm:$0xff]
    %v8497 = vld [vmem:[#allocation11 + $0x80] sm:$0xff]
    %v8498 = vld [vmem:[#allocation11 + $0x88] sm:$0xff]
    %v8499 = vld [vmem:[#allocation11 + $0x90] sm:$0xff]
    %v8500 = vld [vmem:[#allocation11 + $0x98] sm:$0xff]
    %v8501 = vld [vmem:[#allocation11 + $0xa0] sm:$0xff]
    %v8502 = vld [vmem:[#allocation11 + $0xa8] sm:$0xff]
    %v8503 = vld [vmem:[#allocation11 + $0xb0] sm:$0xff]
    %v8504 = vld [vmem:[#allocation11 + $0xb8] sm:$0xff]
    %v8505 = vld [vmem:[#allocation11 + $0xc0] sm:$0xff]
    %v8506 = vld [vmem:[#allocation11 + $0xc8] sm:$0xff]
    %v8507 = vld [vmem:[#allocation11 + $0xd0] sm:$0xff]
    %v8508 = vld [vmem:[#allocation11 + $0xd8] sm:$0xff]
    %v8509 = vld [vmem:[#allocation11 + $0xe0] sm:$0xff]
    %v8510 = vld [vmem:[#allocation11 + $0xe8] sm:$0xff]
    %v8511 = vld [vmem:[#allocation11 + $0xf0] sm:$0xff]
    %v8512 = vld [vmem:[#allocation11 + $0xf8] sm:$0xff]
    %v8513 = vld [vmem:[#allocation11 + $0x100] sm:$0xff]
    %v8514 = vld [vmem:[#allocation11 + $0x108] sm:$0xff]
    %v8515 = vld [vmem:[#allocation11 + $0x110] sm:$0xff]
    %v8516 = vld [vmem:[#allocation11 + $0x118] sm:$0xff]
    %v8517 = vld [vmem:[#allocation11 + $0x120] sm:$0xff]
    %v8518 = vld [vmem:[#allocation11 + $0x128] sm:$0xff]
    %v8519 = vld [vmem:[#allocation11 + $0x130] sm:$0xff]
    %v8520 = vld [vmem:[#allocation11 + $0x138] sm:$0xff]
    %v8521 = vld [vmem:[#allocation11 + $0x140] sm:$0xff]
    %v8522 = vld [vmem:[#allocation11 + $0x148] sm:$0xff]
    %v8523 = vld [vmem:[#allocation11 + $0x150] sm:$0xff]
    %v8524 = vld [vmem:[#allocation11 + $0x158] sm:$0xff]
    %v8525 = vld [vmem:[#allocation11 + $0x160] sm:$0xff]
    %v8526 = vld [vmem:[#allocation11 + $0x168] sm:$0xff]
    %v8527 = vld [vmem:[#allocation11 + $0x170] sm:$0xff]
    %v8528 = vld [vmem:[#allocation11 + $0x178] sm:$0xff]
    %v8529 = vld [vmem:[#allocation11 + $0x180] sm:$0xff]
    %v8530 = vld [vmem:[#allocation11 + $0x188] sm:$0xff]
    %v8531 = vld [vmem:[#allocation11 + $0x190] sm:$0xff]
    %v8532 = vld [vmem:[#allocation11 + $0x198] sm:$0xff]
    %v8533 = vld [vmem:[#allocation11 + $0x1a0] sm:$0xff]
    %v8534 = vld [vmem:[#allocation11 + $0x1a8] sm:$0xff]
    %v8535 = vld [vmem:[#allocation11 + $0x1b0] sm:$0xff]
    %v8536 = vld [vmem:[#allocation11 + $0x1b8] sm:$0xff]
    %v8537 = vld [vmem:[#allocation11 + $0x1c0] sm:$0xff]
    %v8538 = vld [vmem:[#allocation11 + $0x1c8] sm:$0xff]
    %v8539 = vld [vmem:[#allocation11 + $0x1d0] sm:$0xff]
    %v8540 = vld [vmem:[#allocation11 + $0x1d8] sm:$0xff]
    %v8541 = vld [vmem:[#allocation11 + $0x1e0] sm:$0xff]
    %v8542 = vld [vmem:[#allocation11 + $0x1e8] sm:$0xff]
    %v8543 = vld [vmem:[#allocation11 + $0x1f0] sm:$0xff]
    %v8544 = vld [vmem:[#allocation11 + $0x1f8] sm:$0xff]
    %v8545 = vld [vmem:[#allocation11 + $0x200] sm:$0xff]
    %v8546 = vld [vmem:[#allocation11 + $0x208] sm:$0xff]
    %v8547 = vld [vmem:[#allocation11 + $0x210] sm:$0xff]
    %v8548 = vld [vmem:[#allocation11 + $0x218] sm:$0xff]
    %v8549 = vld [vmem:[#allocation11 + $0x220] sm:$0xff]
    %v8550 = vld [vmem:[#allocation11 + $0x228] sm:$0xff]
    %v8551 = vld [vmem:[#allocation11 + $0x230] sm:$0xff]
    %v8552 = vld [vmem:[#allocation11 + $0x238] sm:$0xff]
    %v8553 = vld [vmem:[#allocation11 + $0x240] sm:$0xff]
    %v8554 = vld [vmem:[#allocation11 + $0x248] sm:$0xff]
    %v8555 = vld [vmem:[#allocation11 + $0x250] sm:$0xff]
    %v8556 = vld [vmem:[#allocation11 + $0x258] sm:$0xff]
    %v8557 = vld [vmem:[#allocation11 + $0x260] sm:$0xff]
    %v8558 = vld [vmem:[#allocation11 + $0x268] sm:$0xff]
    %v8559 = vld [vmem:[#allocation11 + $0x270] sm:$0xff]
    %v8560 = vld [vmem:[#allocation11 + $0x278] sm:$0xff]
    %v8561 = vld [vmem:[#allocation11 + $0x280] sm:$0xff]
    %v8562 = vld [vmem:[#allocation11 + $0x288] sm:$0xff]
    %v8563 = vld [vmem:[#allocation11 + $0x290] sm:$0xff]
    %v8564 = vld [vmem:[#allocation11 + $0x298] sm:$0xff]
    %v8565 = vld [vmem:[#allocation11 + $0x2a0] sm:$0xff]
    %v8566 = vld [vmem:[#allocation11 + $0x2a8] sm:$0xff]
    %v8567 = vld [vmem:[#allocation11 + $0x2b0] sm:$0xff]
    %v8568 = vld [vmem:[#allocation11 + $0x2b8] sm:$0xff]
    %v8569 = vld [vmem:[#allocation11 + $0x2c0] sm:$0xff]
    %v8570 = vld [vmem:[#allocation11 + $0x2c8] sm:$0xff]
    %v8571 = vld [vmem:[#allocation11 + $0x2d0] sm:$0xff]
    %v8572 = vld [vmem:[#allocation11 + $0x2d8] sm:$0xff]
    %v8573 = vld [vmem:[#allocation11 + $0x2e0] sm:$0xff]
    %v8574 = vld [vmem:[#allocation11 + $0x2e8] sm:$0xff]
    %v8575 = vld [vmem:[#allocation11 + $0x2f0] sm:$0xff]
    %v8576 = vld [vmem:[#allocation11 + $0x2f8] sm:$0xff]
    %v8577 = vld [vmem:[#allocation11 + $0x300] sm:$0xff]
    %v8578 = vld [vmem:[#allocation11 + $0x308] sm:$0xff]
    %v8579 = vld [vmem:[#allocation11 + $0x310] sm:$0xff]
    %v8580 = vld [vmem:[#allocation11 + $0x318] sm:$0xff]
    %v8581 = vld [vmem:[#allocation11 + $0x320] sm:$0xff]
    %v8582 = vld [vmem:[#allocation11 + $0x328] sm:$0xff]
    %v8583 = vld [vmem:[#allocation11 + $0x330] sm:$0xff]
    %v8584 = vld [vmem:[#allocation11 + $0x338] sm:$0xff]
    %v8585 = vld [vmem:[#allocation11 + $0x340] sm:$0xff]
    %v8586 = vld [vmem:[#allocation11 + $0x348] sm:$0xff]
    %v8587 = vld [vmem:[#allocation11 + $0x350] sm:$0xff]
    %v8588 = vld [vmem:[#allocation11 + $0x358] sm:$0xff]
    %v8589 = vld [vmem:[#allocation11 + $0x360] sm:$0xff]
    %v8590 = vld [vmem:[#allocation11 + $0x368] sm:$0xff]
    %v8591 = vld [vmem:[#allocation11 + $0x370] sm:$0xff]
    %v8592 = vld [vmem:[#allocation11 + $0x378] sm:$0xff]
    %v8593 = vld [vmem:[#allocation11 + $0x380] sm:$0xff]
    %v8594 = vld [vmem:[#allocation11 + $0x388] sm:$0xff]
    %v8595 = vld [vmem:[#allocation11 + $0x390] sm:$0xff]
    %v8596 = vld [vmem:[#allocation11 + $0x398] sm:$0xff]
    %v8597 = vld [vmem:[#allocation11 + $0x3a0] sm:$0xff]
    %v8598 = vld [vmem:[#allocation11 + $0x3a8] sm:$0xff]
    %v8599 = vld [vmem:[#allocation11 + $0x3b0] sm:$0xff]
    %v8600 = vld [vmem:[#allocation11 + $0x3b8] sm:$0xff]
    %v8601 = vld [vmem:[#allocation11 + $0x3c0] sm:$0xff]
    %v8602 = vld [vmem:[#allocation11 + $0x3c8] sm:$0xff]
    %v8603 = vld [vmem:[#allocation11 + $0x3d0] sm:$0xff]
    %v8604 = vld [vmem:[#allocation11 + $0x3d8] sm:$0xff]
    %v8605 = vld [vmem:[#allocation11 + $0x3e0] sm:$0xff]
    %v8606 = vld [vmem:[#allocation11 + $0x3e8] sm:$0xff]
    %v8607 = vld [vmem:[#allocation11 + $0x3f0] sm:$0xff]
    %v8608 = vld [vmem:[#allocation11 + $0x3f8] sm:$0xff]
    %v8609 = vld [vmem:[#allocation13] sm:$0x3]
    %v8611 = vlaneseq
    %v8612 = vshrl.u32 %v8611, 7
    %v8613 = vsub.s32 0, %v8612
    %v8614 = vrot.slane %v8609, %v8613
    %v8615 = vlaneseq
    %v8616 = vshrl.u32 %v8615, 7
    %v8617 = vsub.s32 1, %v8616
    %v8618 = vrot.slane %v8609, %v8617
    %v8749 = vunpack.c.l.b16 %v8481
    %v8750 = vunpack.c.h.b16 %v8481
    %v8751 = vunpack.c.l.b16 %v8482
    %v8752 = vunpack.c.h.b16 %v8482
    %v8753 = vunpack.c.l.b16 %v8483
    %v8754 = vunpack.c.h.b16 %v8483
    %v8755 = vunpack.c.l.b16 %v8484
    %v8756 = vunpack.c.h.b16 %v8484
    %v8757 = vunpack.c.l.b16 %v8485
    %v8758 = vunpack.c.h.b16 %v8485
    %v8759 = vunpack.c.l.b16 %v8486
    %v8760 = vunpack.c.h.b16 %v8486
    %v8761 = vunpack.c.l.b16 %v8487
    %v8762 = vunpack.c.h.b16 %v8487
    %v8763 = vunpack.c.l.b16 %v8488
    %v8764 = vunpack.c.h.b16 %v8488
    %v8765 = vunpack.c.l.b16 %v8489
    %v8766 = vunpack.c.h.b16 %v8489
    %v8767 = vunpack.c.l.b16 %v8490
    %v8768 = vunpack.c.h.b16 %v8490
    %v8769 = vunpack.c.l.b16 %v8491
    %v8770 = vunpack.c.h.b16 %v8491
    %v8771 = vunpack.c.l.b16 %v8492
    %v8772 = vunpack.c.h.b16 %v8492
    %v8773 = vunpack.c.l.b16 %v8493
    %v8774 = vunpack.c.h.b16 %v8493
    %v8775 = vunpack.c.l.b16 %v8494
    %v8776 = vunpack.c.h.b16 %v8494
    %v8777 = vunpack.c.l.b16 %v8495
    %v8778 = vunpack.c.h.b16 %v8495
    %v8779 = vunpack.c.l.b16 %v8496
    %v8780 = vunpack.c.h.b16 %v8496
    %v8781 = vunpack.c.l.b16 %v8497
    %v8782 = vunpack.c.h.b16 %v8497
    %v8783 = vunpack.c.l.b16 %v8498
    %v8784 = vunpack.c.h.b16 %v8498
    %v8785 = vunpack.c.l.b16 %v8499
    %v8786 = vunpack.c.h.b16 %v8499
    %v8787 = vunpack.c.l.b16 %v8500
    %v8788 = vunpack.c.h.b16 %v8500
    %v8789 = vunpack.c.l.b16 %v8501
    %v8790 = vunpack.c.h.b16 %v8501
    %v8791 = vunpack.c.l.b16 %v8502
    %v8792 = vunpack.c.h.b16 %v8502
    %v8793 = vunpack.c.l.b16 %v8503
    %v8794 = vunpack.c.h.b16 %v8503
    %v8795 = vunpack.c.l.b16 %v8504
    %v8796 = vunpack.c.h.b16 %v8504
    %v8797 = vunpack.c.l.b16 %v8505
    %v8798 = vunpack.c.h.b16 %v8505
    %v8799 = vunpack.c.l.b16 %v8506
    %v8800 = vunpack.c.h.b16 %v8506
    %v8801 = vunpack.c.l.b16 %v8507
    %v8802 = vunpack.c.h.b16 %v8507
    %v8803 = vunpack.c.l.b16 %v8508
    %v8804 = vunpack.c.h.b16 %v8508
    %v8805 = vunpack.c.l.b16 %v8509
    %v8806 = vunpack.c.h.b16 %v8509
    %v8807 = vunpack.c.l.b16 %v8510
    %v8808 = vunpack.c.h.b16 %v8510
    %v8809 = vunpack.c.l.b16 %v8511
    %v8810 = vunpack.c.h.b16 %v8511
    %v8811 = vunpack.c.l.b16 %v8512
    %v8812 = vunpack.c.h.b16 %v8512
    %v8813 = vunpack.c.l.b16 %v8513
    %v8814 = vunpack.c.h.b16 %v8513
    %v8815 = vunpack.c.l.b16 %v8514
    %v8816 = vunpack.c.h.b16 %v8514
    %v8817 = vunpack.c.l.b16 %v8515
    %v8818 = vunpack.c.h.b16 %v8515
    %v8819 = vunpack.c.l.b16 %v8516
    %v8820 = vunpack.c.h.b16 %v8516
    %v8821 = vunpack.c.l.b16 %v8517
    %v8822 = vunpack.c.h.b16 %v8517
    %v8823 = vunpack.c.l.b16 %v8518
    %v8824 = vunpack.c.h.b16 %v8518
    %v8825 = vunpack.c.l.b16 %v8519
    %v8826 = vunpack.c.h.b16 %v8519
    %v8827 = vunpack.c.l.b16 %v8520
    %v8828 = vunpack.c.h.b16 %v8520
    %v8829 = vunpack.c.l.b16 %v8521
    %v8830 = vunpack.c.h.b16 %v8521
    %v8831 = vunpack.c.l.b16 %v8522
    %v8832 = vunpack.c.h.b16 %v8522
    %v8833 = vunpack.c.l.b16 %v8523
    %v8834 = vunpack.c.h.b16 %v8523
    %v8835 = vunpack.c.l.b16 %v8524
    %v8836 = vunpack.c.h.b16 %v8524
    %v8837 = vunpack.c.l.b16 %v8525
    %v8838 = vunpack.c.h.b16 %v8525
    %v8839 = vunpack.c.l.b16 %v8526
    %v8840 = vunpack.c.h.b16 %v8526
    %v8841 = vunpack.c.l.b16 %v8527
    %v8842 = vunpack.c.h.b16 %v8527
    %v8843 = vunpack.c.l.b16 %v8528
    %v8844 = vunpack.c.h.b16 %v8528
    %v8845 = vunpack.c.l.b16 %v8529
    %v8846 = vunpack.c.h.b16 %v8529
    %v8847 = vunpack.c.l.b16 %v8530
    %v8848 = vunpack.c.h.b16 %v8530
    %v8849 = vunpack.c.l.b16 %v8531
    %v8850 = vunpack.c.h.b16 %v8531
    %v8851 = vunpack.c.l.b16 %v8532
    %v8852 = vunpack.c.h.b16 %v8532
    %v8853 = vunpack.c.l.b16 %v8533
    %v8854 = vunpack.c.h.b16 %v8533
    %v8855 = vunpack.c.l.b16 %v8534
    %v8856 = vunpack.c.h.b16 %v8534
    %v8857 = vunpack.c.l.b16 %v8535
    %v8858 = vunpack.c.h.b16 %v8535
    %v8859 = vunpack.c.l.b16 %v8536
    %v8860 = vunpack.c.h.b16 %v8536
    %v8861 = vunpack.c.l.b16 %v8537
    %v8862 = vunpack.c.h.b16 %v8537
    %v8863 = vunpack.c.l.b16 %v8538
    %v8864 = vunpack.c.h.b16 %v8538
    %v8865 = vunpack.c.l.b16 %v8539
    %v8866 = vunpack.c.h.b16 %v8539
    %v8867 = vunpack.c.l.b16 %v8540
    %v8868 = vunpack.c.h.b16 %v8540
    %v8869 = vunpack.c.l.b16 %v8541
    %v8870 = vunpack.c.h.b16 %v8541
    %v8871 = vunpack.c.l.b16 %v8542
    %v8872 = vunpack.c.h.b16 %v8542
    %v8873 = vunpack.c.l.b16 %v8543
    %v8874 = vunpack.c.h.b16 %v8543
    %v8875 = vunpack.c.l.b16 %v8544
    %v8876 = vunpack.c.h.b16 %v8544
    %v8877 = vunpack.c.l.b16 %v8545
    %v8878 = vunpack.c.h.b16 %v8545
    %v8879 = vunpack.c.l.b16 %v8546
    %v8880 = vunpack.c.h.b16 %v8546
    %v8881 = vunpack.c.l.b16 %v8547
    %v8882 = vunpack.c.h.b16 %v8547
    %v8883 = vunpack.c.l.b16 %v8548
    %v8884 = vunpack.c.h.b16 %v8548
    %v8885 = vunpack.c.l.b16 %v8549
    %v8886 = vunpack.c.h.b16 %v8549
    %v8887 = vunpack.c.l.b16 %v8550
    %v8888 = vunpack.c.h.b16 %v8550
    %v8889 = vunpack.c.l.b16 %v8551
    %v8890 = vunpack.c.h.b16 %v8551
    %v8891 = vunpack.c.l.b16 %v8552
    %v8892 = vunpack.c.h.b16 %v8552
    %v8893 = vunpack.c.l.b16 %v8553
    %v8894 = vunpack.c.h.b16 %v8553
    %v8895 = vunpack.c.l.b16 %v8554
    %v8896 = vunpack.c.h.b16 %v8554
    %v8897 = vunpack.c.l.b16 %v8555
    %v8898 = vunpack.c.h.b16 %v8555
    %v8899 = vunpack.c.l.b16 %v8556
    %v8900 = vunpack.c.h.b16 %v8556
    %v8901 = vunpack.c.l.b16 %v8557
    %v8902 = vunpack.c.h.b16 %v8557
    %v8903 = vunpack.c.l.b16 %v8558
    %v8904 = vunpack.c.h.b16 %v8558
    %v8905 = vunpack.c.l.b16 %v8559
    %v8906 = vunpack.c.h.b16 %v8559
    %v8907 = vunpack.c.l.b16 %v8560
    %v8908 = vunpack.c.h.b16 %v8560
    %v8909 = vunpack.c.l.b16 %v8561
    %v8910 = vunpack.c.h.b16 %v8561
    %v8911 = vunpack.c.l.b16 %v8562
    %v8912 = vunpack.c.h.b16 %v8562
    %v8913 = vunpack.c.l.b16 %v8563
    %v8914 = vunpack.c.h.b16 %v8563
    %v8915 = vunpack.c.l.b16 %v8564
    %v8916 = vunpack.c.h.b16 %v8564
    %v8917 = vunpack.c.l.b16 %v8565
    %v8918 = vunpack.c.h.b16 %v8565
    %v8919 = vunpack.c.l.b16 %v8566
    %v8920 = vunpack.c.h.b16 %v8566
    %v8921 = vunpack.c.l.b16 %v8567
    %v8922 = vunpack.c.h.b16 %v8567
    %v8923 = vunpack.c.l.b16 %v8568
    %v8924 = vunpack.c.h.b16 %v8568
    %v8925 = vunpack.c.l.b16 %v8569
    %v8926 = vunpack.c.h.b16 %v8569
    %v8927 = vunpack.c.l.b16 %v8570
    %v8928 = vunpack.c.h.b16 %v8570
    %v8929 = vunpack.c.l.b16 %v8571
    %v8930 = vunpack.c.h.b16 %v8571
    %v8931 = vunpack.c.l.b16 %v8572
    %v8932 = vunpack.c.h.b16 %v8572
    %v8933 = vunpack.c.l.b16 %v8573
    %v8934 = vunpack.c.h.b16 %v8573
    %v8935 = vunpack.c.l.b16 %v8574
    %v8936 = vunpack.c.h.b16 %v8574
    %v8937 = vunpack.c.l.b16 %v8575
    %v8938 = vunpack.c.h.b16 %v8575
    %v8939 = vunpack.c.l.b16 %v8576
    %v8940 = vunpack.c.h.b16 %v8576
    %v8941 = vunpack.c.l.b16 %v8577
    %v8942 = vunpack.c.h.b16 %v8577
    %v8943 = vunpack.c.l.b16 %v8578
    %v8944 = vunpack.c.h.b16 %v8578
    %v8945 = vunpack.c.l.b16 %v8579
    %v8946 = vunpack.c.h.b16 %v8579
    %v8947 = vunpack.c.l.b16 %v8580
    %v8948 = vunpack.c.h.b16 %v8580
    %v8949 = vunpack.c.l.b16 %v8581
    %v8950 = vunpack.c.h.b16 %v8581
    %v8951 = vunpack.c.l.b16 %v8582
    %v8952 = vunpack.c.h.b16 %v8582
    %v8953 = vunpack.c.l.b16 %v8583
    %v8954 = vunpack.c.h.b16 %v8583
    %v8955 = vunpack.c.l.b16 %v8584
    %v8956 = vunpack.c.h.b16 %v8584
    %v8957 = vunpack.c.l.b16 %v8585
    %v8958 = vunpack.c.h.b16 %v8585
    %v8959 = vunpack.c.l.b16 %v8586
    %v8960 = vunpack.c.h.b16 %v8586
    %v8961 = vunpack.c.l.b16 %v8587
    %v8962 = vunpack.c.h.b16 %v8587
    %v8963 = vunpack.c.l.b16 %v8588
    %v8964 = vunpack.c.h.b16 %v8588
    %v8965 = vunpack.c.l.b16 %v8589
    %v8966 = vunpack.c.h.b16 %v8589
    %v8967 = vunpack.c.l.b16 %v8590
    %v8968 = vunpack.c.h.b16 %v8590
    %v8969 = vunpack.c.l.b16 %v8591
    %v8970 = vunpack.c.h.b16 %v8591
    %v8971 = vunpack.c.l.b16 %v8592
    %v8972 = vunpack.c.h.b16 %v8592
    %v8973 = vunpack.c.l.b16 %v8593
    %v8974 = vunpack.c.h.b16 %v8593
    %v8975 = vunpack.c.l.b16 %v8594
    %v8976 = vunpack.c.h.b16 %v8594
    %v8977 = vunpack.c.l.b16 %v8595
    %v8978 = vunpack.c.h.b16 %v8595
    %v8979 = vunpack.c.l.b16 %v8596
    %v8980 = vunpack.c.h.b16 %v8596
    %v8981 = vunpack.c.l.b16 %v8597
    %v8982 = vunpack.c.h.b16 %v8597
    %v8983 = vunpack.c.l.b16 %v8598
    %v8984 = vunpack.c.h.b16 %v8598
    %v8985 = vunpack.c.l.b16 %v8599
    %v8986 = vunpack.c.h.b16 %v8599
    %v8987 = vunpack.c.l.b16 %v8600
    %v8988 = vunpack.c.h.b16 %v8600
    %v8989 = vunpack.c.l.b16 %v8601
    %v8990 = vunpack.c.h.b16 %v8601
    %v8991 = vunpack.c.l.b16 %v8602
    %v8992 = vunpack.c.h.b16 %v8602
    %v8993 = vunpack.c.l.b16 %v8603
    %v8994 = vunpack.c.h.b16 %v8603
    %v8995 = vunpack.c.l.b16 %v8604
    %v8996 = vunpack.c.h.b16 %v8604
    %v8997 = vunpack.c.l.b16 %v8605
    %v8998 = vunpack.c.h.b16 %v8605
    %v8999 = vunpack.c.l.b16 %v8606
    %v9000 = vunpack.c.h.b16 %v8606
    %v9001 = vunpack.c.l.b16 %v8607
    %v9002 = vunpack.c.h.b16 %v8607
    %v9003 = vunpack.c.l.b16 %v8608
    %v9004 = vunpack.c.h.b16 %v8608
    %v9005 = vpack.c.b16 %v8751, %v8749
    %v9006 = vpack.c.b16 %v8752, %v8750
    %v9007 = vpack.c.b16 %v8755, %v8753
    %v9008 = vpack.c.b16 %v8756, %v8754
    %v9009 = vpack.c.b16 %v8759, %v8757
    %v9010 = vpack.c.b16 %v8760, %v8758
    %v9011 = vpack.c.b16 %v8763, %v8761
    %v9012 = vpack.c.b16 %v8764, %v8762
    %v9013 = vpack.c.b16 %v8767, %v8765
    %v9014 = vpack.c.b16 %v8768, %v8766
    %v9015 = vpack.c.b16 %v8771, %v8769
    %v9016 = vpack.c.b16 %v8772, %v8770
    %v9017 = vpack.c.b16 %v8775, %v8773
    %v9018 = vpack.c.b16 %v8776, %v8774
    %v9019 = vpack.c.b16 %v8779, %v8777
    %v9020 = vpack.c.b16 %v8780, %v8778
    %v9021 = vpack.c.b16 %v8783, %v8781
    %v9022 = vpack.c.b16 %v8784, %v8782
    %v9023 = vpack.c.b16 %v8787, %v8785
    %v9024 = vpack.c.b16 %v8788, %v8786
    %v9025 = vpack.c.b16 %v8791, %v8789
    %v9026 = vpack.c.b16 %v8792, %v8790
    %v9027 = vpack.c.b16 %v8795, %v8793
    %v9028 = vpack.c.b16 %v8796, %v8794
    %v9029 = vpack.c.b16 %v8799, %v8797
    %v9030 = vpack.c.b16 %v8800, %v8798
    %v9031 = vpack.c.b16 %v8803, %v8801
    %v9032 = vpack.c.b16 %v8804, %v8802
    %v9033 = vpack.c.b16 %v8807, %v8805
    %v9034 = vpack.c.b16 %v8808, %v8806
    %v9035 = vpack.c.b16 %v8811, %v8809
    %v9036 = vpack.c.b16 %v8812, %v8810
    %v9037 = vpack.c.b16 %v8815, %v8813
    %v9038 = vpack.c.b16 %v8816, %v8814
    %v9039 = vpack.c.b16 %v8819, %v8817
    %v9040 = vpack.c.b16 %v8820, %v8818
    %v9041 = vpack.c.b16 %v8823, %v8821
    %v9042 = vpack.c.b16 %v8824, %v8822
    %v9043 = vpack.c.b16 %v8827, %v8825
    %v9044 = vpack.c.b16 %v8828, %v8826
    %v9045 = vpack.c.b16 %v8831, %v8829
    %v9046 = vpack.c.b16 %v8832, %v8830
    %v9047 = vpack.c.b16 %v8835, %v8833
    %v9048 = vpack.c.b16 %v8836, %v8834
    %v9049 = vpack.c.b16 %v8839, %v8837
    %v9050 = vpack.c.b16 %v8840, %v8838
    %v9051 = vpack.c.b16 %v8843, %v8841
    %v9052 = vpack.c.b16 %v8844, %v8842
    %v9053 = vpack.c.b16 %v8847, %v8845
    %v9054 = vpack.c.b16 %v8848, %v8846
    %v9055 = vpack.c.b16 %v8851, %v8849
    %v9056 = vpack.c.b16 %v8852, %v8850
    %v9057 = vpack.c.b16 %v8855, %v8853
    %v9058 = vpack.c.b16 %v8856, %v8854
    %v9059 = vpack.c.b16 %v8859, %v8857
    %v9060 = vpack.c.b16 %v8860, %v8858
    %v9061 = vpack.c.b16 %v8863, %v8861
    %v9062 = vpack.c.b16 %v8864, %v8862
    %v9063 = vpack.c.b16 %v8867, %v8865
    %v9064 = vpack.c.b16 %v8868, %v8866
    %v9065 = vpack.c.b16 %v8871, %v8869
    %v9066 = vpack.c.b16 %v8872, %v8870
    %v9067 = vpack.c.b16 %v8875, %v8873
    %v9068 = vpack.c.b16 %v8876, %v8874
    %v9069 = vpack.c.b16 %v8879, %v8877
    %v9070 = vpack.c.b16 %v8880, %v8878
    %v9071 = vpack.c.b16 %v8883, %v8881
    %v9072 = vpack.c.b16 %v8884, %v8882
    %v9073 = vpack.c.b16 %v8887, %v8885
    %v9074 = vpack.c.b16 %v8888, %v8886
    %v9075 = vpack.c.b16 %v8891, %v8889
    %v9076 = vpack.c.b16 %v8892, %v8890
    %v9077 = vpack.c.b16 %v8895, %v8893
    %v9078 = vpack.c.b16 %v8896, %v8894
    %v9079 = vpack.c.b16 %v8899, %v8897
    %v9080 = vpack.c.b16 %v8900, %v8898
    %v9081 = vpack.c.b16 %v8903, %v8901
    %v9082 = vpack.c.b16 %v8904, %v8902
    %v9083 = vpack.c.b16 %v8907, %v8905
    %v9084 = vpack.c.b16 %v8908, %v8906
    %v9085 = vpack.c.b16 %v8911, %v8909
    %v9086 = vpack.c.b16 %v8912, %v8910
    %v9087 = vpack.c.b16 %v8915, %v8913
    %v9088 = vpack.c.b16 %v8916, %v8914
    %v9089 = vpack.c.b16 %v8919, %v8917
    %v9090 = vpack.c.b16 %v8920, %v8918
    %v9091 = vpack.c.b16 %v8923, %v8921
    %v9092 = vpack.c.b16 %v8924, %v8922
    %v9093 = vpack.c.b16 %v8927, %v8925
    %v9094 = vpack.c.b16 %v8928, %v8926
    %v9095 = vpack.c.b16 %v8931, %v8929
    %v9096 = vpack.c.b16 %v8932, %v8930
    %v9097 = vpack.c.b16 %v8935, %v8933
    %v9098 = vpack.c.b16 %v8936, %v8934
    %v9099 = vpack.c.b16 %v8939, %v8937
    %v9100 = vpack.c.b16 %v8940, %v8938
    %v9101 = vpack.c.b16 %v8943, %v8941
    %v9102 = vpack.c.b16 %v8944, %v8942
    %v9103 = vpack.c.b16 %v8947, %v8945
    %v9104 = vpack.c.b16 %v8948, %v8946
    %v9105 = vpack.c.b16 %v8951, %v8949
    %v9106 = vpack.c.b16 %v8952, %v8950
    %v9107 = vpack.c.b16 %v8955, %v8953
    %v9108 = vpack.c.b16 %v8956, %v8954
    %v9109 = vpack.c.b16 %v8959, %v8957
    %v9110 = vpack.c.b16 %v8960, %v8958
    %v9111 = vpack.c.b16 %v8963, %v8961
    %v9112 = vpack.c.b16 %v8964, %v8962
    %v9113 = vpack.c.b16 %v8967, %v8965
    %v9114 = vpack.c.b16 %v8968, %v8966
    %v9115 = vpack.c.b16 %v8971, %v8969
    %v9116 = vpack.c.b16 %v8972, %v8970
    %v9117 = vpack.c.b16 %v8975, %v8973
    %v9118 = vpack.c.b16 %v8976, %v8974
    %v9119 = vpack.c.b16 %v8979, %v8977
    %v9120 = vpack.c.b16 %v8980, %v8978
    %v9121 = vpack.c.b16 %v8983, %v8981
    %v9122 = vpack.c.b16 %v8984, %v8982
    %v9123 = vpack.c.b16 %v8987, %v8985
    %v9124 = vpack.c.b16 %v8988, %v8986
    %v9125 = vpack.c.b16 %v8991, %v8989
    %v9126 = vpack.c.b16 %v8992, %v8990
    %v9127 = vpack.c.b16 %v8995, %v8993
    %v9128 = vpack.c.b16 %v8996, %v8994
    %v9129 = vpack.c.b16 %v8999, %v8997
    %v9130 = vpack.c.b16 %v9000, %v8998
    %v9131 = vpack.c.b16 %v9003, %v9001
    %v9132 = vpack.c.b16 %v9004, %v9002
    %9261 = vmatprep.subr.bf16.mxu0 %v9020
    %9262 = vmatpush1.bf16.msra.mxu0 %v9019
    %9263 = vmatprep.subr.bf16.mxu0 %v9018
    %9264 = vmatpush1.bf16.msra.mxu0 %v9017
    %9265 = vmatprep.subr.bf16.mxu0 %v9016
    %9266 = vmatpush1.bf16.msra.mxu0 %v9015
    %9267 = vmatprep.subr.bf16.mxu0 %v9014
    %9268 = vmatpush1.bf16.msra.mxu0 %v9013
    %9269 = vmatprep.subr.bf16.mxu0 %v9012
    %9270 = vmatpush1.bf16.msra.mxu0 %v9011
    %9271 = vmatprep.subr.bf16.mxu0 %v9010
    %9272 = vmatpush1.bf16.msra.mxu0 %v9009
    %9273 = vmatprep.subr.bf16.mxu0 %v9008
    %9274 = vmatpush1.bf16.msra.mxu0 %v9007
    %9275 = vmatprep.subr.bf16.mxu0 %v9006
    %9276 = vmatpush1.bf16.msra.mxu0 %v9005
    %9277 = vmatprep.subr.bf16.mxu0 %v9036
    %9278 = vmatpush2.bf16.msra.mxu0 %v9035
    %9279 = vmatprep.subr.bf16.mxu0 %v9034
    %9280 = vmatpush2.bf16.msra.mxu0 %v9033
    %9281 = vmatprep.subr.bf16.mxu0 %v9032
    %9282 = vmatpush2.bf16.msra.mxu0 %v9031
    %9283 = vmatprep.subr.bf16.mxu0 %v9030
    %9284 = vmatpush2.bf16.msra.mxu0 %v9029
    %9285 = vmatprep.subr.bf16.mxu0 %v9028
    %9286 = vmatpush2.bf16.msra.mxu0 %v9027
    %9287 = vmatprep.subr.bf16.mxu0 %v9026
    %9288 = vmatpush2.bf16.msra.mxu0 %v9025
    %9289 = vmatprep.subr.bf16.mxu0 %v9024
    %9290 = vmatpush2.bf16.msra.mxu0 %v9023
    %9291 = vmatprep.subr.bf16.mxu0 %v9022
    %9292 = vmatpush2.bf16.msra.mxu0 %v9021
    %9293 = vmatprep.mubr.bf16.mxu0 %v8474
    %9294 = vmatmul.mubr.bf16.gmra.mxu0 %v8473
    %v9295 = vpop.f32.mrf.mxu0
    %v9296 = vadd.f32 %v8614, %v9295
    %v9297 = vpop.f32.mrf.mxu0
    %v9298 = vadd.f32 %v8618, %v9297
    %v9299 = vpop.f32.mrf.mxu0
    %v9300 = vpop.f32.mrf.mxu0
    %9301 = vdwg.mxu0
    %9302 = vmatprep.subr.bf16.mxu0 %v9052
    %9303 = vmatpush1.bf16.msra.mxu0 %v9051
    %9304 = vmatprep.subr.bf16.mxu0 %v9050
    %9305 = vmatpush1.bf16.msra.mxu0 %v9049
    %9306 = vmatprep.subr.bf16.mxu0 %v9048
    %9307 = vmatpush1.bf16.msra.mxu0 %v9047
    %9308 = vmatprep.subr.bf16.mxu0 %v9046
    %9309 = vmatpush1.bf16.msra.mxu0 %v9045
    %9310 = vmatprep.subr.bf16.mxu0 %v9044
    %9311 = vmatpush1.bf16.msra.mxu0 %v9043
    %9312 = vmatprep.subr.bf16.mxu0 %v9042
    %9313 = vmatpush1.bf16.msra.mxu0 %v9041
    %9314 = vmatprep.subr.bf16.mxu0 %v9040
    %9315 = vmatpush1.bf16.msra.mxu0 %v9039
    %9316 = vmatprep.subr.bf16.mxu0 %v9038
    %9317 = vmatpush1.bf16.msra.mxu0 %v9037
    %9318 = vmatprep.subr.bf16.mxu0 %v9068
    %9319 = vmatpush2.bf16.msra.mxu0 %v9067
    %9320 = vmatprep.subr.bf16.mxu0 %v9066
    %9321 = vmatpush2.bf16.msra.mxu0 %v9065
    %9322 = vmatprep.subr.bf16.mxu0 %v9064
    %9323 = vmatpush2.bf16.msra.mxu0 %v9063
    %9324 = vmatprep.subr.bf16.mxu0 %v9062
    %9325 = vmatpush2.bf16.msra.mxu0 %v9061
    %9326 = vmatprep.subr.bf16.mxu0 %v9060
    %9327 = vmatpush2.bf16.msra.mxu0 %v9059
    %9328 = vmatprep.subr.bf16.mxu0 %v9058
    %9329 = vmatpush2.bf16.msra.mxu0 %v9057
    %9330 = vmatprep.subr.bf16.mxu0 %v9056
    %9331 = vmatpush2.bf16.msra.mxu0 %v9055
    %9332 = vmatprep.subr.bf16.mxu0 %v9054
    %9333 = vmatpush2.bf16.msra.mxu0 %v9053
    %9334 = vmatprep.mubr.bf16.mxu0 %v8476
    %9335 = vmatmul.mubr.bf16.gmra.mxu0 %v8475
    %v9336 = vpop.f32.mrf.mxu0
    %v9337 = vadd.f32 %v9296, %v9336
    %v9338 = vpop.f32.mrf.mxu0
    %v9339 = vadd.f32 %v9298, %v9338
    %v9340 = vpop.f32.mrf.mxu0
    %v9341 = vpop.f32.mrf.mxu0
    %9342 = vdwg.mxu0
    %9343 = vmatprep.subr.bf16.mxu0 %v9084
    %9344 = vmatpush1.bf16.msra.mxu0 %v9083
    %9345 = vmatprep.subr.bf16.mxu0 %v9082
    %9346 = vmatpush1.bf16.msra.mxu0 %v9081
    %9347 = vmatprep.subr.bf16.mxu0 %v9080
    %9348 = vmatpush1.bf16.msra.mxu0 %v9079
    %9349 = vmatprep.subr.bf16.mxu0 %v9078
    %9350 = vmatpush1.bf16.msra.mxu0 %v9077
    %9351 = vmatprep.subr.bf16.mxu0 %v9076
    %9352 = vmatpush1.bf16.msra.mxu0 %v9075
    %9353 = vmatprep.subr.bf16.mxu0 %v9074
    %9354 = vmatpush1.bf16.msra.mxu0 %v9073
    %9355 = vmatprep.subr.bf16.mxu0 %v9072
    %9356 = vmatpush1.bf16.msra.mxu0 %v9071
    %9357 = vmatprep.subr.bf16.mxu0 %v9070
    %9358 = vmatpush1.bf16.msra.mxu0 %v9069
    %9359 = vmatprep.subr.bf16.mxu0 %v9100
    %9360 = vmatpush2.bf16.msra.mxu0 %v9099
    %9361 = vmatprep.subr.bf16.mxu0 %v9098
    %9362 = vmatpush2.bf16.msra.mxu0 %v9097
    %9363 = vmatprep.subr.bf16.mxu0 %v9096
    %9364 = vmatpush2.bf16.msra.mxu0 %v9095
    %9365 = vmatprep.subr.bf16.mxu0 %v9094
    %9366 = vmatpush2.bf16.msra.mxu0 %v9093
    %9367 = vmatprep.subr.bf16.mxu0 %v9092
    %9368 = vmatpush2.bf16.msra.mxu0 %v9091
    %9369 = vmatprep.subr.bf16.mxu0 %v9090
    %9370 = vmatpush2.bf16.msra.mxu0 %v9089
    %9371 = vmatprep.subr.bf16.mxu0 %v9088
    %9372 = vmatpush2.bf16.msra.mxu0 %v9087
    %9373 = vmatprep.subr.bf16.mxu0 %v9086
    %9374 = vmatpush2.bf16.msra.mxu0 %v9085
    %9375 = vmatprep.mubr.bf16.mxu0 %v8478
    %9376 = vmatmul.mubr.bf16.gmra.mxu0 %v8477
    %v9377 = vpop.f32.mrf.mxu0
    %v9378 = vadd.f32 %v9337, %v9377
    %v9379 = vpop.f32.mrf.mxu0
    %v9380 = vadd.f32 %v9339, %v9379
    %v9381 = vpop.f32.mrf.mxu0
    %v9382 = vpop.f32.mrf.mxu0
    %9383 = vdwg.mxu0
    %9384 = vmatprep.subr.bf16.mxu0 %v9116
    %9385 = vmatpush1.bf16.msra.mxu0 %v9115
    %9386 = vmatprep.subr.bf16.mxu0 %v9114
    %9387 = vmatpush1.bf16.msra.mxu0 %v9113
    %9388 = vmatprep.subr.bf16.mxu0 %v9112
    %9389 = vmatpush1.bf16.msra.mxu0 %v9111
    %9390 = vmatprep.subr.bf16.mxu0 %v9110
    %9391 = vmatpush1.bf16.msra.mxu0 %v9109
    %9392 = vmatprep.subr.bf16.mxu0 %v9108
    %9393 = vmatpush1.bf16.msra.mxu0 %v9107
    %9394 = vmatprep.subr.bf16.mxu0 %v9106
    %9395 = vmatpush1.bf16.msra.mxu0 %v9105
    %9396 = vmatprep.subr.bf16.mxu0 %v9104
    %9397 = vmatpush1.bf16.msra.mxu0 %v9103
    %9398 = vmatprep.subr.bf16.mxu0 %v9102
    %9399 = vmatpush1.bf16.msra.mxu0 %v9101
    %9400 = vmatprep.subr.bf16.mxu0 %v9132
    %9401 = vmatpush2.bf16.msra.mxu0 %v9131
    %9402 = vmatprep.subr.bf16.mxu0 %v9130
    %9403 = vmatpush2.bf16.msra.mxu0 %v9129
    %9404 = vmatprep.subr.bf16.mxu0 %v9128
    %9405 = vmatpush2.bf16.msra.mxu0 %v9127
    %9406 = vmatprep.subr.bf16.mxu0 %v9126
    %9407 = vmatpush2.bf16.msra.mxu0 %v9125
    %9408 = vmatprep.subr.bf16.mxu0 %v9124
    %9409 = vmatpush2.bf16.msra.mxu0 %v9123
    %9410 = vmatprep.subr.bf16.mxu0 %v9122
    %9411 = vmatpush2.bf16.msra.mxu0 %v9121
    %9412 = vmatprep.subr.bf16.mxu0 %v9120
    %9413 = vmatpush2.bf16.msra.mxu0 %v9119
    %9414 = vmatprep.subr.bf16.mxu0 %v9118
    %9415 = vmatpush2.bf16.msra.mxu0 %v9117
    %9416 = vmatprep.mubr.bf16.mxu0 %v8480
    %9417 = vmatmul.mubr.bf16.gmra.mxu0 %v8479
    %v9418 = vpop.f32.mrf.mxu0
    %v9419 = vadd.f32 %v9378, %v9418
    %v9420 = vpop.f32.mrf.mxu0
    %v9421 = vadd.f32 %v9380, %v9420
    %v9422 = vpop.f32.mrf.mxu0
    %v9423 = vpop.f32.mrf.mxu0
    %9424 = vdwg.mxu0
    %v9425 = vmax.f32 %v9419, 0.0
    %v9426 = vmax.f32 %v9421, 0.0
    %v9427 = vpack.c.bf16 %v9425, %v9425
    %v9428 = vpack.c.bf16 %v9426, %v9426
    %v9429 = vld [vmem:[%s7] sm:$0xf]
    %v9430 = vld [vmem:[%s7 + $0x4] sm:$0xf]
    %v9431 = vld [vmem:[%s7 + $0x8] sm:$0xf]
    %v9432 = vld [vmem:[%s7 + $0xc] sm:$0xf]
    %v9433 = vld [vmem:[%s7 + $0x10] sm:$0xf]
    %v9434 = vld [vmem:[%s7 + $0x14] sm:$0xf]
    %v9435 = vld [vmem:[%s7 + $0x18] sm:$0xf]
    %v9436 = vld [vmem:[%s7 + $0x1c] sm:$0xf]
    %v9437 = vld [vmem:[%s7 + $0x20] sm:$0xf]
    %v9438 = vld [vmem:[%s7 + $0x24] sm:$0xf]
    %v9439 = vld [vmem:[%s7 + $0x28] sm:$0xf]
    %v9440 = vld [vmem:[%s7 + $0x2c] sm:$0xf]
    %v9441 = vld [vmem:[%s7 + $0x30] sm:$0xf]
    %v9442 = vld [vmem:[%s7 + $0x34] sm:$0xf]
    %v9443 = vld [vmem:[%s7 + $0x38] sm:$0xf]
    %v9444 = vld [vmem:[%s7 + $0x3c] sm:$0xf]
    %v9445 = vld [vmem:[%s7 + $0x40] sm:$0xf]
    %v9446 = vld [vmem:[%s7 + $0x44] sm:$0xf]
    %v9447 = vld [vmem:[%s7 + $0x48] sm:$0xf]
    %v9448 = vld [vmem:[%s7 + $0x4c] sm:$0xf]
    %v9449 = vld [vmem:[%s7 + $0x50] sm:$0xf]
    %v9450 = vld [vmem:[%s7 + $0x54] sm:$0xf]
    %v9451 = vld [vmem:[%s7 + $0x58] sm:$0xf]
    %v9452 = vld [vmem:[%s7 + $0x5c] sm:$0xf]
    %v9453 = vld [vmem:[%s7 + $0x60] sm:$0xf]
    %v9454 = vld [vmem:[%s7 + $0x64] sm:$0xf]
    %v9455 = vld [vmem:[%s7 + $0x68] sm:$0xf]
    %v9456 = vld [vmem:[%s7 + $0x6c] sm:$0xf]
    %v9457 = vld [vmem:[%s7 + $0x70] sm:$0xf]
    %v9458 = vld [vmem:[%s7 + $0x74] sm:$0xf]
    %v9459 = vld [vmem:[%s7 + $0x78] sm:$0xf]
    %v9460 = vld [vmem:[%s7 + $0x7c] sm:$0xf]
    %v9461 = vld [vmem:[#allocation14] sm:$0x1]
    %v9463 = vlaneseq
    %v9464 = vshrl.u32 %v9463, 7
    %v9465 = vsub.s32 0, %v9464
    %v9466 = vrot.slane %v9461, %v9465
    %v9500 = vunpack.c.l.b16 %v9429
    %v9501 = vunpack.c.l.b16 %v9430
    %v9502 = vunpack.c.l.b16 %v9431
    %v9503 = vunpack.c.l.b16 %v9432
    %v9504 = vunpack.c.l.b16 %v9433
    %v9505 = vunpack.c.l.b16 %v9434
    %v9506 = vunpack.c.l.b16 %v9435
    %v9507 = vunpack.c.l.b16 %v9436
    %v9508 = vunpack.c.l.b16 %v9437
    %v9509 = vunpack.c.l.b16 %v9438
    %v9510 = vunpack.c.l.b16 %v9439
    %v9511 = vunpack.c.l.b16 %v9440
    %v9512 = vunpack.c.l.b16 %v9441
    %v9513 = vunpack.c.l.b16 %v9442
    %v9514 = vunpack.c.l.b16 %v9443
    %v9515 = vunpack.c.l.b16 %v9444
    %v9516 = vunpack.c.l.b16 %v9445
    %v9517 = vunpack.c.l.b16 %v9446
    %v9518 = vunpack.c.l.b16 %v9447
    %v9519 = vunpack.c.l.b16 %v9448
    %v9520 = vunpack.c.l.b16 %v9449
    %v9521 = vunpack.c.l.b16 %v9450
    %v9522 = vunpack.c.l.b16 %v9451
    %v9523 = vunpack.c.l.b16 %v9452
    %v9524 = vunpack.c.l.b16 %v9453
    %v9525 = vunpack.c.l.b16 %v9454
    %v9526 = vunpack.c.l.b16 %v9455
    %v9527 = vunpack.c.l.b16 %v9456
    %v9528 = vunpack.c.l.b16 %v9457
    %v9529 = vunpack.c.l.b16 %v9458
    %v9530 = vunpack.c.l.b16 %v9459
    %v9531 = vunpack.c.l.b16 %v9460
    %v9532 = vpack.c.b16 %v9501, %v9500
    %v9533 = vpack.c.b16 %v9503, %v9502
    %v9534 = vpack.c.b16 %v9505, %v9504
    %v9535 = vpack.c.b16 %v9507, %v9506
    %v9536 = vpack.c.b16 %v9509, %v9508
    %v9537 = vpack.c.b16 %v9511, %v9510
    %v9538 = vpack.c.b16 %v9513, %v9512
    %v9539 = vpack.c.b16 %v9515, %v9514
    %v9540 = vpack.c.b16 %v9517, %v9516
    %v9541 = vpack.c.b16 %v9519, %v9518
    %v9542 = vpack.c.b16 %v9521, %v9520
    %v9543 = vpack.c.b16 %v9523, %v9522
    %v9544 = vpack.c.b16 %v9525, %v9524
    %v9545 = vpack.c.b16 %v9527, %v9526
    %v9546 = vpack.c.b16 %v9529, %v9528
    %v9547 = vpack.c.b16 %v9531, %v9530
    %9564 = vmatprep.subr.bf16.mxu0 0
    %9565 = vmatpush1.bf16.msra.mxu0 %v9539
    %9566 = vmatprep.subr.bf16.mxu0 0
    %9567 = vmatpush1.bf16.msra.mxu0 %v9538
    %9568 = vmatprep.subr.bf16.mxu0 0
    %9569 = vmatpush1.bf16.msra.mxu0 %v9537
    %9570 = vmatprep.subr.bf16.mxu0 0
    %9571 = vmatpush1.bf16.msra.mxu0 %v9536
    %9572 = vmatprep.subr.bf16.mxu0 0
    %9573 = vmatpush1.bf16.msra.mxu0 %v9535
    %9574 = vmatprep.subr.bf16.mxu0 0
    %9575 = vmatpush1.bf16.msra.mxu0 %v9534
    %9576 = vmatprep.subr.bf16.mxu0 0
    %9577 = vmatpush1.bf16.msra.mxu0 %v9533
    %9578 = vmatprep.subr.bf16.mxu0 0
    %9579 = vmatpush1.bf16.msra.mxu0 %v9532
    %9580 = vmatprep.subr.bf16.mxu0 0
    %9581 = vmatpush2.bf16.msra.mxu0 %v9547
    %9582 = vmatprep.subr.bf16.mxu0 0
    %9583 = vmatpush2.bf16.msra.mxu0 %v9546
    %9584 = vmatprep.subr.bf16.mxu0 0
    %9585 = vmatpush2.bf16.msra.mxu0 %v9545
    %9586 = vmatprep.subr.bf16.mxu0 0
    %9587 = vmatpush2.bf16.msra.mxu0 %v9544
    %9588 = vmatprep.subr.bf16.mxu0 0
    %9589 = vmatpush2.bf16.msra.mxu0 %v9543
    %9590 = vmatprep.subr.bf16.mxu0 0
    %9591 = vmatpush2.bf16.msra.mxu0 %v9542
    %9592 = vmatprep.subr.bf16.mxu0 0
    %9593 = vmatpush2.bf16.msra.mxu0 %v9541
    %9594 = vmatprep.subr.bf16.mxu0 0
    %9595 = vmatpush2.bf16.msra.mxu0 %v9540
    %9596 = vmatprep.mubr.bf16.mxu0 %v9428
    %9597 = vmatmul.mubr.bf16.gmra.mxu0 %v9427
    %v9598 = vpop.f32.mrf.mxu0
    %v9599 = vadd.f32 %v9466, %v9598
    %v9600 = vpop.f32.mrf.mxu0
    %v9601 = vpop.f32.mrf.mxu0
    %v9602 = vpop.f32.mrf.mxu0
    %9603 = vdwg.mxu0
    %vm9604 = vcmask 130048
    %v9605 = vsel %vm9604, %v9599, -inf
    %9606 = vmax.xlane.f32.xlu0 %v9605
    %v9607 = vpop.xlane.xlu0 %9606
    %v9608 = vsub.f32 %v9599, %v9607
    %v9609 = vmul.f32 %v9608, 1.442695
    %v9610 = vpow.pop %v9609
    %v9611 = vsel %vm9604, %v9610, 0.0
    %9612 = vadd.xlane.f32.xlu0 %v9611
    %v9613 = vpop.xlane.xlu0 %9612
    %v9614 = vlog2.pop %v9613
    %v9615 = vmul.f32 %v9614, 0.6931472
    %v9616 = vadd.f32 %v9615, %v9607
    %v9617 = vsub.f32 %v9599, %v9616
    %9618 = vst.msk [vmem:[#allocation16] sm:$0xff] %vm9604, %v9617
    // Predicated region
    $region70: #{model_forward.1} parent=1 // pred_check
      _
    $region71: #{model_forward.1} parent=1 // pred_check_branch
      %9620 = sbr.rel (0) target = $region73
    $region72: #{model_forward.1} parent=1 // pred_region
      %s9622 = ssub.s32 128, 128
      %9623 = vsyncadd [#allocation4], %s9622
      %s9625 = sshll.u32 [#allocation16], 4
      %s9626 = int_to_ptr.vmem [resolvable:$true] %s9625
      %9628 = dma.vmem_to_hbm [thread:$0]  %s9626, 128, %s9, [#allocation4]
    $region73: #{model_forward.1} parent=1 // pred_fallthru
      _
    // Predicated region
    $region74: #{model_forward.1} parent=1 // pred_check
      _
    $region75: #{model_forward.1} parent=1 // pred_check_branch
      %9630 = sbr.rel (0) target = $region77
    $region76: #{model_forward.1} parent=1 // pred_region
      %9631 = dma.done [#allocation4], 128
    $region77: #{model_forward.1} parent=1 // pred_fallthru
      _
    %9632 = vsyncpa [#allocation3], 1
    %9633 = vsyncpa [#allocation6], 1
    %9634 = vsyncpa [#allocation9], 1
    %9635 = vsyncpa [#allocation12], 1
    %9636 = vsyncpa [#allocation15], 1
    %9637 = vsyncpa [#allocation4], 1

</llo_original>
